<compile_context>
chip_gen: v7x
topology: tpu7x:2x2x1
jax: 0.10.0
libtpu: 0.0.40
codegen_flags: <defaults>
</compile_context>

<pallas_src>
import math
from functools import lru_cache

import numpy as np
import jax
import jax.numpy as jnp
from jax import lax
from jax.experimental import pallas as pl
from jax.experimental.pallas import tpu as pltpu


# ----------------------------------------------------------------------------
# Generation-dependent VMEM budget
# ----------------------------------------------------------------------------
def _vmem_limit_bytes():
    try:
        cap = int(pltpu.get_tpu_info().vmem_capacity_bytes)
    except Exception:
        cap = 64 * 1024 * 1024          # assume the smallest (v7x per-core) VMEM
    return int(min(100 * 1024 * 1024, max(48 * 1024 * 1024, cap - 16 * 1024 * 1024)))


VMEM_LIMIT = _vmem_limit_bytes()


# ----------------------------------------------------------------------------
# Tiling helper
# ----------------------------------------------------------------------------
def _pick_tile(dim, max_tile, mults=(8,)):
    """Largest tile <= max_tile dividing `dim`, preferring multiples in `mults`."""
    if dim <= max_tile:
        return dim
    for m in mults:
        start = max_tile - (max_tile % m)
        for t in range(start, 0, -m):
            if dim % t == 0:
                return t
    for t in range(max_tile, 0, -1):
        if dim % t == 0:
            return t
    return dim


# ----------------------------------------------------------------------------
# Fused matmul + bias + (optional) ReLU kernel (used only for e11's tiny im2col)
# ----------------------------------------------------------------------------
@lru_cache(maxsize=None)
def _build_matmul(M, K, N, relu, out_dtype_name):
    out_dtype = jnp.dtype(out_dtype_name)
    tm = _pick_tile(M, 4096, (8,))
    tn = _pick_tile(N, 512, (256, 128))
    tk = _pick_tile(K, 2048, (256, 128))
    nk = K // tk

    if nk == 1:
        # No K loop -> no accumulator scratch (review item: avoid the extra
        # zero-init + f32 VMEM round trip).
        def kernel(x_ref, w_ref, b_ref, o_ref):
            r = jnp.dot(x_ref[...], w_ref[...], preferred_element_type=jnp.float32)
            r = r + b_ref[...]
            if relu:
                r = jnp.maximum(r, 0.0)
            o_ref[...] = r.astype(o_ref.dtype)

        grid_spec = pltpu.PrefetchScalarGridSpec(
            num_scalar_prefetch=0,
            grid=(M // tm, N // tn),
            in_specs=[
                pl.BlockSpec((tm, K), lambda i, j: (i, 0)),
                pl.BlockSpec((K, tn), lambda i, j: (0, j)),
                pl.BlockSpec((1, tn), lambda i, j: (0, j)),
            ],
            out_specs=pl.BlockSpec((tm, tn), lambda i, j: (i, j)),
        )
        semantics = ("parallel", "parallel")
    else:
        def kernel(x_ref, w_ref, b_ref, o_ref, acc_ref):
            @pl.when(pl.program_id(2) == 0)
            def _():
                acc_ref[...] = jnp.zeros_like(acc_ref)

            acc_ref[...] += jnp.dot(
                x_ref[...], w_ref[...], preferred_element_type=jnp.float32)

            @pl.when(pl.program_id(2) == nk - 1)
            def _():
                r = acc_ref[...] + b_ref[...]
                if relu:
                    r = jnp.maximum(r, 0.0)
                o_ref[...] = r.astype(o_ref.dtype)

        grid_spec = pltpu.PrefetchScalarGridSpec(
            num_scalar_prefetch=0,
            grid=(M // tm, N // tn, nk),
            in_specs=[
                pl.BlockSpec((tm, tk), lambda i, j, k: (i, k)),
                pl.BlockSpec((tk, tn), lambda i, j, k: (k, j)),
                pl.BlockSpec((1, tn), lambda i, j, k: (0, j)),
            ],
            out_specs=pl.BlockSpec((tm, tn), lambda i, j, k: (i, j)),
            scratch_shapes=[pltpu.VMEM((tm, tn), jnp.float32)],
        )
        semantics = ("parallel", "parallel", "arbitrary")

    return pl.pallas_call(
        kernel,
        out_shape=jax.ShapeDtypeStruct((M, N), out_dtype),
        grid_spec=grid_spec,
        compiler_params=pltpu.CompilerParams(
            dimension_semantics=semantics,
            vmem_limit_bytes=VMEM_LIMIT,
        ),
    )


def matmul_bias_act(x, w, b, relu=False, out_dtype=jnp.bfloat16):
    M, K = x.shape
    N = w.shape[1]
    fn = _build_matmul(int(M), int(K), int(N), bool(relu), jnp.dtype(out_dtype).name)
    return fn(
        x.astype(jnp.bfloat16),
        w.astype(jnp.bfloat16),
        jnp.reshape(b, (1, N)).astype(jnp.float32),
    )


# ----------------------------------------------------------------------------
# Direct 3x3 conv kernel:
#   * unpadded input, three clamped row views (top halo / body / bottom halo)
#   * K-folded kx taps (3 matmuls with K = 3*cin per source)
#   * implicit skip-connection concat (multiple sources, split weights)
#   * fused bias + ReLU; optional fused 1x1 outconv + fconv global reduce
# ----------------------------------------------------------------------------
def _row_tile(S):
    if S >= 56:
        return 28
    if S == 28:
        return 14
    return S


@lru_cache(maxsize=None)
def _build_conv3x3(S, cins, cout, relu, final, out_dtype_name):
    out_dtype = jnp.dtype(out_dtype_name)
    n_src = len(cins)
    th = _row_tile(S)
    assert S % th == 0
    nrow = S // th
    tcout = cout if final else min(cout, 256)
    assert cout % tcout == 0
    ncol = cout // tcout

    def kernel(*refs):
        pos = 0
        views = []
        for _ in range(n_src):
            views.append(refs[pos:pos + 3])
            pos += 3
        w_refs = refs[pos:pos + n_src]
        pos += n_src
        bias_ref = refs[pos]
        pos += 1
        if final:
            wp_ref, bp_ref, wf_ref = refs[pos:pos + 3]
            pos += 3
        o_ref = refs[pos]

        i = pl.program_id(1)                       # row-tile index
        acc = None
        for s in range(n_src):
            cin = cins[s]
            top_ref, body_ref, bot_ref = views[s]
            tv = top_ref[...]
            bv = bot_ref[...]
            # zero the halo rows at the image border (row -1 / row S)
            top = tv * (i > 0).astype(tv.dtype)
            bot = bv * (i < nrow - 1).astype(bv.dtype)
            slab = jnp.concatenate([top, body_ref[...], bot], axis=0)   # (th+2, S, cin)
            # K-folded lhs: [col x-1 | col x | col x+1] on the lane axis,
            # zero-filled at the left/right image border.
            zcol = jnp.zeros((th + 2, 1, cin), slab.dtype)
            left = jnp.concatenate([zcol, slab[:, :S - 1, :]], axis=1)
            right = jnp.concatenate([slab[:, 1:, :], zcol], axis=1)
            lhs3 = jnp.concatenate([left, slab, right], axis=-1)        # (th+2, S, 3cin)
            w3 = w_refs[s]                                              # (3, 3cin, tcout)
            for ky in range(3):
                x_ky = lhs3[ky:ky + th].reshape(th * S, 3 * cin)
                c = jnp.dot(x_ky, w3[ky], preferred_element_type=jnp.float32)
                acc = c if acc is None else acc + c

        r = acc + bias_ref[...]
        if relu:
            r = jnp.maximum(r, 0.0)

        if final:
            # fused outconv (1x1, cout->3) + fconv partial reduce for this tile
            rp = jnp.dot(r, wp_ref[...], preferred_element_type=jnp.float32)
            rp = rp + bp_ref[...]                          # (th*S, 3)
            rp3 = rp.reshape(th, S, 3)
            prod = rp3[None, :, :, :] * wf_ref[...]        # (3, th, S, 3)
            o_ref[...] = jnp.sum(prod, axis=(1, 2, 3)).reshape(1, 1, 3)
        else:
            o_ref[...] = r.astype(o_ref.dtype).reshape(th, S, tcout)

    in_specs = []
    for cin in cins:
        in_specs.append(pl.BlockSpec(
            (1, S, cin), lambda j, i: (jnp.maximum(i * th - 1, 0), 0, 0)))
        in_specs.append(pl.BlockSpec((th, S, cin), lambda j, i: (i, 0, 0)))
        in_specs.append(pl.BlockSpec(
            (1, S, cin), lambda j, i: (jnp.minimum((i + 1) * th, S - 1), 0, 0)))
    for cin in cins:
        in_specs.append(pl.BlockSpec((3, 3 * cin, tcout), lambda j, i: (0, 0, j)))
    in_specs.append(pl.BlockSpec((1, tcout), lambda j, i: (0, j)))

    if final:
        in_specs.append(pl.BlockSpec((cout, 3), lambda j, i: (0, 0)))        # wp
        in_specs.append(pl.BlockSpec((1, 3), lambda j, i: (0, 0)))           # bp
        in_specs.append(pl.BlockSpec((3, th, S, 3), lambda j, i: (0, i, 0, 0)))  # wf
        out_specs = pl.BlockSpec((1, 1, 3), lambda j, i: (i, 0, 0))
        out_shape = jax.ShapeDtypeStruct((nrow, 1, 3), jnp.float32)
    else:
        out_specs = pl.BlockSpec((th, S, tcout), lambda j, i: (i, 0, j))
        out_shape = jax.ShapeDtypeStruct((S, S, cout), out_dtype)

    return pl.pallas_call(
        kernel,
        out_shape=out_shape,
        grid_spec=pltpu.PrefetchScalarGridSpec(
            num_scalar_prefetch=0,
            grid=(ncol, nrow),               # cout-major: weight blocks stay resident
            in_specs=in_specs,
            out_specs=out_specs,
        ),
        compiler_params=pltpu.CompilerParams(
            dimension_semantics=("parallel", "parallel"),
            vmem_limit_bytes=VMEM_LIMIT,
        ),
    )


def conv3x3(srcs, ws, b, relu=True, final=None, out_dtype=jnp.bfloat16):
    """srcs: list of (S,S,Cin_s) activations (the skip concat is implicit);
    ws: list of (3, 3*Cin_s, Cout) bf16 weights; b: (1, Cout) f32;
    final: optional dict(wp=(Cout,3) f32, bp=(1,3) f32, wf=(3,S,S,3) f32) —
    fused 1x1 outconv + fconv partial reduce (returns (nrow,1,3) partials)."""
    S = int(srcs[0].shape[0])
    cins = tuple(int(a.shape[-1]) for a in srcs)
    cout = int(ws[0].shape[-1])
    fn = _build_conv3x3(S, cins, cout, bool(relu), final is not None,
                        jnp.dtype(out_dtype).name)
    args = []
    for a in srcs:
        ab = a.astype(jnp.bfloat16)
        args += [ab, ab, ab]                 # top / body / bottom views of the same array
    args += list(ws)
    args.append(b.astype(jnp.float32))
    if final is not None:
        args += [final["wp"], final["bp"], final["wf"]]
    return fn(*args)


# ----------------------------------------------------------------------------
# 2x2 max-pool: single pass over the conv output (free row-major reshape)
# ----------------------------------------------------------------------------
@lru_cache(maxsize=None)
def _build_maxpool(S, C, dt_name):
    dt = jnp.dtype(dt_name)
    S2 = S // 2
    tp = S2 if S2 <= 28 else 28
    assert S2 % tp == 0

    def kernel(x_ref, o_ref):
        v = x_ref[...]                        # (tp, 2, S2, 2*C)
        m = jnp.maximum(v[:, 0], v[:, 1])     # max over the row pair
        o_ref[...] = jnp.maximum(m[:, :, :C], m[:, :, C:])   # max over the col pair

    return pl.pallas_call(
        kernel,
        out_shape=jax.ShapeDtypeStruct((S2, S2, C), dt),
        grid_spec=pltpu.PrefetchScalarGridSpec(
            num_scalar_prefetch=0,
            grid=(S2 // tp,),
            in_specs=[pl.BlockSpec((tp, 2, S2, 2 * C), lambda i: (i, 0, 0, 0))],
            out_specs=pl.BlockSpec((tp, S2, C), lambda i: (i, 0, 0)),
        ),
        compiler_params=pltpu.CompilerParams(
            dimension_semantics=("parallel",),
            vmem_limit_bytes=VMEM_LIMIT,
        ),
    )


def maxpool2x2(x):
    S, _, C = x.shape
    xr = x.reshape(S // 2, 2, S // 2, 2 * C)   # free (row-major compatible)
    return _build_maxpool(int(S), int(C), x.dtype.name)(xr)


# ----------------------------------------------------------------------------
# ConvTranspose2d(k=2, s=2) with the pixel shuffle fused into the kernel.
# Output layout (S, 2, S, 2*Cout) reshapes (free, row-major) to (2S, 2S, Cout).
# ----------------------------------------------------------------------------
@lru_cache(maxsize=None)
def _build_upconv(S, cin, cout):
    if S == 14:
        nt = 1
    elif S == 28:
        nt = 2
    else:
        nt = 4
    r = S // nt
    tm = r * S

    def kernel(x_ref, w0_ref, w1_ref, b_ref, o_ref):
        x = x_ref[...]
        b = b_ref[...]
        y0 = jnp.dot(x, w0_ref[...], preferred_element_type=jnp.float32) + b
        y1 = jnp.dot(x, w1_ref[...], preferred_element_type=jnp.float32) + b
        y0 = y0.astype(o_ref.dtype).reshape(r, S, 2 * cout)
        y1 = y1.astype(o_ref.dtype).reshape(r, S, 2 * cout)
        o_ref[...] = jnp.stack([y0, y1], axis=1)          # (r, 2, S, 2*cout)

    return pl.pallas_call(
        kernel,
        out_shape=jax.ShapeDtypeStruct((S, 2, S, 2 * cout), jnp.bfloat16),
        grid_spec=pltpu.PrefetchScalarGridSpec(
            num_scalar_prefetch=0,
            grid=(nt,),
            in_specs=[
                pl.BlockSpec((tm, cin), lambda i: (i, 0)),
                pl.BlockSpec((cin, 2 * cout), lambda i: (0, 0)),
                pl.BlockSpec((cin, 2 * cout), lambda i: (0, 0)),
                pl.BlockSpec((1, 2 * cout), lambda i: (0, 0)),
            ],
            out_specs=pl.BlockSpec((r, 2, S, 2 * cout), lambda i: (i, 0, 0, 0)),
        ),
        compiler_params=pltpu.CompilerParams(
            dimension_semantics=("parallel",),
            vmem_limit_bytes=VMEM_LIMIT,
        ),
    )


def upconv2x2(x, p):
    S, _, cin = x.shape
    cout = int(p["w0"].shape[1]) // 2
    y = _build_upconv(int(S), int(cin), int(cout))(
        x.reshape(S * S, cin).astype(jnp.bfloat16), p["w0"], p["w1"], p["b"])
    return y.reshape(2 * S, 2 * S, cout)       # free metadata reshape


# ----------------------------------------------------------------------------
# e11 (Cin=1): tiny 9-channel im2col + fused matmul is the fastest form
# ----------------------------------------------------------------------------
def conv3x3_first(x2d, p):
    S = x2d.shape[0]
    xp = jnp.pad(x2d, ((1, 1), (1, 1)))        # 1-channel 224^2 image: negligible
    cols = jnp.stack(
        [xp[ky:ky + S, kx:kx + S] for ky in range(3) for kx in range(3)], axis=-1
    ).reshape(S * S, 9)
    cout = p["w"].shape[1]
    y = matmul_bias_act(cols, p["w"], p["b"], relu=True, out_dtype=jnp.bfloat16)
    return y.reshape(S, S, cout)


# ----------------------------------------------------------------------------
# Parameters: deterministic He-style init in torch layout, converted once into
# kernel layout (bf16, K-folded conv weights, dy-split upconv weights).
# ----------------------------------------------------------------------------
def make_torch_params(key):
    p = {}

    def conv(name, cin, cout, k):
        nonlocal key
        key, k1, k2 = jax.random.split(key, 3)
        fan_in = cin * k * k
        p[name] = (
            jax.random.normal(k1, (cout, cin, k, k), jnp.float32)
            * math.sqrt(2.0 / fan_in),
            jax.random.normal(k2, (cout,), jnp.float32) * 0.01,
        )

    def convT(name, cin, cout, k):
        nonlocal key
        key, k1, k2 = jax.random.split(key, 3)
        fan_in = cin * k * k
        p[name] = (
            jax.random.normal(k1, (cin, cout, k, k), jnp.float32)
            * math.sqrt(2.0 / fan_in),
            jax.random.normal(k2, (cout,), jnp.float32) * 0.01,
        )

    conv("e11", 1, 64, 3);     conv("e12", 64, 64, 3)
    conv("e21", 64, 128, 3);   conv("e22", 128, 128, 3)
    conv("e31", 128, 256, 3);  conv("e32", 256, 256, 3)
    conv("e41", 256, 512, 3);  conv("e42", 512, 512, 3)
    conv("e51", 512, 1024, 3); conv("e52", 1024, 1024, 3)
    convT("up1", 1024, 512, 2); conv("d11", 1024, 512, 3); conv("d12", 512, 512, 3)
    convT("up2", 512, 256, 2);  conv("d21", 512, 256, 3);  conv("d22", 256, 256, 3)
    convT("up3", 256, 128, 2);  conv("d31", 256, 128, 3);  conv("d32", 128, 128, 3)
    convT("up4", 128, 64, 2);   conv("d41", 128, 64, 3);   conv("d42", 64, 64, 3)
    conv("outconv", 64, 3, 1)
    conv("fconv", 3, 3, 224)
    return p


def convert_params(tp):
    kp = {}

    def c3(name, split=None):
        w, b = tp[name]                              # (cout, cin, 3, 3)
        cout, cin = int(w.shape[0]), int(w.shape[1])
        wk = jnp.transpose(w, (2, 3, 1, 0))          # (ky, kx, cin, cout)
        if split is None:
            ws = (wk.reshape(3, 3 * cin, cout).astype(jnp.bfloat16),)
        else:
            ws = (
                wk[:, :, :split].reshape(3, 3 * split, cout).astype(jnp.bfloat16),
                wk[:, :, split:].reshape(3, 3 * (cin - split), cout).astype(jnp.bfloat16),
            )
        kp[name] = {"w": ws, "b": b.reshape(1, cout).astype(jnp.float32)}

    def up(name):
        w, b = tp[name]                               # (cin, cout, 2, 2)
        cin, cout = int(w.shape[0]), int(w.shape[1])
        wt = jnp.transpose(w, (0, 2, 3, 1))           # (cin, dy, dx, cout)
        kp[name] = {
            "w0": wt[:, 0].reshape(cin, 2 * cout).astype(jnp.bfloat16),
            "w1": wt[:, 1].reshape(cin, 2 * cout).astype(jnp.bfloat16),
            "b": jnp.tile(b, 2).reshape(1, 2 * cout).astype(jnp.float32),
        }

    w, b = tp["e11"]                                  # (64, 1, 3, 3)
    kp["e11"] = {
        "w": jnp.transpose(w[:, 0], (1, 2, 0)).reshape(9, w.shape[0]).astype(jnp.bfloat16),
        "b": b.reshape(1, w.shape[0]).astype(jnp.float32),
    }
    for n in ["e12", "e21", "e22", "e31", "e32", "e41", "e42", "e51", "e52",
              "d12", "d22", "d32", "d42"]:
        c3(n)
    # torch.cat([upsampled, encoder_skip], dim=1): first channels belong to the
    # upconv output, second to the skip — the split order below matches that.
    c3("d11", split=512); c3("d21", split=256); c3("d31", split=128); c3("d41", split=64)
    for n in ["up1", "up2", "up3", "up4"]:
        up(n)

    wo, bo = tp["outconv"]                            # (3, 64, 1, 1)
    wf, bf = tp["fconv"]                              # (3, 3, 224, 224) = (co, ci, h, w)
    kp["final"] = {
        "wp": wo[:, :, 0, 0].T.astype(jnp.float32),                   # (64, 3)
        "bp": bo.reshape(1, 3).astype(jnp.float32),
        "wf": jnp.transpose(wf, (0, 2, 3, 1)).astype(jnp.float32),    # (3, 224, 224, 3)
    }
    kp["fconv_b"] = bf.astype(jnp.float32)                             # (3,)
    return kp


# ----------------------------------------------------------------------------
# UNet forward
# ----------------------------------------------------------------------------
def unet_forward(params, x):
    # x: (1, 224, 224, 1) NHWC  == PyTorch NCHW (1, 1, 224, 224)
    x2d = x[0, :, :, 0]

    def conv(name, srcs, final=None):
        p = params[name]
        return conv3x3(srcs, p["w"], p["b"], relu=True, final=final)

    xe11 = conv3x3_first(x2d, params["e11"])
    xe12 = conv("e12", [xe11]); xp1 = maxpool2x2(xe12)
    xe21 = conv("e21", [xp1]);  xe22 = conv("e22", [xe21]); xp2 = maxpool2x2(xe22)
    xe31 = conv("e31", [xp2]);  xe32 = conv("e32", [xe31]); xp3 = maxpool2x2(xe32)
    xe41 = conv("e41", [xp3]);  xe42 = conv("e42", [xe41]); xp4 = maxpool2x2(xe42)
    xe51 = conv("e51", [xp4]);  xe52 = conv("e52", [xe51])

    xu1 = upconv2x2(xe52, params["up1"])
    xd11 = conv("d11", [xu1, xe42]); xd12 = conv("d12", [xd11])
    xu2 = upconv2x2(xd12, params["up2"])
    xd21 = conv("d21", [xu2, xe32]); xd22 = conv("d22", [xd21])
    xu3 = upconv2x2(xd22, params["up3"])
    xd31 = conv("d31", [xu3, xe22]); xd32 = conv("d32", [xd31])
    xu4 = upconv2x2(xd32, params["up4"])
    xd41 = conv("d41", [xu4, xe12])
    # d42 conv (+ReLU) with outconv (1x1, 64->3) and fconv (global 224x224
    # conv) fused into the epilogue; the kernel emits per-row-tile partials.
    partials = conv("d42", [xd41], final=params["final"])    # (nrow, 1, 3) f32
    out = partials.reshape(-1, 3).sum(axis=0) + params["fconv_b"]
    return out.reshape(1, 3)


# ----------------------------------------------------------------------------
# Small correctness self-checks vs. pure-JAX references (bf16 tolerances)
# ----------------------------------------------------------------------------
def _self_check():
    key = jax.random.PRNGKey(123)
    ks = jax.random.split(key, 12)

    # 1) single-source 3x3 conv (two row tiles -> exercises the halo masking)
    S, cin, cout = 56, 8, 16
    x = jax.random.normal(ks[0], (S, S, cin), jnp.float32)
    w = jax.random.normal(ks[1], (cout, cin, 3, 3), jnp.float32) * 0.1
    b = jax.random.normal(ks[2], (cout,), jnp.float32) * 0.1
    wk = (jnp.transpose(w, (2, 3, 1, 0)).reshape(3, 3 * cin, cout).astype(jnp.bfloat16),)
    got = conv3x3([x], wk, b.reshape(1, cout), relu=True).astype(jnp.float32)
    xr = x.astype(jnp.bfloat16).astype(jnp.float32)
    wr = w.astype(jnp.bfloat16).astype(jnp.float32)
    ref = lax.conv_general_dilated(
        xr[None], jnp.transpose(wr, (2, 3, 1, 0)), (1, 1), "SAME",
        dimension_numbers=("NHWC", "HWIO", "NHWC"))[0] + b
    ref = jnp.maximum(ref, 0.0)
    np.testing.assert_allclose(np.asarray(got), np.asarray(ref), rtol=4e-2, atol=4e-2)

    # 2) two-source (implicit skip concat) conv
    a0 = jax.random.normal(ks[3], (S, S, cin), jnp.float32)
    a1 = jax.random.normal(ks[4], (S, S, cin), jnp.float32)
    w2 = jax.random.normal(ks[5], (cout, 2 * cin, 3, 3), jnp.float32) * 0.1
    b2 = jax.random.normal(ks[6], (cout,), jnp.float32) * 0.1
    wk4 = jnp.transpose(w2, (2, 3, 1, 0))
    ws = (wk4[:, :, :cin].reshape(3, 3 * cin, cout).astype(jnp.bfloat16),
          wk4[:, :, cin:].reshape(3, 3 * cin, cout).astype(jnp.bfloat16))
    got2 = conv3x3([a0, a1], ws, b2.reshape(1, cout), relu=True).astype(jnp.float32)
    cat = jnp.concatenate([a0, a1], axis=-1).astype(jnp.bfloat16).astype(jnp.float32)
    wr2 = w2.astype(jnp.bfloat16).astype(jnp.float32)
    ref2 = lax.conv_general_dilated(
        cat[None], jnp.transpose(wr2, (2, 3, 1, 0)), (1, 1), "SAME",
        dimension_numbers=("NHWC", "HWIO", "NHWC"))[0] + b2
    ref2 = jnp.maximum(ref2, 0.0)
    np.testing.assert_allclose(np.asarray(got2), np.asarray(ref2), rtol=4e-2, atol=6e-2)

    # 3) upconv (ConvTranspose2d k=2 s=2) with fused pixel shuffle
    Su, ci_u, co_u = 16, 16, 8
    xu = jax.random.normal(ks[7], (Su, Su, ci_u), jnp.float32)
    wu = jax.random.normal(ks[8], (ci_u, co_u, 2, 2), jnp.float32) * 0.1
    bu = jax.random.normal(ks[9], (co_u,), jnp.float32) * 0.1
    wt = jnp.transpose(wu, (0, 2, 3, 1))
    pu = {"w0": wt[:, 0].reshape(ci_u, 2 * co_u).astype(jnp.bfloat16),
          "w1": wt[:, 1].reshape(ci_u, 2 * co_u).astype(jnp.bfloat16),
          "b": jnp.tile(bu, 2).reshape(1, 2 * co_u).astype(jnp.float32)}
    got_u = upconv2x2(xu.astype(jnp.bfloat16), pu).astype(jnp.float32)
    xur = xu.astype(jnp.bfloat16).astype(jnp.float32)
    wur = wu.astype(jnp.bfloat16).astype(jnp.float32)
    ref_u = jnp.einsum('abi,iopq->apbqo', xur, wur).reshape(2 * Su, 2 * Su, co_u) + bu
    np.testing.assert_allclose(np.asarray(got_u), np.asarray(ref_u), rtol=3e-2, atol=3e-2)

    # 4) fused final path: conv + ReLU -> 1x1 proj -> global multiply-reduce
    wp = jax.random.normal(ks[10], (cout, 3), jnp.float32) * 0.05
    bp = jax.random.normal(ks[11], (3,), jnp.float32) * 0.05
    wf = jax.random.normal(ks[0], (3, S, S, 3), jnp.float32) * 0.05
    fin = {"wp": wp, "bp": bp.reshape(1, 3), "wf": wf}
    parts = conv3x3([x], wk, b.reshape(1, cout), relu=True, final=fin)
    got_f = np.asarray(parts.reshape(-1, 3).sum(axis=0))
    proj = ref @ wp + bp                                # (S, S, 3) reference
    ref_f = np.asarray(jnp.einsum('hwc,khwc->k', proj, wf))
    atol_f = max(0.02 * float(np.max(np.abs(ref_f))), 0.5)
    np.testing.assert_allclose(got_f, ref_f, rtol=5e-2, atol=atol_f)


# ----------------------------------------------------------------------------
# Main
# ----------------------------------------------------------------------------
if __name__ == "__main__":
    _self_check()

    key = jax.random.PRNGKey(0)
    key, kx = jax.random.split(key)
    torch_params = make_torch_params(key)
    params = convert_params(torch_params)   # one-time layout conversion

    # fconv (kernel_size=224, stride=224) pins the spatial size to 224x224;
    # NHWC (1, 224, 224, 1) == PyTorch NCHW (1, 1, 224, 224), n_class=3.
    x = jax.random.normal(kx, (1, 224, 224, 1), jnp.float32)

    fwd = jax.jit(unet_forward)
    out = jax.block_until_ready(fwd(params, x))
    assert out.shape == (1, 3), out.shape
    assert bool(jnp.all(jnp.isfinite(out)))
    print("KERNEL_OK")
</pallas_src>

<mosaic_0001>
module attributes {stable_mosaic.version = 11 : i64} {
  func.func @kernel(%arg0: i32, %arg1: i32, %arg2: memref<1x56x8xbf16, #tpu.memory_space<vmem>>, %arg3: memref<28x56x8xbf16, #tpu.memory_space<vmem>>, %arg4: memref<1x56x8xbf16, #tpu.memory_space<vmem>>, %arg5: memref<3x24x16xbf16, #tpu.memory_space<vmem>>, %arg6: memref<1x16xf32, #tpu.memory_space<vmem>>, %arg7: memref<28x56x16xbf16, #tpu.memory_space<vmem>>) attributes {dimension_semantics = [#tpu.dimension_semantics<parallel>, #tpu.dimension_semantics<parallel>], iteration_bounds = array<i64: 1, 2>, scalar_prefetch = 0 : i64, scratch_operands = 0 : i64, tpu.core_type = #tpu.core_type<tc>, window_params = [{transform_indices = @transform_0, window_bounds = array<i64: 1, 56, 8>}, {transform_indices = @transform_1, window_bounds = array<i64: 28, 56, 8>}, {transform_indices = @transform_2, window_bounds = array<i64: 1, 56, 8>}, {transform_indices = @transform_3, window_bounds = array<i64: 3, 24, 16>}, {transform_indices = @transform_4, window_bounds = array<i64: 1, 16>}, {transform_indices = @transform_5, window_bounds = array<i64: 28, 56, 16>}]} {
    %c0 = arith.constant 0 : index
    %c0_0 = arith.constant 0 : index
    %c0_1 = arith.constant 0 : index
    %0 = vector.load %arg2[%c0, %c0_0, %c0_1] : memref<1x56x8xbf16, #tpu.memory_space<vmem>>, vector<1x56x8xbf16>
    %c0_2 = arith.constant 0 : index
    %c0_3 = arith.constant 0 : index
    %c0_4 = arith.constant 0 : index
    %1 = vector.load %arg4[%c0_2, %c0_3, %c0_4] : memref<1x56x8xbf16, #tpu.memory_space<vmem>>, vector<1x56x8xbf16>
    %c0_i32 = arith.constant 0 : i32
    %2 = arith.cmpi sgt, %arg1, %c0_i32 : i32
    %3 = arith.extui %2 : i1 to i32
    %4 = arith.sitofp %3 : i32 to f32
    %5 = arith.truncf %4 : f32 to bf16
    %6 = vector.broadcast %5 : bf16 to vector<1x56x8xbf16>
    %7 = arith.mulf %0, %6 : vector<1x56x8xbf16>
    %c1_i32 = arith.constant 1 : i32
    %8 = arith.cmpi slt, %arg1, %c1_i32 : i32
    %9 = arith.extui %8 : i1 to i32
    %10 = arith.sitofp %9 : i32 to f32
    %11 = arith.truncf %10 : f32 to bf16
    %12 = vector.broadcast %11 : bf16 to vector<1x56x8xbf16>
    %13 = arith.mulf %1, %12 : vector<1x56x8xbf16>
    %c0_5 = arith.constant 0 : index
    %c0_6 = arith.constant 0 : index
    %c0_7 = arith.constant 0 : index
    %14 = vector.load %arg3[%c0_5, %c0_6, %c0_7] : memref<28x56x8xbf16, #tpu.memory_space<vmem>>, vector<28x56x8xbf16>
    %15 = tpu.concatenate %7, %14, %13 in 0 : vector<1x56x8xbf16>, vector<28x56x8xbf16>, vector<1x56x8xbf16> -> vector<30x56x8xbf16>
    %cst = arith.constant 0.000000e+00 : bf16
    %16 = vector.broadcast %cst : bf16 to vector<30x1x8xbf16>
    %17 = vector.extract_strided_slice %15 {offsets = [0, 0, 0], sizes = [30, 55, 8], strides = [1, 1, 1]} : vector<30x56x8xbf16> to vector<30x55x8xbf16>
    %18 = tpu.concatenate %16, %17 in 1 : vector<30x1x8xbf16>, vector<30x55x8xbf16> -> vector<30x56x8xbf16>
    %19 = vector.extract_strided_slice %15 {offsets = [0, 1, 0], sizes = [30, 55, 8], strides = [1, 1, 1]} : vector<30x56x8xbf16> to vector<30x55x8xbf16>
    %20 = tpu.concatenate %19, %16 in 1 : vector<30x55x8xbf16>, vector<30x1x8xbf16> -> vector<30x56x8xbf16>
    %21 = tpu.concatenate %18, %15, %20 in 2 : vector<30x56x8xbf16>, vector<30x56x8xbf16>, vector<30x56x8xbf16> -> vector<30x56x24xbf16>
    %22 = vector.extract_strided_slice %21 {offsets = [0, 0, 0], sizes = [28, 56, 24], strides = [1, 1, 1]} : vector<30x56x24xbf16> to vector<28x56x24xbf16>
    %23 = vector.shape_cast %22 : vector<28x56x24xbf16> to vector<1568x24xbf16>
    %c0_8 = arith.constant 0 : index
    %c0_9 = arith.constant 0 : index
    %c0_10 = arith.constant 0 : index
    %24 = vector.load %arg5[%c0_8, %c0_9, %c0_10] : memref<3x24x16xbf16, #tpu.memory_space<vmem>>, vector<1x24x16xbf16>
    %25 = vector.shape_cast %24 : vector<1x24x16xbf16> to vector<24x16xbf16>
    %cst_11 = arith.constant dense<0.000000e+00> : vector<1568x16xf32>
    %26 = tpu.matmul %23, %25, %cst_11 {dimension_numbers = #tpu.dot_dimension_numbers<[1], [0], [0], [1], [0, 0, 1, 1], [], []>} : vector<1568x24xbf16>, vector<24x16xbf16>, vector<1568x16xf32> -> vector<1568x16xf32>
    %27 = vector.extract_strided_slice %21 {offsets = [1, 0, 0], sizes = [28, 56, 24], strides = [1, 1, 1]} : vector<30x56x24xbf16> to vector<28x56x24xbf16>
    %28 = vector.shape_cast %27 : vector<28x56x24xbf16> to vector<1568x24xbf16>
    %c1 = arith.constant 1 : index
    %c0_12 = arith.constant 0 : index
    %c0_13 = arith.constant 0 : index
    %29 = vector.load %arg5[%c1, %c0_12, %c0_13] : memref<3x24x16xbf16, #tpu.memory_space<vmem>>, vector<1x24x16xbf16>
    %30 = vector.shape_cast %29 : vector<1x24x16xbf16> to vector<24x16xbf16>
    %cst_14 = arith.constant dense<0.000000e+00> : vector<1568x16xf32>
    %31 = tpu.matmul %28, %30, %cst_14 {dimension_numbers = #tpu.dot_dimension_numbers<[1], [0], [0], [1], [0, 0, 1, 1], [], []>} : vector<1568x24xbf16>, vector<24x16xbf16>, vector<1568x16xf32> -> vector<1568x16xf32>
    %32 = arith.addf %26, %31 : vector<1568x16xf32>
    %33 = vector.extract_strided_slice %21 {offsets = [2, 0, 0], sizes = [28, 56, 24], strides = [1, 1, 1]} : vector<30x56x24xbf16> to vector<28x56x24xbf16>
    %34 = vector.shape_cast %33 : vector<28x56x24xbf16> to vector<1568x24xbf16>
    %c2 = arith.constant 2 : index
    %c0_15 = arith.constant 0 : index
    %c0_16 = arith.constant 0 : index
    %35 = vector.load %arg5[%c2, %c0_15, %c0_16] : memref<3x24x16xbf16, #tpu.memory_space<vmem>>, vector<1x24x16xbf16>
    %36 = vector.shape_cast %35 : vector<1x24x16xbf16> to vector<24x16xbf16>
    %cst_17 = arith.constant dense<0.000000e+00> : vector<1568x16xf32>
    %37 = tpu.matmul %34, %36, %cst_17 {dimension_numbers = #tpu.dot_dimension_numbers<[1], [0], [0], [1], [0, 0, 1, 1], [], []>} : vector<1568x24xbf16>, vector<24x16xbf16>, vector<1568x16xf32> -> vector<1568x16xf32>
    %38 = arith.addf %32, %37 : vector<1568x16xf32>
    %c0_18 = arith.constant 0 : index
    %c0_19 = arith.constant 0 : index
    %39 = vector.load %arg6[%c0_18, %c0_19] : memref<1x16xf32, #tpu.memory_space<vmem>>, vector<1x16xf32>
    %40 = vector.broadcast %39 : vector<1x16xf32> to vector<1568x16xf32>
    %41 = arith.addf %38, %40 : vector<1568x16xf32>
    %cst_20 = arith.constant 0.000000e+00 : f32
    %42 = vector.broadcast %cst_20 : f32 to vector<1568x16xf32>
    %43 = arith.maximumf %41, %42 : vector<1568x16xf32>
    %44 = arith.truncf %43 : vector<1568x16xf32> to vector<1568x16xbf16>
    %45 = vector.shape_cast %44 : vector<1568x16xbf16> to vector<28x56x16xbf16>
    %c0_21 = arith.constant 0 : index
    %c0_22 = arith.constant 0 : index
    %c0_23 = arith.constant 0 : index
    %46 = vector.load %arg7[%c0_21, %c0_22, %c0_23] : memref<28x56x16xbf16, #tpu.memory_space<vmem>>, vector<28x56x16xbf16>
    tpu.vector_store %arg7[%c0_21, %c0_22, %c0_23], %45 {strides = array<i32>} : memref<28x56x16xbf16, #tpu.memory_space<vmem>>, vector<28x56x16xbf16>,
    return
  }
  func.func @transform_0(%arg0: i32, %arg1: i32) -> (i32, i32, i32) {
    %c28_i32 = arith.constant 28 : i32
    %0 = arith.muli %arg1, %c28_i32 : i32
    %c1_i32 = arith.constant 1 : i32
    %1 = arith.subi %0, %c1_i32 : i32
    %c0_i32 = arith.constant 0 : i32
    %2 = arith.maxsi %1, %c0_i32 : i32
    %c0_i32_0 = arith.constant 0 : i32
    %c0_i32_1 = arith.constant 0 : i32
    %c0_i32_2 = arith.constant 0 : i32
    return %2, %c0_i32_0, %c0_i32_1 : i32, i32, i32
  }
  func.func @transform_1(%arg0: i32, %arg1: i32) -> (i32, i32, i32) {
    %c0_i32 = arith.constant 0 : i32
    %c0_i32_0 = arith.constant 0 : i32
    %c0_i32_1 = arith.constant 0 : i32
    return %arg1, %c0_i32, %c0_i32_0 : i32, i32, i32
  }
  func.func @transform_2(%arg0: i32, %arg1: i32) -> (i32, i32, i32) {
    %c1_i32 = arith.constant 1 : i32
    %0 = arith.addi %arg1, %c1_i32 : i32
    %c28_i32 = arith.constant 28 : i32
    %1 = arith.muli %0, %c28_i32 : i32
    %c55_i32 = arith.constant 55 : i32
    %2 = arith.minsi %1, %c55_i32 : i32
    %c0_i32 = arith.constant 0 : i32
    %c0_i32_0 = arith.constant 0 : i32
    %c0_i32_1 = arith.constant 0 : i32
    return %2, %c0_i32, %c0_i32_0 : i32, i32, i32
  }
  func.func @transform_3(%arg0: i32, %arg1: i32) -> (i32, i32, i32) {
    %c0_i32 = arith.constant 0 : i32
    %c0_i32_0 = arith.constant 0 : i32
    %c0_i32_1 = arith.constant 0 : i32
    return %c0_i32, %c0_i32_0, %arg0 : i32, i32, i32
  }
  func.func @transform_4(%arg0: i32, %arg1: i32) -> (i32, i32) {
    %c0_i32 = arith.constant 0 : i32
    %c0_i32_0 = arith.constant 0 : i32
    return %c0_i32, %arg0 : i32, i32
  }
  func.func @transform_5(%arg0: i32, %arg1: i32) -> (i32, i32, i32) {
    %c0_i32 = arith.constant 0 : i32
    %c0_i32_0 = arith.constant 0 : i32
    return %arg1, %c0_i32, %arg0 : i32, i32, i32
  }
}

</mosaic_0001>

<llo_original>
// kernel: tpu_custom_call.1
$region0: #{tpu_custom_call.1}
  #allocation0 [shape = 'u32[]', space=smem, size = 0x4, offset = 0x4, fixed_abs, tag = 'smem constant byte address 0x4 - core index']
  #allocation1 [shape = 'u32[144,128]{1,0:T(1,128)}', space=vmem, size = 0x12000, scoped, tag = 'internal scratch']
  %s0 = inlined_call_operand.vmem [shape: bf16[56,56,8], index: 0, kind: input, shape index: {}]
  %s1 = inlined_call_operand.vmem [shape: bf16[56,56,8], index: 1, kind: input, shape index: {}]
  %s2 = inlined_call_operand.vmem [shape: bf16[56,56,8], index: 2, kind: input, shape index: {}]
  %s3 = inlined_call_operand.vmem [shape: bf16[3,24,16], index: 3, kind: input, shape index: {}]
  %s4 = inlined_call_operand.vmem [shape: f32[1,16], index: 4, kind: input, shape index: {}]
  %s5 = inlined_call_operand.vmem [shape: bf16[56,56,16], index: 5, kind: output, shape index: {}]
  %s6 = sld [smem:[#allocation0]]
  $region53: #{tpu_custom_call.1} parent=0
    _
  %s8 = ssub.s32 1, %s6
  %s9 = scalar_select 0, %s8, %s6
  loop: start=0, step=1, limit=4
  $region2: #{tpu_custom_call.1} parent=0 // loop_pre_header
    _
  $region3: #{tpu_custom_call.1} parent=0 // loop_header
    %s11 = sphi 0, %s15
    %p12 = scmp.ge.s32.totalorder %s11, 4
    %s18 = sphi 0, %s30
    %s19 = sphi 0, %s26
    %s20 = sphi 0, %s18
    %s21 = sphi 0, %s19
    %s22 = sphi 0, %s20
    %s23 = sphi 0, %s21
    %s41 = sphi 0, %s43
    %s44 = sphi 0, %s41
    %s45 = sphi 0, %s44
    %s61 = sphi 0, %s45
    %s67 = sphi 0, %s69
    %s70 = sphi 0, %s67
    %s71 = sphi 0, %s70
    %s87 = sphi 0, %s71
    %s101 = sphi 0, %s103
    %s104 = sphi 0, %s101
    %s105 = sphi 0, %s104
    %s121 = sphi 0, %s105
    %s127 = sphi 0, %s129
    %s130 = sphi 0, %s127
    %s131 = sphi 0, %s130
    %s147 = sphi 0, %s131
    %s153 = sphi 0, %s155
    %s156 = sphi 0, %s153
    %s157 = sphi 0, %s156
    %s173 = sphi 0, %s157
    %s181 = sphi 0, %s183
    %s184 = sphi 0, %s181
    %s185 = sphi 0, %s184
    %s201 = sphi 0, %s185
  $region4: #{tpu_custom_call.1} parent=0 // loop_header_branch
    %14 = sbr.rel (%p12) target = $region8
  $region5: #{tpu_custom_call.1} parent=0 // loop_body
    %s16 = ssub.s32 %s11, 1
    %s17 = ssub.s32 %s11, 2
    %s24 = sadd.s32 1, %s19
    %p25 = scmp.ge.s32.totalorder %s24, 2
    %s26 = scalar_select %p25, 0, %s24
    %s27 = sadd.s32 1, %s18
    %s28 = scalar_select %p25, %s27, %s18
    %p29 = scmp.ge.s32.totalorder %s28, 1
    %s30 = scalar_select %p29, 0, %s28
    %s31 = smul.u32 %s19, 28
    %s32 = ssub.s32 %s31, 1
    %p33 = scmp.gt.s32.totalorder %s32, 0
    %s34 = scalar_select %p33, %s32, 0
    %s35 = smul.u32 %s26, 28
    %s36 = ssub.s32 %s35, 1
    %p37 = scmp.gt.s32.totalorder %s36, 0
    %s38 = scalar_select %p37, %s36, 0
    %s39 = ssub.s32 %s34, %s38
    %p40 = scmp.eq.s32.totalorder %s39, 0
    %s42 = sadd.s32 %s41, 1
    %s43 = scalar_select %p40, %s41, %s42
    %p46 = pneg %p40
    %p47 = scmp.eq.s32.totalorder %s11, 1
    %p48 = por %p46, %p47
    %p49 = scmp.ne.s32.totalorder %s41, %s44
    %p50 = scmp.eq.s32.totalorder %s11, 0
    %p51 = por %p49, %p50
    %p52 = scmp.ne.s32.totalorder %s41, %s44
    %p53 = scmp.eq.s32.totalorder %s16, 1
    %p54 = por %p52, %p53
    %p55 = scmp.ne.s32.totalorder %s44, %s45
    %p56 = scmp.eq.s32.totalorder %s16, 0
    %p57 = por %p55, %p56
    %p58 = scmp.ne.s32.totalorder %s44, %s45
    %p59 = scmp.eq.s32.totalorder %s17, 1
    %p60 = por %p58, %p59
    %p62 = scmp.ne.s32.totalorder %s45, %s61
    %p63 = scmp.eq.s32.totalorder %s17, 0
    %p64 = por %p62, %p63
    %s65 = ssub.s32 %s19, %s26
    %p66 = scmp.eq.s32.totalorder %s65, 0
    %s68 = sadd.s32 %s67, 1
    %s69 = scalar_select %p66, %s67, %s68
    %p72 = pneg %p66
    %p73 = scmp.eq.s32.totalorder %s11, 1
    %p74 = por %p72, %p73
    %p75 = scmp.ne.s32.totalorder %s67, %s70
    %p76 = scmp.eq.s32.totalorder %s11, 0
    %p77 = por %p75, %p76
    %p78 = scmp.ne.s32.totalorder %s67, %s70
    %p79 = scmp.eq.s32.totalorder %s16, 1
    %p80 = por %p78, %p79
    %p81 = scmp.ne.s32.totalorder %s70, %s71
    %p82 = scmp.eq.s32.totalorder %s16, 0
    %p83 = por %p81, %p82
    %p84 = scmp.ne.s32.totalorder %s70, %s71
    %p85 = scmp.eq.s32.totalorder %s17, 1
    %p86 = por %p84, %p85
    %p88 = scmp.ne.s32.totalorder %s71, %s87
    %p89 = scmp.eq.s32.totalorder %s17, 0
    %p90 = por %p88, %p89
    %s91 = sadd.s32 %s19, 1
    %s92 = smul.u32 %s91, 28
    %p93 = scmp.lt.s32.totalorder %s92, 55
    %s94 = scalar_select %p93, %s92, 55
    %s95 = sadd.s32 %s26, 1
    %s96 = smul.u32 %s95, 28
    %p97 = scmp.lt.s32.totalorder %s96, 55
    %s98 = scalar_select %p97, %s96, 55
    %s99 = ssub.s32 %s94, %s98
    %p100 = scmp.eq.s32.totalorder %s99, 0
    %s102 = sadd.s32 %s101, 1
    %s103 = scalar_select %p100, %s101, %s102
    %p106 = pneg %p100
    %p107 = scmp.eq.s32.totalorder %s11, 1
    %p108 = por %p106, %p107
    %p109 = scmp.ne.s32.totalorder %s101, %s104
    %p110 = scmp.eq.s32.totalorder %s11, 0
    %p111 = por %p109, %p110
    %p112 = scmp.ne.s32.totalorder %s101, %s104
    %p113 = scmp.eq.s32.totalorder %s16, 1
    %p114 = por %p112, %p113
    %p115 = scmp.ne.s32.totalorder %s104, %s105
    %p116 = scmp.eq.s32.totalorder %s16, 0
    %p117 = por %p115, %p116
    %p118 = scmp.ne.s32.totalorder %s104, %s105
    %p119 = scmp.eq.s32.totalorder %s17, 1
    %p120 = por %p118, %p119
    %p122 = scmp.ne.s32.totalorder %s105, %s121
    %p123 = scmp.eq.s32.totalorder %s17, 0
    %p124 = por %p122, %p123
    %s125 = ssub.s32 %s18, %s30
    %p126 = scmp.eq.s32.totalorder %s125, 0
    %s128 = sadd.s32 %s127, 1
    %s129 = scalar_select %p126, %s127, %s128
    %p132 = pneg %p126
    %p133 = scmp.eq.s32.totalorder %s11, 1
    %p134 = por %p132, %p133
    %p135 = scmp.ne.s32.totalorder %s127, %s130
    %p136 = scmp.eq.s32.totalorder %s11, 0
    %p137 = por %p135, %p136
    %p138 = scmp.ne.s32.totalorder %s127, %s130
    %p139 = scmp.eq.s32.totalorder %s16, 1
    %p140 = por %p138, %p139
    %p141 = scmp.ne.s32.totalorder %s130, %s131
    %p142 = scmp.eq.s32.totalorder %s16, 0
    %p143 = por %p141, %p142
    %p144 = scmp.ne.s32.totalorder %s130, %s131
    %p145 = scmp.eq.s32.totalorder %s17, 1
    %p146 = por %p144, %p145
    %p148 = scmp.ne.s32.totalorder %s131, %s147
    %p149 = scmp.eq.s32.totalorder %s17, 0
    %p150 = por %p148, %p149
    %s151 = ssub.s32 %s18, %s30
    %p152 = scmp.eq.s32.totalorder %s151, 0
    %s154 = sadd.s32 %s153, 1
    %s155 = scalar_select %p152, %s153, %s154
    %p158 = pneg %p152
    %p159 = scmp.eq.s32.totalorder %s11, 1
    %p160 = por %p158, %p159
    %p161 = scmp.ne.s32.totalorder %s153, %s156
    %p162 = scmp.eq.s32.totalorder %s11, 0
    %p163 = por %p161, %p162
    %p164 = scmp.ne.s32.totalorder %s153, %s156
    %p165 = scmp.eq.s32.totalorder %s16, 1
    %p166 = por %p164, %p165
    %p167 = scmp.ne.s32.totalorder %s156, %s157
    %p168 = scmp.eq.s32.totalorder %s16, 0
    %p169 = por %p167, %p168
    %p170 = scmp.ne.s32.totalorder %s156, %s157
    %p171 = scmp.eq.s32.totalorder %s17, 1
    %p172 = por %p170, %p171
    %p174 = scmp.ne.s32.totalorder %s157, %s173
    %p175 = scmp.eq.s32.totalorder %s17, 0
    %p176 = por %p174, %p175
    %s177 = ssub.s32 %s19, %s26
    %s178 = ssub.s32 %s18, %s30
    %s179 = sor.u32 %s177, %s178
    %p180 = scmp.eq.s32.totalorder %s179, 0
    %s182 = sadd.s32 %s181, 1
    %s183 = scalar_select %p180, %s181, %s182
    %p186 = pneg %p180
    %p187 = scmp.eq.s32.totalorder %s11, 1
    %p188 = por %p186, %p187
    %p189 = scmp.ne.s32.totalorder %s181, %s184
    %p190 = scmp.eq.s32.totalorder %s11, 0
    %p191 = por %p189, %p190
    %p192 = scmp.ne.s32.totalorder %s181, %s184
    %p193 = scmp.eq.s32.totalorder %s16, 1
    %p194 = por %p192, %p193
    %p195 = scmp.ne.s32.totalorder %s184, %s185
    %p196 = scmp.eq.s32.totalorder %s16, 0
    %p197 = por %p195, %p196
    %p198 = scmp.ne.s32.totalorder %s184, %s185
    %p199 = scmp.eq.s32.totalorder %s17, 1
    %p200 = por %p198, %p199
    %p202 = scmp.ne.s32.totalorder %s185, %s201
    %p203 = scmp.eq.s32.totalorder %s17, 0
    %p204 = por %p202, %p203
    %p205 = scmp.le.s32.totalorder 1, %s11
    %p206 = scmp.lt.s32.totalorder %s11, 3
    %p207 = pnand %p205, %p206
    %p208 = pneg %p207
    // Predicated region
    $region9: #{tpu_custom_call.1} parent=5 // pred_check
      _
    $region10: #{tpu_custom_call.1} parent=5 // pred_check_branch
      %210 = sbr.rel (%p207) target = $region12
    $region11: #{tpu_custom_call.1} parent=5 // pred_region
      %s211 = ssub.s32 %s11, 1
      // Predicated region
      $region13: #{tpu_custom_call.1} parent=11 // pred_check
        %p212 = pneg %p143
      $region14: #{tpu_custom_call.1} parent=11 // pred_check_branch
        %214 = sbr.rel (%p212) target = $region16
      $region15: #{tpu_custom_call.1} parent=11 // pred_region
        %p215 = scmp.lt.s32.totalorder %s20, 0
        %s216 = scalar_select %p215, %s20, 0
        %s217 = smul.addr %s216, 4
        %s218 = scalar_lea.vmem %s3, %s217
      $region16: #{tpu_custom_call.1} parent=11 // pred_fallthru
        _
      // Predicated region
      $region17: #{tpu_custom_call.1} parent=11 // pred_check
        %p219 = pneg %p169
      $region18: #{tpu_custom_call.1} parent=11 // pred_check_branch
        %221 = sbr.rel (%p219) target = $region20
      $region19: #{tpu_custom_call.1} parent=11 // pred_region
        %p222 = scmp.lt.s32.totalorder %s20, 0
        %s223 = scalar_select %p222, %s20, 0
        %s224 = scalar_lea.vmem %s4, %s223
      $region20: #{tpu_custom_call.1} parent=11 // pred_fallthru
        _
    $region12: #{tpu_custom_call.1} parent=5 // pred_fallthru
      _
    %p225 = scmp.lt.s32.totalorder %s11, 2
    // Predicated region
    $region21: #{tpu_custom_call.1} parent=5 // pred_check
      %p226 = pneg %p225
    $region22: #{tpu_custom_call.1} parent=5 // pred_check_branch
      %228 = sbr.rel (%p226) target = $region24
    $region23: #{tpu_custom_call.1} parent=5 // pred_region
      // Predicated region
      $region25: #{tpu_custom_call.1} parent=23 // pred_check
        %p229 = pneg %p51
      $region26: #{tpu_custom_call.1} parent=23 // pred_check_branch
        %231 = sbr.rel (%p229) target = $region28
      $region27: #{tpu_custom_call.1} parent=23 // pred_region
        %s232 = smul.u32 %s19, 28
        %s233 = ssub.s32 %s232, 1
        %p234 = scmp.gt.s32.totalorder %s233, 0
        %s235 = scalar_select %p234, %s233, 0
        %p236 = scmp.lt.s32.totalorder %s235, 55
        %s237 = scalar_select %p236, %s235, 55
        %s238 = smul.addr %s237, 7
        %s239 = smul.addr %s238, 4
        %s240 = scalar_lea.vmem %s0, %s239
        %s241 = smul.u32 %s19, 28
        %s242 = ssub.s32 %s241, 1
        %p243 = scmp.gt.s32.totalorder %s242, 0
        %s244 = scalar_select %p243, %s242, 0
      $region28: #{tpu_custom_call.1} parent=23 // pred_fallthru
        _
      // Predicated region
      $region29: #{tpu_custom_call.1} parent=23 // pred_check
        %p245 = pneg %p77
      $region30: #{tpu_custom_call.1} parent=23 // pred_check_branch
        %247 = sbr.rel (%p245) target = $region32
      $region31: #{tpu_custom_call.1} parent=23 // pred_region
        %s248 = smul.u32 28, %s19
        %p249 = scmp.lt.s32.totalorder %s248, 55
        %s250 = scalar_select %p249, %s248, 55
        %s251 = smul.addr %s250, 7
        %s252 = smul.addr %s251, 4
        %s253 = scalar_lea.vmem %s1, %s252
        %s254 = smul.u32 28, %s19
      $region32: #{tpu_custom_call.1} parent=23 // pred_fallthru
        _
      // Predicated region
      $region33: #{tpu_custom_call.1} parent=23 // pred_check
        %p255 = pneg %p111
      $region34: #{tpu_custom_call.1} parent=23 // pred_check_branch
        %257 = sbr.rel (%p255) target = $region36
      $region35: #{tpu_custom_call.1} parent=23 // pred_region
        %s258 = sadd.s32 %s19, 1
        %s259 = smul.u32 %s258, 28
        %p260 = scmp.lt.s32.totalorder %s259, 55
        %s261 = scalar_select %p260, %s259, 55
        %p262 = scmp.lt.s32.totalorder %s261, 55
        %s263 = scalar_select %p262, %s261, 55
        %s264 = smul.addr %s263, 7
        %s265 = smul.addr %s264, 4
        %s266 = scalar_lea.vmem %s2, %s265
        %s267 = sadd.s32 %s19, 1
        %s268 = smul.u32 %s267, 28
        %p269 = scmp.lt.s32.totalorder %s268, 55
        %s270 = scalar_select %p269, %s268, 55
      $region36: #{tpu_custom_call.1} parent=23 // pred_fallthru
        _
    $region24: #{tpu_custom_call.1} parent=5 // pred_fallthru
      _
    %p271 = scmp.le.s32.totalorder 1, %s11
    %p272 = scmp.lt.s32.totalorder %s11, 3
    %p273 = pnand %p271, %p272
    %p274 = pneg %p273
    // Predicated region
    $region37: #{tpu_custom_call.1} parent=5 // pred_check
      _
    $region38: #{tpu_custom_call.1} parent=5 // pred_check_branch
      %276 = sbr.rel (%p273) target = $region40
    $region39: #{tpu_custom_call.1} parent=5 // pred_region
      %s277 = ssub.s32 %s11, 1
      %s278 = smul.u32 %s21, 28
      %s279 = ssub.s32 %s278, 1
      %p280 = scmp.gt.s32.totalorder %s279, 0
      %s281 = scalar_select %p280, %s279, 0
      %p282 = scmp.lt.s32.totalorder %s281, 55
      %s283 = scalar_select %p282, %s281, 55
      %s284 = smul.addr %s283, 7
      %s285 = smul.addr %s284, 4
      %s286 = scalar_lea.vmem %s0, %s285
      %p287 = pneg %p57
      %p288 = pneg %p54
      %s289 = smul.u32 28, %s21
      %p290 = scmp.lt.s32.totalorder %s289, 55
      %s291 = scalar_select %p290, %s289, 55
      %s292 = smul.addr %s291, 7
      %s293 = smul.addr %s292, 4
      %s294 = scalar_lea.vmem %s1, %s293
      %p295 = pneg %p83
      %p296 = pneg %p80
      %s297 = sadd.s32 %s21, 1
      %s298 = smul.u32 %s297, 28
      %p299 = scmp.lt.s32.totalorder %s298, 55
      %s300 = scalar_select %p299, %s298, 55
      %p301 = scmp.lt.s32.totalorder %s300, 55
      %s302 = scalar_select %p301, %s300, 55
      %s303 = smul.addr %s302, 7
      %s304 = smul.addr %s303, 4
      %s305 = scalar_lea.vmem %s2, %s304
      %p306 = pneg %p117
      %p307 = pneg %p114
      %p308 = scmp.lt.s32.totalorder %s20, 0
      %s309 = scalar_select %p308, %s20, 0
      %s310 = smul.addr %s309, 4
      %s311 = scalar_lea.vmem %s3, %s310
      %p312 = pneg %p143
      %p313 = pneg %p140
      %p314 = scmp.lt.s32.totalorder %s20, 0
      %s315 = scalar_select %p314, %s20, 0
      %s316 = scalar_lea.vmem %s4, %s315
      %p317 = pneg %p169
      %p318 = pneg %p166
      %p319 = pneg %p197
      %p320 = pneg %p194
      %s321 = smul.u32 28, %s21
      %p322 = scmp.lt.s32.totalorder %s321, 55
      %s323 = scalar_select %p322, %s321, 55
      %p324 = scmp.lt.s32.totalorder %s20, 0
      %s325 = scalar_select %p324, %s20, 0
      %s326 = smul.addr %s323, 7
      %s327 = sadd.s32 %s325, %s326
      %s328 = smul.addr %s327, 4
      %s329 = scalar_lea.vmem %s5, %s328
      %s330 = smul.u32 %s21, 28
      %s331 = ssub.s32 %s330, 1
      %p332 = scmp.gt.s32.totalorder %s331, 0
      %s333 = scalar_select %p332, %s331, 0
      %p334 = scmp.lt.s32.totalorder %s333, 55
      %s335 = scalar_select %p334, %s333, 55
      %s336 = smul.addr %s335, 7
      %s337 = smul.addr %s336, 4
      %s338 = scalar_lea.vmem %s0, %s337
      %s339 = smul.u32 %s21, 28
      %s340 = ssub.s32 %s339, 1
      %p341 = scmp.gt.s32.totalorder %s340, 0
      %s342 = scalar_select %p341, %s340, 0
      %s343 = smul.u32 28, %s21
      %p344 = scmp.lt.s32.totalorder %s343, 55
      %s345 = scalar_select %p344, %s343, 55
      %s346 = smul.addr %s345, 7
      %s347 = smul.addr %s346, 4
      %s348 = scalar_lea.vmem %s1, %s347
      %s349 = smul.u32 28, %s21
      %s350 = sadd.s32 %s21, 1
      %s351 = smul.u32 %s350, 28
      %p352 = scmp.lt.s32.totalorder %s351, 55
      %s353 = scalar_select %p352, %s351, 55
      %p354 = scmp.lt.s32.totalorder %s353, 55
      %s355 = scalar_select %p354, %s353, 55
      %s356 = smul.addr %s355, 7
      %s357 = smul.addr %s356, 4
      %s358 = scalar_lea.vmem %s2, %s357
      %s359 = sadd.s32 %s21, 1
      %s360 = smul.u32 %s359, 28
      %p361 = scmp.lt.s32.totalorder %s360, 55
      %s362 = scalar_select %p361, %s360, 55
      %p363 = scmp.lt.s32.totalorder %s20, 0
      %s364 = scalar_select %p363, %s20, 0
      %s365 = smul.addr %s364, 4
      %s366 = scalar_lea.vmem %s3, %s365
      %p367 = scmp.lt.s32.totalorder %s20, 0
      %s368 = scalar_select %p367, %s20, 0
      %s369 = scalar_lea.vmem %s4, %s368
      %s370 = smul.u32 28, %s21
      %p371 = scmp.lt.s32.totalorder %s370, 55
      %s372 = scalar_select %p371, %s370, 55
      %p373 = scmp.lt.s32.totalorder %s20, 0
      %s374 = scalar_select %p373, %s20, 0
      %s375 = smul.addr %s372, 7
      %s376 = sadd.s32 %s374, %s375
      %s377 = smul.addr %s376, 4
      %s378 = scalar_lea.vmem %s5, %s377
      %s379 = smul.u32 28, %s21
      %v381 = vld [vmem:[%s338] sm:$0xf]
      %v382 = vld [vmem:[%s338 + $0x4] sm:$0xf]
      %v383 = vld [vmem:[%s338 + $0x8] sm:$0xf]
      %v384 = vld [vmem:[%s338 + $0xc] sm:$0xf]
      %v385 = vld [vmem:[%s338 + $0x10] sm:$0xf]
      %v386 = vld [vmem:[%s338 + $0x14] sm:$0xf]
      %v387 = vld [vmem:[%s338 + $0x18] sm:$0xf]
      %v388 = vld [vmem:[%s358] sm:$0xf]
      %v389 = vld [vmem:[%s358 + $0x4] sm:$0xf]
      %v390 = vld [vmem:[%s358 + $0x8] sm:$0xf]
      %v391 = vld [vmem:[%s358 + $0xc] sm:$0xf]
      %v392 = vld [vmem:[%s358 + $0x10] sm:$0xf]
      %v393 = vld [vmem:[%s358 + $0x14] sm:$0xf]
      %v394 = vld [vmem:[%s358 + $0x18] sm:$0xf]
      %p395 = scmp.gt.s32.totalorder %s21, 0
      %s396 = scalar_select %p395, 1, 0
      %s397 = scvt.s32.f32 %s396
      %p399 = scmp.ne.f32.partialorder %s397, %s397
      %s400 = sshrl.u32 %s397, 16
      %s401 = sand.u32 %s400, 1
      %s402 = sadd.s32 32767, %s401
      %s403 = sadd.s32 %s397, %s402
      %s404 = sand.u32 %s403, 4294901760
      %s405 = scalar_select %p399, 2143289344, %s404
      %s407 = sshrl.u32 %s405, 16
      %s408 = sshll.u32 %s407, 16
      %s409 = sor.u32 %s407, %s408
      %v410 = vstv %s409
      %v412 = vmul.bf16 %v381, %v410
      %v413 = vmul.bf16 %v382, %v410
      %v414 = vmul.bf16 %v383, %v410
      %v415 = vmul.bf16 %v384, %v410
      %v416 = vmul.bf16 %v385, %v410
      %v417 = vmul.bf16 %v386, %v410
      %v418 = vmul.bf16 %v387, %v410
      %p419 = scmp.lt.s32.totalorder %s21, 1
      %s420 = scalar_select %p419, 1, 0
      %s421 = scvt.s32.f32 %s420
      %p423 = scmp.ne.f32.partialorder %s421, %s421
      %s424 = sshrl.u32 %s421, 16
      %s425 = sand.u32 %s424, 1
      %s426 = sadd.s32 32767, %s425
      %s427 = sadd.s32 %s421, %s426
      %s428 = sand.u32 %s427, 4294901760
      %s429 = scalar_select %p423, 2143289344, %s428
      %s431 = sshrl.u32 %s429, 16
      %s432 = sshll.u32 %s431, 16
      %s433 = sor.u32 %s431, %s432
      %v434 = vstv %s433
      %v436 = vmul.bf16 %v388, %v434
      %v437 = vmul.bf16 %v389, %v434
      %v438 = vmul.bf16 %v390, %v434
      %v439 = vmul.bf16 %v391, %v434
      %v440 = vmul.bf16 %v392, %v434
      %v441 = vmul.bf16 %v393, %v434
      %v442 = vmul.bf16 %v394, %v434
      %v443 = vld [vmem:[%s348] sm:$0xf]
      %v444 = vld [vmem:[%s348 + $0x4] sm:$0xf]
      %v445 = vld [vmem:[%s348 + $0x8] sm:$0xf]
      %v446 = vld [vmem:[%s348 + $0xc] sm:$0xf]
      %v447 = vld [vmem:[%s348 + $0x10] sm:$0xf]
      %v448 = vld [vmem:[%s348 + $0x14] sm:$0xf]
      %v449 = vld [vmem:[%s348 + $0x18] sm:$0xf]
      %v450 = vld [vmem:[%s348 + $0x1c] sm:$0xf]
      %v451 = vld [vmem:[%s348 + $0x20] sm:$0xf]
      %v452 = vld [vmem:[%s348 + $0x24] sm:$0xf]
      %v453 = vld [vmem:[%s348 + $0x28] sm:$0xf]
      %v454 = vld [vmem:[%s348 + $0x2c] sm:$0xf]
      %v455 = vld [vmem:[%s348 + $0x30] sm:$0xf]
      %v456 = vld [vmem:[%s348 + $0x34] sm:$0xf]
      %v457 = vld [vmem:[%s348 + $0x38] sm:$0xf]
      %v458 = vld [vmem:[%s348 + $0x3c] sm:$0xf]
      %v459 = vld [vmem:[%s348 + $0x40] sm:$0xf]
      %v460 = vld [vmem:[%s348 + $0x44] sm:$0xf]
      %v461 = vld [vmem:[%s348 + $0x48] sm:$0xf]
      %v462 = vld [vmem:[%s348 + $0x4c] sm:$0xf]
      %v463 = vld [vmem:[%s348 + $0x50] sm:$0xf]
      %v464 = vld [vmem:[%s348 + $0x54] sm:$0xf]
      %v465 = vld [vmem:[%s348 + $0x58] sm:$0xf]
      %v466 = vld [vmem:[%s348 + $0x5c] sm:$0xf]
      %v467 = vld [vmem:[%s348 + $0x60] sm:$0xf]
      %v468 = vld [vmem:[%s348 + $0x64] sm:$0xf]
      %v469 = vld [vmem:[%s348 + $0x68] sm:$0xf]
      %v470 = vld [vmem:[%s348 + $0x6c] sm:$0xf]
      %v471 = vld [vmem:[%s348 + $0x70] sm:$0xf]
      %v472 = vld [vmem:[%s348 + $0x74] sm:$0xf]
      %v473 = vld [vmem:[%s348 + $0x78] sm:$0xf]
      %v474 = vld [vmem:[%s348 + $0x7c] sm:$0xf]
      %v475 = vld [vmem:[%s348 + $0x80] sm:$0xf]
      %v476 = vld [vmem:[%s348 + $0x84] sm:$0xf]
      %v477 = vld [vmem:[%s348 + $0x88] sm:$0xf]
      %v478 = vld [vmem:[%s348 + $0x8c] sm:$0xf]
      %v479 = vld [vmem:[%s348 + $0x90] sm:$0xf]
      %v480 = vld [vmem:[%s348 + $0x94] sm:$0xf]
      %v481 = vld [vmem:[%s348 + $0x98] sm:$0xf]
      %v482 = vld [vmem:[%s348 + $0x9c] sm:$0xf]
      %v483 = vld [vmem:[%s348 + $0xa0] sm:$0xf]
      %v484 = vld [vmem:[%s348 + $0xa4] sm:$0xf]
      %v485 = vld [vmem:[%s348 + $0xa8] sm:$0xf]
      %v486 = vld [vmem:[%s348 + $0xac] sm:$0xf]
      %v487 = vld [vmem:[%s348 + $0xb0] sm:$0xf]
      %v488 = vld [vmem:[%s348 + $0xb4] sm:$0xf]
      %v489 = vld [vmem:[%s348 + $0xb8] sm:$0xf]
      %v490 = vld [vmem:[%s348 + $0xbc] sm:$0xf]
      %v491 = vld [vmem:[%s348 + $0xc0] sm:$0xf]
      %v492 = vld [vmem:[%s348 + $0xc4] sm:$0xf]
      %v493 = vld [vmem:[%s348 + $0xc8] sm:$0xf]
      %v494 = vld [vmem:[%s348 + $0xcc] sm:$0xf]
      %v495 = vld [vmem:[%s348 + $0xd0] sm:$0xf]
      %v496 = vld [vmem:[%s348 + $0xd4] sm:$0xf]
      %v497 = vld [vmem:[%s348 + $0xd8] sm:$0xf]
      %v498 = vld [vmem:[%s348 + $0xdc] sm:$0xf]
      %v499 = vld [vmem:[%s348 + $0xe0] sm:$0xf]
      %v500 = vld [vmem:[%s348 + $0xe4] sm:$0xf]
      %v501 = vld [vmem:[%s348 + $0xe8] sm:$0xf]
      %v502 = vld [vmem:[%s348 + $0xec] sm:$0xf]
      %v503 = vld [vmem:[%s348 + $0xf0] sm:$0xf]
      %v504 = vld [vmem:[%s348 + $0xf4] sm:$0xf]
      %v505 = vld [vmem:[%s348 + $0xf8] sm:$0xf]
      %v506 = vld [vmem:[%s348 + $0xfc] sm:$0xf]
      %v507 = vld [vmem:[%s348 + $0x100] sm:$0xf]
      %v508 = vld [vmem:[%s348 + $0x104] sm:$0xf]
      %v509 = vld [vmem:[%s348 + $0x108] sm:$0xf]
      %v510 = vld [vmem:[%s348 + $0x10c] sm:$0xf]
      %v511 = vld [vmem:[%s348 + $0x110] sm:$0xf]
      %v512 = vld [vmem:[%s348 + $0x114] sm:$0xf]
      %v513 = vld [vmem:[%s348 + $0x118] sm:$0xf]
      %v514 = vld [vmem:[%s348 + $0x11c] sm:$0xf]
      %v515 = vld [vmem:[%s348 + $0x120] sm:$0xf]
      %v516 = vld [vmem:[%s348 + $0x124] sm:$0xf]
      %v517 = vld [vmem:[%s348 + $0x128] sm:$0xf]
      %v518 = vld [vmem:[%s348 + $0x12c] sm:$0xf]
      %v519 = vld [vmem:[%s348 + $0x130] sm:$0xf]
      %v520 = vld [vmem:[%s348 + $0x134] sm:$0xf]
      %v521 = vld [vmem:[%s348 + $0x138] sm:$0xf]
      %v522 = vld [vmem:[%s348 + $0x13c] sm:$0xf]
      %v523 = vld [vmem:[%s348 + $0x140] sm:$0xf]
      %v524 = vld [vmem:[%s348 + $0x144] sm:$0xf]
      %v525 = vld [vmem:[%s348 + $0x148] sm:$0xf]
      %v526 = vld [vmem:[%s348 + $0x14c] sm:$0xf]
      %v527 = vld [vmem:[%s348 + $0x150] sm:$0xf]
      %v528 = vld [vmem:[%s348 + $0x154] sm:$0xf]
      %v529 = vld [vmem:[%s348 + $0x158] sm:$0xf]
      %v530 = vld [vmem:[%s348 + $0x15c] sm:$0xf]
      %v531 = vld [vmem:[%s348 + $0x160] sm:$0xf]
      %v532 = vld [vmem:[%s348 + $0x164] sm:$0xf]
      %v533 = vld [vmem:[%s348 + $0x168] sm:$0xf]
      %v534 = vld [vmem:[%s348 + $0x16c] sm:$0xf]
      %v535 = vld [vmem:[%s348 + $0x170] sm:$0xf]
      %v536 = vld [vmem:[%s348 + $0x174] sm:$0xf]
      %v537 = vld [vmem:[%s348 + $0x178] sm:$0xf]
      %v538 = vld [vmem:[%s348 + $0x17c] sm:$0xf]
      %v539 = vld [vmem:[%s348 + $0x180] sm:$0xf]
      %v540 = vld [vmem:[%s348 + $0x184] sm:$0xf]
      %v541 = vld [vmem:[%s348 + $0x188] sm:$0xf]
      %v542 = vld [vmem:[%s348 + $0x18c] sm:$0xf]
      %v543 = vld [vmem:[%s348 + $0x190] sm:$0xf]
      %v544 = vld [vmem:[%s348 + $0x194] sm:$0xf]
      %v545 = vld [vmem:[%s348 + $0x198] sm:$0xf]
      %v546 = vld [vmem:[%s348 + $0x19c] sm:$0xf]
      %v547 = vld [vmem:[%s348 + $0x1a0] sm:$0xf]
      %v548 = vld [vmem:[%s348 + $0x1a4] sm:$0xf]
      %v549 = vld [vmem:[%s348 + $0x1a8] sm:$0xf]
      %v550 = vld [vmem:[%s348 + $0x1ac] sm:$0xf]
      %v551 = vld [vmem:[%s348 + $0x1b0] sm:$0xf]
      %v552 = vld [vmem:[%s348 + $0x1b4] sm:$0xf]
      %v553 = vld [vmem:[%s348 + $0x1b8] sm:$0xf]
      %v554 = vld [vmem:[%s348 + $0x1bc] sm:$0xf]
      %v555 = vld [vmem:[%s348 + $0x1c0] sm:$0xf]
      %v556 = vld [vmem:[%s348 + $0x1c4] sm:$0xf]
      %v557 = vld [vmem:[%s348 + $0x1c8] sm:$0xf]
      %v558 = vld [vmem:[%s348 + $0x1cc] sm:$0xf]
      %v559 = vld [vmem:[%s348 + $0x1d0] sm:$0xf]
      %v560 = vld [vmem:[%s348 + $0x1d4] sm:$0xf]
      %v561 = vld [vmem:[%s348 + $0x1d8] sm:$0xf]
      %v562 = vld [vmem:[%s348 + $0x1dc] sm:$0xf]
      %v563 = vld [vmem:[%s348 + $0x1e0] sm:$0xf]
      %v564 = vld [vmem:[%s348 + $0x1e4] sm:$0xf]
      %v565 = vld [vmem:[%s348 + $0x1e8] sm:$0xf]
      %v566 = vld [vmem:[%s348 + $0x1ec] sm:$0xf]
      %v567 = vld [vmem:[%s348 + $0x1f0] sm:$0xf]
      %v568 = vld [vmem:[%s348 + $0x1f4] sm:$0xf]
      %v569 = vld [vmem:[%s348 + $0x1f8] sm:$0xf]
      %v570 = vld [vmem:[%s348 + $0x1fc] sm:$0xf]
      %v571 = vld [vmem:[%s348 + $0x200] sm:$0xf]
      %v572 = vld [vmem:[%s348 + $0x204] sm:$0xf]
      %v573 = vld [vmem:[%s348 + $0x208] sm:$0xf]
      %v574 = vld [vmem:[%s348 + $0x20c] sm:$0xf]
      %v575 = vld [vmem:[%s348 + $0x210] sm:$0xf]
      %v576 = vld [vmem:[%s348 + $0x214] sm:$0xf]
      %v577 = vld [vmem:[%s348 + $0x218] sm:$0xf]
      %v578 = vld [vmem:[%s348 + $0x21c] sm:$0xf]
      %v579 = vld [vmem:[%s348 + $0x220] sm:$0xf]
      %v580 = vld [vmem:[%s348 + $0x224] sm:$0xf]
      %v581 = vld [vmem:[%s348 + $0x228] sm:$0xf]
      %v582 = vld [vmem:[%s348 + $0x22c] sm:$0xf]
      %v583 = vld [vmem:[%s348 + $0x230] sm:$0xf]
      %v584 = vld [vmem:[%s348 + $0x234] sm:$0xf]
      %v585 = vld [vmem:[%s348 + $0x238] sm:$0xf]
      %v586 = vld [vmem:[%s348 + $0x23c] sm:$0xf]
      %v587 = vld [vmem:[%s348 + $0x240] sm:$0xf]
      %v588 = vld [vmem:[%s348 + $0x244] sm:$0xf]
      %v589 = vld [vmem:[%s348 + $0x248] sm:$0xf]
      %v590 = vld [vmem:[%s348 + $0x24c] sm:$0xf]
      %v591 = vld [vmem:[%s348 + $0x250] sm:$0xf]
      %v592 = vld [vmem:[%s348 + $0x254] sm:$0xf]
      %v593 = vld [vmem:[%s348 + $0x258] sm:$0xf]
      %v594 = vld [vmem:[%s348 + $0x25c] sm:$0xf]
      %v595 = vld [vmem:[%s348 + $0x260] sm:$0xf]
      %v596 = vld [vmem:[%s348 + $0x264] sm:$0xf]
      %v597 = vld [vmem:[%s348 + $0x268] sm:$0xf]
      %v598 = vld [vmem:[%s348 + $0x26c] sm:$0xf]
      %v599 = vld [vmem:[%s348 + $0x270] sm:$0xf]
      %v600 = vld [vmem:[%s348 + $0x274] sm:$0xf]
      %v601 = vld [vmem:[%s348 + $0x278] sm:$0xf]
      %v602 = vld [vmem:[%s348 + $0x27c] sm:$0xf]
      %v603 = vld [vmem:[%s348 + $0x280] sm:$0xf]
      %v604 = vld [vmem:[%s348 + $0x284] sm:$0xf]
      %v605 = vld [vmem:[%s348 + $0x288] sm:$0xf]
      %v606 = vld [vmem:[%s348 + $0x28c] sm:$0xf]
      %v607 = vld [vmem:[%s348 + $0x290] sm:$0xf]
      %v608 = vld [vmem:[%s348 + $0x294] sm:$0xf]
      %v609 = vld [vmem:[%s348 + $0x298] sm:$0xf]
      %v610 = vld [vmem:[%s348 + $0x29c] sm:$0xf]
      %v611 = vld [vmem:[%s348 + $0x2a0] sm:$0xf]
      %v612 = vld [vmem:[%s348 + $0x2a4] sm:$0xf]
      %v613 = vld [vmem:[%s348 + $0x2a8] sm:$0xf]
      %v614 = vld [vmem:[%s348 + $0x2ac] sm:$0xf]
      %v615 = vld [vmem:[%s348 + $0x2b0] sm:$0xf]
      %v616 = vld [vmem:[%s348 + $0x2b4] sm:$0xf]
      %v617 = vld [vmem:[%s348 + $0x2b8] sm:$0xf]
      %v618 = vld [vmem:[%s348 + $0x2bc] sm:$0xf]
      %v619 = vld [vmem:[%s348 + $0x2c0] sm:$0xf]
      %v620 = vld [vmem:[%s348 + $0x2c4] sm:$0xf]
      %v621 = vld [vmem:[%s348 + $0x2c8] sm:$0xf]
      %v622 = vld [vmem:[%s348 + $0x2cc] sm:$0xf]
      %v623 = vld [vmem:[%s348 + $0x2d0] sm:$0xf]
      %v624 = vld [vmem:[%s348 + $0x2d4] sm:$0xf]
      %v625 = vld [vmem:[%s348 + $0x2d8] sm:$0xf]
      %v626 = vld [vmem:[%s348 + $0x2dc] sm:$0xf]
      %v627 = vld [vmem:[%s348 + $0x2e0] sm:$0xf]
      %v628 = vld [vmem:[%s348 + $0x2e4] sm:$0xf]
      %v629 = vld [vmem:[%s348 + $0x2e8] sm:$0xf]
      %v630 = vld [vmem:[%s348 + $0x2ec] sm:$0xf]
      %v631 = vld [vmem:[%s348 + $0x2f0] sm:$0xf]
      %v632 = vld [vmem:[%s348 + $0x2f4] sm:$0xf]
      %v633 = vld [vmem:[%s348 + $0x2f8] sm:$0xf]
      %v634 = vld [vmem:[%s348 + $0x2fc] sm:$0xf]
      %v635 = vld [vmem:[%s348 + $0x300] sm:$0xf]
      %v636 = vld [vmem:[%s348 + $0x304] sm:$0xf]
      %v637 = vld [vmem:[%s348 + $0x308] sm:$0xf]
      %v638 = vld [vmem:[%s348 + $0x30c] sm:$0xf]
      %v849 = vunpack.c.l.b16 %v412
      %v850 = vunpack.c.l.b16 %v413
      %v851 = vunpack.c.l.b16 %v414
      %v852 = vunpack.c.l.b16 %v415
      %v853 = vunpack.c.l.b16 %v416
      %v854 = vunpack.c.l.b16 %v417
      %v855 = vunpack.c.l.b16 %v418
      %v856 = vunpack.c.l.b16 %v443
      %v857 = vunpack.c.l.b16 %v444
      %v858 = vunpack.c.l.b16 %v445
      %v859 = vunpack.c.l.b16 %v446
      %v860 = vunpack.c.l.b16 %v447
      %v861 = vunpack.c.l.b16 %v448
      %v862 = vunpack.c.l.b16 %v449
      %v863 = vunpack.c.l.b16 %v450
      %v864 = vunpack.c.l.b16 %v451
      %v865 = vunpack.c.l.b16 %v452
      %v866 = vunpack.c.l.b16 %v453
      %v867 = vunpack.c.l.b16 %v454
      %v868 = vunpack.c.l.b16 %v455
      %v869 = vunpack.c.l.b16 %v456
      %v870 = vunpack.c.l.b16 %v457
      %v871 = vunpack.c.l.b16 %v458
      %v872 = vunpack.c.l.b16 %v459
      %v873 = vunpack.c.l.b16 %v460
      %v874 = vunpack.c.l.b16 %v461
      %v875 = vunpack.c.l.b16 %v462
      %v876 = vunpack.c.l.b16 %v463
      %v877 = vunpack.c.l.b16 %v464
      %v878 = vunpack.c.l.b16 %v465
      %v879 = vunpack.c.l.b16 %v466
      %v880 = vunpack.c.l.b16 %v467
      %v881 = vunpack.c.l.b16 %v468
      %v882 = vunpack.c.l.b16 %v469
      %v883 = vunpack.c.l.b16 %v470
      %v884 = vunpack.c.l.b16 %v471
      %v885 = vunpack.c.l.b16 %v472
      %v886 = vunpack.c.l.b16 %v473
      %v887 = vunpack.c.l.b16 %v474
      %v888 = vunpack.c.l.b16 %v475
      %v889 = vunpack.c.l.b16 %v476
      %v890 = vunpack.c.l.b16 %v477
      %v891 = vunpack.c.l.b16 %v478
      %v892 = vunpack.c.l.b16 %v479
      %v893 = vunpack.c.l.b16 %v480
      %v894 = vunpack.c.l.b16 %v481
      %v895 = vunpack.c.l.b16 %v482
      %v896 = vunpack.c.l.b16 %v483
      %v897 = vunpack.c.l.b16 %v484
      %v898 = vunpack.c.l.b16 %v485
      %v899 = vunpack.c.l.b16 %v486
      %v900 = vunpack.c.l.b16 %v487
      %v901 = vunpack.c.l.b16 %v488
      %v902 = vunpack.c.l.b16 %v489
      %v903 = vunpack.c.l.b16 %v490
      %v904 = vunpack.c.l.b16 %v491
      %v905 = vunpack.c.l.b16 %v492
      %v906 = vunpack.c.l.b16 %v493
      %v907 = vunpack.c.l.b16 %v494
      %v908 = vunpack.c.l.b16 %v495
      %v909 = vunpack.c.l.b16 %v496
      %v910 = vunpack.c.l.b16 %v497
      %v911 = vunpack.c.l.b16 %v498
      %v912 = vunpack.c.l.b16 %v499
      %v913 = vunpack.c.l.b16 %v500
      %v914 = vunpack.c.l.b16 %v501
      %v915 = vunpack.c.l.b16 %v502
      %v916 = vunpack.c.l.b16 %v503
      %v917 = vunpack.c.l.b16 %v504
      %v918 = vunpack.c.l.b16 %v505
      %v919 = vunpack.c.l.b16 %v506
      %v920 = vunpack.c.l.b16 %v507
      %v921 = vunpack.c.l.b16 %v508
      %v922 = vunpack.c.l.b16 %v509
      %v923 = vunpack.c.l.b16 %v510
      %v924 = vunpack.c.l.b16 %v511
      %v925 = vunpack.c.l.b16 %v512
      %v926 = vunpack.c.l.b16 %v513
      %v927 = vunpack.c.l.b16 %v514
      %v928 = vunpack.c.l.b16 %v515
      %v929 = vunpack.c.l.b16 %v516
      %v930 = vunpack.c.l.b16 %v517
      %v931 = vunpack.c.l.b16 %v518
      %v932 = vunpack.c.l.b16 %v519
      %v933 = vunpack.c.l.b16 %v520
      %v934 = vunpack.c.l.b16 %v521
      %v935 = vunpack.c.l.b16 %v522
      %v936 = vunpack.c.l.b16 %v523
      %v937 = vunpack.c.l.b16 %v524
      %v938 = vunpack.c.l.b16 %v525
      %v939 = vunpack.c.l.b16 %v526
      %v940 = vunpack.c.l.b16 %v527
      %v941 = vunpack.c.l.b16 %v528
      %v942 = vunpack.c.l.b16 %v529
      %v943 = vunpack.c.l.b16 %v530
      %v944 = vunpack.c.l.b16 %v531
      %v945 = vunpack.c.l.b16 %v532
      %v946 = vunpack.c.l.b16 %v533
      %v947 = vunpack.c.l.b16 %v534
      %v948 = vunpack.c.l.b16 %v535
      %v949 = vunpack.c.l.b16 %v536
      %v950 = vunpack.c.l.b16 %v537
      %v951 = vunpack.c.l.b16 %v538
      %v952 = vunpack.c.l.b16 %v539
      %v953 = vunpack.c.l.b16 %v540
      %v954 = vunpack.c.l.b16 %v541
      %v955 = vunpack.c.l.b16 %v542
      %v956 = vunpack.c.l.b16 %v543
      %v957 = vunpack.c.l.b16 %v544
      %v958 = vunpack.c.l.b16 %v545
      %v959 = vunpack.c.l.b16 %v546
      %v960 = vunpack.c.l.b16 %v547
      %v961 = vunpack.c.l.b16 %v548
      %v962 = vunpack.c.l.b16 %v549
      %v963 = vunpack.c.l.b16 %v550
      %v964 = vunpack.c.l.b16 %v551
      %v965 = vunpack.c.l.b16 %v552
      %v966 = vunpack.c.l.b16 %v553
      %v967 = vunpack.c.l.b16 %v554
      %v968 = vunpack.c.l.b16 %v555
      %v969 = vunpack.c.l.b16 %v556
      %v970 = vunpack.c.l.b16 %v557
      %v971 = vunpack.c.l.b16 %v558
      %v972 = vunpack.c.l.b16 %v559
      %v973 = vunpack.c.l.b16 %v560
      %v974 = vunpack.c.l.b16 %v561
      %v975 = vunpack.c.l.b16 %v562
      %v976 = vunpack.c.l.b16 %v563
      %v977 = vunpack.c.l.b16 %v564
      %v978 = vunpack.c.l.b16 %v565
      %v979 = vunpack.c.l.b16 %v566
      %v980 = vunpack.c.l.b16 %v567
      %v981 = vunpack.c.l.b16 %v568
      %v982 = vunpack.c.l.b16 %v569
      %v983 = vunpack.c.l.b16 %v570
      %v984 = vunpack.c.l.b16 %v571
      %v985 = vunpack.c.l.b16 %v572
      %v986 = vunpack.c.l.b16 %v573
      %v987 = vunpack.c.l.b16 %v574
      %v988 = vunpack.c.l.b16 %v575
      %v989 = vunpack.c.l.b16 %v576
      %v990 = vunpack.c.l.b16 %v577
      %v991 = vunpack.c.l.b16 %v578
      %v992 = vunpack.c.l.b16 %v579
      %v993 = vunpack.c.l.b16 %v580
      %v994 = vunpack.c.l.b16 %v581
      %v995 = vunpack.c.l.b16 %v582
      %v996 = vunpack.c.l.b16 %v583
      %v997 = vunpack.c.l.b16 %v584
      %v998 = vunpack.c.l.b16 %v585
      %v999 = vunpack.c.l.b16 %v586
      %v1000 = vunpack.c.l.b16 %v587
      %v1001 = vunpack.c.l.b16 %v588
      %v1002 = vunpack.c.l.b16 %v589
      %v1003 = vunpack.c.l.b16 %v590
      %v1004 = vunpack.c.l.b16 %v591
      %v1005 = vunpack.c.l.b16 %v592
      %v1006 = vunpack.c.l.b16 %v593
      %v1007 = vunpack.c.l.b16 %v594
      %v1008 = vunpack.c.l.b16 %v595
      %v1009 = vunpack.c.l.b16 %v596
      %v1010 = vunpack.c.l.b16 %v597
      %v1011 = vunpack.c.l.b16 %v598
      %v1012 = vunpack.c.l.b16 %v599
      %v1013 = vunpack.c.l.b16 %v600
      %v1014 = vunpack.c.l.b16 %v601
      %v1015 = vunpack.c.l.b16 %v602
      %v1016 = vunpack.c.l.b16 %v603
      %v1017 = vunpack.c.l.b16 %v604
      %v1018 = vunpack.c.l.b16 %v605
      %v1019 = vunpack.c.l.b16 %v606
      %v1020 = vunpack.c.l.b16 %v607
      %v1021 = vunpack.c.l.b16 %v608
      %v1022 = vunpack.c.l.b16 %v609
      %v1023 = vunpack.c.l.b16 %v610
      %v1024 = vunpack.c.l.b16 %v611
      %v1025 = vunpack.c.l.b16 %v612
      %v1026 = vunpack.c.l.b16 %v613
      %v1027 = vunpack.c.l.b16 %v614
      %v1028 = vunpack.c.l.b16 %v615
      %v1029 = vunpack.c.l.b16 %v616
      %v1030 = vunpack.c.l.b16 %v617
      %v1031 = vunpack.c.l.b16 %v618
      %v1032 = vunpack.c.l.b16 %v619
      %v1033 = vunpack.c.l.b16 %v620
      %v1034 = vunpack.c.l.b16 %v621
      %v1035 = vunpack.c.l.b16 %v622
      %v1036 = vunpack.c.l.b16 %v623
      %v1037 = vunpack.c.l.b16 %v624
      %v1038 = vunpack.c.l.b16 %v625
      %v1039 = vunpack.c.l.b16 %v626
      %v1040 = vunpack.c.l.b16 %v627
      %v1041 = vunpack.c.l.b16 %v628
      %v1042 = vunpack.c.l.b16 %v629
      %v1043 = vunpack.c.l.b16 %v630
      %v1044 = vunpack.c.l.b16 %v631
      %v1045 = vunpack.c.l.b16 %v632
      %v1046 = vunpack.c.l.b16 %v633
      %v1047 = vunpack.c.l.b16 %v634
      %v1048 = vunpack.c.l.b16 %v635
      %v1049 = vunpack.c.l.b16 %v636
      %v1050 = vunpack.c.l.b16 %v637
      %v1051 = vunpack.c.l.b16 %v638
      %v1052 = vunpack.c.l.b16 %v436
      %v1053 = vunpack.c.l.b16 %v437
      %v1054 = vunpack.c.l.b16 %v438
      %v1055 = vunpack.c.l.b16 %v439
      %v1056 = vunpack.c.l.b16 %v440
      %v1057 = vunpack.c.l.b16 %v441
      %v1058 = vunpack.c.l.b16 %v442
      %v1059 = vpack.c.b16 %v850, %v849
      %v1060 = vpack.c.b16 %v852, %v851
      %v1061 = vpack.c.b16 %v854, %v853
      %v1062 = vpack.c.b16 %v855, %v855
      %v1063 = vpack.c.b16 %v857, %v856
      %v1064 = vpack.c.b16 %v859, %v858
      %v1065 = vpack.c.b16 %v861, %v860
      %v1066 = vpack.c.b16 %v862, %v862
      %v1067 = vpack.c.b16 %v864, %v863
      %v1068 = vpack.c.b16 %v866, %v865
      %v1069 = vpack.c.b16 %v868, %v867
      %v1070 = vpack.c.b16 %v869, %v869
      %v1071 = vpack.c.b16 %v871, %v870
      %v1072 = vpack.c.b16 %v873, %v872
      %v1073 = vpack.c.b16 %v875, %v874
      %v1074 = vpack.c.b16 %v876, %v876
      %v1075 = vpack.c.b16 %v878, %v877
      %v1076 = vpack.c.b16 %v880, %v879
      %v1077 = vpack.c.b16 %v882, %v881
      %v1078 = vpack.c.b16 %v883, %v883
      %v1079 = vpack.c.b16 %v885, %v884
      %v1080 = vpack.c.b16 %v887, %v886
      %v1081 = vpack.c.b16 %v889, %v888
      %v1082 = vpack.c.b16 %v890, %v890
      %v1083 = vpack.c.b16 %v892, %v891
      %v1084 = vpack.c.b16 %v894, %v893
      %v1085 = vpack.c.b16 %v896, %v895
      %v1086 = vpack.c.b16 %v897, %v897
      %v1087 = vpack.c.b16 %v899, %v898
      %v1088 = vpack.c.b16 %v901, %v900
      %v1089 = vpack.c.b16 %v903, %v902
      %v1090 = vpack.c.b16 %v904, %v904
      %v1091 = vpack.c.b16 %v906, %v905
      %v1092 = vpack.c.b16 %v908, %v907
      %v1093 = vpack.c.b16 %v910, %v909
      %v1094 = vpack.c.b16 %v911, %v911
      %v1095 = vpack.c.b16 %v913, %v912
      %v1096 = vpack.c.b16 %v915, %v914
      %v1097 = vpack.c.b16 %v917, %v916
      %v1098 = vpack.c.b16 %v918, %v918
      %v1099 = vpack.c.b16 %v920, %v919
      %v1100 = vpack.c.b16 %v922, %v921
      %v1101 = vpack.c.b16 %v924, %v923
      %v1102 = vpack.c.b16 %v925, %v925
      %v1103 = vpack.c.b16 %v927, %v926
      %v1104 = vpack.c.b16 %v929, %v928
      %v1105 = vpack.c.b16 %v931, %v930
      %v1106 = vpack.c.b16 %v932, %v932
      %v1107 = vpack.c.b16 %v934, %v933
      %v1108 = vpack.c.b16 %v936, %v935
      %v1109 = vpack.c.b16 %v938, %v937
      %v1110 = vpack.c.b16 %v939, %v939
      %v1111 = vpack.c.b16 %v941, %v940
      %v1112 = vpack.c.b16 %v943, %v942
      %v1113 = vpack.c.b16 %v945, %v944
      %v1114 = vpack.c.b16 %v946, %v946
      %v1115 = vpack.c.b16 %v948, %v947
      %v1116 = vpack.c.b16 %v950, %v949
      %v1117 = vpack.c.b16 %v952, %v951
      %v1118 = vpack.c.b16 %v953, %v953
      %v1119 = vpack.c.b16 %v955, %v954
      %v1120 = vpack.c.b16 %v957, %v956
      %v1121 = vpack.c.b16 %v959, %v958
      %v1122 = vpack.c.b16 %v960, %v960
      %v1123 = vpack.c.b16 %v962, %v961
      %v1124 = vpack.c.b16 %v964, %v963
      %v1125 = vpack.c.b16 %v966, %v965
      %v1126 = vpack.c.b16 %v967, %v967
      %v1127 = vpack.c.b16 %v969, %v968
      %v1128 = vpack.c.b16 %v971, %v970
      %v1129 = vpack.c.b16 %v973, %v972
      %v1130 = vpack.c.b16 %v974, %v974
      %v1131 = vpack.c.b16 %v976, %v975
      %v1132 = vpack.c.b16 %v978, %v977
      %v1133 = vpack.c.b16 %v980, %v979
      %v1134 = vpack.c.b16 %v981, %v981
      %v1135 = vpack.c.b16 %v983, %v982
      %v1136 = vpack.c.b16 %v985, %v984
      %v1137 = vpack.c.b16 %v987, %v986
      %v1138 = vpack.c.b16 %v988, %v988
      %v1139 = vpack.c.b16 %v990, %v989
      %v1140 = vpack.c.b16 %v992, %v991
      %v1141 = vpack.c.b16 %v994, %v993
      %v1142 = vpack.c.b16 %v995, %v995
      %v1143 = vpack.c.b16 %v997, %v996
      %v1144 = vpack.c.b16 %v999, %v998
      %v1145 = vpack.c.b16 %v1001, %v1000
      %v1146 = vpack.c.b16 %v1002, %v1002
      %v1147 = vpack.c.b16 %v1004, %v1003
      %v1148 = vpack.c.b16 %v1006, %v1005
      %v1149 = vpack.c.b16 %v1008, %v1007
      %v1150 = vpack.c.b16 %v1009, %v1009
      %v1151 = vpack.c.b16 %v1011, %v1010
      %v1152 = vpack.c.b16 %v1013, %v1012
      %v1153 = vpack.c.b16 %v1015, %v1014
      %v1154 = vpack.c.b16 %v1016, %v1016
      %v1155 = vpack.c.b16 %v1018, %v1017
      %v1156 = vpack.c.b16 %v1020, %v1019
      %v1157 = vpack.c.b16 %v1022, %v1021
      %v1158 = vpack.c.b16 %v1023, %v1023
      %v1159 = vpack.c.b16 %v1025, %v1024
      %v1160 = vpack.c.b16 %v1027, %v1026
      %v1161 = vpack.c.b16 %v1029, %v1028
      %v1162 = vpack.c.b16 %v1030, %v1030
      %v1163 = vpack.c.b16 %v1032, %v1031
      %v1164 = vpack.c.b16 %v1034, %v1033
      %v1165 = vpack.c.b16 %v1036, %v1035
      %v1166 = vpack.c.b16 %v1037, %v1037
      %v1167 = vpack.c.b16 %v1039, %v1038
      %v1168 = vpack.c.b16 %v1041, %v1040
      %v1169 = vpack.c.b16 %v1043, %v1042
      %v1170 = vpack.c.b16 %v1044, %v1044
      %v1171 = vpack.c.b16 %v1046, %v1045
      %v1172 = vpack.c.b16 %v1048, %v1047
      %v1173 = vpack.c.b16 %v1050, %v1049
      %v1174 = vpack.c.b16 %v1051, %v1051
      %v1175 = vpack.c.b16 %v1053, %v1052
      %v1176 = vpack.c.b16 %v1055, %v1054
      %v1177 = vpack.c.b16 %v1057, %v1056
      %v1178 = vpack.c.b16 %v1058, %v1058
      %vm1179 = vsmask.f32 256
      %v1181 = vshrl.u32 %v1059, 16
      %v1183 = vrot.slane %v1181, 7
      %v1184 = vshll.u32 %v1059, 16
      %v1186 = vor.u32 %v1183, %v1184
      %v1188 = vshrl.u32 %v1060, 16
      %v1190 = vrot.slane %v1188, 7
      %v1191 = vshll.u32 %v1060, 16
      %v1193 = vor.u32 %v1190, %v1191
      %v1194 = vsel %vm1179, %v1183, %v1193
      %v1196 = vshrl.u32 %v1061, 16
      %v1198 = vrot.slane %v1196, 7
      %v1199 = vshll.u32 %v1061, 16
      %v1201 = vor.u32 %v1198, %v1199
      %v1202 = vsel %vm1179, %v1190, %v1201
      %v1204 = vshrl.u32 %v1062, 16
      %v1206 = vrot.slane %v1204, 7
      %v1207 = vshll.u32 %v1062, 16
      %v1209 = vor.u32 %v1206, %v1207
      %v1210 = vsel %vm1179, %v1198, %v1209
      %v1212 = vshrl.u32 %v1063, 16
      %v1214 = vrot.slane %v1212, 7
      %v1215 = vshll.u32 %v1063, 16
      %v1217 = vor.u32 %v1214, %v1215
      %v1219 = vshrl.u32 %v1064, 16
      %v1221 = vrot.slane %v1219, 7
      %v1222 = vshll.u32 %v1064, 16
      %v1224 = vor.u32 %v1221, %v1222
      %v1225 = vsel %vm1179, %v1214, %v1224
      %v1227 = vshrl.u32 %v1065, 16
      %v1229 = vrot.slane %v1227, 7
      %v1230 = vshll.u32 %v1065, 16
      %v1232 = vor.u32 %v1229, %v1230
      %v1233 = vsel %vm1179, %v1221, %v1232
      %v1235 = vshrl.u32 %v1066, 16
      %v1237 = vrot.slane %v1235, 7
      %v1238 = vshll.u32 %v1066, 16
      %v1240 = vor.u32 %v1237, %v1238
      %v1241 = vsel %vm1179, %v1229, %v1240
      %v1243 = vshrl.u32 %v1067, 16
      %v1245 = vrot.slane %v1243, 7
      %v1246 = vshll.u32 %v1067, 16
      %v1248 = vor.u32 %v1245, %v1246
      %v1250 = vshrl.u32 %v1068, 16
      %v1252 = vrot.slane %v1250, 7
      %v1253 = vshll.u32 %v1068, 16
      %v1255 = vor.u32 %v1252, %v1253
      %v1256 = vsel %vm1179, %v1245, %v1255
      %v1258 = vshrl.u32 %v1069, 16
      %v1260 = vrot.slane %v1258, 7
      %v1261 = vshll.u32 %v1069, 16
      %v1263 = vor.u32 %v1260, %v1261
      %v1264 = vsel %vm1179, %v1252, %v1263
      %v1266 = vshrl.u32 %v1070, 16
      %v1268 = vrot.slane %v1266, 7
      %v1269 = vshll.u32 %v1070, 16
      %v1271 = vor.u32 %v1268, %v1269
      %v1272 = vsel %vm1179, %v1260, %v1271
      %v1274 = vshrl.u32 %v1071, 16
      %v1276 = vrot.slane %v1274, 7
      %v1277 = vshll.u32 %v1071, 16
      %v1279 = vor.u32 %v1276, %v1277
      %v1281 = vshrl.u32 %v1072, 16
      %v1283 = vrot.slane %v1281, 7
      %v1284 = vshll.u32 %v1072, 16
      %v1286 = vor.u32 %v1283, %v1284
      %v1287 = vsel %vm1179, %v1276, %v1286
      %v1289 = vshrl.u32 %v1073, 16
      %v1291 = vrot.slane %v1289, 7
      %v1292 = vshll.u32 %v1073, 16
      %v1294 = vor.u32 %v1291, %v1292
      %v1295 = vsel %vm1179, %v1283, %v1294
      %v1297 = vshrl.u32 %v1074, 16
      %v1299 = vrot.slane %v1297, 7
      %v1300 = vshll.u32 %v1074, 16
      %v1302 = vor.u32 %v1299, %v1300
      %v1303 = vsel %vm1179, %v1291, %v1302
      %v1305 = vshrl.u32 %v1075, 16
      %v1307 = vrot.slane %v1305, 7
      %v1308 = vshll.u32 %v1075, 16
      %v1310 = vor.u32 %v1307, %v1308
      %v1312 = vshrl.u32 %v1076, 16
      %v1314 = vrot.slane %v1312, 7
      %v1315 = vshll.u32 %v1076, 16
      %v1317 = vor.u32 %v1314, %v1315
      %v1318 = vsel %vm1179, %v1307, %v1317
      %v1320 = vshrl.u32 %v1077, 16
      %v1322 = vrot.slane %v1320, 7
      %v1323 = vshll.u32 %v1077, 16
      %v1325 = vor.u32 %v1322, %v1323
      %v1326 = vsel %vm1179, %v1314, %v1325
      %v1328 = vshrl.u32 %v1078, 16
      %v1330 = vrot.slane %v1328, 7
      %v1331 = vshll.u32 %v1078, 16
      %v1333 = vor.u32 %v1330, %v1331
      %v1334 = vsel %vm1179, %v1322, %v1333
      %v1336 = vshrl.u32 %v1079, 16
      %v1338 = vrot.slane %v1336, 7
      %v1339 = vshll.u32 %v1079, 16
      %v1341 = vor.u32 %v1338, %v1339
      %v1343 = vshrl.u32 %v1080, 16
      %v1345 = vrot.slane %v1343, 7
      %v1346 = vshll.u32 %v1080, 16
      %v1348 = vor.u32 %v1345, %v1346
      %v1349 = vsel %vm1179, %v1338, %v1348
      %v1351 = vshrl.u32 %v1081, 16
      %v1353 = vrot.slane %v1351, 7
      %v1354 = vshll.u32 %v1081, 16
      %v1356 = vor.u32 %v1353, %v1354
      %v1357 = vsel %vm1179, %v1345, %v1356
      %v1359 = vshrl.u32 %v1082, 16
      %v1361 = vrot.slane %v1359, 7
      %v1362 = vshll.u32 %v1082, 16
      %v1364 = vor.u32 %v1361, %v1362
      %v1365 = vsel %vm1179, %v1353, %v1364
      %v1367 = vshrl.u32 %v1083, 16
      %v1369 = vrot.slane %v1367, 7
      %v1370 = vshll.u32 %v1083, 16
      %v1372 = vor.u32 %v1369, %v1370
      %v1374 = vshrl.u32 %v1084, 16
      %v1376 = vrot.slane %v1374, 7
      %v1377 = vshll.u32 %v1084, 16
      %v1379 = vor.u32 %v1376, %v1377
      %v1380 = vsel %vm1179, %v1369, %v1379
      %v1382 = vshrl.u32 %v1085, 16
      %v1384 = vrot.slane %v1382, 7
      %v1385 = vshll.u32 %v1085, 16
      %v1387 = vor.u32 %v1384, %v1385
      %v1388 = vsel %vm1179, %v1376, %v1387
      %v1390 = vshrl.u32 %v1086, 16
      %v1392 = vrot.slane %v1390, 7
      %v1393 = vshll.u32 %v1086, 16
      %v1395 = vor.u32 %v1392, %v1393
      %v1396 = vsel %vm1179, %v1384, %v1395
      %v1398 = vshrl.u32 %v1087, 16
      %v1400 = vrot.slane %v1398, 7
      %v1401 = vshll.u32 %v1087, 16
      %v1403 = vor.u32 %v1400, %v1401
      %v1405 = vshrl.u32 %v1088, 16
      %v1407 = vrot.slane %v1405, 7
      %v1408 = vshll.u32 %v1088, 16
      %v1410 = vor.u32 %v1407, %v1408
      %v1411 = vsel %vm1179, %v1400, %v1410
      %v1413 = vshrl.u32 %v1089, 16
      %v1415 = vrot.slane %v1413, 7
      %v1416 = vshll.u32 %v1089, 16
      %v1418 = vor.u32 %v1415, %v1416
      %v1419 = vsel %vm1179, %v1407, %v1418
      %v1421 = vshrl.u32 %v1090, 16
      %v1423 = vrot.slane %v1421, 7
      %v1424 = vshll.u32 %v1090, 16
      %v1426 = vor.u32 %v1423, %v1424
      %v1427 = vsel %vm1179, %v1415, %v1426
      %v1429 = vshrl.u32 %v1091, 16
      %v1431 = vrot.slane %v1429, 7
      %v1432 = vshll.u32 %v1091, 16
      %v1434 = vor.u32 %v1431, %v1432
      %v1436 = vshrl.u32 %v1092, 16
      %v1438 = vrot.slane %v1436, 7
      %v1439 = vshll.u32 %v1092, 16
      %v1441 = vor.u32 %v1438, %v1439
      %v1442 = vsel %vm1179, %v1431, %v1441
      %v1444 = vshrl.u32 %v1093, 16
      %v1446 = vrot.slane %v1444, 7
      %v1447 = vshll.u32 %v1093, 16
      %v1449 = vor.u32 %v1446, %v1447
      %v1450 = vsel %vm1179, %v1438, %v1449
      %v1452 = vshrl.u32 %v1094, 16
      %v1454 = vrot.slane %v1452, 7
      %v1455 = vshll.u32 %v1094, 16
      %v1457 = vor.u32 %v1454, %v1455
      %v1458 = vsel %vm1179, %v1446, %v1457
      %v1460 = vshrl.u32 %v1095, 16
      %v1462 = vrot.slane %v1460, 7
      %v1463 = vshll.u32 %v1095, 16
      %v1465 = vor.u32 %v1462, %v1463
      %v1467 = vshrl.u32 %v1096, 16
      %v1469 = vrot.slane %v1467, 7
      %v1470 = vshll.u32 %v1096, 16
      %v1472 = vor.u32 %v1469, %v1470
      %v1473 = vsel %vm1179, %v1462, %v1472
      %v1475 = vshrl.u32 %v1097, 16
      %v1477 = vrot.slane %v1475, 7
      %v1478 = vshll.u32 %v1097, 16
      %v1480 = vor.u32 %v1477, %v1478
      %v1481 = vsel %vm1179, %v1469, %v1480
      %v1483 = vshrl.u32 %v1098, 16
      %v1485 = vrot.slane %v1483, 7
      %v1486 = vshll.u32 %v1098, 16
      %v1488 = vor.u32 %v1485, %v1486
      %v1489 = vsel %vm1179, %v1477, %v1488
      %v1491 = vshrl.u32 %v1099, 16
      %v1493 = vrot.slane %v1491, 7
      %v1494 = vshll.u32 %v1099, 16
      %v1496 = vor.u32 %v1493, %v1494
      %v1498 = vshrl.u32 %v1100, 16
      %v1500 = vrot.slane %v1498, 7
      %v1501 = vshll.u32 %v1100, 16
      %v1503 = vor.u32 %v1500, %v1501
      %v1504 = vsel %vm1179, %v1493, %v1503
      %v1506 = vshrl.u32 %v1101, 16
      %v1508 = vrot.slane %v1506, 7
      %v1509 = vshll.u32 %v1101, 16
      %v1511 = vor.u32 %v1508, %v1509
      %v1512 = vsel %vm1179, %v1500, %v1511
      %v1514 = vshrl.u32 %v1102, 16
      %v1516 = vrot.slane %v1514, 7
      %v1517 = vshll.u32 %v1102, 16
      %v1519 = vor.u32 %v1516, %v1517
      %v1520 = vsel %vm1179, %v1508, %v1519
      %v1522 = vshrl.u32 %v1103, 16
      %v1524 = vrot.slane %v1522, 7
      %v1525 = vshll.u32 %v1103, 16
      %v1527 = vor.u32 %v1524, %v1525
      %v1529 = vshrl.u32 %v1104, 16
      %v1531 = vrot.slane %v1529, 7
      %v1532 = vshll.u32 %v1104, 16
      %v1534 = vor.u32 %v1531, %v1532
      %v1535 = vsel %vm1179, %v1524, %v1534
      %v1537 = vshrl.u32 %v1105, 16
      %v1539 = vrot.slane %v1537, 7
      %v1540 = vshll.u32 %v1105, 16
      %v1542 = vor.u32 %v1539, %v1540
      %v1543 = vsel %vm1179, %v1531, %v1542
      %v1545 = vshrl.u32 %v1106, 16
      %v1547 = vrot.slane %v1545, 7
      %v1548 = vshll.u32 %v1106, 16
      %v1550 = vor.u32 %v1547, %v1548
      %v1551 = vsel %vm1179, %v1539, %v1550
      %v1553 = vshrl.u32 %v1107, 16
      %v1555 = vrot.slane %v1553, 7
      %v1556 = vshll.u32 %v1107, 16
      %v1558 = vor.u32 %v1555, %v1556
      %v1560 = vshrl.u32 %v1108, 16
      %v1562 = vrot.slane %v1560, 7
      %v1563 = vshll.u32 %v1108, 16
      %v1565 = vor.u32 %v1562, %v1563
      %v1566 = vsel %vm1179, %v1555, %v1565
      %v1568 = vshrl.u32 %v1109, 16
      %v1570 = vrot.slane %v1568, 7
      %v1571 = vshll.u32 %v1109, 16
      %v1573 = vor.u32 %v1570, %v1571
      %v1574 = vsel %vm1179, %v1562, %v1573
      %v1576 = vshrl.u32 %v1110, 16
      %v1578 = vrot.slane %v1576, 7
      %v1579 = vshll.u32 %v1110, 16
      %v1581 = vor.u32 %v1578, %v1579
      %v1582 = vsel %vm1179, %v1570, %v1581
      %v1584 = vshrl.u32 %v1111, 16
      %v1586 = vrot.slane %v1584, 7
      %v1587 = vshll.u32 %v1111, 16
      %v1589 = vor.u32 %v1586, %v1587
      %v1591 = vshrl.u32 %v1112, 16
      %v1593 = vrot.slane %v1591, 7
      %v1594 = vshll.u32 %v1112, 16
      %v1596 = vor.u32 %v1593, %v1594
      %v1597 = vsel %vm1179, %v1586, %v1596
      %v1599 = vshrl.u32 %v1113, 16
      %v1601 = vrot.slane %v1599, 7
      %v1602 = vshll.u32 %v1113, 16
      %v1604 = vor.u32 %v1601, %v1602
      %v1605 = vsel %vm1179, %v1593, %v1604
      %v1607 = vshrl.u32 %v1114, 16
      %v1609 = vrot.slane %v1607, 7
      %v1610 = vshll.u32 %v1114, 16
      %v1612 = vor.u32 %v1609, %v1610
      %v1613 = vsel %vm1179, %v1601, %v1612
      %v1615 = vshrl.u32 %v1115, 16
      %v1617 = vrot.slane %v1615, 7
      %v1618 = vshll.u32 %v1115, 16
      %v1620 = vor.u32 %v1617, %v1618
      %v1622 = vshrl.u32 %v1116, 16
      %v1624 = vrot.slane %v1622, 7
      %v1625 = vshll.u32 %v1116, 16
      %v1627 = vor.u32 %v1624, %v1625
      %v1628 = vsel %vm1179, %v1617, %v1627
      %v1630 = vshrl.u32 %v1117, 16
      %v1632 = vrot.slane %v1630, 7
      %v1633 = vshll.u32 %v1117, 16
      %v1635 = vor.u32 %v1632, %v1633
      %v1636 = vsel %vm1179, %v1624, %v1635
      %v1638 = vshrl.u32 %v1118, 16
      %v1640 = vrot.slane %v1638, 7
      %v1641 = vshll.u32 %v1118, 16
      %v1643 = vor.u32 %v1640, %v1641
      %v1644 = vsel %vm1179, %v1632, %v1643
      %v1646 = vshrl.u32 %v1119, 16
      %v1648 = vrot.slane %v1646, 7
      %v1649 = vshll.u32 %v1119, 16
      %v1651 = vor.u32 %v1648, %v1649
      %v1653 = vshrl.u32 %v1120, 16
      %v1655 = vrot.slane %v1653, 7
      %v1656 = vshll.u32 %v1120, 16
      %v1658 = vor.u32 %v1655, %v1656
      %v1659 = vsel %vm1179, %v1648, %v1658
      %v1661 = vshrl.u32 %v1121, 16
      %v1663 = vrot.slane %v1661, 7
      %v1664 = vshll.u32 %v1121, 16
      %v1666 = vor.u32 %v1663, %v1664
      %v1667 = vsel %vm1179, %v1655, %v1666
      %v1669 = vshrl.u32 %v1122, 16
      %v1671 = vrot.slane %v1669, 7
      %v1672 = vshll.u32 %v1122, 16
      %v1674 = vor.u32 %v1671, %v1672
      %v1675 = vsel %vm1179, %v1663, %v1674
      %v1677 = vshrl.u32 %v1123, 16
      %v1679 = vrot.slane %v1677, 7
      %v1680 = vshll.u32 %v1123, 16
      %v1682 = vor.u32 %v1679, %v1680
      %v1684 = vshrl.u32 %v1124, 16
      %v1686 = vrot.slane %v1684, 7
      %v1687 = vshll.u32 %v1124, 16
      %v1689 = vor.u32 %v1686, %v1687
      %v1690 = vsel %vm1179, %v1679, %v1689
      %v1692 = vshrl.u32 %v1125, 16
      %v1694 = vrot.slane %v1692, 7
      %v1695 = vshll.u32 %v1125, 16
      %v1697 = vor.u32 %v1694, %v1695
      %v1698 = vsel %vm1179, %v1686, %v1697
      %v1700 = vshrl.u32 %v1126, 16
      %v1702 = vrot.slane %v1700, 7
      %v1703 = vshll.u32 %v1126, 16
      %v1705 = vor.u32 %v1702, %v1703
      %v1706 = vsel %vm1179, %v1694, %v1705
      %v1708 = vshrl.u32 %v1127, 16
      %v1710 = vrot.slane %v1708, 7
      %v1711 = vshll.u32 %v1127, 16
      %v1713 = vor.u32 %v1710, %v1711
      %v1715 = vshrl.u32 %v1128, 16
      %v1717 = vrot.slane %v1715, 7
      %v1718 = vshll.u32 %v1128, 16
      %v1720 = vor.u32 %v1717, %v1718
      %v1721 = vsel %vm1179, %v1710, %v1720
      %v1723 = vshrl.u32 %v1129, 16
      %v1725 = vrot.slane %v1723, 7
      %v1726 = vshll.u32 %v1129, 16
      %v1728 = vor.u32 %v1725, %v1726
      %v1729 = vsel %vm1179, %v1717, %v1728
      %v1731 = vshrl.u32 %v1130, 16
      %v1733 = vrot.slane %v1731, 7
      %v1734 = vshll.u32 %v1130, 16
      %v1736 = vor.u32 %v1733, %v1734
      %v1737 = vsel %vm1179, %v1725, %v1736
      %v1739 = vshrl.u32 %v1131, 16
      %v1741 = vrot.slane %v1739, 7
      %v1742 = vshll.u32 %v1131, 16
      %v1744 = vor.u32 %v1741, %v1742
      %v1746 = vshrl.u32 %v1132, 16
      %v1748 = vrot.slane %v1746, 7
      %v1749 = vshll.u32 %v1132, 16
      %v1751 = vor.u32 %v1748, %v1749
      %v1752 = vsel %vm1179, %v1741, %v1751
      %v1754 = vshrl.u32 %v1133, 16
      %v1756 = vrot.slane %v1754, 7
      %v1757 = vshll.u32 %v1133, 16
      %v1759 = vor.u32 %v1756, %v1757
      %v1760 = vsel %vm1179, %v1748, %v1759
      %v1762 = vshrl.u32 %v1134, 16
      %v1764 = vrot.slane %v1762, 7
      %v1765 = vshll.u32 %v1134, 16
      %v1767 = vor.u32 %v1764, %v1765
      %v1768 = vsel %vm1179, %v1756, %v1767
      %v1770 = vshrl.u32 %v1135, 16
      %v1772 = vrot.slane %v1770, 7
      %v1773 = vshll.u32 %v1135, 16
      %v1775 = vor.u32 %v1772, %v1773
      %v1777 = vshrl.u32 %v1136, 16
      %v1779 = vrot.slane %v1777, 7
      %v1780 = vshll.u32 %v1136, 16
      %v1782 = vor.u32 %v1779, %v1780
      %v1783 = vsel %vm1179, %v1772, %v1782
      %v1785 = vshrl.u32 %v1137, 16
      %v1787 = vrot.slane %v1785, 7
      %v1788 = vshll.u32 %v1137, 16
      %v1790 = vor.u32 %v1787, %v1788
      %v1791 = vsel %vm1179, %v1779, %v1790
      %v1793 = vshrl.u32 %v1138, 16
      %v1795 = vrot.slane %v1793, 7
      %v1796 = vshll.u32 %v1138, 16
      %v1798 = vor.u32 %v1795, %v1796
      %v1799 = vsel %vm1179, %v1787, %v1798
      %v1801 = vshrl.u32 %v1139, 16
      %v1803 = vrot.slane %v1801, 7
      %v1804 = vshll.u32 %v1139, 16
      %v1806 = vor.u32 %v1803, %v1804
      %v1808 = vshrl.u32 %v1140, 16
      %v1810 = vrot.slane %v1808, 7
      %v1811 = vshll.u32 %v1140, 16
      %v1813 = vor.u32 %v1810, %v1811
      %v1814 = vsel %vm1179, %v1803, %v1813
      %v1816 = vshrl.u32 %v1141, 16
      %v1818 = vrot.slane %v1816, 7
      %v1819 = vshll.u32 %v1141, 16
      %v1821 = vor.u32 %v1818, %v1819
      %v1822 = vsel %vm1179, %v1810, %v1821
      %v1824 = vshrl.u32 %v1142, 16
      %v1826 = vrot.slane %v1824, 7
      %v1827 = vshll.u32 %v1142, 16
      %v1829 = vor.u32 %v1826, %v1827
      %v1830 = vsel %vm1179, %v1818, %v1829
      %v1832 = vshrl.u32 %v1143, 16
      %v1834 = vrot.slane %v1832, 7
      %v1835 = vshll.u32 %v1143, 16
      %v1837 = vor.u32 %v1834, %v1835
      %v1839 = vshrl.u32 %v1144, 16
      %v1841 = vrot.slane %v1839, 7
      %v1842 = vshll.u32 %v1144, 16
      %v1844 = vor.u32 %v1841, %v1842
      %v1845 = vsel %vm1179, %v1834, %v1844
      %v1847 = vshrl.u32 %v1145, 16
      %v1849 = vrot.slane %v1847, 7
      %v1850 = vshll.u32 %v1145, 16
      %v1852 = vor.u32 %v1849, %v1850
      %v1853 = vsel %vm1179, %v1841, %v1852
      %v1855 = vshrl.u32 %v1146, 16
      %v1857 = vrot.slane %v1855, 7
      %v1858 = vshll.u32 %v1146, 16
      %v1860 = vor.u32 %v1857, %v1858
      %v1861 = vsel %vm1179, %v1849, %v1860
      %v1863 = vshrl.u32 %v1147, 16
      %v1865 = vrot.slane %v1863, 7
      %v1866 = vshll.u32 %v1147, 16
      %v1868 = vor.u32 %v1865, %v1866
      %v1870 = vshrl.u32 %v1148, 16
      %v1872 = vrot.slane %v1870, 7
      %v1873 = vshll.u32 %v1148, 16
      %v1875 = vor.u32 %v1872, %v1873
      %v1876 = vsel %vm1179, %v1865, %v1875
      %v1878 = vshrl.u32 %v1149, 16
      %v1880 = vrot.slane %v1878, 7
      %v1881 = vshll.u32 %v1149, 16
      %v1883 = vor.u32 %v1880, %v1881
      %v1884 = vsel %vm1179, %v1872, %v1883
      %v1886 = vshrl.u32 %v1150, 16
      %v1888 = vrot.slane %v1886, 7
      %v1889 = vshll.u32 %v1150, 16
      %v1891 = vor.u32 %v1888, %v1889
      %v1892 = vsel %vm1179, %v1880, %v1891
      %v1894 = vshrl.u32 %v1151, 16
      %v1896 = vrot.slane %v1894, 7
      %v1897 = vshll.u32 %v1151, 16
      %v1899 = vor.u32 %v1896, %v1897
      %v1901 = vshrl.u32 %v1152, 16
      %v1903 = vrot.slane %v1901, 7
      %v1904 = vshll.u32 %v1152, 16
      %v1906 = vor.u32 %v1903, %v1904
      %v1907 = vsel %vm1179, %v1896, %v1906
      %v1909 = vshrl.u32 %v1153, 16
      %v1911 = vrot.slane %v1909, 7
      %v1912 = vshll.u32 %v1153, 16
      %v1914 = vor.u32 %v1911, %v1912
      %v1915 = vsel %vm1179, %v1903, %v1914
      %v1917 = vshrl.u32 %v1154, 16
      %v1919 = vrot.slane %v1917, 7
      %v1920 = vshll.u32 %v1154, 16
      %v1922 = vor.u32 %v1919, %v1920
      %v1923 = vsel %vm1179, %v1911, %v1922
      %v1925 = vshrl.u32 %v1155, 16
      %v1927 = vrot.slane %v1925, 7
      %v1928 = vshll.u32 %v1155, 16
      %v1930 = vor.u32 %v1927, %v1928
      %v1932 = vshrl.u32 %v1156, 16
      %v1934 = vrot.slane %v1932, 7
      %v1935 = vshll.u32 %v1156, 16
      %v1937 = vor.u32 %v1934, %v1935
      %v1938 = vsel %vm1179, %v1927, %v1937
      %v1940 = vshrl.u32 %v1157, 16
      %v1942 = vrot.slane %v1940, 7
      %v1943 = vshll.u32 %v1157, 16
      %v1945 = vor.u32 %v1942, %v1943
      %v1946 = vsel %vm1179, %v1934, %v1945
      %v1948 = vshrl.u32 %v1158, 16
      %v1950 = vrot.slane %v1948, 7
      %v1951 = vshll.u32 %v1158, 16
      %v1953 = vor.u32 %v1950, %v1951
      %v1954 = vsel %vm1179, %v1942, %v1953
      %v1956 = vshrl.u32 %v1159, 16
      %v1958 = vrot.slane %v1956, 7
      %v1959 = vshll.u32 %v1159, 16
      %v1961 = vor.u32 %v1958, %v1959
      %v1963 = vshrl.u32 %v1160, 16
      %v1965 = vrot.slane %v1963, 7
      %v1966 = vshll.u32 %v1160, 16
      %v1968 = vor.u32 %v1965, %v1966
      %v1969 = vsel %vm1179, %v1958, %v1968
      %v1971 = vshrl.u32 %v1161, 16
      %v1973 = vrot.slane %v1971, 7
      %v1974 = vshll.u32 %v1161, 16
      %v1976 = vor.u32 %v1973, %v1974
      %v1977 = vsel %vm1179, %v1965, %v1976
      %v1979 = vshrl.u32 %v1162, 16
      %v1981 = vrot.slane %v1979, 7
      %v1982 = vshll.u32 %v1162, 16
      %v1984 = vor.u32 %v1981, %v1982
      %v1985 = vsel %vm1179, %v1973, %v1984
      %v1987 = vshrl.u32 %v1163, 16
      %v1989 = vrot.slane %v1987, 7
      %v1990 = vshll.u32 %v1163, 16
      %v1992 = vor.u32 %v1989, %v1990
      %v1994 = vshrl.u32 %v1164, 16
      %v1996 = vrot.slane %v1994, 7
      %v1997 = vshll.u32 %v1164, 16
      %v1999 = vor.u32 %v1996, %v1997
      %v2000 = vsel %vm1179, %v1989, %v1999
      %v2002 = vshrl.u32 %v1165, 16
      %v2004 = vrot.slane %v2002, 7
      %v2005 = vshll.u32 %v1165, 16
      %v2007 = vor.u32 %v2004, %v2005
      %v2008 = vsel %vm1179, %v1996, %v2007
      %v2010 = vshrl.u32 %v1166, 16
      %v2012 = vrot.slane %v2010, 7
      %v2013 = vshll.u32 %v1166, 16
      %v2015 = vor.u32 %v2012, %v2013
      %v2016 = vsel %vm1179, %v2004, %v2015
      %v2018 = vshrl.u32 %v1167, 16
      %v2020 = vrot.slane %v2018, 7
      %v2021 = vshll.u32 %v1167, 16
      %v2023 = vor.u32 %v2020, %v2021
      %v2025 = vshrl.u32 %v1168, 16
      %v2027 = vrot.slane %v2025, 7
      %v2028 = vshll.u32 %v1168, 16
      %v2030 = vor.u32 %v2027, %v2028
      %v2031 = vsel %vm1179, %v2020, %v2030
      %v2033 = vshrl.u32 %v1169, 16
      %v2035 = vrot.slane %v2033, 7
      %v2036 = vshll.u32 %v1169, 16
      %v2038 = vor.u32 %v2035, %v2036
      %v2039 = vsel %vm1179, %v2027, %v2038
      %v2041 = vshrl.u32 %v1170, 16
      %v2043 = vrot.slane %v2041, 7
      %v2044 = vshll.u32 %v1170, 16
      %v2046 = vor.u32 %v2043, %v2044
      %v2047 = vsel %vm1179, %v2035, %v2046
      %v2049 = vshrl.u32 %v1171, 16
      %v2051 = vrot.slane %v2049, 7
      %v2052 = vshll.u32 %v1171, 16
      %v2054 = vor.u32 %v2051, %v2052
      %v2056 = vshrl.u32 %v1172, 16
      %v2058 = vrot.slane %v2056, 7
      %v2059 = vshll.u32 %v1172, 16
      %v2061 = vor.u32 %v2058, %v2059
      %v2062 = vsel %vm1179, %v2051, %v2061
      %v2064 = vshrl.u32 %v1173, 16
      %v2066 = vrot.slane %v2064, 7
      %v2067 = vshll.u32 %v1173, 16
      %v2069 = vor.u32 %v2066, %v2067
      %v2070 = vsel %vm1179, %v2058, %v2069
      %v2072 = vshrl.u32 %v1174, 16
      %v2074 = vrot.slane %v2072, 7
      %v2075 = vshll.u32 %v1174, 16
      %v2077 = vor.u32 %v2074, %v2075
      %v2078 = vsel %vm1179, %v2066, %v2077
      %v2080 = vshrl.u32 %v1175, 16
      %v2082 = vrot.slane %v2080, 7
      %v2083 = vshll.u32 %v1175, 16
      %v2085 = vor.u32 %v2082, %v2083
      %v2087 = vshrl.u32 %v1176, 16
      %v2089 = vrot.slane %v2087, 7
      %v2090 = vshll.u32 %v1176, 16
      %v2092 = vor.u32 %v2089, %v2090
      %v2093 = vsel %vm1179, %v2082, %v2092
      %v2095 = vshrl.u32 %v1177, 16
      %v2097 = vrot.slane %v2095, 7
      %v2098 = vshll.u32 %v1177, 16
      %v2100 = vor.u32 %v2097, %v2098
      %v2101 = vsel %vm1179, %v2089, %v2100
      %v2103 = vshrl.u32 %v1178, 16
      %v2105 = vrot.slane %v2103, 7
      %v2106 = vshll.u32 %v1178, 16
      %v2108 = vor.u32 %v2105, %v2106
      %v2109 = vsel %vm1179, %v2097, %v2108
      %vm2140 = vcmask 1040384
      %vm2141 = vmand %vm2140, %vm1179
      %v2142 = vsel %vm2141, 0, %v1186
      %v2143 = vsel %vm2141, 0, %v1217
      %v2144 = vsel %vm2141, 0, %v1248
      %v2145 = vsel %vm2141, 0, %v1279
      %v2146 = vsel %vm2141, 0, %v1310
      %v2147 = vsel %vm2141, 0, %v1341
      %v2148 = vsel %vm2141, 0, %v1372
      %v2149 = vsel %vm2141, 0, %v1403
      %v2150 = vsel %vm2141, 0, %v1434
      %v2151 = vsel %vm2141, 0, %v1465
      %v2152 = vsel %vm2141, 0, %v1496
      %v2153 = vsel %vm2141, 0, %v1527
      %v2154 = vsel %vm2141, 0, %v1558
      %v2155 = vsel %vm2141, 0, %v1589
      %v2156 = vsel %vm2141, 0, %v1620
      %v2157 = vsel %vm2141, 0, %v1651
      %v2158 = vsel %vm2141, 0, %v1682
      %v2159 = vsel %vm2141, 0, %v1713
      %v2160 = vsel %vm2141, 0, %v1744
      %v2161 = vsel %vm2141, 0, %v1775
      %v2162 = vsel %vm2141, 0, %v1806
      %v2163 = vsel %vm2141, 0, %v1837
      %v2164 = vsel %vm2141, 0, %v1868
      %v2165 = vsel %vm2141, 0, %v1899
      %v2166 = vsel %vm2141, 0, %v1930
      %v2167 = vsel %vm2141, 0, %v1961
      %v2168 = vsel %vm2141, 0, %v1992
      %v2169 = vsel %vm2141, 0, %v2023
      %v2170 = vsel %vm2141, 0, %v2054
      %v2171 = vsel %vm2141, 0, %v2085
      %vm2172 = vsmask.f32 7424
      %v2173 = vrot.slane %v1184, 1
      %v2174 = vor.u32 %v1181, %v2173
      %v2175 = vrot.slane %v1191, 1
      %v2176 = vsel %vm2172, %v2174, %v2175
      %v2177 = vor.u32 %v1188, %v2175
      %v2178 = vrot.slane %v1199, 1
      %v2179 = vsel %vm2172, %v2177, %v2178
      %v2180 = vor.u32 %v1196, %v2178
      %v2181 = vrot.slane %v1207, 1
      %v2182 = vsel %vm2172, %v2180, %v2181
      %v2183 = vor.u32 %v1204, %v2181
      %v2184 = vrot.slane %v1215, 1
      %v2185 = vor.u32 %v1212, %v2184
      %v2186 = vrot.slane %v1222, 1
      %v2187 = vsel %vm2172, %v2185, %v2186
      %v2188 = vor.u32 %v1219, %v2186
      %v2189 = vrot.slane %v1230, 1
      %v2190 = vsel %vm2172, %v2188, %v2189
      %v2191 = vor.u32 %v1227, %v2189
      %v2192 = vrot.slane %v1238, 1
      %v2193 = vsel %vm2172, %v2191, %v2192
      %v2194 = vor.u32 %v1235, %v2192
      %v2195 = vrot.slane %v1246, 1
      %v2196 = vor.u32 %v1243, %v2195
      %v2197 = vrot.slane %v1253, 1
      %v2198 = vsel %vm2172, %v2196, %v2197
      %v2199 = vor.u32 %v1250, %v2197
      %v2200 = vrot.slane %v1261, 1
      %v2201 = vsel %vm2172, %v2199, %v2200
      %v2202 = vor.u32 %v1258, %v2200
      %v2203 = vrot.slane %v1269, 1
      %v2204 = vsel %vm2172, %v2202, %v2203
      %v2205 = vor.u32 %v1266, %v2203
      %v2206 = vrot.slane %v1277, 1
      %v2207 = vor.u32 %v1274, %v2206
      %v2208 = vrot.slane %v1284, 1
      %v2209 = vsel %vm2172, %v2207, %v2208
      %v2210 = vor.u32 %v1281, %v2208
      %v2211 = vrot.slane %v1292, 1
      %v2212 = vsel %vm2172, %v2210, %v2211
      %v2213 = vor.u32 %v1289, %v2211
      %v2214 = vrot.slane %v1300, 1
      %v2215 = vsel %vm2172, %v2213, %v2214
      %v2216 = vor.u32 %v1297, %v2214
      %v2217 = vrot.slane %v1308, 1
      %v2218 = vor.u32 %v1305, %v2217
      %v2219 = vrot.slane %v1315, 1
      %v2220 = vsel %vm2172, %v2218, %v2219
      %v2221 = vor.u32 %v1312, %v2219
      %v2222 = vrot.slane %v1323, 1
      %v2223 = vsel %vm2172, %v2221, %v2222
      %v2224 = vor.u32 %v1320, %v2222
      %v2225 = vrot.slane %v1331, 1
      %v2226 = vsel %vm2172, %v2224, %v2225
      %v2227 = vor.u32 %v1328, %v2225
      %v2228 = vrot.slane %v1339, 1
      %v2229 = vor.u32 %v1336, %v2228
      %v2230 = vrot.slane %v1346, 1
      %v2231 = vsel %vm2172, %v2229, %v2230
      %v2232 = vor.u32 %v1343, %v2230
      %v2233 = vrot.slane %v1354, 1
      %v2234 = vsel %vm2172, %v2232, %v2233
      %v2235 = vor.u32 %v1351, %v2233
      %v2236 = vrot.slane %v1362, 1
      %v2237 = vsel %vm2172, %v2235, %v2236
      %v2238 = vor.u32 %v1359, %v2236
      %v2239 = vrot.slane %v1370, 1
      %v2240 = vor.u32 %v1367, %v2239
      %v2241 = vrot.slane %v1377, 1
      %v2242 = vsel %vm2172, %v2240, %v2241
      %v2243 = vor.u32 %v1374, %v2241
      %v2244 = vrot.slane %v1385, 1
      %v2245 = vsel %vm2172, %v2243, %v2244
      %v2246 = vor.u32 %v1382, %v2244
      %v2247 = vrot.slane %v1393, 1
      %v2248 = vsel %vm2172, %v2246, %v2247
      %v2249 = vor.u32 %v1390, %v2247
      %v2250 = vrot.slane %v1401, 1
      %v2251 = vor.u32 %v1398, %v2250
      %v2252 = vrot.slane %v1408, 1
      %v2253 = vsel %vm2172, %v2251, %v2252
      %v2254 = vor.u32 %v1405, %v2252
      %v2255 = vrot.slane %v1416, 1
      %v2256 = vsel %vm2172, %v2254, %v2255
      %v2257 = vor.u32 %v1413, %v2255
      %v2258 = vrot.slane %v1424, 1
      %v2259 = vsel %vm2172, %v2257, %v2258
      %v2260 = vor.u32 %v1421, %v2258
      %v2261 = vrot.slane %v1432, 1
      %v2262 = vor.u32 %v1429, %v2261
      %v2263 = vrot.slane %v1439, 1
      %v2264 = vsel %vm2172, %v2262, %v2263
      %v2265 = vor.u32 %v1436, %v2263
      %v2266 = vrot.slane %v1447, 1
      %v2267 = vsel %vm2172, %v2265, %v2266
      %v2268 = vor.u32 %v1444, %v2266
      %v2269 = vrot.slane %v1455, 1
      %v2270 = vsel %vm2172, %v2268, %v2269
      %v2271 = vor.u32 %v1452, %v2269
      %v2272 = vrot.slane %v1463, 1
      %v2273 = vor.u32 %v1460, %v2272
      %v2274 = vrot.slane %v1470, 1
      %v2275 = vsel %vm2172, %v2273, %v2274
      %v2276 = vor.u32 %v1467, %v2274
      %v2277 = vrot.slane %v1478, 1
      %v2278 = vsel %vm2172, %v2276, %v2277
      %v2279 = vor.u32 %v1475, %v2277
      %v2280 = vrot.slane %v1486, 1
      %v2281 = vsel %vm2172, %v2279, %v2280
      %v2282 = vor.u32 %v1483, %v2280
      %v2283 = vrot.slane %v1494, 1
      %v2284 = vor.u32 %v1491, %v2283
      %v2285 = vrot.slane %v1501, 1
      %v2286 = vsel %vm2172, %v2284, %v2285
      %v2287 = vor.u32 %v1498, %v2285
      %v2288 = vrot.slane %v1509, 1
      %v2289 = vsel %vm2172, %v2287, %v2288
      %v2290 = vor.u32 %v1506, %v2288
      %v2291 = vrot.slane %v1517, 1
      %v2292 = vsel %vm2172, %v2290, %v2291
      %v2293 = vor.u32 %v1514, %v2291
      %v2294 = vrot.slane %v1525, 1
      %v2295 = vor.u32 %v1522, %v2294
      %v2296 = vrot.slane %v1532, 1
      %v2297 = vsel %vm2172, %v2295, %v2296
      %v2298 = vor.u32 %v1529, %v2296
      %v2299 = vrot.slane %v1540, 1
      %v2300 = vsel %vm2172, %v2298, %v2299
      %v2301 = vor.u32 %v1537, %v2299
      %v2302 = vrot.slane %v1548, 1
      %v2303 = vsel %vm2172, %v2301, %v2302
      %v2304 = vor.u32 %v1545, %v2302
      %v2305 = vrot.slane %v1556, 1
      %v2306 = vor.u32 %v1553, %v2305
      %v2307 = vrot.slane %v1563, 1
      %v2308 = vsel %vm2172, %v2306, %v2307
      %v2309 = vor.u32 %v1560, %v2307
      %v2310 = vrot.slane %v1571, 1
      %v2311 = vsel %vm2172, %v2309, %v2310
      %v2312 = vor.u32 %v1568, %v2310
      %v2313 = vrot.slane %v1579, 1
      %v2314 = vsel %vm2172, %v2312, %v2313
      %v2315 = vor.u32 %v1576, %v2313
      %v2316 = vrot.slane %v1587, 1
      %v2317 = vor.u32 %v1584, %v2316
      %v2318 = vrot.slane %v1594, 1
      %v2319 = vsel %vm2172, %v2317, %v2318
      %v2320 = vor.u32 %v1591, %v2318
      %v2321 = vrot.slane %v1602, 1
      %v2322 = vsel %vm2172, %v2320, %v2321
      %v2323 = vor.u32 %v1599, %v2321
      %v2324 = vrot.slane %v1610, 1
      %v2325 = vsel %vm2172, %v2323, %v2324
      %v2326 = vor.u32 %v1607, %v2324
      %v2327 = vrot.slane %v1618, 1
      %v2328 = vor.u32 %v1615, %v2327
      %v2329 = vrot.slane %v1625, 1
      %v2330 = vsel %vm2172, %v2328, %v2329
      %v2331 = vor.u32 %v1622, %v2329
      %v2332 = vrot.slane %v1633, 1
      %v2333 = vsel %vm2172, %v2331, %v2332
      %v2334 = vor.u32 %v1630, %v2332
      %v2335 = vrot.slane %v1641, 1
      %v2336 = vsel %vm2172, %v2334, %v2335
      %v2337 = vor.u32 %v1638, %v2335
      %v2338 = vrot.slane %v1649, 1
      %v2339 = vor.u32 %v1646, %v2338
      %v2340 = vrot.slane %v1656, 1
      %v2341 = vsel %vm2172, %v2339, %v2340
      %v2342 = vor.u32 %v1653, %v2340
      %v2343 = vrot.slane %v1664, 1
      %v2344 = vsel %vm2172, %v2342, %v2343
      %v2345 = vor.u32 %v1661, %v2343
      %v2346 = vrot.slane %v1672, 1
      %v2347 = vsel %vm2172, %v2345, %v2346
      %v2348 = vor.u32 %v1669, %v2346
      %v2349 = vrot.slane %v1680, 1
      %v2350 = vor.u32 %v1677, %v2349
      %v2351 = vrot.slane %v1687, 1
      %v2352 = vsel %vm2172, %v2350, %v2351
      %v2353 = vor.u32 %v1684, %v2351
      %v2354 = vrot.slane %v1695, 1
      %v2355 = vsel %vm2172, %v2353, %v2354
      %v2356 = vor.u32 %v1692, %v2354
      %v2357 = vrot.slane %v1703, 1
      %v2358 = vsel %vm2172, %v2356, %v2357
      %v2359 = vor.u32 %v1700, %v2357
      %v2360 = vrot.slane %v1711, 1
      %v2361 = vor.u32 %v1708, %v2360
      %v2362 = vrot.slane %v1718, 1
      %v2363 = vsel %vm2172, %v2361, %v2362
      %v2364 = vor.u32 %v1715, %v2362
      %v2365 = vrot.slane %v1726, 1
      %v2366 = vsel %vm2172, %v2364, %v2365
      %v2367 = vor.u32 %v1723, %v2365
      %v2368 = vrot.slane %v1734, 1
      %v2369 = vsel %vm2172, %v2367, %v2368
      %v2370 = vor.u32 %v1731, %v2368
      %v2371 = vrot.slane %v1742, 1
      %v2372 = vor.u32 %v1739, %v2371
      %v2373 = vrot.slane %v1749, 1
      %v2374 = vsel %vm2172, %v2372, %v2373
      %v2375 = vor.u32 %v1746, %v2373
      %v2376 = vrot.slane %v1757, 1
      %v2377 = vsel %vm2172, %v2375, %v2376
      %v2378 = vor.u32 %v1754, %v2376
      %v2379 = vrot.slane %v1765, 1
      %v2380 = vsel %vm2172, %v2378, %v2379
      %v2381 = vor.u32 %v1762, %v2379
      %v2382 = vrot.slane %v1773, 1
      %v2383 = vor.u32 %v1770, %v2382
      %v2384 = vrot.slane %v1780, 1
      %v2385 = vsel %vm2172, %v2383, %v2384
      %v2386 = vor.u32 %v1777, %v2384
      %v2387 = vrot.slane %v1788, 1
      %v2388 = vsel %vm2172, %v2386, %v2387
      %v2389 = vor.u32 %v1785, %v2387
      %v2390 = vrot.slane %v1796, 1
      %v2391 = vsel %vm2172, %v2389, %v2390
      %v2392 = vor.u32 %v1793, %v2390
      %v2393 = vrot.slane %v1804, 1
      %v2394 = vor.u32 %v1801, %v2393
      %v2395 = vrot.slane %v1811, 1
      %v2396 = vsel %vm2172, %v2394, %v2395
      %v2397 = vor.u32 %v1808, %v2395
      %v2398 = vrot.slane %v1819, 1
      %v2399 = vsel %vm2172, %v2397, %v2398
      %v2400 = vor.u32 %v1816, %v2398
      %v2401 = vrot.slane %v1827, 1
      %v2402 = vsel %vm2172, %v2400, %v2401
      %v2403 = vor.u32 %v1824, %v2401
      %v2404 = vrot.slane %v1835, 1
      %v2405 = vor.u32 %v1832, %v2404
      %v2406 = vrot.slane %v1842, 1
      %v2407 = vsel %vm2172, %v2405, %v2406
      %v2408 = vor.u32 %v1839, %v2406
      %v2409 = vrot.slane %v1850, 1
      %v2410 = vsel %vm2172, %v2408, %v2409
      %v2411 = vor.u32 %v1847, %v2409
      %v2412 = vrot.slane %v1858, 1
      %v2413 = vsel %vm2172, %v2411, %v2412
      %v2414 = vor.u32 %v1855, %v2412
      %v2415 = vrot.slane %v1866, 1
      %v2416 = vor.u32 %v1863, %v2415
      %v2417 = vrot.slane %v1873, 1
      %v2418 = vsel %vm2172, %v2416, %v2417
      %v2419 = vor.u32 %v1870, %v2417
      %v2420 = vrot.slane %v1881, 1
      %v2421 = vsel %vm2172, %v2419, %v2420
      %v2422 = vor.u32 %v1878, %v2420
      %v2423 = vrot.slane %v1889, 1
      %v2424 = vsel %vm2172, %v2422, %v2423
      %v2425 = vor.u32 %v1886, %v2423
      %v2426 = vrot.slane %v1897, 1
      %v2427 = vor.u32 %v1894, %v2426
      %v2428 = vrot.slane %v1904, 1
      %v2429 = vsel %vm2172, %v2427, %v2428
      %v2430 = vor.u32 %v1901, %v2428
      %v2431 = vrot.slane %v1912, 1
      %v2432 = vsel %vm2172, %v2430, %v2431
      %v2433 = vor.u32 %v1909, %v2431
      %v2434 = vrot.slane %v1920, 1
      %v2435 = vsel %vm2172, %v2433, %v2434
      %v2436 = vor.u32 %v1917, %v2434
      %v2437 = vrot.slane %v1928, 1
      %v2438 = vor.u32 %v1925, %v2437
      %v2439 = vrot.slane %v1935, 1
      %v2440 = vsel %vm2172, %v2438, %v2439
      %v2441 = vor.u32 %v1932, %v2439
      %v2442 = vrot.slane %v1943, 1
      %v2443 = vsel %vm2172, %v2441, %v2442
      %v2444 = vor.u32 %v1940, %v2442
      %v2445 = vrot.slane %v1951, 1
      %v2446 = vsel %vm2172, %v2444, %v2445
      %v2447 = vor.u32 %v1948, %v2445
      %v2448 = vrot.slane %v1959, 1
      %v2449 = vor.u32 %v1956, %v2448
      %v2450 = vrot.slane %v1966, 1
      %v2451 = vsel %vm2172, %v2449, %v2450
      %v2452 = vor.u32 %v1963, %v2450
      %v2453 = vrot.slane %v1974, 1
      %v2454 = vsel %vm2172, %v2452, %v2453
      %v2455 = vor.u32 %v1971, %v2453
      %v2456 = vrot.slane %v1982, 1
      %v2457 = vsel %vm2172, %v2455, %v2456
      %v2458 = vor.u32 %v1979, %v2456
      %v2459 = vrot.slane %v1990, 1
      %v2460 = vor.u32 %v1987, %v2459
      %v2461 = vrot.slane %v1997, 1
      %v2462 = vsel %vm2172, %v2460, %v2461
      %v2463 = vor.u32 %v1994, %v2461
      %v2464 = vrot.slane %v2005, 1
      %v2465 = vsel %vm2172, %v2463, %v2464
      %v2466 = vor.u32 %v2002, %v2464
      %v2467 = vrot.slane %v2013, 1
      %v2468 = vsel %vm2172, %v2466, %v2467
      %v2469 = vor.u32 %v2010, %v2467
      %v2470 = vrot.slane %v2021, 1
      %v2471 = vor.u32 %v2018, %v2470
      %v2472 = vrot.slane %v2028, 1
      %v2473 = vsel %vm2172, %v2471, %v2472
      %v2474 = vor.u32 %v2025, %v2472
      %v2475 = vrot.slane %v2036, 1
      %v2476 = vsel %vm2172, %v2474, %v2475
      %v2477 = vor.u32 %v2033, %v2475
      %v2478 = vrot.slane %v2044, 1
      %v2479 = vsel %vm2172, %v2477, %v2478
      %v2480 = vor.u32 %v2041, %v2478
      %v2481 = vrot.slane %v2052, 1
      %v2482 = vor.u32 %v2049, %v2481
      %v2483 = vrot.slane %v2059, 1
      %v2484 = vsel %vm2172, %v2482, %v2483
      %v2485 = vor.u32 %v2056, %v2483
      %v2486 = vrot.slane %v2067, 1
      %v2487 = vsel %vm2172, %v2485, %v2486
      %v2488 = vor.u32 %v2064, %v2486
      %v2489 = vrot.slane %v2075, 1
      %v2490 = vsel %vm2172, %v2488, %v2489
      %v2491 = vor.u32 %v2072, %v2489
      %v2492 = vrot.slane %v2083, 1
      %v2493 = vor.u32 %v2080, %v2492
      %v2494 = vrot.slane %v2090, 1
      %v2495 = vsel %vm2172, %v2493, %v2494
      %v2496 = vor.u32 %v2087, %v2494
      %v2497 = vrot.slane %v2098, 1
      %v2498 = vsel %vm2172, %v2496, %v2497
      %v2499 = vor.u32 %v2095, %v2497
      %v2500 = vrot.slane %v2106, 1
      %v2501 = vsel %vm2172, %v2499, %v2500
      %v2502 = vor.u32 %v2103, %v2500
      %vm2533 = vcmask 1043456
      %vm2534 = vsmask.f32 3328
      %vm2535 = vmand %vm2533, %vm2534
      %v2536 = vsel %vm2535, %v2183, 0
      %v2537 = vsel %vm2535, %v2194, 0
      %v2538 = vsel %vm2535, %v2205, 0
      %v2539 = vsel %vm2535, %v2216, 0
      %v2540 = vsel %vm2535, %v2227, 0
      %v2541 = vsel %vm2535, %v2238, 0
      %v2542 = vsel %vm2535, %v2249, 0
      %v2543 = vsel %vm2535, %v2260, 0
      %v2544 = vsel %vm2535, %v2271, 0
      %v2545 = vsel %vm2535, %v2282, 0
      %v2546 = vsel %vm2535, %v2293, 0
      %v2547 = vsel %vm2535, %v2304, 0
      %v2548 = vsel %vm2535, %v2315, 0
      %v2549 = vsel %vm2535, %v2326, 0
      %v2550 = vsel %vm2535, %v2337, 0
      %v2551 = vsel %vm2535, %v2348, 0
      %v2552 = vsel %vm2535, %v2359, 0
      %v2553 = vsel %vm2535, %v2370, 0
      %v2554 = vsel %vm2535, %v2381, 0
      %v2555 = vsel %vm2535, %v2392, 0
      %v2556 = vsel %vm2535, %v2403, 0
      %v2557 = vsel %vm2535, %v2414, 0
      %v2558 = vsel %vm2535, %v2425, 0
      %v2559 = vsel %vm2535, %v2436, 0
      %v2560 = vsel %vm2535, %v2447, 0
      %v2561 = vsel %vm2535, %v2458, 0
      %v2562 = vsel %vm2535, %v2469, 0
      %v2563 = vsel %vm2535, %v2480, 0
      %v2564 = vsel %vm2535, %v2491, 0
      %v2565 = vsel %vm2535, %v2502, 0
      %2566 = vrot.lane.b32.xlu0 %v1059, 8
      %v2567 = vpop.permute.xlu0 %2566
      %2568 = vrot.lane.b32.xlu0 %v1060, 8
      %v2569 = vpop.permute.xlu0 %2568
      %2570 = vrot.lane.b32.xlu0 %v1061, 8
      %v2571 = vpop.permute.xlu0 %2570
      %2572 = vrot.lane.b32.xlu0 %v1062, 8
      %v2573 = vpop.permute.xlu0 %2572
      %2574 = vrot.lane.b32.xlu0 %v1063, 8
      %v2575 = vpop.permute.xlu0 %2574
      %2576 = vrot.lane.b32.xlu0 %v1064, 8
      %v2577 = vpop.permute.xlu0 %2576
      %2578 = vrot.lane.b32.xlu0 %v1065, 8
      %v2579 = vpop.permute.xlu0 %2578
      %2580 = vrot.lane.b32.xlu0 %v1066, 8
      %v2581 = vpop.permute.xlu0 %2580
      %2582 = vrot.lane.b32.xlu0 %v1067, 8
      %v2583 = vpop.permute.xlu0 %2582
      %2584 = vrot.lane.b32.xlu0 %v1068, 8
      %v2585 = vpop.permute.xlu0 %2584
      %2586 = vrot.lane.b32.xlu0 %v1069, 8
      %v2587 = vpop.permute.xlu0 %2586
      %2588 = vrot.lane.b32.xlu0 %v1070, 8
      %v2589 = vpop.permute.xlu0 %2588
      %2590 = vrot.lane.b32.xlu0 %v1071, 8
      %v2591 = vpop.permute.xlu0 %2590
      %2592 = vrot.lane.b32.xlu0 %v1072, 8
      %v2593 = vpop.permute.xlu0 %2592
      %2594 = vrot.lane.b32.xlu0 %v1073, 8
      %v2595 = vpop.permute.xlu0 %2594
      %2596 = vrot.lane.b32.xlu0 %v1074, 8
      %v2597 = vpop.permute.xlu0 %2596
      %2598 = vrot.lane.b32.xlu0 %v1075, 8
      %v2599 = vpop.permute.xlu0 %2598
      %2600 = vrot.lane.b32.xlu0 %v1076, 8
      %v2601 = vpop.permute.xlu0 %2600
      %2602 = vrot.lane.b32.xlu0 %v1077, 8
      %v2603 = vpop.permute.xlu0 %2602
      %2604 = vrot.lane.b32.xlu0 %v1078, 8
      %v2605 = vpop.permute.xlu0 %2604
      %2606 = vrot.lane.b32.xlu0 %v1079, 8
      %v2607 = vpop.permute.xlu0 %2606
      %2608 = vrot.lane.b32.xlu0 %v1080, 8
      %v2609 = vpop.permute.xlu0 %2608
      %2610 = vrot.lane.b32.xlu0 %v1081, 8
      %v2611 = vpop.permute.xlu0 %2610
      %2612 = vrot.lane.b32.xlu0 %v1082, 8
      %v2613 = vpop.permute.xlu0 %2612
      %2614 = vrot.lane.b32.xlu0 %v1083, 8
      %v2615 = vpop.permute.xlu0 %2614
      %2616 = vrot.lane.b32.xlu0 %v1084, 8
      %v2617 = vpop.permute.xlu0 %2616
      %2618 = vrot.lane.b32.xlu0 %v1085, 8
      %v2619 = vpop.permute.xlu0 %2618
      %2620 = vrot.lane.b32.xlu0 %v1086, 8
      %v2621 = vpop.permute.xlu0 %2620
      %2622 = vrot.lane.b32.xlu0 %v1087, 8
      %v2623 = vpop.permute.xlu0 %2622
      %2624 = vrot.lane.b32.xlu0 %v1088, 8
      %v2625 = vpop.permute.xlu0 %2624
      %2626 = vrot.lane.b32.xlu0 %v1089, 8
      %v2627 = vpop.permute.xlu0 %2626
      %2628 = vrot.lane.b32.xlu0 %v1090, 8
      %v2629 = vpop.permute.xlu0 %2628
      %2630 = vrot.lane.b32.xlu0 %v1091, 8
      %v2631 = vpop.permute.xlu0 %2630
      %2632 = vrot.lane.b32.xlu0 %v1092, 8
      %v2633 = vpop.permute.xlu0 %2632
      %2634 = vrot.lane.b32.xlu0 %v1093, 8
      %v2635 = vpop.permute.xlu0 %2634
      %2636 = vrot.lane.b32.xlu0 %v1094, 8
      %v2637 = vpop.permute.xlu0 %2636
      %2638 = vrot.lane.b32.xlu0 %v1095, 8
      %v2639 = vpop.permute.xlu0 %2638
      %2640 = vrot.lane.b32.xlu0 %v1096, 8
      %v2641 = vpop.permute.xlu0 %2640
      %2642 = vrot.lane.b32.xlu0 %v1097, 8
      %v2643 = vpop.permute.xlu0 %2642
      %2644 = vrot.lane.b32.xlu0 %v1098, 8
      %v2645 = vpop.permute.xlu0 %2644
      %2646 = vrot.lane.b32.xlu0 %v1099, 8
      %v2647 = vpop.permute.xlu0 %2646
      %2648 = vrot.lane.b32.xlu0 %v1100, 8
      %v2649 = vpop.permute.xlu0 %2648
      %2650 = vrot.lane.b32.xlu0 %v1101, 8
      %v2651 = vpop.permute.xlu0 %2650
      %2652 = vrot.lane.b32.xlu0 %v1102, 8
      %v2653 = vpop.permute.xlu0 %2652
      %2654 = vrot.lane.b32.xlu0 %v1103, 8
      %v2655 = vpop.permute.xlu0 %2654
      %2656 = vrot.lane.b32.xlu0 %v1104, 8
      %v2657 = vpop.permute.xlu0 %2656
      %2658 = vrot.lane.b32.xlu0 %v1105, 8
      %v2659 = vpop.permute.xlu0 %2658
      %2660 = vrot.lane.b32.xlu0 %v1106, 8
      %v2661 = vpop.permute.xlu0 %2660
      %2662 = vrot.lane.b32.xlu0 %v1107, 8
      %v2663 = vpop.permute.xlu0 %2662
      %2664 = vrot.lane.b32.xlu0 %v1108, 8
      %v2665 = vpop.permute.xlu0 %2664
      %2666 = vrot.lane.b32.xlu0 %v1109, 8
      %v2667 = vpop.permute.xlu0 %2666
      %2668 = vrot.lane.b32.xlu0 %v1110, 8
      %v2669 = vpop.permute.xlu0 %2668
      %2670 = vrot.lane.b32.xlu0 %v1111, 8
      %v2671 = vpop.permute.xlu0 %2670
      %2672 = vrot.lane.b32.xlu0 %v1112, 8
      %v2673 = vpop.permute.xlu0 %2672
      %2674 = vrot.lane.b32.xlu0 %v1113, 8
      %v2675 = vpop.permute.xlu0 %2674
      %2676 = vrot.lane.b32.xlu0 %v1114, 8
      %v2677 = vpop.permute.xlu0 %2676
      %2678 = vrot.lane.b32.xlu0 %v1115, 8
      %v2679 = vpop.permute.xlu0 %2678
      %2680 = vrot.lane.b32.xlu0 %v1116, 8
      %v2681 = vpop.permute.xlu0 %2680
      %2682 = vrot.lane.b32.xlu0 %v1117, 8
      %v2683 = vpop.permute.xlu0 %2682
      %2684 = vrot.lane.b32.xlu0 %v1118, 8
      %v2685 = vpop.permute.xlu0 %2684
      %2686 = vrot.lane.b32.xlu0 %v1119, 8
      %v2687 = vpop.permute.xlu0 %2686
      %2688 = vrot.lane.b32.xlu0 %v1120, 8
      %v2689 = vpop.permute.xlu0 %2688
      %2690 = vrot.lane.b32.xlu0 %v1121, 8
      %v2691 = vpop.permute.xlu0 %2690
      %2692 = vrot.lane.b32.xlu0 %v1122, 8
      %v2693 = vpop.permute.xlu0 %2692
      %2694 = vrot.lane.b32.xlu0 %v1123, 8
      %v2695 = vpop.permute.xlu0 %2694
      %2696 = vrot.lane.b32.xlu0 %v1124, 8
      %v2697 = vpop.permute.xlu0 %2696
      %2698 = vrot.lane.b32.xlu0 %v1125, 8
      %v2699 = vpop.permute.xlu0 %2698
      %2700 = vrot.lane.b32.xlu0 %v1126, 8
      %v2701 = vpop.permute.xlu0 %2700
      %2702 = vrot.lane.b32.xlu0 %v1127, 8
      %v2703 = vpop.permute.xlu0 %2702
      %2704 = vrot.lane.b32.xlu0 %v1128, 8
      %v2705 = vpop.permute.xlu0 %2704
      %2706 = vrot.lane.b32.xlu0 %v1129, 8
      %v2707 = vpop.permute.xlu0 %2706
      %2708 = vrot.lane.b32.xlu0 %v1130, 8
      %v2709 = vpop.permute.xlu0 %2708
      %2710 = vrot.lane.b32.xlu0 %v1131, 8
      %v2711 = vpop.permute.xlu0 %2710
      %2712 = vrot.lane.b32.xlu0 %v1132, 8
      %v2713 = vpop.permute.xlu0 %2712
      %2714 = vrot.lane.b32.xlu0 %v1133, 8
      %v2715 = vpop.permute.xlu0 %2714
      %2716 = vrot.lane.b32.xlu0 %v1134, 8
      %v2717 = vpop.permute.xlu0 %2716
      %2718 = vrot.lane.b32.xlu0 %v1135, 8
      %v2719 = vpop.permute.xlu0 %2718
      %2720 = vrot.lane.b32.xlu0 %v1136, 8
      %v2721 = vpop.permute.xlu0 %2720
      %2722 = vrot.lane.b32.xlu0 %v1137, 8
      %v2723 = vpop.permute.xlu0 %2722
      %2724 = vrot.lane.b32.xlu0 %v1138, 8
      %v2725 = vpop.permute.xlu0 %2724
      %2726 = vrot.lane.b32.xlu0 %v1139, 8
      %v2727 = vpop.permute.xlu0 %2726
      %2728 = vrot.lane.b32.xlu0 %v1140, 8
      %v2729 = vpop.permute.xlu0 %2728
      %2730 = vrot.lane.b32.xlu0 %v1141, 8
      %v2731 = vpop.permute.xlu0 %2730
      %2732 = vrot.lane.b32.xlu0 %v1142, 8
      %v2733 = vpop.permute.xlu0 %2732
      %2734 = vrot.lane.b32.xlu0 %v1143, 8
      %v2735 = vpop.permute.xlu0 %2734
      %2736 = vrot.lane.b32.xlu0 %v1144, 8
      %v2737 = vpop.permute.xlu0 %2736
      %2738 = vrot.lane.b32.xlu0 %v1145, 8
      %v2739 = vpop.permute.xlu0 %2738
      %2740 = vrot.lane.b32.xlu0 %v1146, 8
      %v2741 = vpop.permute.xlu0 %2740
      %2742 = vrot.lane.b32.xlu0 %v1147, 8
      %v2743 = vpop.permute.xlu0 %2742
      %2744 = vrot.lane.b32.xlu0 %v1148, 8
      %v2745 = vpop.permute.xlu0 %2744
      %2746 = vrot.lane.b32.xlu0 %v1149, 8
      %v2747 = vpop.permute.xlu0 %2746
      %2748 = vrot.lane.b32.xlu0 %v1150, 8
      %v2749 = vpop.permute.xlu0 %2748
      %2750 = vrot.lane.b32.xlu0 %v1151, 8
      %v2751 = vpop.permute.xlu0 %2750
      %2752 = vrot.lane.b32.xlu0 %v1152, 8
      %v2753 = vpop.permute.xlu0 %2752
      %2754 = vrot.lane.b32.xlu0 %v1153, 8
      %v2755 = vpop.permute.xlu0 %2754
      %2756 = vrot.lane.b32.xlu0 %v1154, 8
      %v2757 = vpop.permute.xlu0 %2756
      %2758 = vrot.lane.b32.xlu0 %v1155, 8
      %v2759 = vpop.permute.xlu0 %2758
      %2760 = vrot.lane.b32.xlu0 %v1156, 8
      %v2761 = vpop.permute.xlu0 %2760
      %2762 = vrot.lane.b32.xlu0 %v1157, 8
      %v2763 = vpop.permute.xlu0 %2762
      %2764 = vrot.lane.b32.xlu0 %v1158, 8
      %v2765 = vpop.permute.xlu0 %2764
      %2766 = vrot.lane.b32.xlu0 %v1159, 8
      %v2767 = vpop.permute.xlu0 %2766
      %2768 = vrot.lane.b32.xlu0 %v1160, 8
      %v2769 = vpop.permute.xlu0 %2768
      %2770 = vrot.lane.b32.xlu0 %v1161, 8
      %v2771 = vpop.permute.xlu0 %2770
      %2772 = vrot.lane.b32.xlu0 %v1162, 8
      %v2773 = vpop.permute.xlu0 %2772
      %2774 = vrot.lane.b32.xlu0 %v1163, 8
      %v2775 = vpop.permute.xlu0 %2774
      %2776 = vrot.lane.b32.xlu0 %v1164, 8
      %v2777 = vpop.permute.xlu0 %2776
      %2778 = vrot.lane.b32.xlu0 %v1165, 8
      %v2779 = vpop.permute.xlu0 %2778
      %2780 = vrot.lane.b32.xlu0 %v1166, 8
      %v2781 = vpop.permute.xlu0 %2780
      %2782 = vrot.lane.b32.xlu0 %v1167, 8
      %v2783 = vpop.permute.xlu0 %2782
      %2784 = vrot.lane.b32.xlu0 %v1168, 8
      %v2785 = vpop.permute.xlu0 %2784
      %2786 = vrot.lane.b32.xlu0 %v1169, 8
      %v2787 = vpop.permute.xlu0 %2786
      %2788 = vrot.lane.b32.xlu0 %v1170, 8
      %v2789 = vpop.permute.xlu0 %2788
      %2790 = vrot.lane.b32.xlu0 %v1171, 8
      %v2791 = vpop.permute.xlu0 %2790
      %2792 = vrot.lane.b32.xlu0 %v1172, 8
      %v2793 = vpop.permute.xlu0 %2792
      %2794 = vrot.lane.b32.xlu0 %v1173, 8
      %v2795 = vpop.permute.xlu0 %2794
      %2796 = vrot.lane.b32.xlu0 %v1174, 8
      %v2797 = vpop.permute.xlu0 %2796
      %2798 = vrot.lane.b32.xlu0 %v1175, 8
      %v2799 = vpop.permute.xlu0 %2798
      %2800 = vrot.lane.b32.xlu0 %v1176, 8
      %v2801 = vpop.permute.xlu0 %2800
      %2802 = vrot.lane.b32.xlu0 %v1177, 8
      %v2803 = vpop.permute.xlu0 %2802
      %2804 = vrot.lane.b32.xlu0 %v1178, 8
      %v2805 = vpop.permute.xlu0 %2804
      %2836 = vrot.lane.b32.xlu0 %v2176, 16
      %v2837 = vpop.permute.xlu0 %2836
      %2838 = vrot.lane.b32.xlu0 %v2179, 16
      %v2839 = vpop.permute.xlu0 %2838
      %2840 = vrot.lane.b32.xlu0 %v2182, 16
      %v2841 = vpop.permute.xlu0 %2840
      %2842 = vrot.lane.b32.xlu0 %v2536, 16
      %v2843 = vpop.permute.xlu0 %2842
      %2844 = vrot.lane.b32.xlu0 %v2187, 16
      %v2845 = vpop.permute.xlu0 %2844
      %2846 = vrot.lane.b32.xlu0 %v2190, 16
      %v2847 = vpop.permute.xlu0 %2846
      %2848 = vrot.lane.b32.xlu0 %v2193, 16
      %v2849 = vpop.permute.xlu0 %2848
      %2850 = vrot.lane.b32.xlu0 %v2537, 16
      %v2851 = vpop.permute.xlu0 %2850
      %2852 = vrot.lane.b32.xlu0 %v2198, 16
      %v2853 = vpop.permute.xlu0 %2852
      %2854 = vrot.lane.b32.xlu0 %v2201, 16
      %v2855 = vpop.permute.xlu0 %2854
      %2856 = vrot.lane.b32.xlu0 %v2204, 16
      %v2857 = vpop.permute.xlu0 %2856
      %2858 = vrot.lane.b32.xlu0 %v2538, 16
      %v2859 = vpop.permute.xlu0 %2858
      %2860 = vrot.lane.b32.xlu0 %v2209, 16
      %v2861 = vpop.permute.xlu0 %2860
      %2862 = vrot.lane.b32.xlu0 %v2212, 16
      %v2863 = vpop.permute.xlu0 %2862
      %2864 = vrot.lane.b32.xlu0 %v2215, 16
      %v2865 = vpop.permute.xlu0 %2864
      %2866 = vrot.lane.b32.xlu0 %v2539, 16
      %v2867 = vpop.permute.xlu0 %2866
      %2868 = vrot.lane.b32.xlu0 %v2220, 16
      %v2869 = vpop.permute.xlu0 %2868
      %2870 = vrot.lane.b32.xlu0 %v2223, 16
      %v2871 = vpop.permute.xlu0 %2870
      %2872 = vrot.lane.b32.xlu0 %v2226, 16
      %v2873 = vpop.permute.xlu0 %2872
      %2874 = vrot.lane.b32.xlu0 %v2540, 16
      %v2875 = vpop.permute.xlu0 %2874
      %2876 = vrot.lane.b32.xlu0 %v2231, 16
      %v2877 = vpop.permute.xlu0 %2876
      %2878 = vrot.lane.b32.xlu0 %v2234, 16
      %v2879 = vpop.permute.xlu0 %2878
      %2880 = vrot.lane.b32.xlu0 %v2237, 16
      %v2881 = vpop.permute.xlu0 %2880
      %2882 = vrot.lane.b32.xlu0 %v2541, 16
      %v2883 = vpop.permute.xlu0 %2882
      %2884 = vrot.lane.b32.xlu0 %v2242, 16
      %v2885 = vpop.permute.xlu0 %2884
      %2886 = vrot.lane.b32.xlu0 %v2245, 16
      %v2887 = vpop.permute.xlu0 %2886
      %2888 = vrot.lane.b32.xlu0 %v2248, 16
      %v2889 = vpop.permute.xlu0 %2888
      %2890 = vrot.lane.b32.xlu0 %v2542, 16
      %v2891 = vpop.permute.xlu0 %2890
      %2892 = vrot.lane.b32.xlu0 %v2253, 16
      %v2893 = vpop.permute.xlu0 %2892
      %2894 = vrot.lane.b32.xlu0 %v2256, 16
      %v2895 = vpop.permute.xlu0 %2894
      %2896 = vrot.lane.b32.xlu0 %v2259, 16
      %v2897 = vpop.permute.xlu0 %2896
      %2898 = vrot.lane.b32.xlu0 %v2543, 16
      %v2899 = vpop.permute.xlu0 %2898
      %2900 = vrot.lane.b32.xlu0 %v2264, 16
      %v2901 = vpop.permute.xlu0 %2900
      %2902 = vrot.lane.b32.xlu0 %v2267, 16
      %v2903 = vpop.permute.xlu0 %2902
      %2904 = vrot.lane.b32.xlu0 %v2270, 16
      %v2905 = vpop.permute.xlu0 %2904
      %2906 = vrot.lane.b32.xlu0 %v2544, 16
      %v2907 = vpop.permute.xlu0 %2906
      %2908 = vrot.lane.b32.xlu0 %v2275, 16
      %v2909 = vpop.permute.xlu0 %2908
      %2910 = vrot.lane.b32.xlu0 %v2278, 16
      %v2911 = vpop.permute.xlu0 %2910
      %2912 = vrot.lane.b32.xlu0 %v2281, 16
      %v2913 = vpop.permute.xlu0 %2912
      %2914 = vrot.lane.b32.xlu0 %v2545, 16
      %v2915 = vpop.permute.xlu0 %2914
      %2916 = vrot.lane.b32.xlu0 %v2286, 16
      %v2917 = vpop.permute.xlu0 %2916
      %2918 = vrot.lane.b32.xlu0 %v2289, 16
      %v2919 = vpop.permute.xlu0 %2918
      %2920 = vrot.lane.b32.xlu0 %v2292, 16
      %v2921 = vpop.permute.xlu0 %2920
      %2922 = vrot.lane.b32.xlu0 %v2546, 16
      %v2923 = vpop.permute.xlu0 %2922
      %2924 = vrot.lane.b32.xlu0 %v2297, 16
      %v2925 = vpop.permute.xlu0 %2924
      %2926 = vrot.lane.b32.xlu0 %v2300, 16
      %v2927 = vpop.permute.xlu0 %2926
      %2928 = vrot.lane.b32.xlu0 %v2303, 16
      %v2929 = vpop.permute.xlu0 %2928
      %2930 = vrot.lane.b32.xlu0 %v2547, 16
      %v2931 = vpop.permute.xlu0 %2930
      %2932 = vrot.lane.b32.xlu0 %v2308, 16
      %v2933 = vpop.permute.xlu0 %2932
      %2934 = vrot.lane.b32.xlu0 %v2311, 16
      %v2935 = vpop.permute.xlu0 %2934
      %2936 = vrot.lane.b32.xlu0 %v2314, 16
      %v2937 = vpop.permute.xlu0 %2936
      %2938 = vrot.lane.b32.xlu0 %v2548, 16
      %v2939 = vpop.permute.xlu0 %2938
      %2940 = vrot.lane.b32.xlu0 %v2319, 16
      %v2941 = vpop.permute.xlu0 %2940
      %2942 = vrot.lane.b32.xlu0 %v2322, 16
      %v2943 = vpop.permute.xlu0 %2942
      %2944 = vrot.lane.b32.xlu0 %v2325, 16
      %v2945 = vpop.permute.xlu0 %2944
      %2946 = vrot.lane.b32.xlu0 %v2549, 16
      %v2947 = vpop.permute.xlu0 %2946
      %2948 = vrot.lane.b32.xlu0 %v2330, 16
      %v2949 = vpop.permute.xlu0 %2948
      %2950 = vrot.lane.b32.xlu0 %v2333, 16
      %v2951 = vpop.permute.xlu0 %2950
      %2952 = vrot.lane.b32.xlu0 %v2336, 16
      %v2953 = vpop.permute.xlu0 %2952
      %2954 = vrot.lane.b32.xlu0 %v2550, 16
      %v2955 = vpop.permute.xlu0 %2954
      %2956 = vrot.lane.b32.xlu0 %v2341, 16
      %v2957 = vpop.permute.xlu0 %2956
      %2958 = vrot.lane.b32.xlu0 %v2344, 16
      %v2959 = vpop.permute.xlu0 %2958
      %2960 = vrot.lane.b32.xlu0 %v2347, 16
      %v2961 = vpop.permute.xlu0 %2960
      %2962 = vrot.lane.b32.xlu0 %v2551, 16
      %v2963 = vpop.permute.xlu0 %2962
      %2964 = vrot.lane.b32.xlu0 %v2352, 16
      %v2965 = vpop.permute.xlu0 %2964
      %2966 = vrot.lane.b32.xlu0 %v2355, 16
      %v2967 = vpop.permute.xlu0 %2966
      %2968 = vrot.lane.b32.xlu0 %v2358, 16
      %v2969 = vpop.permute.xlu0 %2968
      %2970 = vrot.lane.b32.xlu0 %v2552, 16
      %v2971 = vpop.permute.xlu0 %2970
      %2972 = vrot.lane.b32.xlu0 %v2363, 16
      %v2973 = vpop.permute.xlu0 %2972
      %2974 = vrot.lane.b32.xlu0 %v2366, 16
      %v2975 = vpop.permute.xlu0 %2974
      %2976 = vrot.lane.b32.xlu0 %v2369, 16
      %v2977 = vpop.permute.xlu0 %2976
      %2978 = vrot.lane.b32.xlu0 %v2553, 16
      %v2979 = vpop.permute.xlu0 %2978
      %2980 = vrot.lane.b32.xlu0 %v2374, 16
      %v2981 = vpop.permute.xlu0 %2980
      %2982 = vrot.lane.b32.xlu0 %v2377, 16
      %v2983 = vpop.permute.xlu0 %2982
      %2984 = vrot.lane.b32.xlu0 %v2380, 16
      %v2985 = vpop.permute.xlu0 %2984
      %2986 = vrot.lane.b32.xlu0 %v2554, 16
      %v2987 = vpop.permute.xlu0 %2986
      %2988 = vrot.lane.b32.xlu0 %v2385, 16
      %v2989 = vpop.permute.xlu0 %2988
      %2990 = vrot.lane.b32.xlu0 %v2388, 16
      %v2991 = vpop.permute.xlu0 %2990
      %2992 = vrot.lane.b32.xlu0 %v2391, 16
      %v2993 = vpop.permute.xlu0 %2992
      %2994 = vrot.lane.b32.xlu0 %v2555, 16
      %v2995 = vpop.permute.xlu0 %2994
      %2996 = vrot.lane.b32.xlu0 %v2396, 16
      %v2997 = vpop.permute.xlu0 %2996
      %2998 = vrot.lane.b32.xlu0 %v2399, 16
      %v2999 = vpop.permute.xlu0 %2998
      %3000 = vrot.lane.b32.xlu0 %v2402, 16
      %v3001 = vpop.permute.xlu0 %3000
      %3002 = vrot.lane.b32.xlu0 %v2556, 16
      %v3003 = vpop.permute.xlu0 %3002
      %3004 = vrot.lane.b32.xlu0 %v2407, 16
      %v3005 = vpop.permute.xlu0 %3004
      %3006 = vrot.lane.b32.xlu0 %v2410, 16
      %v3007 = vpop.permute.xlu0 %3006
      %3008 = vrot.lane.b32.xlu0 %v2413, 16
      %v3009 = vpop.permute.xlu0 %3008
      %3010 = vrot.lane.b32.xlu0 %v2557, 16
      %v3011 = vpop.permute.xlu0 %3010
      %3012 = vrot.lane.b32.xlu0 %v2418, 16
      %v3013 = vpop.permute.xlu0 %3012
      %3014 = vrot.lane.b32.xlu0 %v2421, 16
      %v3015 = vpop.permute.xlu0 %3014
      %3016 = vrot.lane.b32.xlu0 %v2424, 16
      %v3017 = vpop.permute.xlu0 %3016
      %3018 = vrot.lane.b32.xlu0 %v2558, 16
      %v3019 = vpop.permute.xlu0 %3018
      %3020 = vrot.lane.b32.xlu0 %v2429, 16
      %v3021 = vpop.permute.xlu0 %3020
      %3022 = vrot.lane.b32.xlu0 %v2432, 16
      %v3023 = vpop.permute.xlu0 %3022
      %3024 = vrot.lane.b32.xlu0 %v2435, 16
      %v3025 = vpop.permute.xlu0 %3024
      %3026 = vrot.lane.b32.xlu0 %v2559, 16
      %v3027 = vpop.permute.xlu0 %3026
      %3028 = vrot.lane.b32.xlu0 %v2440, 16
      %v3029 = vpop.permute.xlu0 %3028
      %3030 = vrot.lane.b32.xlu0 %v2443, 16
      %v3031 = vpop.permute.xlu0 %3030
      %3032 = vrot.lane.b32.xlu0 %v2446, 16
      %v3033 = vpop.permute.xlu0 %3032
      %3034 = vrot.lane.b32.xlu0 %v2560, 16
      %v3035 = vpop.permute.xlu0 %3034
      %3036 = vrot.lane.b32.xlu0 %v2451, 16
      %v3037 = vpop.permute.xlu0 %3036
      %3038 = vrot.lane.b32.xlu0 %v2454, 16
      %v3039 = vpop.permute.xlu0 %3038
      %3040 = vrot.lane.b32.xlu0 %v2457, 16
      %v3041 = vpop.permute.xlu0 %3040
      %3042 = vrot.lane.b32.xlu0 %v2561, 16
      %v3043 = vpop.permute.xlu0 %3042
      %3044 = vrot.lane.b32.xlu0 %v2462, 16
      %v3045 = vpop.permute.xlu0 %3044
      %3046 = vrot.lane.b32.xlu0 %v2465, 16
      %v3047 = vpop.permute.xlu0 %3046
      %3048 = vrot.lane.b32.xlu0 %v2468, 16
      %v3049 = vpop.permute.xlu0 %3048
      %3050 = vrot.lane.b32.xlu0 %v2562, 16
      %v3051 = vpop.permute.xlu0 %3050
      %3052 = vrot.lane.b32.xlu0 %v2473, 16
      %v3053 = vpop.permute.xlu0 %3052
      %3054 = vrot.lane.b32.xlu0 %v2476, 16
      %v3055 = vpop.permute.xlu0 %3054
      %3056 = vrot.lane.b32.xlu0 %v2479, 16
      %v3057 = vpop.permute.xlu0 %3056
      %3058 = vrot.lane.b32.xlu0 %v2563, 16
      %v3059 = vpop.permute.xlu0 %3058
      %3060 = vrot.lane.b32.xlu0 %v2484, 16
      %v3061 = vpop.permute.xlu0 %3060
      %3062 = vrot.lane.b32.xlu0 %v2487, 16
      %v3063 = vpop.permute.xlu0 %3062
      %3064 = vrot.lane.b32.xlu0 %v2490, 16
      %v3065 = vpop.permute.xlu0 %3064
      %3066 = vrot.lane.b32.xlu0 %v2564, 16
      %v3067 = vpop.permute.xlu0 %3066
      %3068 = vrot.lane.b32.xlu0 %v2495, 16
      %v3069 = vpop.permute.xlu0 %3068
      %3070 = vrot.lane.b32.xlu0 %v2498, 16
      %v3071 = vpop.permute.xlu0 %3070
      %3072 = vrot.lane.b32.xlu0 %v2501, 16
      %v3073 = vpop.permute.xlu0 %3072
      %3074 = vrot.lane.b32.xlu0 %v2565, 16
      %v3075 = vpop.permute.xlu0 %3074
      %vm3076 = vcmask 64512
      %v3079 = vsel %vm3076, %v2142, %v2567
      %v3082 = vsel %vm3076, %v1194, %v2569
      %v3085 = vsel %vm3076, %v1202, %v2571
      %v3088 = vsel %vm3076, %v1210, %v2573
      %v3091 = vsel %vm3076, %v2143, %v2575
      %v3094 = vsel %vm3076, %v1225, %v2577
      %v3097 = vsel %vm3076, %v1233, %v2579
      %v3100 = vsel %vm3076, %v1241, %v2581
      %v3103 = vsel %vm3076, %v2144, %v2583
      %v3106 = vsel %vm3076, %v1256, %v2585
      %v3109 = vsel %vm3076, %v1264, %v2587
      %v3112 = vsel %vm3076, %v1272, %v2589
      %v3115 = vsel %vm3076, %v2145, %v2591
      %v3118 = vsel %vm3076, %v1287, %v2593
      %v3121 = vsel %vm3076, %v1295, %v2595
      %v3124 = vsel %vm3076, %v1303, %v2597
      %v3127 = vsel %vm3076, %v2146, %v2599
      %v3130 = vsel %vm3076, %v1318, %v2601
      %v3133 = vsel %vm3076, %v1326, %v2603
      %v3136 = vsel %vm3076, %v1334, %v2605
      %v3139 = vsel %vm3076, %v2147, %v2607
      %v3142 = vsel %vm3076, %v1349, %v2609
      %v3145 = vsel %vm3076, %v1357, %v2611
      %v3148 = vsel %vm3076, %v1365, %v2613
      %v3151 = vsel %vm3076, %v2148, %v2615
      %v3154 = vsel %vm3076, %v1380, %v2617
      %v3157 = vsel %vm3076, %v1388, %v2619
      %v3160 = vsel %vm3076, %v1396, %v2621
      %v3163 = vsel %vm3076, %v2149, %v2623
      %v3166 = vsel %vm3076, %v1411, %v2625
      %v3169 = vsel %vm3076, %v1419, %v2627
      %v3172 = vsel %vm3076, %v1427, %v2629
      %v3175 = vsel %vm3076, %v2150, %v2631
      %v3178 = vsel %vm3076, %v1442, %v2633
      %v3181 = vsel %vm3076, %v1450, %v2635
      %v3184 = vsel %vm3076, %v1458, %v2637
      %v3187 = vsel %vm3076, %v2151, %v2639
      %v3190 = vsel %vm3076, %v1473, %v2641
      %v3193 = vsel %vm3076, %v1481, %v2643
      %v3196 = vsel %vm3076, %v1489, %v2645
      %v3199 = vsel %vm3076, %v2152, %v2647
      %v3202 = vsel %vm3076, %v1504, %v2649
      %v3205 = vsel %vm3076, %v1512, %v2651
      %v3208 = vsel %vm3076, %v1520, %v2653
      %v3211 = vsel %vm3076, %v2153, %v2655
      %v3214 = vsel %vm3076, %v1535, %v2657
      %v3217 = vsel %vm3076, %v1543, %v2659
      %v3220 = vsel %vm3076, %v1551, %v2661
      %v3223 = vsel %vm3076, %v2154, %v2663
      %v3226 = vsel %vm3076, %v1566, %v2665
      %v3229 = vsel %vm3076, %v1574, %v2667
      %v3232 = vsel %vm3076, %v1582, %v2669
      %v3235 = vsel %vm3076, %v2155, %v2671
      %v3238 = vsel %vm3076, %v1597, %v2673
      %v3241 = vsel %vm3076, %v1605, %v2675
      %v3244 = vsel %vm3076, %v1613, %v2677
      %v3247 = vsel %vm3076, %v2156, %v2679
      %v3250 = vsel %vm3076, %v1628, %v2681
      %v3253 = vsel %vm3076, %v1636, %v2683
      %v3256 = vsel %vm3076, %v1644, %v2685
      %v3259 = vsel %vm3076, %v2157, %v2687
      %v3262 = vsel %vm3076, %v1659, %v2689
      %v3265 = vsel %vm3076, %v1667, %v2691
      %v3268 = vsel %vm3076, %v1675, %v2693
      %v3271 = vsel %vm3076, %v2158, %v2695
      %v3274 = vsel %vm3076, %v1690, %v2697
      %v3277 = vsel %vm3076, %v1698, %v2699
      %v3280 = vsel %vm3076, %v1706, %v2701
      %v3283 = vsel %vm3076, %v2159, %v2703
      %v3286 = vsel %vm3076, %v1721, %v2705
      %v3289 = vsel %vm3076, %v1729, %v2707
      %v3292 = vsel %vm3076, %v1737, %v2709
      %v3295 = vsel %vm3076, %v2160, %v2711
      %v3298 = vsel %vm3076, %v1752, %v2713
      %v3301 = vsel %vm3076, %v1760, %v2715
      %v3304 = vsel %vm3076, %v1768, %v2717
      %v3307 = vsel %vm3076, %v2161, %v2719
      %v3310 = vsel %vm3076, %v1783, %v2721
      %v3313 = vsel %vm3076, %v1791, %v2723
      %v3316 = vsel %vm3076, %v1799, %v2725
      %v3319 = vsel %vm3076, %v2162, %v2727
      %v3322 = vsel %vm3076, %v1814, %v2729
      %v3325 = vsel %vm3076, %v1822, %v2731
      %v3328 = vsel %vm3076, %v1830, %v2733
      %v3331 = vsel %vm3076, %v2163, %v2735
      %v3334 = vsel %vm3076, %v1845, %v2737
      %v3337 = vsel %vm3076, %v1853, %v2739
      %v3340 = vsel %vm3076, %v1861, %v2741
      %v3343 = vsel %vm3076, %v2164, %v2743
      %v3346 = vsel %vm3076, %v1876, %v2745
      %v3349 = vsel %vm3076, %v1884, %v2747
      %v3352 = vsel %vm3076, %v1892, %v2749
      %v3355 = vsel %vm3076, %v2165, %v2751
      %v3358 = vsel %vm3076, %v1907, %v2753
      %v3361 = vsel %vm3076, %v1915, %v2755
      %v3364 = vsel %vm3076, %v1923, %v2757
      %v3367 = vsel %vm3076, %v2166, %v2759
      %v3370 = vsel %vm3076, %v1938, %v2761
      %v3373 = vsel %vm3076, %v1946, %v2763
      %v3376 = vsel %vm3076, %v1954, %v2765
      %v3379 = vsel %vm3076, %v2167, %v2767
      %v3382 = vsel %vm3076, %v1969, %v2769
      %v3385 = vsel %vm3076, %v1977, %v2771
      %v3388 = vsel %vm3076, %v1985, %v2773
      %v3391 = vsel %vm3076, %v2168, %v2775
      %v3394 = vsel %vm3076, %v2000, %v2777
      %v3397 = vsel %vm3076, %v2008, %v2779
      %v3400 = vsel %vm3076, %v2016, %v2781
      %v3403 = vsel %vm3076, %v2169, %v2783
      %v3406 = vsel %vm3076, %v2031, %v2785
      %v3409 = vsel %vm3076, %v2039, %v2787
      %v3412 = vsel %vm3076, %v2047, %v2789
      %v3415 = vsel %vm3076, %v2170, %v2791
      %v3418 = vsel %vm3076, %v2062, %v2793
      %v3421 = vsel %vm3076, %v2070, %v2795
      %v3424 = vsel %vm3076, %v2078, %v2797
      %v3427 = vsel %vm3076, %v2171, %v2799
      %v3430 = vsel %vm3076, %v2093, %v2801
      %v3433 = vsel %vm3076, %v2101, %v2803
      %v3436 = vsel %vm3076, %v2109, %v2805
      %vm3437 = vcmask 130048
      %v3439 = vsel %vm3437, %v3079, %v2837
      %v3441 = vsel %vm3437, %v3082, %v2839
      %v3443 = vsel %vm3437, %v3085, %v2841
      %v3445 = vsel %vm3437, %v3088, %v2843
      %v3447 = vsel %vm3437, %v3091, %v2845
      %v3449 = vsel %vm3437, %v3094, %v2847
      %v3451 = vsel %vm3437, %v3097, %v2849
      %v3453 = vsel %vm3437, %v3100, %v2851
      %v3455 = vsel %vm3437, %v3103, %v2853
      %v3457 = vsel %vm3437, %v3106, %v2855
      %v3459 = vsel %vm3437, %v3109, %v2857
      %v3461 = vsel %vm3437, %v3112, %v2859
      %v3463 = vsel %vm3437, %v3115, %v2861
      %v3465 = vsel %vm3437, %v3118, %v2863
      %v3467 = vsel %vm3437, %v3121, %v2865
      %v3469 = vsel %vm3437, %v3124, %v2867
      %v3471 = vsel %vm3437, %v3127, %v2869
      %v3473 = vsel %vm3437, %v3130, %v2871
      %v3475 = vsel %vm3437, %v3133, %v2873
      %v3477 = vsel %vm3437, %v3136, %v2875
      %v3479 = vsel %vm3437, %v3139, %v2877
      %v3481 = vsel %vm3437, %v3142, %v2879
      %v3483 = vsel %vm3437, %v3145, %v2881
      %v3485 = vsel %vm3437, %v3148, %v2883
      %v3487 = vsel %vm3437, %v3151, %v2885
      %v3489 = vsel %vm3437, %v3154, %v2887
      %v3491 = vsel %vm3437, %v3157, %v2889
      %v3493 = vsel %vm3437, %v3160, %v2891
      %v3495 = vsel %vm3437, %v3163, %v2893
      %v3497 = vsel %vm3437, %v3166, %v2895
      %v3499 = vsel %vm3437, %v3169, %v2897
      %v3501 = vsel %vm3437, %v3172, %v2899
      %v3503 = vsel %vm3437, %v3175, %v2901
      %v3505 = vsel %vm3437, %v3178, %v2903
      %v3507 = vsel %vm3437, %v3181, %v2905
      %v3509 = vsel %vm3437, %v3184, %v2907
      %v3511 = vsel %vm3437, %v3187, %v2909
      %v3513 = vsel %vm3437, %v3190, %v2911
      %v3515 = vsel %vm3437, %v3193, %v2913
      %v3517 = vsel %vm3437, %v3196, %v2915
      %v3519 = vsel %vm3437, %v3199, %v2917
      %v3521 = vsel %vm3437, %v3202, %v2919
      %v3523 = vsel %vm3437, %v3205, %v2921
      %v3525 = vsel %vm3437, %v3208, %v2923
      %v3527 = vsel %vm3437, %v3211, %v2925
      %v3529 = vsel %vm3437, %v3214, %v2927
      %v3531 = vsel %vm3437, %v3217, %v2929
      %v3533 = vsel %vm3437, %v3220, %v2931
      %v3535 = vsel %vm3437, %v3223, %v2933
      %v3537 = vsel %vm3437, %v3226, %v2935
      %v3539 = vsel %vm3437, %v3229, %v2937
      %v3541 = vsel %vm3437, %v3232, %v2939
      %v3543 = vsel %vm3437, %v3235, %v2941
      %v3545 = vsel %vm3437, %v3238, %v2943
      %v3547 = vsel %vm3437, %v3241, %v2945
      %v3549 = vsel %vm3437, %v3244, %v2947
      %v3551 = vsel %vm3437, %v3247, %v2949
      %v3553 = vsel %vm3437, %v3250, %v2951
      %v3555 = vsel %vm3437, %v3253, %v2953
      %v3557 = vsel %vm3437, %v3256, %v2955
      %v3559 = vsel %vm3437, %v3259, %v2957
      %v3561 = vsel %vm3437, %v3262, %v2959
      %v3563 = vsel %vm3437, %v3265, %v2961
      %v3565 = vsel %vm3437, %v3268, %v2963
      %v3567 = vsel %vm3437, %v3271, %v2965
      %v3569 = vsel %vm3437, %v3274, %v2967
      %v3571 = vsel %vm3437, %v3277, %v2969
      %v3573 = vsel %vm3437, %v3280, %v2971
      %v3575 = vsel %vm3437, %v3283, %v2973
      %v3577 = vsel %vm3437, %v3286, %v2975
      %v3579 = vsel %vm3437, %v3289, %v2977
      %v3581 = vsel %vm3437, %v3292, %v2979
      %v3583 = vsel %vm3437, %v3295, %v2981
      %v3585 = vsel %vm3437, %v3298, %v2983
      %v3587 = vsel %vm3437, %v3301, %v2985
      %v3589 = vsel %vm3437, %v3304, %v2987
      %v3591 = vsel %vm3437, %v3307, %v2989
      %v3593 = vsel %vm3437, %v3310, %v2991
      %v3595 = vsel %vm3437, %v3313, %v2993
      %v3597 = vsel %vm3437, %v3316, %v2995
      %v3599 = vsel %vm3437, %v3319, %v2997
      %v3601 = vsel %vm3437, %v3322, %v2999
      %v3603 = vsel %vm3437, %v3325, %v3001
      %v3605 = vsel %vm3437, %v3328, %v3003
      %v3607 = vsel %vm3437, %v3331, %v3005
      %v3609 = vsel %vm3437, %v3334, %v3007
      %v3611 = vsel %vm3437, %v3337, %v3009
      %v3613 = vsel %vm3437, %v3340, %v3011
      %v3615 = vsel %vm3437, %v3343, %v3013
      %v3617 = vsel %vm3437, %v3346, %v3015
      %v3619 = vsel %vm3437, %v3349, %v3017
      %v3621 = vsel %vm3437, %v3352, %v3019
      %v3623 = vsel %vm3437, %v3355, %v3021
      %v3625 = vsel %vm3437, %v3358, %v3023
      %v3627 = vsel %vm3437, %v3361, %v3025
      %v3629 = vsel %vm3437, %v3364, %v3027
      %v3631 = vsel %vm3437, %v3367, %v3029
      %v3633 = vsel %vm3437, %v3370, %v3031
      %v3635 = vsel %vm3437, %v3373, %v3033
      %v3637 = vsel %vm3437, %v3376, %v3035
      %v3639 = vsel %vm3437, %v3379, %v3037
      %v3641 = vsel %vm3437, %v3382, %v3039
      %v3643 = vsel %vm3437, %v3385, %v3041
      %v3645 = vsel %vm3437, %v3388, %v3043
      %v3647 = vsel %vm3437, %v3391, %v3045
      %v3649 = vsel %vm3437, %v3394, %v3047
      %v3651 = vsel %vm3437, %v3397, %v3049
      %v3653 = vsel %vm3437, %v3400, %v3051
      %v3655 = vsel %vm3437, %v3403, %v3053
      %v3657 = vsel %vm3437, %v3406, %v3055
      %v3659 = vsel %vm3437, %v3409, %v3057
      %v3661 = vsel %vm3437, %v3412, %v3059
      %v3663 = vsel %vm3437, %v3415, %v3061
      %v3665 = vsel %vm3437, %v3418, %v3063
      %v3667 = vsel %vm3437, %v3421, %v3065
      %v3669 = vsel %vm3437, %v3424, %v3067
      %v3671 = vsel %vm3437, %v3427, %v3069
      %v3673 = vsel %vm3437, %v3430, %v3071
      %v3675 = vsel %vm3437, %v3433, %v3073
      %v3677 = vsel %vm3437, %v3436, %v3075
      %v3790 = vunpack.c.l.b16 %v3439
      %v3791 = vunpack.c.h.b16 %v3439
      %v3792 = vunpack.c.l.b16 %v3441
      %v3793 = vunpack.c.h.b16 %v3441
      %v3794 = vunpack.c.l.b16 %v3443
      %v3795 = vunpack.c.h.b16 %v3443
      %v3796 = vunpack.c.l.b16 %v3445
      %v3797 = vunpack.c.l.b16 %v3447
      %v3798 = vunpack.c.h.b16 %v3447
      %v3799 = vunpack.c.l.b16 %v3449
      %v3800 = vunpack.c.h.b16 %v3449
      %v3801 = vunpack.c.l.b16 %v3451
      %v3802 = vunpack.c.h.b16 %v3451
      %v3803 = vunpack.c.l.b16 %v3453
      %v3804 = vunpack.c.l.b16 %v3455
      %v3805 = vunpack.c.h.b16 %v3455
      %v3806 = vunpack.c.l.b16 %v3457
      %v3807 = vunpack.c.h.b16 %v3457
      %v3808 = vunpack.c.l.b16 %v3459
      %v3809 = vunpack.c.h.b16 %v3459
      %v3810 = vunpack.c.l.b16 %v3461
      %v3811 = vunpack.c.l.b16 %v3463
      %v3812 = vunpack.c.h.b16 %v3463
      %v3813 = vunpack.c.l.b16 %v3465
      %v3814 = vunpack.c.h.b16 %v3465
      %v3815 = vunpack.c.l.b16 %v3467
      %v3816 = vunpack.c.h.b16 %v3467
      %v3817 = vunpack.c.l.b16 %v3469
      %v3818 = vunpack.c.l.b16 %v3471
      %v3819 = vunpack.c.h.b16 %v3471
      %v3820 = vunpack.c.l.b16 %v3473
      %v3821 = vunpack.c.h.b16 %v3473
      %v3822 = vunpack.c.l.b16 %v3475
      %v3823 = vunpack.c.h.b16 %v3475
      %v3824 = vunpack.c.l.b16 %v3477
      %v3825 = vunpack.c.l.b16 %v3479
      %v3826 = vunpack.c.h.b16 %v3479
      %v3827 = vunpack.c.l.b16 %v3481
      %v3828 = vunpack.c.h.b16 %v3481
      %v3829 = vunpack.c.l.b16 %v3483
      %v3830 = vunpack.c.h.b16 %v3483
      %v3831 = vunpack.c.l.b16 %v3485
      %v3832 = vunpack.c.l.b16 %v3487
      %v3833 = vunpack.c.h.b16 %v3487
      %v3834 = vunpack.c.l.b16 %v3489
      %v3835 = vunpack.c.h.b16 %v3489
      %v3836 = vunpack.c.l.b16 %v3491
      %v3837 = vunpack.c.h.b16 %v3491
      %v3838 = vunpack.c.l.b16 %v3493
      %v3839 = vunpack.c.l.b16 %v3495
      %v3840 = vunpack.c.h.b16 %v3495
      %v3841 = vunpack.c.l.b16 %v3497
      %v3842 = vunpack.c.h.b16 %v3497
      %v3843 = vunpack.c.l.b16 %v3499
      %v3844 = vunpack.c.h.b16 %v3499
      %v3845 = vunpack.c.l.b16 %v3501
      %v3846 = vunpack.c.l.b16 %v3503
      %v3847 = vunpack.c.h.b16 %v3503
      %v3848 = vunpack.c.l.b16 %v3505
      %v3849 = vunpack.c.h.b16 %v3505
      %v3850 = vunpack.c.l.b16 %v3507
      %v3851 = vunpack.c.h.b16 %v3507
      %v3852 = vunpack.c.l.b16 %v3509
      %v3853 = vunpack.c.l.b16 %v3511
      %v3854 = vunpack.c.h.b16 %v3511
      %v3855 = vunpack.c.l.b16 %v3513
      %v3856 = vunpack.c.h.b16 %v3513
      %v3857 = vunpack.c.l.b16 %v3515
      %v3858 = vunpack.c.h.b16 %v3515
      %v3859 = vunpack.c.l.b16 %v3517
      %v3860 = vunpack.c.l.b16 %v3519
      %v3861 = vunpack.c.h.b16 %v3519
      %v3862 = vunpack.c.l.b16 %v3521
      %v3863 = vunpack.c.h.b16 %v3521
      %v3864 = vunpack.c.l.b16 %v3523
      %v3865 = vunpack.c.h.b16 %v3523
      %v3866 = vunpack.c.l.b16 %v3525
      %v3867 = vunpack.c.l.b16 %v3527
      %v3868 = vunpack.c.h.b16 %v3527
      %v3869 = vunpack.c.l.b16 %v3529
      %v3870 = vunpack.c.h.b16 %v3529
      %v3871 = vunpack.c.l.b16 %v3531
      %v3872 = vunpack.c.h.b16 %v3531
      %v3873 = vunpack.c.l.b16 %v3533
      %v3874 = vunpack.c.l.b16 %v3535
      %v3875 = vunpack.c.h.b16 %v3535
      %v3876 = vunpack.c.l.b16 %v3537
      %v3877 = vunpack.c.h.b16 %v3537
      %v3878 = vunpack.c.l.b16 %v3539
      %v3879 = vunpack.c.h.b16 %v3539
      %v3880 = vunpack.c.l.b16 %v3541
      %v3881 = vunpack.c.l.b16 %v3543
      %v3882 = vunpack.c.h.b16 %v3543
      %v3883 = vunpack.c.l.b16 %v3545
      %v3884 = vunpack.c.h.b16 %v3545
      %v3885 = vunpack.c.l.b16 %v3547
      %v3886 = vunpack.c.h.b16 %v3547
      %v3887 = vunpack.c.l.b16 %v3549
      %v3888 = vunpack.c.l.b16 %v3551
      %v3889 = vunpack.c.h.b16 %v3551
      %v3890 = vunpack.c.l.b16 %v3553
      %v3891 = vunpack.c.h.b16 %v3553
      %v3892 = vunpack.c.l.b16 %v3555
      %v3893 = vunpack.c.h.b16 %v3555
      %v3894 = vunpack.c.l.b16 %v3557
      %v3895 = vunpack.c.l.b16 %v3559
      %v3896 = vunpack.c.h.b16 %v3559
      %v3897 = vunpack.c.l.b16 %v3561
      %v3898 = vunpack.c.h.b16 %v3561
      %v3899 = vunpack.c.l.b16 %v3563
      %v3900 = vunpack.c.h.b16 %v3563
      %v3901 = vunpack.c.l.b16 %v3565
      %v3902 = vunpack.c.l.b16 %v3567
      %v3903 = vunpack.c.h.b16 %v3567
      %v3904 = vunpack.c.l.b16 %v3569
      %v3905 = vunpack.c.h.b16 %v3569
      %v3906 = vunpack.c.l.b16 %v3571
      %v3907 = vunpack.c.h.b16 %v3571
      %v3908 = vunpack.c.l.b16 %v3573
      %v3909 = vunpack.c.l.b16 %v3575
      %v3910 = vunpack.c.h.b16 %v3575
      %v3911 = vunpack.c.l.b16 %v3577
      %v3912 = vunpack.c.h.b16 %v3577
      %v3913 = vunpack.c.l.b16 %v3579
      %v3914 = vunpack.c.h.b16 %v3579
      %v3915 = vunpack.c.l.b16 %v3581
      %v3916 = vunpack.c.l.b16 %v3583
      %v3917 = vunpack.c.h.b16 %v3583
      %v3918 = vunpack.c.l.b16 %v3585
      %v3919 = vunpack.c.h.b16 %v3585
      %v3920 = vunpack.c.l.b16 %v3587
      %v3921 = vunpack.c.h.b16 %v3587
      %v3922 = vunpack.c.l.b16 %v3589
      %v3923 = vunpack.c.l.b16 %v3591
      %v3924 = vunpack.c.h.b16 %v3591
      %v3925 = vunpack.c.l.b16 %v3593
      %v3926 = vunpack.c.h.b16 %v3593
      %v3927 = vunpack.c.l.b16 %v3595
      %v3928 = vunpack.c.h.b16 %v3595
      %v3929 = vunpack.c.l.b16 %v3597
      %v3930 = vunpack.c.l.b16 %v3599
      %v3931 = vunpack.c.h.b16 %v3599
      %v3932 = vunpack.c.l.b16 %v3601
      %v3933 = vunpack.c.h.b16 %v3601
      %v3934 = vunpack.c.l.b16 %v3603
      %v3935 = vunpack.c.h.b16 %v3603
      %v3936 = vunpack.c.l.b16 %v3605
      %v3937 = vunpack.c.l.b16 %v3607
      %v3938 = vunpack.c.h.b16 %v3607
      %v3939 = vunpack.c.l.b16 %v3609
      %v3940 = vunpack.c.h.b16 %v3609
      %v3941 = vunpack.c.l.b16 %v3611
      %v3942 = vunpack.c.h.b16 %v3611
      %v3943 = vunpack.c.l.b16 %v3613
      %v3944 = vunpack.c.l.b16 %v3615
      %v3945 = vunpack.c.h.b16 %v3615
      %v3946 = vunpack.c.l.b16 %v3617
      %v3947 = vunpack.c.h.b16 %v3617
      %v3948 = vunpack.c.l.b16 %v3619
      %v3949 = vunpack.c.h.b16 %v3619
      %v3950 = vunpack.c.l.b16 %v3621
      %v3951 = vunpack.c.l.b16 %v3623
      %v3952 = vunpack.c.h.b16 %v3623
      %v3953 = vunpack.c.l.b16 %v3625
      %v3954 = vunpack.c.h.b16 %v3625
      %v3955 = vunpack.c.l.b16 %v3627
      %v3956 = vunpack.c.h.b16 %v3627
      %v3957 = vunpack.c.l.b16 %v3629
      %v3958 = vunpack.c.l.b16 %v3631
      %v3959 = vunpack.c.h.b16 %v3631
      %v3960 = vunpack.c.l.b16 %v3633
      %v3961 = vunpack.c.h.b16 %v3633
      %v3962 = vunpack.c.l.b16 %v3635
      %v3963 = vunpack.c.h.b16 %v3635
      %v3964 = vunpack.c.l.b16 %v3637
      %v3965 = vunpack.c.l.b16 %v3639
      %v3966 = vunpack.c.h.b16 %v3639
      %v3967 = vunpack.c.l.b16 %v3641
      %v3968 = vunpack.c.h.b16 %v3641
      %v3969 = vunpack.c.l.b16 %v3643
      %v3970 = vunpack.c.h.b16 %v3643
      %v3971 = vunpack.c.l.b16 %v3645
      %v3972 = vunpack.c.l.b16 %v3647
      %v3973 = vunpack.c.h.b16 %v3647
      %v3974 = vunpack.c.l.b16 %v3649
      %v3975 = vunpack.c.h.b16 %v3649
      %v3976 = vunpack.c.l.b16 %v3651
      %v3977 = vunpack.c.h.b16 %v3651
      %v3978 = vunpack.c.l.b16 %v3653
      %v3979 = vunpack.c.l.b16 %v3655
      %v3980 = vunpack.c.h.b16 %v3655
      %v3981 = vunpack.c.l.b16 %v3657
      %v3982 = vunpack.c.h.b16 %v3657
      %v3983 = vunpack.c.l.b16 %v3659
      %v3984 = vunpack.c.h.b16 %v3659
      %v3985 = vunpack.c.l.b16 %v3661
      %v3986 = vld [vmem:[%s366] sm:$0xf]
      %v3987 = vld [vmem:[%s366 + $0x4] sm:$0xf]
      %v3988 = vld [vmem:[%s366 + $0x8] sm:$0xf]
      %v3993 = vunpack.c.l.b16 %v3663
      %v3994 = vunpack.c.h.b16 %v3663
      %v3995 = vunpack.c.l.b16 %v3665
      %v3996 = vunpack.c.h.b16 %v3665
      %v3997 = vunpack.c.l.b16 %v3667
      %v3998 = vunpack.c.h.b16 %v3667
      %v3999 = vunpack.c.l.b16 %v3669
      %s4000 = scalar_lea.vmem %s366, 12
      %v4001 = vld [vmem:[%s4000] sm:$0xf]
      %v4002 = vld [vmem:[%s4000 + $0x4] sm:$0xf]
      %v4003 = vld [vmem:[%s4000 + $0x8] sm:$0xf]
      %v4004 = vpack.c.b16 %v3798, %v3797
      %v4005 = vpack.c.b16 %v3800, %v3799
      %v4006 = vpack.c.b16 %v3802, %v3801
      %v4007 = vpack.c.b16 %v3804, %v3803
      %v4008 = vpack.c.b16 %v3806, %v3805
      %v4009 = vpack.c.b16 %v3808, %v3807
      %v4010 = vpack.c.b16 %v3810, %v3809
      %v4011 = vpack.c.b16 %v3812, %v3811
      %v4012 = vpack.c.b16 %v3814, %v3813
      %v4013 = vpack.c.b16 %v3816, %v3815
      %v4014 = vpack.c.b16 %v3818, %v3817
      %v4015 = vpack.c.b16 %v3820, %v3819
      %v4016 = vpack.c.b16 %v3822, %v3821
      %v4017 = vpack.c.b16 %v3824, %v3823
      %v4018 = vpack.c.b16 %v3826, %v3825
      %v4019 = vpack.c.b16 %v3828, %v3827
      %v4020 = vpack.c.b16 %v3830, %v3829
      %v4021 = vpack.c.b16 %v3832, %v3831
      %v4022 = vpack.c.b16 %v3834, %v3833
      %v4023 = vpack.c.b16 %v3836, %v3835
      %v4024 = vpack.c.b16 %v3838, %v3837
      %v4025 = vpack.c.b16 %v3840, %v3839
      %v4026 = vpack.c.b16 %v3842, %v3841
      %v4027 = vpack.c.b16 %v3844, %v3843
      %v4028 = vpack.c.b16 %v3846, %v3845
      %v4029 = vpack.c.b16 %v3848, %v3847
      %v4030 = vpack.c.b16 %v3850, %v3849
      %v4031 = vpack.c.b16 %v3852, %v3851
      %v4032 = vpack.c.b16 %v3854, %v3853
      %v4033 = vpack.c.b16 %v3856, %v3855
      %v4034 = vpack.c.b16 %v3858, %v3857
      %v4035 = vpack.c.b16 %v3860, %v3859
      %v4036 = vpack.c.b16 %v3862, %v3861
      %v4037 = vpack.c.b16 %v3864, %v3863
      %v4038 = vpack.c.b16 %v3866, %v3865
      %v4039 = vpack.c.b16 %v3868, %v3867
      %v4040 = vpack.c.b16 %v3870, %v3869
      %v4041 = vpack.c.b16 %v3872, %v3871
      %v4042 = vpack.c.b16 %v3874, %v3873
      %v4043 = vpack.c.b16 %v3876, %v3875
      %v4044 = vpack.c.b16 %v3878, %v3877
      %v4045 = vpack.c.b16 %v3880, %v3879
      %v4046 = vpack.c.b16 %v3882, %v3881
      %v4047 = vpack.c.b16 %v3884, %v3883
      %v4048 = vpack.c.b16 %v3886, %v3885
      %v4049 = vpack.c.b16 %v3888, %v3887
      %v4050 = vpack.c.b16 %v3890, %v3889
      %v4051 = vpack.c.b16 %v3892, %v3891
      %v4052 = vpack.c.b16 %v3894, %v3893
      %v4053 = vpack.c.b16 %v3896, %v3895
      %v4054 = vpack.c.b16 %v3898, %v3897
      %v4055 = vpack.c.b16 %v3900, %v3899
      %v4056 = vpack.c.b16 %v3902, %v3901
      %v4057 = vpack.c.b16 %v3904, %v3903
      %v4058 = vpack.c.b16 %v3906, %v3905
      %v4059 = vpack.c.b16 %v3908, %v3907
      %v4060 = vpack.c.b16 %v3910, %v3909
      %v4061 = vpack.c.b16 %v3912, %v3911
      %v4062 = vpack.c.b16 %v3914, %v3913
      %v4063 = vpack.c.b16 %v3916, %v3915
      %v4064 = vpack.c.b16 %v3918, %v3917
      %v4065 = vpack.c.b16 %v3920, %v3919
      %v4066 = vpack.c.b16 %v3922, %v3921
      %v4067 = vpack.c.b16 %v3924, %v3923
      %v4068 = vpack.c.b16 %v3926, %v3925
      %v4069 = vpack.c.b16 %v3928, %v3927
      %v4070 = vpack.c.b16 %v3930, %v3929
      %v4071 = vpack.c.b16 %v3932, %v3931
      %v4072 = vpack.c.b16 %v3934, %v3933
      %v4073 = vpack.c.b16 %v3936, %v3935
      %v4074 = vpack.c.b16 %v3938, %v3937
      %v4075 = vpack.c.b16 %v3940, %v3939
      %v4076 = vpack.c.b16 %v3942, %v3941
      %v4077 = vpack.c.b16 %v3944, %v3943
      %v4078 = vpack.c.b16 %v3946, %v3945
      %v4079 = vpack.c.b16 %v3948, %v3947
      %v4080 = vpack.c.b16 %v3950, %v3949
      %v4081 = vpack.c.b16 %v3952, %v3951
      %v4082 = vpack.c.b16 %v3954, %v3953
      %v4083 = vpack.c.b16 %v3956, %v3955
      %v4084 = vpack.c.b16 %v3958, %v3957
      %v4085 = vpack.c.b16 %v3960, %v3959
      %v4086 = vpack.c.b16 %v3962, %v3961
      %v4087 = vpack.c.b16 %v3964, %v3963
      %v4088 = vpack.c.b16 %v3966, %v3965
      %v4089 = vpack.c.b16 %v3968, %v3967
      %v4090 = vpack.c.b16 %v3970, %v3969
      %v4091 = vpack.c.b16 %v3972, %v3971
      %v4092 = vpack.c.b16 %v3974, %v3973
      %v4093 = vpack.c.b16 %v3976, %v3975
      %v4094 = vpack.c.b16 %v3978, %v3977
      %v4095 = vpack.c.b16 %v3980, %v3979
      %v4096 = vpack.c.b16 %v3982, %v3981
      %v4097 = vpack.c.b16 %v3984, %v3983
      %v4098 = vpack.c.b16 %v3993, %v3985
      %v4099 = vpack.c.b16 %v3995, %v3994
      %v4100 = vpack.c.b16 %v3997, %v3996
      %v4101 = vpack.c.b16 %v3999, %v3998
      %v4105 = vunpack.c.l.b16 %v4001
      %v4106 = vunpack.c.l.b16 %v4002
      %v4107 = vunpack.c.l.b16 %v4003
      %v4108 = vpack.c.b16 %v4106, %v4105
      %v4109 = vpack.c.b16 %v4107, %v4107
      %vm4111 = vcmask 195584
      %v4113 = vsel %vm4111, %v4004, 0
      %v4116 = vsel %vm4111, %v4005, 0
      %v4119 = vsel %vm4111, %v4006, 0
      %v4122 = vsel %vm4111, %v4007, 0
      %v4125 = vsel %vm4111, %v4008, 0
      %v4128 = vsel %vm4111, %v4009, 0
      %v4131 = vsel %vm4111, %v4010, 0
      %v4134 = vsel %vm4111, %v4011, 0
      %v4137 = vsel %vm4111, %v4012, 0
      %v4140 = vsel %vm4111, %v4013, 0
      %v4143 = vsel %vm4111, %v4014, 0
      %v4146 = vsel %vm4111, %v4015, 0
      %v4149 = vsel %vm4111, %v4016, 0
      %v4152 = vsel %vm4111, %v4017, 0
      %v4155 = vsel %vm4111, %v4018, 0
      %v4158 = vsel %vm4111, %v4019, 0
      %v4161 = vsel %vm4111, %v4020, 0
      %v4164 = vsel %vm4111, %v4021, 0
      %v4167 = vsel %vm4111, %v4022, 0
      %v4170 = vsel %vm4111, %v4023, 0
      %v4173 = vsel %vm4111, %v4024, 0
      %v4176 = vsel %vm4111, %v4025, 0
      %v4179 = vsel %vm4111, %v4026, 0
      %v4182 = vsel %vm4111, %v4027, 0
      %v4185 = vsel %vm4111, %v4028, 0
      %v4188 = vsel %vm4111, %v4029, 0
      %v4191 = vsel %vm4111, %v4030, 0
      %v4194 = vsel %vm4111, %v4031, 0
      %v4197 = vsel %vm4111, %v4032, 0
      %v4200 = vsel %vm4111, %v4033, 0
      %v4203 = vsel %vm4111, %v4034, 0
      %v4206 = vsel %vm4111, %v4035, 0
      %v4209 = vsel %vm4111, %v4036, 0
      %v4212 = vsel %vm4111, %v4037, 0
      %v4215 = vsel %vm4111, %v4038, 0
      %v4218 = vsel %vm4111, %v4039, 0
      %v4221 = vsel %vm4111, %v4040, 0
      %v4224 = vsel %vm4111, %v4041, 0
      %v4227 = vsel %vm4111, %v4042, 0
      %v4230 = vsel %vm4111, %v4043, 0
      %v4233 = vsel %vm4111, %v4044, 0
      %v4236 = vsel %vm4111, %v4045, 0
      %v4239 = vsel %vm4111, %v4046, 0
      %v4242 = vsel %vm4111, %v4047, 0
      %v4245 = vsel %vm4111, %v4048, 0
      %v4248 = vsel %vm4111, %v4049, 0
      %v4251 = vsel %vm4111, %v4050, 0
      %v4254 = vsel %vm4111, %v4051, 0
      %v4257 = vsel %vm4111, %v4052, 0
      %v4260 = vsel %vm4111, %v4053, 0
      %v4263 = vsel %vm4111, %v4054, 0
      %v4266 = vsel %vm4111, %v4055, 0
      %v4269 = vsel %vm4111, %v4056, 0
      %v4272 = vsel %vm4111, %v4057, 0
      %v4275 = vsel %vm4111, %v4058, 0
      %v4278 = vsel %vm4111, %v4059, 0
      %v4281 = vsel %vm4111, %v4060, 0
      %v4284 = vsel %vm4111, %v4061, 0
      %v4287 = vsel %vm4111, %v4062, 0
      %v4290 = vsel %vm4111, %v4063, 0
      %v4293 = vsel %vm4111, %v4064, 0
      %v4296 = vsel %vm4111, %v4065, 0
      %v4299 = vsel %vm4111, %v4066, 0
      %v4302 = vsel %vm4111, %v4067, 0
      %v4305 = vsel %vm4111, %v4068, 0
      %v4308 = vsel %vm4111, %v4069, 0
      %v4311 = vsel %vm4111, %v4070, 0
      %v4314 = vsel %vm4111, %v4071, 0
      %v4317 = vsel %vm4111, %v4072, 0
      %v4320 = vsel %vm4111, %v4073, 0
      %v4323 = vsel %vm4111, %v4074, 0
      %v4326 = vsel %vm4111, %v4075, 0
      %v4329 = vsel %vm4111, %v4076, 0
      %v4332 = vsel %vm4111, %v4077, 0
      %v4335 = vsel %vm4111, %v4078, 0
      %v4338 = vsel %vm4111, %v4079, 0
      %v4341 = vsel %vm4111, %v4080, 0
      %v4344 = vsel %vm4111, %v4081, 0
      %v4347 = vsel %vm4111, %v4082, 0
      %v4350 = vsel %vm4111, %v4083, 0
      %v4353 = vsel %vm4111, %v4084, 0
      %v4356 = vsel %vm4111, %v4085, 0
      %v4359 = vsel %vm4111, %v4086, 0
      %v4362 = vsel %vm4111, %v4087, 0
      %v4365 = vsel %vm4111, %v4088, 0
      %v4368 = vsel %vm4111, %v4089, 0
      %v4371 = vsel %vm4111, %v4090, 0
      %v4374 = vsel %vm4111, %v4091, 0
      %v4377 = vsel %vm4111, %v4092, 0
      %v4380 = vsel %vm4111, %v4093, 0
      %v4383 = vsel %vm4111, %v4094, 0
      %v4386 = vsel %vm4111, %v4095, 0
      %v4389 = vsel %vm4111, %v4096, 0
      %v4392 = vsel %vm4111, %v4097, 0
      %v4395 = vsel %vm4111, %v4098, 0
      %v4398 = vsel %vm4111, %v4099, 0
      %v4401 = vsel %vm4111, %v4100, 0
      %v4404 = vsel %vm4111, %v4101, 0
      %vm4406 = vcmask 1043456
      %v4408 = vsel %vm4406, %v4109, 0
      %4410 = vmatprep.subr.bf16.mxu0 0
      %4411 = vmatpush1.bf16.msra.mxu0 %v4108
      %4412 = vmatprep.subr.bf16.mxu0 0
      %4413 = vmatpush1.bf16.msra.mxu0 %v4408
      %4414 = vmatprep.subr.bf16.mxu0 0
      %4415 = vmatpush1.bf16.msra.mxu0 0
      %4416 = vmatprep.subr.bf16.mxu0 0
      %4417 = vmatpush1.bf16.msra.mxu0 0
      %4418 = vmatprep.subr.bf16.mxu0 0
      %4419 = vmatpush1.bf16.msra.mxu0 0
      %4420 = vmatprep.subr.bf16.mxu0 0
      %4421 = vmatpush1.bf16.msra.mxu0 0
      %4422 = vmatprep.subr.bf16.mxu0 0
      %4423 = vmatpush1.bf16.msra.mxu0 0
      %4424 = vmatprep.subr.bf16.mxu0 0
      %4425 = vmatpush1.bf16.msra.mxu0 0
      %4426 = vmatprep.subr.bf16.mxu0 0
      %4427 = vmatpush1.bf16.msra.mxu0 0
      %4428 = vmatprep.subr.bf16.mxu0 0
      %4429 = vmatpush1.bf16.msra.mxu0 0
      %4430 = vmatprep.subr.bf16.mxu0 0
      %4431 = vmatpush1.bf16.msra.mxu0 0
      %4432 = vmatprep.subr.bf16.mxu0 0
      %4433 = vmatpush1.bf16.msra.mxu0 0
      %4434 = vmatprep.subr.bf16.mxu0 0
      %4435 = vmatpush1.bf16.msra.mxu0 0
      %4436 = vmatprep.subr.bf16.mxu0 0
      %4437 = vmatpush1.bf16.msra.mxu0 0
      %4438 = vmatprep.subr.bf16.mxu0 0
      %4439 = vmatpush1.bf16.msra.mxu0 0
      %4440 = vmatprep.subr.bf16.mxu0 0
      %4441 = vmatpush1.bf16.msra.mxu0 0
      %4442 = vmatprep.mubr.bf16.mxu0 0
      %4443 = vmatmul.mubr.bf16.gmra.mrb[0].mxu0 %v4113
      %v4444 = vpop.f32.mrb[0].mxu0
      %v4445 = vadd.f32 0.0, %v4444
      %v4446 = vpop.f32.mrb[0].mxu0
      %v4447 = vpop.f32.mrb[0].mxu0
      %v4448 = vadd.f32 0.0, %v4447
      %v4449 = vpop.f32.mrb[0].mxu0
      %4450 = vmatprep.mubr.bf16.mxu0 0
      %4451 = vmatmul.mubr.bf16.gmra.mrb[0].mxu0 %v4116
      %v4452 = vpop.f32.mrb[0].mxu0
      %v4453 = vadd.f32 0.0, %v4452
      %v4454 = vpop.f32.mrb[0].mxu0
      %v4455 = vpop.f32.mrb[0].mxu0
      %v4456 = vadd.f32 0.0, %v4455
      %v4457 = vpop.f32.mrb[0].mxu0
      %4458 = vmatprep.mubr.bf16.mxu0 0
      %4459 = vmatmul.mubr.bf16.gmra.mrb[0].mxu0 %v4119
      %v4460 = vpop.f32.mrb[0].mxu0
      %v4461 = vadd.f32 0.0, %v4460
      %v4462 = vpop.f32.mrb[0].mxu0
      %v4463 = vpop.f32.mrb[0].mxu0
      %v4464 = vadd.f32 0.0, %v4463
      %v4465 = vpop.f32.mrb[0].mxu0
      %4466 = vmatprep.mubr.bf16.mxu0 0
      %4467 = vmatmul.mubr.bf16.gmra.mrb[0].mxu0 %v4122
      %v4468 = vpop.f32.mrb[0].mxu0
      %v4469 = vadd.f32 0.0, %v4468
      %v4470 = vpop.f32.mrb[0].mxu0
      %v4471 = vpop.f32.mrb[0].mxu0
      %v4472 = vadd.f32 0.0, %v4471
      %v4473 = vpop.f32.mrb[0].mxu0
      %4474 = vmatprep.mubr.bf16.mxu0 0
      %4475 = vmatmul.mubr.bf16.gmra.mrb[0].mxu0 %v4125
      %v4476 = vpop.f32.mrb[0].mxu0
      %v4477 = vadd.f32 0.0, %v4476
      %v4478 = vpop.f32.mrb[0].mxu0
      %v4479 = vpop.f32.mrb[0].mxu0
      %v4480 = vadd.f32 0.0, %v4479
      %v4481 = vpop.f32.mrb[0].mxu0
      %4482 = vmatprep.mubr.bf16.mxu0 0
      %4483 = vmatmul.mubr.bf16.gmra.mrb[0].mxu0 %v4128
      %v4484 = vpop.f32.mrb[0].mxu0
      %v4485 = vadd.f32 0.0, %v4484
      %v4486 = vpop.f32.mrb[0].mxu0
      %v4487 = vpop.f32.mrb[0].mxu0
      %v4488 = vadd.f32 0.0, %v4487
      %v4489 = vpop.f32.mrb[0].mxu0
      %4490 = vmatprep.mubr.bf16.mxu0 0
      %4491 = vmatmul.mubr.bf16.gmra.mrb[0].mxu0 %v4131
      %v4492 = vpop.f32.mrb[0].mxu0
      %v4493 = vadd.f32 0.0, %v4492
      %v4494 = vpop.f32.mrb[0].mxu0
      %v4495 = vpop.f32.mrb[0].mxu0
      %v4496 = vadd.f32 0.0, %v4495
      %v4497 = vpop.f32.mrb[0].mxu0
      %4498 = vmatprep.mubr.bf16.mxu0 0
      %4499 = vmatmul.mubr.bf16.gmra.mrb[0].mxu0 %v4134
      %v4500 = vpop.f32.mrb[0].mxu0
      %v4501 = vadd.f32 0.0, %v4500
      %v4502 = vpop.f32.mrb[0].mxu0
      %v4503 = vpop.f32.mrb[0].mxu0
      %v4504 = vadd.f32 0.0, %v4503
      %v4505 = vpop.f32.mrb[0].mxu0
      %4506 = vmatprep.mubr.bf16.mxu0 0
      %4507 = vmatmul.mubr.bf16.gmra.mrb[0].mxu0 %v4137
      %v4508 = vpop.f32.mrb[0].mxu0
      %v4509 = vadd.f32 0.0, %v4508
      %v4510 = vpop.f32.mrb[0].mxu0
      %v4511 = vpop.f32.mrb[0].mxu0
      %v4512 = vadd.f32 0.0, %v4511
      %v4513 = vpop.f32.mrb[0].mxu0
      %4514 = vmatprep.mubr.bf16.mxu0 0
      %4515 = vmatmul.mubr.bf16.gmra.mrb[0].mxu0 %v4140
      %v4516 = vpop.f32.mrb[0].mxu0
      %v4517 = vadd.f32 0.0, %v4516
      %v4518 = vpop.f32.mrb[0].mxu0
      %v4519 = vpop.f32.mrb[0].mxu0
      %v4520 = vadd.f32 0.0, %v4519
      %v4521 = vpop.f32.mrb[0].mxu0
      %4522 = vmatprep.mubr.bf16.mxu0 0
      %4523 = vmatmul.mubr.bf16.gmra.mrb[0].mxu0 %v4143
      %v4524 = vpop.f32.mrb[0].mxu0
      %v4525 = vadd.f32 0.0, %v4524
      %v4526 = vpop.f32.mrb[0].mxu0
      %v4527 = vpop.f32.mrb[0].mxu0
      %v4528 = vadd.f32 0.0, %v4527
      %v4529 = vpop.f32.mrb[0].mxu0
      %4530 = vmatprep.mubr.bf16.mxu0 0
      %4531 = vmatmul.mubr.bf16.gmra.mrb[0].mxu0 %v4146
      %v4532 = vpop.f32.mrb[0].mxu0
      %v4533 = vadd.f32 0.0, %v4532
      %v4534 = vpop.f32.mrb[0].mxu0
      %v4535 = vpop.f32.mrb[0].mxu0
      %v4536 = vadd.f32 0.0, %v4535
      %v4537 = vpop.f32.mrb[0].mxu0
      %4538 = vmatprep.mubr.bf16.mxu0 0
      %4539 = vmatmul.mubr.bf16.gmra.mrb[0].mxu0 %v4149
      %v4540 = vpop.f32.mrb[0].mxu0
      %v4541 = vadd.f32 0.0, %v4540
      %v4542 = vpop.f32.mrb[0].mxu0
      %v4543 = vpop.f32.mrb[0].mxu0
      %v4544 = vadd.f32 0.0, %v4543
      %v4545 = vpop.f32.mrb[0].mxu0
      %4546 = vmatprep.mubr.bf16.mxu0 0
      %4547 = vmatmul.mubr.bf16.gmra.mrb[0].mxu0 %v4152
      %v4548 = vpop.f32.mrb[0].mxu0
      %v4549 = vadd.f32 0.0, %v4548
      %v4550 = vpop.f32.mrb[0].mxu0
      %v4551 = vpop.f32.mrb[0].mxu0
      %v4552 = vadd.f32 0.0, %v4551
      %v4553 = vpop.f32.mrb[0].mxu0
      %4554 = vmatprep.mubr.bf16.mxu0 0
      %4555 = vmatmul.mubr.bf16.gmra.mrb[0].mxu0 %v4155
      %v4556 = vpop.f32.mrb[0].mxu0
      %v4557 = vadd.f32 0.0, %v4556
      %v4558 = vpop.f32.mrb[0].mxu0
      %v4559 = vpop.f32.mrb[0].mxu0
      %v4560 = vadd.f32 0.0, %v4559
      %v4561 = vpop.f32.mrb[0].mxu0
      %4562 = vmatprep.mubr.bf16.mxu0 0
      %4563 = vmatmul.mubr.bf16.gmra.mrb[0].mxu0 %v4158
      %v4564 = vpop.f32.mrb[0].mxu0
      %v4565 = vadd.f32 0.0, %v4564
      %v4566 = vpop.f32.mrb[0].mxu0
      %v4567 = vpop.f32.mrb[0].mxu0
      %v4568 = vadd.f32 0.0, %v4567
      %v4569 = vpop.f32.mrb[0].mxu0
      %4570 = vmatprep.mubr.bf16.mxu0 0
      %4571 = vmatmul.mubr.bf16.gmra.mrb[0].mxu0 %v4161
      %v4572 = vpop.f32.mrb[0].mxu0
      %v4573 = vadd.f32 0.0, %v4572
      %v4574 = vpop.f32.mrb[0].mxu0
      %v4575 = vpop.f32.mrb[0].mxu0
      %v4576 = vadd.f32 0.0, %v4575
      %v4577 = vpop.f32.mrb[0].mxu0
      %4578 = vmatprep.mubr.bf16.mxu0 0
      %4579 = vmatmul.mubr.bf16.gmra.mrb[0].mxu0 %v4164
      %v4580 = vpop.f32.mrb[0].mxu0
      %v4581 = vadd.f32 0.0, %v4580
      %v4582 = vpop.f32.mrb[0].mxu0
      %v4583 = vpop.f32.mrb[0].mxu0
      %v4584 = vadd.f32 0.0, %v4583
      %v4585 = vpop.f32.mrb[0].mxu0
      %4586 = vmatprep.mubr.bf16.mxu0 0
      %4587 = vmatmul.mubr.bf16.gmra.mrb[0].mxu0 %v4167
      %v4588 = vpop.f32.mrb[0].mxu0
      %v4589 = vadd.f32 0.0, %v4588
      %v4590 = vpop.f32.mrb[0].mxu0
      %v4591 = vpop.f32.mrb[0].mxu0
      %v4592 = vadd.f32 0.0, %v4591
      %v4593 = vpop.f32.mrb[0].mxu0
      %4594 = vmatprep.mubr.bf16.mxu0 0
      %4595 = vmatmul.mubr.bf16.gmra.mrb[0].mxu0 %v4170
      %v4596 = vpop.f32.mrb[0].mxu0
      %v4597 = vadd.f32 0.0, %v4596
      %v4598 = vpop.f32.mrb[0].mxu0
      %v4599 = vpop.f32.mrb[0].mxu0
      %v4600 = vadd.f32 0.0, %v4599
      %v4601 = vpop.f32.mrb[0].mxu0
      %4602 = vmatprep.mubr.bf16.mxu0 0
      %4603 = vmatmul.mubr.bf16.gmra.mrb[0].mxu0 %v4173
      %v4604 = vpop.f32.mrb[0].mxu0
      %v4605 = vadd.f32 0.0, %v4604
      %v4606 = vpop.f32.mrb[0].mxu0
      %v4607 = vpop.f32.mrb[0].mxu0
      %v4608 = vadd.f32 0.0, %v4607
      %v4609 = vpop.f32.mrb[0].mxu0
      %4610 = vmatprep.mubr.bf16.mxu0 0
      %4611 = vmatmul.mubr.bf16.gmra.mrb[0].mxu0 %v4176
      %v4612 = vpop.f32.mrb[0].mxu0
      %v4613 = vadd.f32 0.0, %v4612
      %v4614 = vpop.f32.mrb[0].mxu0
      %v4615 = vpop.f32.mrb[0].mxu0
      %v4616 = vadd.f32 0.0, %v4615
      %v4617 = vpop.f32.mrb[0].mxu0
      %4618 = vmatprep.mubr.bf16.mxu0 0
      %4619 = vmatmul.mubr.bf16.gmra.mrb[0].mxu0 %v4179
      %v4620 = vpop.f32.mrb[0].mxu0
      %v4621 = vadd.f32 0.0, %v4620
      %v4622 = vpop.f32.mrb[0].mxu0
      %v4623 = vpop.f32.mrb[0].mxu0
      %v4624 = vadd.f32 0.0, %v4623
      %v4625 = vpop.f32.mrb[0].mxu0
      %4626 = vmatprep.mubr.bf16.mxu0 0
      %4627 = vmatmul.mubr.bf16.gmra.mrb[0].mxu0 %v4182
      %v4628 = vpop.f32.mrb[0].mxu0
      %v4629 = vadd.f32 0.0, %v4628
      %v4630 = vpop.f32.mrb[0].mxu0
      %v4631 = vpop.f32.mrb[0].mxu0
      %v4632 = vadd.f32 0.0, %v4631
      %v4633 = vpop.f32.mrb[0].mxu0
      %4634 = vmatprep.mubr.bf16.mxu0 0
      %4635 = vmatmul.mubr.bf16.gmra.mrb[0].mxu0 %v4185
      %v4636 = vpop.f32.mrb[0].mxu0
      %v4637 = vadd.f32 0.0, %v4636
      %v4638 = vpop.f32.mrb[0].mxu0
      %v4639 = vpop.f32.mrb[0].mxu0
      %v4640 = vadd.f32 0.0, %v4639
      %v4641 = vpop.f32.mrb[0].mxu0
      %4642 = vmatprep.mubr.bf16.mxu0 0
      %4643 = vmatmul.mubr.bf16.gmra.mrb[0].mxu0 %v4188
      %v4644 = vpop.f32.mrb[0].mxu0
      %v4645 = vadd.f32 0.0, %v4644
      %v4646 = vpop.f32.mrb[0].mxu0
      %v4647 = vpop.f32.mrb[0].mxu0
      %v4648 = vadd.f32 0.0, %v4647
      %v4649 = vpop.f32.mrb[0].mxu0
      %4650 = vmatprep.mubr.bf16.mxu0 0
      %4651 = vmatmul.mubr.bf16.gmra.mrb[0].mxu0 %v4191
      %v4652 = vpop.f32.mrb[0].mxu0
      %v4653 = vadd.f32 0.0, %v4652
      %v4654 = vpop.f32.mrb[0].mxu0
      %v4655 = vpop.f32.mrb[0].mxu0
      %v4656 = vadd.f32 0.0, %v4655
      %v4657 = vpop.f32.mrb[0].mxu0
      %4658 = vmatprep.mubr.bf16.mxu0 0
      %4659 = vmatmul.mubr.bf16.gmra.mrb[0].mxu0 %v4194
      %v4660 = vpop.f32.mrb[0].mxu0
      %v4661 = vadd.f32 0.0, %v4660
      %v4662 = vpop.f32.mrb[0].mxu0
      %v4663 = vpop.f32.mrb[0].mxu0
      %v4664 = vadd.f32 0.0, %v4663
      %v4665 = vpop.f32.mrb[0].mxu0
      %4666 = vmatprep.mubr.bf16.mxu0 0
      %4667 = vmatmul.mubr.bf16.gmra.mrb[0].mxu0 %v4197
      %v4668 = vpop.f32.mrb[0].mxu0
      %v4669 = vadd.f32 0.0, %v4668
      %v4670 = vpop.f32.mrb[0].mxu0
      %v4671 = vpop.f32.mrb[0].mxu0
      %v4672 = vadd.f32 0.0, %v4671
      %v4673 = vpop.f32.mrb[0].mxu0
      %4674 = vmatprep.mubr.bf16.mxu0 0
      %4675 = vmatmul.mubr.bf16.gmra.mrb[0].mxu0 %v4200
      %v4676 = vpop.f32.mrb[0].mxu0
      %v4677 = vadd.f32 0.0, %v4676
      %v4678 = vpop.f32.mrb[0].mxu0
      %v4679 = vpop.f32.mrb[0].mxu0
      %v4680 = vadd.f32 0.0, %v4679
      %v4681 = vpop.f32.mrb[0].mxu0
      %4682 = vmatprep.mubr.bf16.mxu0 0
      %4683 = vmatmul.mubr.bf16.gmra.mrb[0].mxu0 %v4203
      %v4684 = vpop.f32.mrb[0].mxu0
      %v4685 = vadd.f32 0.0, %v4684
      %v4686 = vpop.f32.mrb[0].mxu0
      %v4687 = vpop.f32.mrb[0].mxu0
      %v4688 = vadd.f32 0.0, %v4687
      %v4689 = vpop.f32.mrb[0].mxu0
      %4690 = vmatprep.mubr.bf16.mxu0 0
      %4691 = vmatmul.mubr.bf16.gmra.mrb[0].mxu0 %v4206
      %v4692 = vpop.f32.mrb[0].mxu0
      %v4693 = vadd.f32 0.0, %v4692
      %v4694 = vpop.f32.mrb[0].mxu0
      %v4695 = vpop.f32.mrb[0].mxu0
      %v4696 = vadd.f32 0.0, %v4695
      %v4697 = vpop.f32.mrb[0].mxu0
      %4698 = vmatprep.mubr.bf16.mxu0 0
      %4699 = vmatmul.mubr.bf16.gmra.mrb[0].mxu0 %v4209
      %v4700 = vpop.f32.mrb[0].mxu0
      %v4701 = vadd.f32 0.0, %v4700
      %v4702 = vpop.f32.mrb[0].mxu0
      %v4703 = vpop.f32.mrb[0].mxu0
      %v4704 = vadd.f32 0.0, %v4703
      %v4705 = vpop.f32.mrb[0].mxu0
      %4706 = vmatprep.mubr.bf16.mxu0 0
      %4707 = vmatmul.mubr.bf16.gmra.mrb[0].mxu0 %v4212
      %v4708 = vpop.f32.mrb[0].mxu0
      %v4709 = vadd.f32 0.0, %v4708
      %v4710 = vpop.f32.mrb[0].mxu0
      %v4711 = vpop.f32.mrb[0].mxu0
      %v4712 = vadd.f32 0.0, %v4711
      %v4713 = vpop.f32.mrb[0].mxu0
      %4714 = vmatprep.mubr.bf16.mxu0 0
      %4715 = vmatmul.mubr.bf16.gmra.mrb[0].mxu0 %v4215
      %v4716 = vpop.f32.mrb[0].mxu0
      %v4717 = vadd.f32 0.0, %v4716
      %v4718 = vpop.f32.mrb[0].mxu0
      %v4719 = vpop.f32.mrb[0].mxu0
      %v4720 = vadd.f32 0.0, %v4719
      %v4721 = vpop.f32.mrb[0].mxu0
      %4722 = vmatprep.mubr.bf16.mxu0 0
      %4723 = vmatmul.mubr.bf16.gmra.mrb[0].mxu0 %v4218
      %v4724 = vpop.f32.mrb[0].mxu0
      %v4725 = vadd.f32 0.0, %v4724
      %v4726 = vpop.f32.mrb[0].mxu0
      %v4727 = vpop.f32.mrb[0].mxu0
      %v4728 = vadd.f32 0.0, %v4727
      %v4729 = vpop.f32.mrb[0].mxu0
      %4730 = vmatprep.mubr.bf16.mxu0 0
      %4731 = vmatmul.mubr.bf16.gmra.mrb[0].mxu0 %v4221
      %v4732 = vpop.f32.mrb[0].mxu0
      %v4733 = vadd.f32 0.0, %v4732
      %v4734 = vpop.f32.mrb[0].mxu0
      %v4735 = vpop.f32.mrb[0].mxu0
      %v4736 = vadd.f32 0.0, %v4735
      %v4737 = vpop.f32.mrb[0].mxu0
      %4738 = vmatprep.mubr.bf16.mxu0 0
      %4739 = vmatmul.mubr.bf16.gmra.mrb[0].mxu0 %v4224
      %v4740 = vpop.f32.mrb[0].mxu0
      %v4741 = vadd.f32 0.0, %v4740
      %v4742 = vpop.f32.mrb[0].mxu0
      %v4743 = vpop.f32.mrb[0].mxu0
      %v4744 = vadd.f32 0.0, %v4743
      %v4745 = vpop.f32.mrb[0].mxu0
      %4746 = vmatprep.mubr.bf16.mxu0 0
      %4747 = vmatmul.mubr.bf16.gmra.mrb[0].mxu0 %v4227
      %v4748 = vpop.f32.mrb[0].mxu0
      %v4749 = vadd.f32 0.0, %v4748
      %v4750 = vpop.f32.mrb[0].mxu0
      %v4751 = vpop.f32.mrb[0].mxu0
      %v4752 = vadd.f32 0.0, %v4751
      %v4753 = vpop.f32.mrb[0].mxu0
      %4754 = vmatprep.mubr.bf16.mxu0 0
      %4755 = vmatmul.mubr.bf16.gmra.mrb[0].mxu0 %v4230
      %v4756 = vpop.f32.mrb[0].mxu0
      %v4757 = vadd.f32 0.0, %v4756
      %v4758 = vpop.f32.mrb[0].mxu0
      %v4759 = vpop.f32.mrb[0].mxu0
      %v4760 = vadd.f32 0.0, %v4759
      %v4761 = vpop.f32.mrb[0].mxu0
      %4762 = vmatprep.mubr.bf16.mxu0 0
      %4763 = vmatmul.mubr.bf16.gmra.mrb[0].mxu0 %v4233
      %v4764 = vpop.f32.mrb[0].mxu0
      %v4765 = vadd.f32 0.0, %v4764
      %v4766 = vpop.f32.mrb[0].mxu0
      %v4767 = vpop.f32.mrb[0].mxu0
      %v4768 = vadd.f32 0.0, %v4767
      %v4769 = vpop.f32.mrb[0].mxu0
      %4770 = vmatprep.mubr.bf16.mxu0 0
      %4771 = vmatmul.mubr.bf16.gmra.mrb[0].mxu0 %v4236
      %v4772 = vpop.f32.mrb[0].mxu0
      %v4773 = vadd.f32 0.0, %v4772
      %v4774 = vpop.f32.mrb[0].mxu0
      %v4775 = vpop.f32.mrb[0].mxu0
      %v4776 = vadd.f32 0.0, %v4775
      %v4777 = vpop.f32.mrb[0].mxu0
      %4778 = vmatprep.mubr.bf16.mxu0 0
      %4779 = vmatmul.mubr.bf16.gmra.mrb[0].mxu0 %v4239
      %v4780 = vpop.f32.mrb[0].mxu0
      %v4781 = vadd.f32 0.0, %v4780
      %v4782 = vpop.f32.mrb[0].mxu0
      %v4783 = vpop.f32.mrb[0].mxu0
      %v4784 = vadd.f32 0.0, %v4783
      %v4785 = vpop.f32.mrb[0].mxu0
      %4786 = vmatprep.mubr.bf16.mxu0 0
      %4787 = vmatmul.mubr.bf16.gmra.mrb[0].mxu0 %v4242
      %v4788 = vpop.f32.mrb[0].mxu0
      %v4789 = vadd.f32 0.0, %v4788
      %v4790 = vpop.f32.mrb[0].mxu0
      %v4791 = vpop.f32.mrb[0].mxu0
      %v4792 = vadd.f32 0.0, %v4791
      %v4793 = vpop.f32.mrb[0].mxu0
      %4794 = vmatprep.mubr.bf16.mxu0 0
      %4795 = vmatmul.mubr.bf16.gmra.mrb[0].mxu0 %v4245
      %v4796 = vpop.f32.mrb[0].mxu0
      %v4797 = vadd.f32 0.0, %v4796
      %v4798 = vpop.f32.mrb[0].mxu0
      %v4799 = vpop.f32.mrb[0].mxu0
      %v4800 = vadd.f32 0.0, %v4799
      %v4801 = vpop.f32.mrb[0].mxu0
      %4802 = vmatprep.mubr.bf16.mxu0 0
      %4803 = vmatmul.mubr.bf16.gmra.mrb[0].mxu0 %v4248
      %v4804 = vpop.f32.mrb[0].mxu0
      %v4805 = vadd.f32 0.0, %v4804
      %v4806 = vpop.f32.mrb[0].mxu0
      %v4807 = vpop.f32.mrb[0].mxu0
      %v4808 = vadd.f32 0.0, %v4807
      %v4809 = vpop.f32.mrb[0].mxu0
      %4810 = vmatprep.mubr.bf16.mxu0 0
      %4811 = vmatmul.mubr.bf16.gmra.mrb[0].mxu0 %v4251
      %v4812 = vpop.f32.mrb[0].mxu0
      %v4813 = vadd.f32 0.0, %v4812
      %v4814 = vpop.f32.mrb[0].mxu0
      %v4815 = vpop.f32.mrb[0].mxu0
      %v4816 = vadd.f32 0.0, %v4815
      %v4817 = vpop.f32.mrb[0].mxu0
      %4818 = vmatprep.mubr.bf16.mxu0 0
      %4819 = vmatmul.mubr.bf16.gmra.mrb[0].mxu0 %v4254
      %v4820 = vpop.f32.mrb[0].mxu0
      %v4821 = vadd.f32 0.0, %v4820
      %v4822 = vpop.f32.mrb[0].mxu0
      %v4823 = vpop.f32.mrb[0].mxu0
      %v4824 = vadd.f32 0.0, %v4823
      %v4825 = vpop.f32.mrb[0].mxu0
      %4826 = vmatprep.mubr.bf16.mxu0 0
      %4827 = vmatmul.mubr.bf16.gmra.mrb[0].mxu0 %v4257
      %v4828 = vpop.f32.mrb[0].mxu0
      %v4829 = vadd.f32 0.0, %v4828
      %v4830 = vpop.f32.mrb[0].mxu0
      %v4831 = vpop.f32.mrb[0].mxu0
      %v4832 = vadd.f32 0.0, %v4831
      %v4833 = vpop.f32.mrb[0].mxu0
      %4834 = vmatprep.mubr.bf16.mxu0 0
      %4835 = vmatmul.mubr.bf16.gmra.mrb[0].mxu0 %v4260
      %v4836 = vpop.f32.mrb[0].mxu0
      %v4837 = vadd.f32 0.0, %v4836
      %v4838 = vpop.f32.mrb[0].mxu0
      %v4839 = vpop.f32.mrb[0].mxu0
      %v4840 = vadd.f32 0.0, %v4839
      %v4841 = vpop.f32.mrb[0].mxu0
      %4842 = vmatprep.mubr.bf16.mxu0 0
      %4843 = vmatmul.mubr.bf16.gmra.mrb[0].mxu0 %v4263
      %v4844 = vpop.f32.mrb[0].mxu0
      %v4845 = vadd.f32 0.0, %v4844
      %v4846 = vpop.f32.mrb[0].mxu0
      %v4847 = vpop.f32.mrb[0].mxu0
      %v4848 = vadd.f32 0.0, %v4847
      %v4849 = vpop.f32.mrb[0].mxu0
      %4850 = vmatprep.mubr.bf16.mxu0 0
      %4851 = vmatmul.mubr.bf16.gmra.mrb[0].mxu0 %v4266
      %v4852 = vpop.f32.mrb[0].mxu0
      %v4853 = vadd.f32 0.0, %v4852
      %v4854 = vpop.f32.mrb[0].mxu0
      %v4855 = vpop.f32.mrb[0].mxu0
      %v4856 = vadd.f32 0.0, %v4855
      %v4857 = vpop.f32.mrb[0].mxu0
      %4858 = vmatprep.mubr.bf16.mxu0 0
      %4859 = vmatmul.mubr.bf16.gmra.mrb[0].mxu0 %v4269
      %v4860 = vpop.f32.mrb[0].mxu0
      %v4861 = vadd.f32 0.0, %v4860
      %v4862 = vpop.f32.mrb[0].mxu0
      %v4863 = vpop.f32.mrb[0].mxu0
      %v4864 = vadd.f32 0.0, %v4863
      %v4865 = vpop.f32.mrb[0].mxu0
      %4866 = vmatprep.mubr.bf16.mxu0 0
      %4867 = vmatmul.mubr.bf16.gmra.mrb[0].mxu0 %v4272
      %v4868 = vpop.f32.mrb[0].mxu0
      %v4869 = vadd.f32 0.0, %v4868
      %v4870 = vpop.f32.mrb[0].mxu0
      %v4871 = vpop.f32.mrb[0].mxu0
      %v4872 = vadd.f32 0.0, %v4871
      %v4873 = vpop.f32.mrb[0].mxu0
      %4874 = vmatprep.mubr.bf16.mxu0 0
      %4875 = vmatmul.mubr.bf16.gmra.mrb[0].mxu0 %v4275
      %v4876 = vpop.f32.mrb[0].mxu0
      %v4877 = vadd.f32 0.0, %v4876
      %v4878 = vpop.f32.mrb[0].mxu0
      %v4879 = vpop.f32.mrb[0].mxu0
      %v4880 = vadd.f32 0.0, %v4879
      %v4881 = vpop.f32.mrb[0].mxu0
      %4882 = vmatprep.mubr.bf16.mxu0 0
      %4883 = vmatmul.mubr.bf16.gmra.mrb[0].mxu0 %v4278
      %v4884 = vpop.f32.mrb[0].mxu0
      %v4885 = vadd.f32 0.0, %v4884
      %v4886 = vpop.f32.mrb[0].mxu0
      %v4887 = vpop.f32.mrb[0].mxu0
      %v4888 = vadd.f32 0.0, %v4887
      %v4889 = vpop.f32.mrb[0].mxu0
      %4890 = vmatprep.mubr.bf16.mxu0 0
      %4891 = vmatmul.mubr.bf16.gmra.mrb[0].mxu0 %v4281
      %v4892 = vpop.f32.mrb[0].mxu0
      %v4893 = vadd.f32 0.0, %v4892
      %v4894 = vpop.f32.mrb[0].mxu0
      %v4895 = vpop.f32.mrb[0].mxu0
      %v4896 = vadd.f32 0.0, %v4895
      %v4897 = vpop.f32.mrb[0].mxu0
      %4898 = vmatprep.mubr.bf16.mxu0 0
      %4899 = vmatmul.mubr.bf16.gmra.mrb[0].mxu0 %v4284
      %v4900 = vpop.f32.mrb[0].mxu0
      %v4901 = vadd.f32 0.0, %v4900
      %v4902 = vpop.f32.mrb[0].mxu0
      %v4903 = vpop.f32.mrb[0].mxu0
      %v4904 = vadd.f32 0.0, %v4903
      %v4905 = vpop.f32.mrb[0].mxu0
      %4906 = vmatprep.mubr.bf16.mxu0 0
      %4907 = vmatmul.mubr.bf16.gmra.mrb[0].mxu0 %v4287
      %v4908 = vpop.f32.mrb[0].mxu0
      %v4909 = vadd.f32 0.0, %v4908
      %v4910 = vpop.f32.mrb[0].mxu0
      %v4911 = vpop.f32.mrb[0].mxu0
      %v4912 = vadd.f32 0.0, %v4911
      %v4913 = vpop.f32.mrb[0].mxu0
      %4914 = vmatprep.mubr.bf16.mxu0 0
      %4915 = vmatmul.mubr.bf16.gmra.mrb[0].mxu0 %v4290
      %v4916 = vpop.f32.mrb[0].mxu0
      %v4917 = vadd.f32 0.0, %v4916
      %v4918 = vpop.f32.mrb[0].mxu0
      %v4919 = vpop.f32.mrb[0].mxu0
      %v4920 = vadd.f32 0.0, %v4919
      %v4921 = vpop.f32.mrb[0].mxu0
      %4922 = vmatprep.mubr.bf16.mxu0 0
      %4923 = vmatmul.mubr.bf16.gmra.mrb[0].mxu0 %v4293
      %v4924 = vpop.f32.mrb[0].mxu0
      %v4925 = vadd.f32 0.0, %v4924
      %v4926 = vpop.f32.mrb[0].mxu0
      %v4927 = vpop.f32.mrb[0].mxu0
      %v4928 = vadd.f32 0.0, %v4927
      %v4929 = vpop.f32.mrb[0].mxu0
      %4930 = vmatprep.mubr.bf16.mxu0 0
      %4931 = vmatmul.mubr.bf16.gmra.mrb[0].mxu0 %v4296
      %v4932 = vpop.f32.mrb[0].mxu0
      %v4933 = vadd.f32 0.0, %v4932
      %v4934 = vpop.f32.mrb[0].mxu0
      %v4935 = vpop.f32.mrb[0].mxu0
      %v4936 = vadd.f32 0.0, %v4935
      %v4937 = vpop.f32.mrb[0].mxu0
      %4938 = vmatprep.mubr.bf16.mxu0 0
      %4939 = vmatmul.mubr.bf16.gmra.mrb[0].mxu0 %v4299
      %v4940 = vpop.f32.mrb[0].mxu0
      %v4941 = vadd.f32 0.0, %v4940
      %v4942 = vpop.f32.mrb[0].mxu0
      %v4943 = vpop.f32.mrb[0].mxu0
      %v4944 = vadd.f32 0.0, %v4943
      %v4945 = vpop.f32.mrb[0].mxu0
      %4946 = vmatprep.mubr.bf16.mxu0 0
      %4947 = vmatmul.mubr.bf16.gmra.mrb[0].mxu0 %v4302
      %v4948 = vpop.f32.mrb[0].mxu0
      %v4949 = vadd.f32 0.0, %v4948
      %v4950 = vpop.f32.mrb[0].mxu0
      %v4951 = vpop.f32.mrb[0].mxu0
      %v4952 = vadd.f32 0.0, %v4951
      %v4953 = vpop.f32.mrb[0].mxu0
      %4954 = vmatprep.mubr.bf16.mxu0 0
      %4955 = vmatmul.mubr.bf16.gmra.mrb[0].mxu0 %v4305
      %v4956 = vpop.f32.mrb[0].mxu0
      %v4957 = vadd.f32 0.0, %v4956
      %v4958 = vpop.f32.mrb[0].mxu0
      %v4959 = vpop.f32.mrb[0].mxu0
      %v4960 = vadd.f32 0.0, %v4959
      %v4961 = vpop.f32.mrb[0].mxu0
      %4962 = vmatprep.mubr.bf16.mxu0 0
      %4963 = vmatmul.mubr.bf16.gmra.mrb[0].mxu0 %v4308
      %v4964 = vpop.f32.mrb[0].mxu0
      %v4965 = vadd.f32 0.0, %v4964
      %v4966 = vpop.f32.mrb[0].mxu0
      %v4967 = vpop.f32.mrb[0].mxu0
      %v4968 = vadd.f32 0.0, %v4967
      %v4969 = vpop.f32.mrb[0].mxu0
      %4970 = vmatprep.mubr.bf16.mxu0 0
      %4971 = vmatmul.mubr.bf16.gmra.mrb[0].mxu0 %v4311
      %v4972 = vpop.f32.mrb[0].mxu0
      %v4973 = vadd.f32 0.0, %v4972
      %v4974 = vpop.f32.mrb[0].mxu0
      %v4975 = vpop.f32.mrb[0].mxu0
      %v4976 = vadd.f32 0.0, %v4975
      %v4977 = vpop.f32.mrb[0].mxu0
      %4978 = vmatprep.mubr.bf16.mxu0 0
      %4979 = vmatmul.mubr.bf16.gmra.mrb[0].mxu0 %v4314
      %v4980 = vpop.f32.mrb[0].mxu0
      %v4981 = vadd.f32 0.0, %v4980
      %v4982 = vpop.f32.mrb[0].mxu0
      %v4983 = vpop.f32.mrb[0].mxu0
      %v4984 = vadd.f32 0.0, %v4983
      %v4985 = vpop.f32.mrb[0].mxu0
      %4986 = vmatprep.mubr.bf16.mxu0 0
      %4987 = vmatmul.mubr.bf16.gmra.mrb[0].mxu0 %v4317
      %v4988 = vpop.f32.mrb[0].mxu0
      %v4989 = vadd.f32 0.0, %v4988
      %v4990 = vpop.f32.mrb[0].mxu0
      %v4991 = vpop.f32.mrb[0].mxu0
      %v4992 = vadd.f32 0.0, %v4991
      %v4993 = vpop.f32.mrb[0].mxu0
      %4994 = vmatprep.mubr.bf16.mxu0 0
      %4995 = vmatmul.mubr.bf16.gmra.mrb[0].mxu0 %v4320
      %v4996 = vpop.f32.mrb[0].mxu0
      %v4997 = vadd.f32 0.0, %v4996
      %v4998 = vpop.f32.mrb[0].mxu0
      %v4999 = vpop.f32.mrb[0].mxu0
      %v5000 = vadd.f32 0.0, %v4999
      %v5001 = vpop.f32.mrb[0].mxu0
      %5002 = vmatprep.mubr.bf16.mxu0 0
      %5003 = vmatmul.mubr.bf16.gmra.mrb[0].mxu0 %v4323
      %v5004 = vpop.f32.mrb[0].mxu0
      %v5005 = vadd.f32 0.0, %v5004
      %v5006 = vpop.f32.mrb[0].mxu0
      %v5007 = vpop.f32.mrb[0].mxu0
      %v5008 = vadd.f32 0.0, %v5007
      %v5009 = vpop.f32.mrb[0].mxu0
      %5010 = vmatprep.mubr.bf16.mxu0 0
      %5011 = vmatmul.mubr.bf16.gmra.mrb[0].mxu0 %v4326
      %v5012 = vpop.f32.mrb[0].mxu0
      %v5013 = vadd.f32 0.0, %v5012
      %v5014 = vpop.f32.mrb[0].mxu0
      %v5015 = vpop.f32.mrb[0].mxu0
      %v5016 = vadd.f32 0.0, %v5015
      %v5017 = vpop.f32.mrb[0].mxu0
      %5018 = vmatprep.mubr.bf16.mxu0 0
      %5019 = vmatmul.mubr.bf16.gmra.mrb[0].mxu0 %v4329
      %v5020 = vpop.f32.mrb[0].mxu0
      %v5021 = vadd.f32 0.0, %v5020
      %v5022 = vpop.f32.mrb[0].mxu0
      %v5023 = vpop.f32.mrb[0].mxu0
      %v5024 = vadd.f32 0.0, %v5023
      %v5025 = vpop.f32.mrb[0].mxu0
      %5026 = vmatprep.mubr.bf16.mxu0 0
      %5027 = vmatmul.mubr.bf16.gmra.mrb[0].mxu0 %v4332
      %v5028 = vpop.f32.mrb[0].mxu0
      %v5029 = vadd.f32 0.0, %v5028
      %v5030 = vpop.f32.mrb[0].mxu0
      %v5031 = vpop.f32.mrb[0].mxu0
      %v5032 = vadd.f32 0.0, %v5031
      %v5033 = vpop.f32.mrb[0].mxu0
      %5034 = vmatprep.mubr.bf16.mxu0 0
      %5035 = vmatmul.mubr.bf16.gmra.mrb[0].mxu0 %v4335
      %v5036 = vpop.f32.mrb[0].mxu0
      %v5037 = vadd.f32 0.0, %v5036
      %v5038 = vpop.f32.mrb[0].mxu0
      %v5039 = vpop.f32.mrb[0].mxu0
      %v5040 = vadd.f32 0.0, %v5039
      %v5041 = vpop.f32.mrb[0].mxu0
      %5042 = vmatprep.mubr.bf16.mxu0 0
      %5043 = vmatmul.mubr.bf16.gmra.mrb[0].mxu0 %v4338
      %v5044 = vpop.f32.mrb[0].mxu0
      %v5045 = vadd.f32 0.0, %v5044
      %v5046 = vpop.f32.mrb[0].mxu0
      %v5047 = vpop.f32.mrb[0].mxu0
      %v5048 = vadd.f32 0.0, %v5047
      %v5049 = vpop.f32.mrb[0].mxu0
      %5050 = vmatprep.mubr.bf16.mxu0 0
      %5051 = vmatmul.mubr.bf16.gmra.mrb[0].mxu0 %v4341
      %v5052 = vpop.f32.mrb[0].mxu0
      %v5053 = vadd.f32 0.0, %v5052
      %v5054 = vpop.f32.mrb[0].mxu0
      %v5055 = vpop.f32.mrb[0].mxu0
      %v5056 = vadd.f32 0.0, %v5055
      %v5057 = vpop.f32.mrb[0].mxu0
      %5058 = vmatprep.mubr.bf16.mxu0 0
      %5059 = vmatmul.mubr.bf16.gmra.mrb[0].mxu0 %v4344
      %v5060 = vpop.f32.mrb[0].mxu0
      %v5061 = vadd.f32 0.0, %v5060
      %v5062 = vpop.f32.mrb[0].mxu0
      %v5063 = vpop.f32.mrb[0].mxu0
      %v5064 = vadd.f32 0.0, %v5063
      %v5065 = vpop.f32.mrb[0].mxu0
      %5066 = vmatprep.mubr.bf16.mxu0 0
      %5067 = vmatmul.mubr.bf16.gmra.mrb[0].mxu0 %v4347
      %v5068 = vpop.f32.mrb[0].mxu0
      %v5069 = vadd.f32 0.0, %v5068
      %v5070 = vpop.f32.mrb[0].mxu0
      %v5071 = vpop.f32.mrb[0].mxu0
      %v5072 = vadd.f32 0.0, %v5071
      %v5073 = vpop.f32.mrb[0].mxu0
      %5074 = vmatprep.mubr.bf16.mxu0 0
      %5075 = vmatmul.mubr.bf16.gmra.mrb[0].mxu0 %v4350
      %v5076 = vpop.f32.mrb[0].mxu0
      %v5077 = vadd.f32 0.0, %v5076
      %v5078 = vpop.f32.mrb[0].mxu0
      %v5079 = vpop.f32.mrb[0].mxu0
      %v5080 = vadd.f32 0.0, %v5079
      %v5081 = vpop.f32.mrb[0].mxu0
      %5082 = vmatprep.mubr.bf16.mxu0 0
      %5083 = vmatmul.mubr.bf16.gmra.mrb[0].mxu0 %v4353
      %v5084 = vpop.f32.mrb[0].mxu0
      %v5085 = vadd.f32 0.0, %v5084
      %v5086 = vpop.f32.mrb[0].mxu0
      %v5087 = vpop.f32.mrb[0].mxu0
      %v5088 = vadd.f32 0.0, %v5087
      %v5089 = vpop.f32.mrb[0].mxu0
      %5090 = vmatprep.mubr.bf16.mxu0 0
      %5091 = vmatmul.mubr.bf16.gmra.mrb[0].mxu0 %v4356
      %v5092 = vpop.f32.mrb[0].mxu0
      %v5093 = vadd.f32 0.0, %v5092
      %v5094 = vpop.f32.mrb[0].mxu0
      %v5095 = vpop.f32.mrb[0].mxu0
      %v5096 = vadd.f32 0.0, %v5095
      %v5097 = vpop.f32.mrb[0].mxu0
      %5098 = vmatprep.mubr.bf16.mxu0 0
      %5099 = vmatmul.mubr.bf16.gmra.mrb[0].mxu0 %v4359
      %v5100 = vpop.f32.mrb[0].mxu0
      %v5101 = vadd.f32 0.0, %v5100
      %v5102 = vpop.f32.mrb[0].mxu0
      %v5103 = vpop.f32.mrb[0].mxu0
      %v5104 = vadd.f32 0.0, %v5103
      %v5105 = vpop.f32.mrb[0].mxu0
      %5106 = vmatprep.mubr.bf16.mxu0 0
      %5107 = vmatmul.mubr.bf16.gmra.mrb[0].mxu0 %v4362
      %v5108 = vpop.f32.mrb[0].mxu0
      %v5109 = vadd.f32 0.0, %v5108
      %v5110 = vpop.f32.mrb[0].mxu0
      %v5111 = vpop.f32.mrb[0].mxu0
      %v5112 = vadd.f32 0.0, %v5111
      %v5113 = vpop.f32.mrb[0].mxu0
      %5114 = vmatprep.mubr.bf16.mxu0 0
      %5115 = vmatmul.mubr.bf16.gmra.mrb[0].mxu0 %v4365
      %v5116 = vpop.f32.mrb[0].mxu0
      %v5117 = vadd.f32 0.0, %v5116
      %v5118 = vpop.f32.mrb[0].mxu0
      %v5119 = vpop.f32.mrb[0].mxu0
      %v5120 = vadd.f32 0.0, %v5119
      %v5121 = vpop.f32.mrb[0].mxu0
      %5122 = vmatprep.mubr.bf16.mxu0 0
      %5123 = vmatmul.mubr.bf16.gmra.mrb[0].mxu0 %v4368
      %v5124 = vpop.f32.mrb[0].mxu0
      %v5125 = vadd.f32 0.0, %v5124
      %v5126 = vpop.f32.mrb[0].mxu0
      %v5127 = vpop.f32.mrb[0].mxu0
      %v5128 = vadd.f32 0.0, %v5127
      %v5129 = vpop.f32.mrb[0].mxu0
      %5130 = vmatprep.mubr.bf16.mxu0 0
      %5131 = vmatmul.mubr.bf16.gmra.mrb[0].mxu0 %v4371
      %v5132 = vpop.f32.mrb[0].mxu0
      %v5133 = vadd.f32 0.0, %v5132
      %v5134 = vpop.f32.mrb[0].mxu0
      %v5135 = vpop.f32.mrb[0].mxu0
      %v5136 = vadd.f32 0.0, %v5135
      %v5137 = vpop.f32.mrb[0].mxu0
      %5138 = vmatprep.mubr.bf16.mxu0 0
      %5139 = vmatmul.mubr.bf16.gmra.mrb[0].mxu0 %v4374
      %v5140 = vpop.f32.mrb[0].mxu0
      %v5141 = vadd.f32 0.0, %v5140
      %v5142 = vpop.f32.mrb[0].mxu0
      %v5143 = vpop.f32.mrb[0].mxu0
      %v5144 = vadd.f32 0.0, %v5143
      %v5145 = vpop.f32.mrb[0].mxu0
      %5146 = vmatprep.mubr.bf16.mxu0 0
      %5147 = vmatmul.mubr.bf16.gmra.mrb[0].mxu0 %v4377
      %v5148 = vpop.f32.mrb[0].mxu0
      %v5149 = vadd.f32 0.0, %v5148
      %v5150 = vpop.f32.mrb[0].mxu0
      %v5151 = vpop.f32.mrb[0].mxu0
      %v5152 = vadd.f32 0.0, %v5151
      %v5153 = vpop.f32.mrb[0].mxu0
      %5154 = vmatprep.mubr.bf16.mxu0 0
      %5155 = vmatmul.mubr.bf16.gmra.mrb[0].mxu0 %v4380
      %v5156 = vpop.f32.mrb[0].mxu0
      %v5157 = vadd.f32 0.0, %v5156
      %v5158 = vpop.f32.mrb[0].mxu0
      %v5159 = vpop.f32.mrb[0].mxu0
      %v5160 = vadd.f32 0.0, %v5159
      %v5161 = vpop.f32.mrb[0].mxu0
      %5162 = vmatprep.mubr.bf16.mxu0 0
      %5163 = vmatmul.mubr.bf16.gmra.mrb[0].mxu0 %v4383
      %v5164 = vpop.f32.mrb[0].mxu0
      %v5165 = vadd.f32 0.0, %v5164
      %v5166 = vpop.f32.mrb[0].mxu0
      %v5167 = vpop.f32.mrb[0].mxu0
      %v5168 = vadd.f32 0.0, %v5167
      %v5169 = vpop.f32.mrb[0].mxu0
      %5170 = vmatprep.mubr.bf16.mxu0 0
      %5171 = vmatmul.mubr.bf16.gmra.mrb[0].mxu0 %v4386
      %v5172 = vpop.f32.mrb[0].mxu0
      %v5173 = vadd.f32 0.0, %v5172
      %v5174 = vpop.f32.mrb[0].mxu0
      %v5175 = vpop.f32.mrb[0].mxu0
      %v5176 = vadd.f32 0.0, %v5175
      %v5177 = vpop.f32.mrb[0].mxu0
      %5178 = vmatprep.mubr.bf16.mxu0 0
      %5179 = vmatmul.mubr.bf16.gmra.mrb[0].mxu0 %v4389
      %v5180 = vpop.f32.mrb[0].mxu0
      %v5181 = vadd.f32 0.0, %v5180
      %v5182 = vpop.f32.mrb[0].mxu0
      %v5183 = vpop.f32.mrb[0].mxu0
      %v5184 = vadd.f32 0.0, %v5183
      %v5185 = vpop.f32.mrb[0].mxu0
      %5186 = vmatprep.mubr.bf16.mxu0 0
      %5187 = vmatmul.mubr.bf16.gmra.mrb[0].mxu0 %v4392
      %v5188 = vpop.f32.mrb[0].mxu0
      %v5189 = vadd.f32 0.0, %v5188
      %v5190 = vpop.f32.mrb[0].mxu0
      %v5191 = vpop.f32.mrb[0].mxu0
      %v5192 = vadd.f32 0.0, %v5191
      %v5193 = vpop.f32.mrb[0].mxu0
      %5194 = vmatprep.mubr.bf16.mxu0 0
      %5195 = vmatmul.mubr.bf16.gmra.mrb[0].mxu0 %v4395
      %v5196 = vpop.f32.mrb[0].mxu0
      %v5197 = vadd.f32 0.0, %v5196
      %v5198 = vpop.f32.mrb[0].mxu0
      %v5199 = vpop.f32.mrb[0].mxu0
      %v5200 = vadd.f32 0.0, %v5199
      %v5201 = vpop.f32.mrb[0].mxu0
      %5202 = vmatprep.mubr.bf16.mxu0 0
      %5203 = vmatmul.mubr.bf16.gmra.mrb[0].mxu0 %v4398
      %v5204 = vpop.f32.mrb[0].mxu0
      %v5205 = vadd.f32 0.0, %v5204
      %v5206 = vpop.f32.mrb[0].mxu0
      %v5207 = vpop.f32.mrb[0].mxu0
      %v5208 = vadd.f32 0.0, %v5207
      %v5209 = vpop.f32.mrb[0].mxu0
      %5210 = vmatprep.mubr.bf16.mxu0 0
      %5211 = vmatmul.mubr.bf16.gmra.mrb[0].mxu0 %v4401
      %v5212 = vpop.f32.mrb[0].mxu0
      %v5213 = vadd.f32 0.0, %v5212
      %v5214 = vpop.f32.mrb[0].mxu0
      %v5215 = vpop.f32.mrb[0].mxu0
      %v5216 = vadd.f32 0.0, %v5215
      %v5217 = vpop.f32.mrb[0].mxu0
      %5218 = vmatprep.mubr.bf16.mxu0 0
      %5219 = vmatmul.mubr.bf16.gmra.mrb[0].mxu0 %v4404
      %v5220 = vpop.f32.mrb[0].mxu0
      %v5221 = vadd.f32 0.0, %v5220
      %v5222 = vpop.f32.mrb[0].mxu0
      %v5223 = vpop.f32.mrb[0].mxu0
      %v5224 = vadd.f32 0.0, %v5223
      %v5225 = vpop.f32.mrb[0].mxu0
      %5226 = vdwg.mxu0
      %v5227 = vpack.c.b16 %v3791, %v3790
      %v5228 = vpack.c.b16 %v3793, %v3792
      %v5229 = vpack.c.b16 %v3795, %v3794
      %v5230 = vpack.c.b16 %v3797, %v3796
      %v5231 = vpack.c.b16 %v3799, %v3798
      %v5232 = vpack.c.b16 %v3801, %v3800
      %v5233 = vpack.c.b16 %v3803, %v3802
      %v5234 = vpack.c.b16 %v3805, %v3804
      %v5235 = vpack.c.b16 %v3807, %v3806
      %v5236 = vpack.c.b16 %v3809, %v3808
      %v5237 = vpack.c.b16 %v3811, %v3810
      %v5238 = vpack.c.b16 %v3813, %v3812
      %v5239 = vpack.c.b16 %v3815, %v3814
      %v5240 = vpack.c.b16 %v3817, %v3816
      %v5241 = vpack.c.b16 %v3819, %v3818
      %v5242 = vpack.c.b16 %v3821, %v3820
      %v5243 = vpack.c.b16 %v3823, %v3822
      %v5244 = vpack.c.b16 %v3825, %v3824
      %v5245 = vpack.c.b16 %v3827, %v3826
      %v5246 = vpack.c.b16 %v3829, %v3828
      %v5247 = vpack.c.b16 %v3831, %v3830
      %v5248 = vpack.c.b16 %v3833, %v3832
      %v5249 = vpack.c.b16 %v3835, %v3834
      %v5250 = vpack.c.b16 %v3837, %v3836
      %v5251 = vpack.c.b16 %v3839, %v3838
      %v5252 = vpack.c.b16 %v3841, %v3840
      %v5253 = vpack.c.b16 %v3843, %v3842
      %v5254 = vpack.c.b16 %v3845, %v3844
      %v5255 = vpack.c.b16 %v3847, %v3846
      %v5256 = vpack.c.b16 %v3849, %v3848
      %v5257 = vpack.c.b16 %v3851, %v3850
      %v5258 = vpack.c.b16 %v3853, %v3852
      %v5259 = vpack.c.b16 %v3855, %v3854
      %v5260 = vpack.c.b16 %v3857, %v3856
      %v5261 = vpack.c.b16 %v3859, %v3858
      %v5262 = vpack.c.b16 %v3861, %v3860
      %v5263 = vpack.c.b16 %v3863, %v3862
      %v5264 = vpack.c.b16 %v3865, %v3864
      %v5265 = vpack.c.b16 %v3867, %v3866
      %v5266 = vpack.c.b16 %v3869, %v3868
      %v5267 = vpack.c.b16 %v3871, %v3870
      %v5268 = vpack.c.b16 %v3873, %v3872
      %v5269 = vpack.c.b16 %v3875, %v3874
      %v5270 = vpack.c.b16 %v3877, %v3876
      %v5271 = vpack.c.b16 %v3879, %v3878
      %v5272 = vpack.c.b16 %v3881, %v3880
      %v5273 = vpack.c.b16 %v3883, %v3882
      %v5274 = vpack.c.b16 %v3885, %v3884
      %v5275 = vpack.c.b16 %v3887, %v3886
      %v5276 = vpack.c.b16 %v3889, %v3888
      %v5277 = vpack.c.b16 %v3891, %v3890
      %v5278 = vpack.c.b16 %v3893, %v3892
      %v5279 = vpack.c.b16 %v3895, %v3894
      %v5280 = vpack.c.b16 %v3897, %v3896
      %v5281 = vpack.c.b16 %v3899, %v3898
      %v5282 = vpack.c.b16 %v3901, %v3900
      %v5283 = vpack.c.b16 %v3903, %v3902
      %v5284 = vpack.c.b16 %v3905, %v3904
      %v5285 = vpack.c.b16 %v3907, %v3906
      %v5286 = vpack.c.b16 %v3909, %v3908
      %v5287 = vpack.c.b16 %v3911, %v3910
      %v5288 = vpack.c.b16 %v3913, %v3912
      %v5289 = vpack.c.b16 %v3915, %v3914
      %v5290 = vpack.c.b16 %v3917, %v3916
      %v5291 = vpack.c.b16 %v3919, %v3918
      %v5292 = vpack.c.b16 %v3921, %v3920
      %v5293 = vpack.c.b16 %v3923, %v3922
      %v5294 = vpack.c.b16 %v3925, %v3924
      %v5295 = vpack.c.b16 %v3927, %v3926
      %v5296 = vpack.c.b16 %v3929, %v3928
      %v5297 = vpack.c.b16 %v3931, %v3930
      %v5298 = vpack.c.b16 %v3933, %v3932
      %v5299 = vpack.c.b16 %v3935, %v3934
      %v5300 = vpack.c.b16 %v3937, %v3936
      %v5301 = vpack.c.b16 %v3939, %v3938
      %v5302 = vpack.c.b16 %v3941, %v3940
      %v5303 = vpack.c.b16 %v3943, %v3942
      %v5304 = vpack.c.b16 %v3945, %v3944
      %v5305 = vpack.c.b16 %v3947, %v3946
      %v5306 = vpack.c.b16 %v3949, %v3948
      %v5307 = vpack.c.b16 %v3951, %v3950
      %v5308 = vpack.c.b16 %v3953, %v3952
      %v5309 = vpack.c.b16 %v3955, %v3954
      %v5310 = vpack.c.b16 %v3957, %v3956
      %v5311 = vpack.c.b16 %v3959, %v3958
      %v5312 = vpack.c.b16 %v3961, %v3960
      %v5313 = vpack.c.b16 %v3963, %v3962
      %v5314 = vpack.c.b16 %v3965, %v3964
      %v5315 = vpack.c.b16 %v3967, %v3966
      %v5316 = vpack.c.b16 %v3969, %v3968
      %v5317 = vpack.c.b16 %v3971, %v3970
      %v5318 = vpack.c.b16 %v3973, %v3972
      %v5319 = vpack.c.b16 %v3975, %v3974
      %v5320 = vpack.c.b16 %v3977, %v3976
      %v5321 = vpack.c.b16 %v3979, %v3978
      %v5322 = vpack.c.b16 %v3981, %v3980
      %v5323 = vpack.c.b16 %v3983, %v3982
      %v5324 = vpack.c.b16 %v3985, %v3984
      %v5328 = vunpack.c.l.b16 %v3986
      %v5329 = vunpack.c.l.b16 %v3987
      %v5330 = vunpack.c.l.b16 %v3988
      %v5331 = vpack.c.b16 %v5329, %v5328
      %v5332 = vpack.c.b16 %v5330, %v5330
      %v5335 = vsel %vm4111, %v5227, 0
      %v5338 = vsel %vm4111, %v5228, 0
      %v5341 = vsel %vm4111, %v5229, 0
      %v5344 = vsel %vm4111, %v5230, 0
      %v5347 = vsel %vm4111, %v5231, 0
      %v5350 = vsel %vm4111, %v5232, 0
      %v5353 = vsel %vm4111, %v5233, 0
      %v5356 = vsel %vm4111, %v5234, 0
      %v5359 = vsel %vm4111, %v5235, 0
      %v5362 = vsel %vm4111, %v5236, 0
      %v5365 = vsel %vm4111, %v5237, 0
      %v5368 = vsel %vm4111, %v5238, 0
      %v5371 = vsel %vm4111, %v5239, 0
      %v5374 = vsel %vm4111, %v5240, 0
      %v5377 = vsel %vm4111, %v5241, 0
      %v5380 = vsel %vm4111, %v5242, 0
      %v5383 = vsel %vm4111, %v5243, 0
      %v5386 = vsel %vm4111, %v5244, 0
      %v5389 = vsel %vm4111, %v5245, 0
      %v5392 = vsel %vm4111, %v5246, 0
      %v5395 = vsel %vm4111, %v5247, 0
      %v5398 = vsel %vm4111, %v5248, 0
      %v5401 = vsel %vm4111, %v5249, 0
      %v5404 = vsel %vm4111, %v5250, 0
      %v5407 = vsel %vm4111, %v5251, 0
      %v5410 = vsel %vm4111, %v5252, 0
      %v5413 = vsel %vm4111, %v5253, 0
      %v5416 = vsel %vm4111, %v5254, 0
      %v5419 = vsel %vm4111, %v5255, 0
      %v5422 = vsel %vm4111, %v5256, 0
      %v5425 = vsel %vm4111, %v5257, 0
      %v5428 = vsel %vm4111, %v5258, 0
      %v5431 = vsel %vm4111, %v5259, 0
      %v5434 = vsel %vm4111, %v5260, 0
      %v5437 = vsel %vm4111, %v5261, 0
      %v5440 = vsel %vm4111, %v5262, 0
      %v5443 = vsel %vm4111, %v5263, 0
      %v5446 = vsel %vm4111, %v5264, 0
      %v5449 = vsel %vm4111, %v5265, 0
      %v5452 = vsel %vm4111, %v5266, 0
      %v5455 = vsel %vm4111, %v5267, 0
      %v5458 = vsel %vm4111, %v5268, 0
      %v5461 = vsel %vm4111, %v5269, 0
      %v5464 = vsel %vm4111, %v5270, 0
      %v5467 = vsel %vm4111, %v5271, 0
      %v5470 = vsel %vm4111, %v5272, 0
      %v5473 = vsel %vm4111, %v5273, 0
      %v5476 = vsel %vm4111, %v5274, 0
      %v5479 = vsel %vm4111, %v5275, 0
      %v5482 = vsel %vm4111, %v5276, 0
      %v5485 = vsel %vm4111, %v5277, 0
      %v5488 = vsel %vm4111, %v5278, 0
      %v5491 = vsel %vm4111, %v5279, 0
      %v5494 = vsel %vm4111, %v5280, 0
      %v5497 = vsel %vm4111, %v5281, 0
      %v5500 = vsel %vm4111, %v5282, 0
      %v5503 = vsel %vm4111, %v5283, 0
      %v5506 = vsel %vm4111, %v5284, 0
      %v5509 = vsel %vm4111, %v5285, 0
      %v5512 = vsel %vm4111, %v5286, 0
      %v5515 = vsel %vm4111, %v5287, 0
      %v5518 = vsel %vm4111, %v5288, 0
      %v5521 = vsel %vm4111, %v5289, 0
      %v5524 = vsel %vm4111, %v5290, 0
      %v5527 = vsel %vm4111, %v5291, 0
      %v5530 = vsel %vm4111, %v5292, 0
      %v5533 = vsel %vm4111, %v5293, 0
      %v5536 = vsel %vm4111, %v5294, 0
      %v5539 = vsel %vm4111, %v5295, 0
      %v5542 = vsel %vm4111, %v5296, 0
      %v5545 = vsel %vm4111, %v5297, 0
      %v5548 = vsel %vm4111, %v5298, 0
      %v5551 = vsel %vm4111, %v5299, 0
      %v5554 = vsel %vm4111, %v5300, 0
      %v5557 = vsel %vm4111, %v5301, 0
      %v5560 = vsel %vm4111, %v5302, 0
      %v5563 = vsel %vm4111, %v5303, 0
      %v5566 = vsel %vm4111, %v5304, 0
      %v5569 = vsel %vm4111, %v5305, 0
      %v5572 = vsel %vm4111, %v5306, 0
      %v5575 = vsel %vm4111, %v5307, 0
      %v5578 = vsel %vm4111, %v5308, 0
      %v5581 = vsel %vm4111, %v5309, 0
      %v5584 = vsel %vm4111, %v5310, 0
      %v5587 = vsel %vm4111, %v5311, 0
      %v5590 = vsel %vm4111, %v5312, 0
      %v5593 = vsel %vm4111, %v5313, 0
      %v5596 = vsel %vm4111, %v5314, 0
      %v5599 = vsel %vm4111, %v5315, 0
      %v5602 = vsel %vm4111, %v5316, 0
      %v5605 = vsel %vm4111, %v5317, 0
      %v5608 = vsel %vm4111, %v5318, 0
      %v5611 = vsel %vm4111, %v5319, 0
      %v5614 = vsel %vm4111, %v5320, 0
      %v5617 = vsel %vm4111, %v5321, 0
      %v5620 = vsel %vm4111, %v5322, 0
      %v5623 = vsel %vm4111, %v5323, 0
      %v5626 = vsel %vm4111, %v5324, 0
      %v5629 = vsel %vm4406, %v5332, 0
      %5631 = vmatprep.subr.bf16.mxu0 0
      %5632 = vmatpush1.bf16.msra.mxu0 %v5331
      %5633 = vmatprep.subr.bf16.mxu0 0
      %5634 = vmatpush1.bf16.msra.mxu0 %v5629
      %5635 = vmatprep.subr.bf16.mxu0 0
      %5636 = vmatpush1.bf16.msra.mxu0 0
      %5637 = vmatprep.subr.bf16.mxu0 0
      %5638 = vmatpush1.bf16.msra.mxu0 0
      %5639 = vmatprep.subr.bf16.mxu0 0
      %5640 = vmatpush1.bf16.msra.mxu0 0
      %5641 = vmatprep.subr.bf16.mxu0 0
      %5642 = vmatpush1.bf16.msra.mxu0 0
      %5643 = vmatprep.subr.bf16.mxu0 0
      %5644 = vmatpush1.bf16.msra.mxu0 0
      %5645 = vmatprep.subr.bf16.mxu0 0
      %5646 = vmatpush1.bf16.msra.mxu0 0
      %5647 = vmatprep.subr.bf16.mxu0 0
      %5648 = vmatpush1.bf16.msra.mxu0 0
      %5649 = vmatprep.subr.bf16.mxu0 0
      %5650 = vmatpush1.bf16.msra.mxu0 0
      %5651 = vmatprep.subr.bf16.mxu0 0
      %5652 = vmatpush1.bf16.msra.mxu0 0
      %5653 = vmatprep.subr.bf16.mxu0 0
      %5654 = vmatpush1.bf16.msra.mxu0 0
      %5655 = vmatprep.subr.bf16.mxu0 0
      %5656 = vmatpush1.bf16.msra.mxu0 0
      %5657 = vmatprep.subr.bf16.mxu0 0
      %5658 = vmatpush1.bf16.msra.mxu0 0
      %5659 = vmatprep.subr.bf16.mxu0 0
      %5660 = vmatpush1.bf16.msra.mxu0 0
      %5661 = vmatprep.subr.bf16.mxu0 0
      %5662 = vmatpush1.bf16.msra.mxu0 0
      %5663 = vmatprep.mubr.bf16.mxu0 0
      %5664 = vmatmul.mubr.bf16.gmra.mrb[0].mxu0 %v5335
      %v5665 = vpop.f32.mrb[0].mxu0
      %v5666 = vadd.f32 %v4445, %v5665
      %v5667 = vpop.f32.mrb[0].mxu0
      %v5668 = vpop.f32.mrb[0].mxu0
      %v5669 = vadd.f32 %v4448, %v5668
      %v5670 = vpop.f32.mrb[0].mxu0
      %5671 = vmatprep.mubr.bf16.mxu0 0
      %5672 = vmatmul.mubr.bf16.gmra.mrb[0].mxu0 %v5338
      %v5673 = vpop.f32.mrb[0].mxu0
      %v5674 = vadd.f32 %v4453, %v5673
      %v5675 = vpop.f32.mrb[0].mxu0
      %v5676 = vpop.f32.mrb[0].mxu0
      %v5677 = vadd.f32 %v4456, %v5676
      %v5678 = vpop.f32.mrb[0].mxu0
      %5679 = vmatprep.mubr.bf16.mxu0 0
      %5680 = vmatmul.mubr.bf16.gmra.mrb[0].mxu0 %v5341
      %v5681 = vpop.f32.mrb[0].mxu0
      %v5682 = vadd.f32 %v4461, %v5681
      %v5683 = vpop.f32.mrb[0].mxu0
      %v5684 = vpop.f32.mrb[0].mxu0
      %v5685 = vadd.f32 %v4464, %v5684
      %v5686 = vpop.f32.mrb[0].mxu0
      %5687 = vmatprep.mubr.bf16.mxu0 0
      %5688 = vmatmul.mubr.bf16.gmra.mrb[0].mxu0 %v5344
      %v5689 = vpop.f32.mrb[0].mxu0
      %v5690 = vadd.f32 %v4469, %v5689
      %v5691 = vpop.f32.mrb[0].mxu0
      %v5692 = vpop.f32.mrb[0].mxu0
      %v5693 = vadd.f32 %v4472, %v5692
      %v5694 = vpop.f32.mrb[0].mxu0
      %5695 = vmatprep.mubr.bf16.mxu0 0
      %5696 = vmatmul.mubr.bf16.gmra.mrb[0].mxu0 %v5347
      %v5697 = vpop.f32.mrb[0].mxu0
      %v5698 = vadd.f32 %v4477, %v5697
      %v5699 = vpop.f32.mrb[0].mxu0
      %v5700 = vpop.f32.mrb[0].mxu0
      %v5701 = vadd.f32 %v4480, %v5700
      %v5702 = vpop.f32.mrb[0].mxu0
      %5703 = vmatprep.mubr.bf16.mxu0 0
      %5704 = vmatmul.mubr.bf16.gmra.mrb[0].mxu0 %v5350
      %v5705 = vpop.f32.mrb[0].mxu0
      %v5706 = vadd.f32 %v4485, %v5705
      %v5707 = vpop.f32.mrb[0].mxu0
      %v5708 = vpop.f32.mrb[0].mxu0
      %v5709 = vadd.f32 %v4488, %v5708
      %v5710 = vpop.f32.mrb[0].mxu0
      %5711 = vmatprep.mubr.bf16.mxu0 0
      %5712 = vmatmul.mubr.bf16.gmra.mrb[0].mxu0 %v5353
      %v5713 = vpop.f32.mrb[0].mxu0
      %v5714 = vadd.f32 %v4493, %v5713
      %v5715 = vpop.f32.mrb[0].mxu0
      %v5716 = vpop.f32.mrb[0].mxu0
      %v5717 = vadd.f32 %v4496, %v5716
      %v5718 = vpop.f32.mrb[0].mxu0
      %5719 = vmatprep.mubr.bf16.mxu0 0
      %5720 = vmatmul.mubr.bf16.gmra.mrb[0].mxu0 %v5356
      %v5721 = vpop.f32.mrb[0].mxu0
      %v5722 = vadd.f32 %v4501, %v5721
      %v5723 = vpop.f32.mrb[0].mxu0
      %v5724 = vpop.f32.mrb[0].mxu0
      %v5725 = vadd.f32 %v4504, %v5724
      %v5726 = vpop.f32.mrb[0].mxu0
      %5727 = vmatprep.mubr.bf16.mxu0 0
      %5728 = vmatmul.mubr.bf16.gmra.mrb[0].mxu0 %v5359
      %v5729 = vpop.f32.mrb[0].mxu0
      %v5730 = vadd.f32 %v4509, %v5729
      %v5731 = vpop.f32.mrb[0].mxu0
      %v5732 = vpop.f32.mrb[0].mxu0
      %v5733 = vadd.f32 %v4512, %v5732
      %v5734 = vpop.f32.mrb[0].mxu0
      %5735 = vmatprep.mubr.bf16.mxu0 0
      %5736 = vmatmul.mubr.bf16.gmra.mrb[0].mxu0 %v5362
      %v5737 = vpop.f32.mrb[0].mxu0
      %v5738 = vadd.f32 %v4517, %v5737
      %v5739 = vpop.f32.mrb[0].mxu0
      %v5740 = vpop.f32.mrb[0].mxu0
      %v5741 = vadd.f32 %v4520, %v5740
      %v5742 = vpop.f32.mrb[0].mxu0
      %5743 = vmatprep.mubr.bf16.mxu0 0
      %5744 = vmatmul.mubr.bf16.gmra.mrb[0].mxu0 %v5365
      %v5745 = vpop.f32.mrb[0].mxu0
      %v5746 = vadd.f32 %v4525, %v5745
      %v5747 = vpop.f32.mrb[0].mxu0
      %v5748 = vpop.f32.mrb[0].mxu0
      %v5749 = vadd.f32 %v4528, %v5748
      %v5750 = vpop.f32.mrb[0].mxu0
      %5751 = vmatprep.mubr.bf16.mxu0 0
      %5752 = vmatmul.mubr.bf16.gmra.mrb[0].mxu0 %v5368
      %v5753 = vpop.f32.mrb[0].mxu0
      %v5754 = vadd.f32 %v4533, %v5753
      %v5755 = vpop.f32.mrb[0].mxu0
      %v5756 = vpop.f32.mrb[0].mxu0
      %v5757 = vadd.f32 %v4536, %v5756
      %v5758 = vpop.f32.mrb[0].mxu0
      %5759 = vmatprep.mubr.bf16.mxu0 0
      %5760 = vmatmul.mubr.bf16.gmra.mrb[0].mxu0 %v5371
      %v5761 = vpop.f32.mrb[0].mxu0
      %v5762 = vadd.f32 %v4541, %v5761
      %v5763 = vpop.f32.mrb[0].mxu0
      %v5764 = vpop.f32.mrb[0].mxu0
      %v5765 = vadd.f32 %v4544, %v5764
      %v5766 = vpop.f32.mrb[0].mxu0
      %5767 = vmatprep.mubr.bf16.mxu0 0
      %5768 = vmatmul.mubr.bf16.gmra.mrb[0].mxu0 %v5374
      %v5769 = vpop.f32.mrb[0].mxu0
      %v5770 = vadd.f32 %v4549, %v5769
      %v5771 = vpop.f32.mrb[0].mxu0
      %v5772 = vpop.f32.mrb[0].mxu0
      %v5773 = vadd.f32 %v4552, %v5772
      %v5774 = vpop.f32.mrb[0].mxu0
      %5775 = vmatprep.mubr.bf16.mxu0 0
      %5776 = vmatmul.mubr.bf16.gmra.mrb[0].mxu0 %v5377
      %v5777 = vpop.f32.mrb[0].mxu0
      %v5778 = vadd.f32 %v4557, %v5777
      %v5779 = vpop.f32.mrb[0].mxu0
      %v5780 = vpop.f32.mrb[0].mxu0
      %v5781 = vadd.f32 %v4560, %v5780
      %v5782 = vpop.f32.mrb[0].mxu0
      %5783 = vmatprep.mubr.bf16.mxu0 0
      %5784 = vmatmul.mubr.bf16.gmra.mrb[0].mxu0 %v5380
      %v5785 = vpop.f32.mrb[0].mxu0
      %v5786 = vadd.f32 %v4565, %v5785
      %v5787 = vpop.f32.mrb[0].mxu0
      %v5788 = vpop.f32.mrb[0].mxu0
      %v5789 = vadd.f32 %v4568, %v5788
      %v5790 = vpop.f32.mrb[0].mxu0
      %5791 = vmatprep.mubr.bf16.mxu0 0
      %5792 = vmatmul.mubr.bf16.gmra.mrb[0].mxu0 %v5383
      %v5793 = vpop.f32.mrb[0].mxu0
      %v5794 = vadd.f32 %v4573, %v5793
      %v5795 = vpop.f32.mrb[0].mxu0
      %v5796 = vpop.f32.mrb[0].mxu0
      %v5797 = vadd.f32 %v4576, %v5796
      %v5798 = vpop.f32.mrb[0].mxu0
      %5799 = vmatprep.mubr.bf16.mxu0 0
      %5800 = vmatmul.mubr.bf16.gmra.mrb[0].mxu0 %v5386
      %v5801 = vpop.f32.mrb[0].mxu0
      %v5802 = vadd.f32 %v4581, %v5801
      %v5803 = vpop.f32.mrb[0].mxu0
      %v5804 = vpop.f32.mrb[0].mxu0
      %v5805 = vadd.f32 %v4584, %v5804
      %v5806 = vpop.f32.mrb[0].mxu0
      %5807 = vmatprep.mubr.bf16.mxu0 0
      %5808 = vmatmul.mubr.bf16.gmra.mrb[0].mxu0 %v5389
      %v5809 = vpop.f32.mrb[0].mxu0
      %v5810 = vadd.f32 %v4589, %v5809
      %v5811 = vpop.f32.mrb[0].mxu0
      %v5812 = vpop.f32.mrb[0].mxu0
      %v5813 = vadd.f32 %v4592, %v5812
      %v5814 = vpop.f32.mrb[0].mxu0
      %5815 = vmatprep.mubr.bf16.mxu0 0
      %5816 = vmatmul.mubr.bf16.gmra.mrb[0].mxu0 %v5392
      %v5817 = vpop.f32.mrb[0].mxu0
      %v5818 = vadd.f32 %v4597, %v5817
      %v5819 = vpop.f32.mrb[0].mxu0
      %v5820 = vpop.f32.mrb[0].mxu0
      %v5821 = vadd.f32 %v4600, %v5820
      %v5822 = vpop.f32.mrb[0].mxu0
      %5823 = vmatprep.mubr.bf16.mxu0 0
      %5824 = vmatmul.mubr.bf16.gmra.mrb[0].mxu0 %v5395
      %v5825 = vpop.f32.mrb[0].mxu0
      %v5826 = vadd.f32 %v4605, %v5825
      %v5827 = vpop.f32.mrb[0].mxu0
      %v5828 = vpop.f32.mrb[0].mxu0
      %v5829 = vadd.f32 %v4608, %v5828
      %v5830 = vpop.f32.mrb[0].mxu0
      %5831 = vmatprep.mubr.bf16.mxu0 0
      %5832 = vmatmul.mubr.bf16.gmra.mrb[0].mxu0 %v5398
      %v5833 = vpop.f32.mrb[0].mxu0
      %v5834 = vadd.f32 %v4613, %v5833
      %v5835 = vpop.f32.mrb[0].mxu0
      %v5836 = vpop.f32.mrb[0].mxu0
      %v5837 = vadd.f32 %v4616, %v5836
      %v5838 = vpop.f32.mrb[0].mxu0
      %5839 = vmatprep.mubr.bf16.mxu0 0
      %5840 = vmatmul.mubr.bf16.gmra.mrb[0].mxu0 %v5401
      %v5841 = vpop.f32.mrb[0].mxu0
      %v5842 = vadd.f32 %v4621, %v5841
      %v5843 = vpop.f32.mrb[0].mxu0
      %v5844 = vpop.f32.mrb[0].mxu0
      %v5845 = vadd.f32 %v4624, %v5844
      %v5846 = vpop.f32.mrb[0].mxu0
      %5847 = vmatprep.mubr.bf16.mxu0 0
      %5848 = vmatmul.mubr.bf16.gmra.mrb[0].mxu0 %v5404
      %v5849 = vpop.f32.mrb[0].mxu0
      %v5850 = vadd.f32 %v4629, %v5849
      %v5851 = vpop.f32.mrb[0].mxu0
      %v5852 = vpop.f32.mrb[0].mxu0
      %v5853 = vadd.f32 %v4632, %v5852
      %v5854 = vpop.f32.mrb[0].mxu0
      %5855 = vmatprep.mubr.bf16.mxu0 0
      %5856 = vmatmul.mubr.bf16.gmra.mrb[0].mxu0 %v5407
      %v5857 = vpop.f32.mrb[0].mxu0
      %v5858 = vadd.f32 %v4637, %v5857
      %v5859 = vpop.f32.mrb[0].mxu0
      %v5860 = vpop.f32.mrb[0].mxu0
      %v5861 = vadd.f32 %v4640, %v5860
      %v5862 = vpop.f32.mrb[0].mxu0
      %5863 = vmatprep.mubr.bf16.mxu0 0
      %5864 = vmatmul.mubr.bf16.gmra.mrb[0].mxu0 %v5410
      %v5865 = vpop.f32.mrb[0].mxu0
      %v5866 = vadd.f32 %v4645, %v5865
      %v5867 = vpop.f32.mrb[0].mxu0
      %v5868 = vpop.f32.mrb[0].mxu0
      %v5869 = vadd.f32 %v4648, %v5868
      %v5870 = vpop.f32.mrb[0].mxu0
      %5871 = vmatprep.mubr.bf16.mxu0 0
      %5872 = vmatmul.mubr.bf16.gmra.mrb[0].mxu0 %v5413
      %v5873 = vpop.f32.mrb[0].mxu0
      %v5874 = vadd.f32 %v4653, %v5873
      %v5875 = vpop.f32.mrb[0].mxu0
      %v5876 = vpop.f32.mrb[0].mxu0
      %v5877 = vadd.f32 %v4656, %v5876
      %v5878 = vpop.f32.mrb[0].mxu0
      %5879 = vmatprep.mubr.bf16.mxu0 0
      %5880 = vmatmul.mubr.bf16.gmra.mrb[0].mxu0 %v5416
      %v5881 = vpop.f32.mrb[0].mxu0
      %v5882 = vadd.f32 %v4661, %v5881
      %v5883 = vpop.f32.mrb[0].mxu0
      %v5884 = vpop.f32.mrb[0].mxu0
      %v5885 = vadd.f32 %v4664, %v5884
      %v5886 = vpop.f32.mrb[0].mxu0
      %5887 = vmatprep.mubr.bf16.mxu0 0
      %5888 = vmatmul.mubr.bf16.gmra.mrb[0].mxu0 %v5419
      %v5889 = vpop.f32.mrb[0].mxu0
      %v5890 = vadd.f32 %v4669, %v5889
      %v5891 = vpop.f32.mrb[0].mxu0
      %v5892 = vpop.f32.mrb[0].mxu0
      %v5893 = vadd.f32 %v4672, %v5892
      %v5894 = vpop.f32.mrb[0].mxu0
      %5895 = vmatprep.mubr.bf16.mxu0 0
      %5896 = vmatmul.mubr.bf16.gmra.mrb[0].mxu0 %v5422
      %v5897 = vpop.f32.mrb[0].mxu0
      %v5898 = vadd.f32 %v4677, %v5897
      %v5899 = vpop.f32.mrb[0].mxu0
      %v5900 = vpop.f32.mrb[0].mxu0
      %v5901 = vadd.f32 %v4680, %v5900
      %v5902 = vpop.f32.mrb[0].mxu0
      %5903 = vmatprep.mubr.bf16.mxu0 0
      %5904 = vmatmul.mubr.bf16.gmra.mrb[0].mxu0 %v5425
      %v5905 = vpop.f32.mrb[0].mxu0
      %v5906 = vadd.f32 %v4685, %v5905
      %v5907 = vpop.f32.mrb[0].mxu0
      %v5908 = vpop.f32.mrb[0].mxu0
      %v5909 = vadd.f32 %v4688, %v5908
      %v5910 = vpop.f32.mrb[0].mxu0
      %5911 = vmatprep.mubr.bf16.mxu0 0
      %5912 = vmatmul.mubr.bf16.gmra.mrb[0].mxu0 %v5428
      %v5913 = vpop.f32.mrb[0].mxu0
      %v5914 = vadd.f32 %v4693, %v5913
      %v5915 = vpop.f32.mrb[0].mxu0
      %v5916 = vpop.f32.mrb[0].mxu0
      %v5917 = vadd.f32 %v4696, %v5916
      %v5918 = vpop.f32.mrb[0].mxu0
      %5919 = vmatprep.mubr.bf16.mxu0 0
      %5920 = vmatmul.mubr.bf16.gmra.mrb[0].mxu0 %v5431
      %v5921 = vpop.f32.mrb[0].mxu0
      %v5922 = vadd.f32 %v4701, %v5921
      %v5923 = vpop.f32.mrb[0].mxu0
      %v5924 = vpop.f32.mrb[0].mxu0
      %v5925 = vadd.f32 %v4704, %v5924
      %v5926 = vpop.f32.mrb[0].mxu0
      %5927 = vmatprep.mubr.bf16.mxu0 0
      %5928 = vmatmul.mubr.bf16.gmra.mrb[0].mxu0 %v5434
      %v5929 = vpop.f32.mrb[0].mxu0
      %v5930 = vadd.f32 %v4709, %v5929
      %v5931 = vpop.f32.mrb[0].mxu0
      %v5932 = vpop.f32.mrb[0].mxu0
      %v5933 = vadd.f32 %v4712, %v5932
      %v5934 = vpop.f32.mrb[0].mxu0
      %5935 = vmatprep.mubr.bf16.mxu0 0
      %5936 = vmatmul.mubr.bf16.gmra.mrb[0].mxu0 %v5437
      %v5937 = vpop.f32.mrb[0].mxu0
      %v5938 = vadd.f32 %v4717, %v5937
      %v5939 = vpop.f32.mrb[0].mxu0
      %v5940 = vpop.f32.mrb[0].mxu0
      %v5941 = vadd.f32 %v4720, %v5940
      %v5942 = vpop.f32.mrb[0].mxu0
      %5943 = vmatprep.mubr.bf16.mxu0 0
      %5944 = vmatmul.mubr.bf16.gmra.mrb[0].mxu0 %v5440
      %v5945 = vpop.f32.mrb[0].mxu0
      %v5946 = vadd.f32 %v4725, %v5945
      %v5947 = vpop.f32.mrb[0].mxu0
      %v5948 = vpop.f32.mrb[0].mxu0
      %v5949 = vadd.f32 %v4728, %v5948
      %v5950 = vpop.f32.mrb[0].mxu0
      %5951 = vmatprep.mubr.bf16.mxu0 0
      %5952 = vmatmul.mubr.bf16.gmra.mrb[0].mxu0 %v5443
      %v5953 = vpop.f32.mrb[0].mxu0
      %v5954 = vadd.f32 %v4733, %v5953
      %v5955 = vpop.f32.mrb[0].mxu0
      %v5956 = vpop.f32.mrb[0].mxu0
      %v5957 = vadd.f32 %v4736, %v5956
      %v5958 = vpop.f32.mrb[0].mxu0
      %5959 = vmatprep.mubr.bf16.mxu0 0
      %5960 = vmatmul.mubr.bf16.gmra.mrb[0].mxu0 %v5446
      %v5961 = vpop.f32.mrb[0].mxu0
      %v5962 = vadd.f32 %v4741, %v5961
      %v5963 = vpop.f32.mrb[0].mxu0
      %v5964 = vpop.f32.mrb[0].mxu0
      %v5965 = vadd.f32 %v4744, %v5964
      %v5966 = vpop.f32.mrb[0].mxu0
      %5967 = vmatprep.mubr.bf16.mxu0 0
      %5968 = vmatmul.mubr.bf16.gmra.mrb[0].mxu0 %v5449
      %v5969 = vpop.f32.mrb[0].mxu0
      %v5970 = vadd.f32 %v4749, %v5969
      %v5971 = vpop.f32.mrb[0].mxu0
      %v5972 = vpop.f32.mrb[0].mxu0
      %v5973 = vadd.f32 %v4752, %v5972
      %v5974 = vpop.f32.mrb[0].mxu0
      %5975 = vmatprep.mubr.bf16.mxu0 0
      %5976 = vmatmul.mubr.bf16.gmra.mrb[0].mxu0 %v5452
      %v5977 = vpop.f32.mrb[0].mxu0
      %v5978 = vadd.f32 %v4757, %v5977
      %v5979 = vpop.f32.mrb[0].mxu0
      %v5980 = vpop.f32.mrb[0].mxu0
      %v5981 = vadd.f32 %v4760, %v5980
      %v5982 = vpop.f32.mrb[0].mxu0
      %5983 = vmatprep.mubr.bf16.mxu0 0
      %5984 = vmatmul.mubr.bf16.gmra.mrb[0].mxu0 %v5455
      %v5985 = vpop.f32.mrb[0].mxu0
      %v5986 = vadd.f32 %v4765, %v5985
      %v5987 = vpop.f32.mrb[0].mxu0
      %v5988 = vpop.f32.mrb[0].mxu0
      %v5989 = vadd.f32 %v4768, %v5988
      %v5990 = vpop.f32.mrb[0].mxu0
      %5991 = vmatprep.mubr.bf16.mxu0 0
      %5992 = vmatmul.mubr.bf16.gmra.mrb[0].mxu0 %v5458
      %v5993 = vpop.f32.mrb[0].mxu0
      %v5994 = vadd.f32 %v4773, %v5993
      %v5995 = vpop.f32.mrb[0].mxu0
      %v5996 = vpop.f32.mrb[0].mxu0
      %v5997 = vadd.f32 %v4776, %v5996
      %v5998 = vpop.f32.mrb[0].mxu0
      %5999 = vmatprep.mubr.bf16.mxu0 0
      %6000 = vmatmul.mubr.bf16.gmra.mrb[0].mxu0 %v5461
      %v6001 = vpop.f32.mrb[0].mxu0
      %v6002 = vadd.f32 %v4781, %v6001
      %v6003 = vpop.f32.mrb[0].mxu0
      %v6004 = vpop.f32.mrb[0].mxu0
      %v6005 = vadd.f32 %v4784, %v6004
      %v6006 = vpop.f32.mrb[0].mxu0
      %6007 = vmatprep.mubr.bf16.mxu0 0
      %6008 = vmatmul.mubr.bf16.gmra.mrb[0].mxu0 %v5464
      %v6009 = vpop.f32.mrb[0].mxu0
      %v6010 = vadd.f32 %v4789, %v6009
      %v6011 = vpop.f32.mrb[0].mxu0
      %v6012 = vpop.f32.mrb[0].mxu0
      %v6013 = vadd.f32 %v4792, %v6012
      %v6014 = vpop.f32.mrb[0].mxu0
      %6015 = vmatprep.mubr.bf16.mxu0 0
      %6016 = vmatmul.mubr.bf16.gmra.mrb[0].mxu0 %v5467
      %v6017 = vpop.f32.mrb[0].mxu0
      %v6018 = vadd.f32 %v4797, %v6017
      %v6019 = vpop.f32.mrb[0].mxu0
      %v6020 = vpop.f32.mrb[0].mxu0
      %v6021 = vadd.f32 %v4800, %v6020
      %v6022 = vpop.f32.mrb[0].mxu0
      %6023 = vmatprep.mubr.bf16.mxu0 0
      %6024 = vmatmul.mubr.bf16.gmra.mrb[0].mxu0 %v5470
      %v6025 = vpop.f32.mrb[0].mxu0
      %v6026 = vadd.f32 %v4805, %v6025
      %v6027 = vpop.f32.mrb[0].mxu0
      %v6028 = vpop.f32.mrb[0].mxu0
      %v6029 = vadd.f32 %v4808, %v6028
      %v6030 = vpop.f32.mrb[0].mxu0
      %6031 = vmatprep.mubr.bf16.mxu0 0
      %6032 = vmatmul.mubr.bf16.gmra.mrb[0].mxu0 %v5473
      %v6033 = vpop.f32.mrb[0].mxu0
      %v6034 = vadd.f32 %v4813, %v6033
      %v6035 = vpop.f32.mrb[0].mxu0
      %v6036 = vpop.f32.mrb[0].mxu0
      %v6037 = vadd.f32 %v4816, %v6036
      %v6038 = vpop.f32.mrb[0].mxu0
      %6039 = vmatprep.mubr.bf16.mxu0 0
      %6040 = vmatmul.mubr.bf16.gmra.mrb[0].mxu0 %v5476
      %v6041 = vpop.f32.mrb[0].mxu0
      %v6042 = vadd.f32 %v4821, %v6041
      %v6043 = vpop.f32.mrb[0].mxu0
      %v6044 = vpop.f32.mrb[0].mxu0
      %v6045 = vadd.f32 %v4824, %v6044
      %v6046 = vpop.f32.mrb[0].mxu0
      %6047 = vmatprep.mubr.bf16.mxu0 0
      %6048 = vmatmul.mubr.bf16.gmra.mrb[0].mxu0 %v5479
      %v6049 = vpop.f32.mrb[0].mxu0
      %v6050 = vadd.f32 %v4829, %v6049
      %v6051 = vpop.f32.mrb[0].mxu0
      %v6052 = vpop.f32.mrb[0].mxu0
      %v6053 = vadd.f32 %v4832, %v6052
      %v6054 = vpop.f32.mrb[0].mxu0
      %6055 = vmatprep.mubr.bf16.mxu0 0
      %6056 = vmatmul.mubr.bf16.gmra.mrb[0].mxu0 %v5482
      %v6057 = vpop.f32.mrb[0].mxu0
      %v6058 = vadd.f32 %v4837, %v6057
      %v6059 = vpop.f32.mrb[0].mxu0
      %v6060 = vpop.f32.mrb[0].mxu0
      %v6061 = vadd.f32 %v4840, %v6060
      %v6062 = vpop.f32.mrb[0].mxu0
      %6063 = vmatprep.mubr.bf16.mxu0 0
      %6064 = vmatmul.mubr.bf16.gmra.mrb[0].mxu0 %v5485
      %v6065 = vpop.f32.mrb[0].mxu0
      %v6066 = vadd.f32 %v4845, %v6065
      %v6067 = vpop.f32.mrb[0].mxu0
      %v6068 = vpop.f32.mrb[0].mxu0
      %v6069 = vadd.f32 %v4848, %v6068
      %v6070 = vpop.f32.mrb[0].mxu0
      %6071 = vmatprep.mubr.bf16.mxu0 0
      %6072 = vmatmul.mubr.bf16.gmra.mrb[0].mxu0 %v5488
      %v6073 = vpop.f32.mrb[0].mxu0
      %v6074 = vadd.f32 %v4853, %v6073
      %v6075 = vpop.f32.mrb[0].mxu0
      %v6076 = vpop.f32.mrb[0].mxu0
      %v6077 = vadd.f32 %v4856, %v6076
      %v6078 = vpop.f32.mrb[0].mxu0
      %6079 = vmatprep.mubr.bf16.mxu0 0
      %6080 = vmatmul.mubr.bf16.gmra.mrb[0].mxu0 %v5491
      %v6081 = vpop.f32.mrb[0].mxu0
      %v6082 = vadd.f32 %v4861, %v6081
      %v6083 = vpop.f32.mrb[0].mxu0
      %v6084 = vpop.f32.mrb[0].mxu0
      %v6085 = vadd.f32 %v4864, %v6084
      %v6086 = vpop.f32.mrb[0].mxu0
      %6087 = vmatprep.mubr.bf16.mxu0 0
      %6088 = vmatmul.mubr.bf16.gmra.mrb[0].mxu0 %v5494
      %v6089 = vpop.f32.mrb[0].mxu0
      %v6090 = vadd.f32 %v4869, %v6089
      %v6091 = vpop.f32.mrb[0].mxu0
      %v6092 = vpop.f32.mrb[0].mxu0
      %v6093 = vadd.f32 %v4872, %v6092
      %v6094 = vpop.f32.mrb[0].mxu0
      %6095 = vmatprep.mubr.bf16.mxu0 0
      %6096 = vmatmul.mubr.bf16.gmra.mrb[0].mxu0 %v5497
      %v6097 = vpop.f32.mrb[0].mxu0
      %v6098 = vadd.f32 %v4877, %v6097
      %v6099 = vpop.f32.mrb[0].mxu0
      %v6100 = vpop.f32.mrb[0].mxu0
      %v6101 = vadd.f32 %v4880, %v6100
      %v6102 = vpop.f32.mrb[0].mxu0
      %6103 = vmatprep.mubr.bf16.mxu0 0
      %6104 = vmatmul.mubr.bf16.gmra.mrb[0].mxu0 %v5500
      %v6105 = vpop.f32.mrb[0].mxu0
      %v6106 = vadd.f32 %v4885, %v6105
      %v6107 = vpop.f32.mrb[0].mxu0
      %v6108 = vpop.f32.mrb[0].mxu0
      %v6109 = vadd.f32 %v4888, %v6108
      %v6110 = vpop.f32.mrb[0].mxu0
      %6111 = vmatprep.mubr.bf16.mxu0 0
      %6112 = vmatmul.mubr.bf16.gmra.mrb[0].mxu0 %v5503
      %v6113 = vpop.f32.mrb[0].mxu0
      %v6114 = vadd.f32 %v4893, %v6113
      %v6115 = vpop.f32.mrb[0].mxu0
      %v6116 = vpop.f32.mrb[0].mxu0
      %v6117 = vadd.f32 %v4896, %v6116
      %v6118 = vpop.f32.mrb[0].mxu0
      %6119 = vmatprep.mubr.bf16.mxu0 0
      %6120 = vmatmul.mubr.bf16.gmra.mrb[0].mxu0 %v5506
      %v6121 = vpop.f32.mrb[0].mxu0
      %v6122 = vadd.f32 %v4901, %v6121
      %v6123 = vpop.f32.mrb[0].mxu0
      %v6124 = vpop.f32.mrb[0].mxu0
      %v6125 = vadd.f32 %v4904, %v6124
      %v6126 = vpop.f32.mrb[0].mxu0
      %6127 = vmatprep.mubr.bf16.mxu0 0
      %6128 = vmatmul.mubr.bf16.gmra.mrb[0].mxu0 %v5509
      %v6129 = vpop.f32.mrb[0].mxu0
      %v6130 = vadd.f32 %v4909, %v6129
      %v6131 = vpop.f32.mrb[0].mxu0
      %v6132 = vpop.f32.mrb[0].mxu0
      %v6133 = vadd.f32 %v4912, %v6132
      %v6134 = vpop.f32.mrb[0].mxu0
      %6135 = vmatprep.mubr.bf16.mxu0 0
      %6136 = vmatmul.mubr.bf16.gmra.mrb[0].mxu0 %v5512
      %v6137 = vpop.f32.mrb[0].mxu0
      %v6138 = vadd.f32 %v4917, %v6137
      %v6139 = vpop.f32.mrb[0].mxu0
      %v6140 = vpop.f32.mrb[0].mxu0
      %v6141 = vadd.f32 %v4920, %v6140
      %v6142 = vpop.f32.mrb[0].mxu0
      %6143 = vmatprep.mubr.bf16.mxu0 0
      %6144 = vmatmul.mubr.bf16.gmra.mrb[0].mxu0 %v5515
      %v6145 = vpop.f32.mrb[0].mxu0
      %v6146 = vadd.f32 %v4925, %v6145
      %v6147 = vpop.f32.mrb[0].mxu0
      %v6148 = vpop.f32.mrb[0].mxu0
      %v6149 = vadd.f32 %v4928, %v6148
      %v6150 = vpop.f32.mrb[0].mxu0
      %6151 = vmatprep.mubr.bf16.mxu0 0
      %6152 = vmatmul.mubr.bf16.gmra.mrb[0].mxu0 %v5518
      %v6153 = vpop.f32.mrb[0].mxu0
      %v6154 = vadd.f32 %v4933, %v6153
      %v6155 = vpop.f32.mrb[0].mxu0
      %v6156 = vpop.f32.mrb[0].mxu0
      %v6157 = vadd.f32 %v4936, %v6156
      %v6158 = vpop.f32.mrb[0].mxu0
      %6159 = vmatprep.mubr.bf16.mxu0 0
      %6160 = vmatmul.mubr.bf16.gmra.mrb[0].mxu0 %v5521
      %v6161 = vpop.f32.mrb[0].mxu0
      %v6162 = vadd.f32 %v4941, %v6161
      %v6163 = vpop.f32.mrb[0].mxu0
      %v6164 = vpop.f32.mrb[0].mxu0
      %v6165 = vadd.f32 %v4944, %v6164
      %v6166 = vpop.f32.mrb[0].mxu0
      %6167 = vmatprep.mubr.bf16.mxu0 0
      %6168 = vmatmul.mubr.bf16.gmra.mrb[0].mxu0 %v5524
      %v6169 = vpop.f32.mrb[0].mxu0
      %v6170 = vadd.f32 %v4949, %v6169
      %v6171 = vpop.f32.mrb[0].mxu0
      %v6172 = vpop.f32.mrb[0].mxu0
      %v6173 = vadd.f32 %v4952, %v6172
      %v6174 = vpop.f32.mrb[0].mxu0
      %6175 = vmatprep.mubr.bf16.mxu0 0
      %6176 = vmatmul.mubr.bf16.gmra.mrb[0].mxu0 %v5527
      %v6177 = vpop.f32.mrb[0].mxu0
      %v6178 = vadd.f32 %v4957, %v6177
      %v6179 = vpop.f32.mrb[0].mxu0
      %v6180 = vpop.f32.mrb[0].mxu0
      %v6181 = vadd.f32 %v4960, %v6180
      %v6182 = vpop.f32.mrb[0].mxu0
      %6183 = vmatprep.mubr.bf16.mxu0 0
      %6184 = vmatmul.mubr.bf16.gmra.mrb[0].mxu0 %v5530
      %v6185 = vpop.f32.mrb[0].mxu0
      %v6186 = vadd.f32 %v4965, %v6185
      %v6187 = vpop.f32.mrb[0].mxu0
      %v6188 = vpop.f32.mrb[0].mxu0
      %v6189 = vadd.f32 %v4968, %v6188
      %v6190 = vpop.f32.mrb[0].mxu0
      %6191 = vmatprep.mubr.bf16.mxu0 0
      %6192 = vmatmul.mubr.bf16.gmra.mrb[0].mxu0 %v5533
      %v6193 = vpop.f32.mrb[0].mxu0
      %v6194 = vadd.f32 %v4973, %v6193
      %v6195 = vpop.f32.mrb[0].mxu0
      %v6196 = vpop.f32.mrb[0].mxu0
      %v6197 = vadd.f32 %v4976, %v6196
      %v6198 = vpop.f32.mrb[0].mxu0
      %6199 = vmatprep.mubr.bf16.mxu0 0
      %6200 = vmatmul.mubr.bf16.gmra.mrb[0].mxu0 %v5536
      %v6201 = vpop.f32.mrb[0].mxu0
      %v6202 = vadd.f32 %v4981, %v6201
      %v6203 = vpop.f32.mrb[0].mxu0
      %v6204 = vpop.f32.mrb[0].mxu0
      %v6205 = vadd.f32 %v4984, %v6204
      %v6206 = vpop.f32.mrb[0].mxu0
      %6207 = vmatprep.mubr.bf16.mxu0 0
      %6208 = vmatmul.mubr.bf16.gmra.mrb[0].mxu0 %v5539
      %v6209 = vpop.f32.mrb[0].mxu0
      %v6210 = vadd.f32 %v4989, %v6209
      %v6211 = vpop.f32.mrb[0].mxu0
      %v6212 = vpop.f32.mrb[0].mxu0
      %v6213 = vadd.f32 %v4992, %v6212
      %v6214 = vpop.f32.mrb[0].mxu0
      %6215 = vmatprep.mubr.bf16.mxu0 0
      %6216 = vmatmul.mubr.bf16.gmra.mrb[0].mxu0 %v5542
      %v6217 = vpop.f32.mrb[0].mxu0
      %v6218 = vadd.f32 %v4997, %v6217
      %v6219 = vpop.f32.mrb[0].mxu0
      %v6220 = vpop.f32.mrb[0].mxu0
      %v6221 = vadd.f32 %v5000, %v6220
      %v6222 = vpop.f32.mrb[0].mxu0
      %6223 = vmatprep.mubr.bf16.mxu0 0
      %6224 = vmatmul.mubr.bf16.gmra.mrb[0].mxu0 %v5545
      %v6225 = vpop.f32.mrb[0].mxu0
      %v6226 = vadd.f32 %v5005, %v6225
      %v6227 = vpop.f32.mrb[0].mxu0
      %v6228 = vpop.f32.mrb[0].mxu0
      %v6229 = vadd.f32 %v5008, %v6228
      %v6230 = vpop.f32.mrb[0].mxu0
      %6231 = vmatprep.mubr.bf16.mxu0 0
      %6232 = vmatmul.mubr.bf16.gmra.mrb[0].mxu0 %v5548
      %v6233 = vpop.f32.mrb[0].mxu0
      %v6234 = vadd.f32 %v5013, %v6233
      %v6235 = vpop.f32.mrb[0].mxu0
      %v6236 = vpop.f32.mrb[0].mxu0
      %v6237 = vadd.f32 %v5016, %v6236
      %v6238 = vpop.f32.mrb[0].mxu0
      %6239 = vmatprep.mubr.bf16.mxu0 0
      %6240 = vmatmul.mubr.bf16.gmra.mrb[0].mxu0 %v5551
      %v6241 = vpop.f32.mrb[0].mxu0
      %v6242 = vadd.f32 %v5021, %v6241
      %v6243 = vpop.f32.mrb[0].mxu0
      %v6244 = vpop.f32.mrb[0].mxu0
      %v6245 = vadd.f32 %v5024, %v6244
      %v6246 = vpop.f32.mrb[0].mxu0
      %6247 = vmatprep.mubr.bf16.mxu0 0
      %6248 = vmatmul.mubr.bf16.gmra.mrb[0].mxu0 %v5554
      %v6249 = vpop.f32.mrb[0].mxu0
      %v6250 = vadd.f32 %v5029, %v6249
      %v6251 = vpop.f32.mrb[0].mxu0
      %v6252 = vpop.f32.mrb[0].mxu0
      %v6253 = vadd.f32 %v5032, %v6252
      %v6254 = vpop.f32.mrb[0].mxu0
      %6255 = vmatprep.mubr.bf16.mxu0 0
      %6256 = vmatmul.mubr.bf16.gmra.mrb[0].mxu0 %v5557
      %v6257 = vpop.f32.mrb[0].mxu0
      %v6258 = vadd.f32 %v5037, %v6257
      %v6259 = vpop.f32.mrb[0].mxu0
      %v6260 = vpop.f32.mrb[0].mxu0
      %v6261 = vadd.f32 %v5040, %v6260
      %v6262 = vpop.f32.mrb[0].mxu0
      %6263 = vmatprep.mubr.bf16.mxu0 0
      %6264 = vmatmul.mubr.bf16.gmra.mrb[0].mxu0 %v5560
      %v6265 = vpop.f32.mrb[0].mxu0
      %v6266 = vadd.f32 %v5045, %v6265
      %v6267 = vpop.f32.mrb[0].mxu0
      %v6268 = vpop.f32.mrb[0].mxu0
      %v6269 = vadd.f32 %v5048, %v6268
      %v6270 = vpop.f32.mrb[0].mxu0
      %6271 = vmatprep.mubr.bf16.mxu0 0
      %6272 = vmatmul.mubr.bf16.gmra.mrb[0].mxu0 %v5563
      %v6273 = vpop.f32.mrb[0].mxu0
      %v6274 = vadd.f32 %v5053, %v6273
      %v6275 = vpop.f32.mrb[0].mxu0
      %v6276 = vpop.f32.mrb[0].mxu0
      %v6277 = vadd.f32 %v5056, %v6276
      %v6278 = vpop.f32.mrb[0].mxu0
      %6279 = vmatprep.mubr.bf16.mxu0 0
      %6280 = vmatmul.mubr.bf16.gmra.mrb[0].mxu0 %v5566
      %v6281 = vpop.f32.mrb[0].mxu0
      %v6282 = vadd.f32 %v5061, %v6281
      %v6283 = vpop.f32.mrb[0].mxu0
      %v6284 = vpop.f32.mrb[0].mxu0
      %v6285 = vadd.f32 %v5064, %v6284
      %v6286 = vpop.f32.mrb[0].mxu0
      %6287 = vmatprep.mubr.bf16.mxu0 0
      %6288 = vmatmul.mubr.bf16.gmra.mrb[0].mxu0 %v5569
      %v6289 = vpop.f32.mrb[0].mxu0
      %v6290 = vadd.f32 %v5069, %v6289
      %v6291 = vpop.f32.mrb[0].mxu0
      %v6292 = vpop.f32.mrb[0].mxu0
      %v6293 = vadd.f32 %v5072, %v6292
      %v6294 = vpop.f32.mrb[0].mxu0
      %6295 = vmatprep.mubr.bf16.mxu0 0
      %6296 = vmatmul.mubr.bf16.gmra.mrb[0].mxu0 %v5572
      %v6297 = vpop.f32.mrb[0].mxu0
      %v6298 = vadd.f32 %v5077, %v6297
      %v6299 = vpop.f32.mrb[0].mxu0
      %v6300 = vpop.f32.mrb[0].mxu0
      %v6301 = vadd.f32 %v5080, %v6300
      %v6302 = vpop.f32.mrb[0].mxu0
      %6303 = vmatprep.mubr.bf16.mxu0 0
      %6304 = vmatmul.mubr.bf16.gmra.mrb[0].mxu0 %v5575
      %v6305 = vpop.f32.mrb[0].mxu0
      %v6306 = vadd.f32 %v5085, %v6305
      %v6307 = vpop.f32.mrb[0].mxu0
      %v6308 = vpop.f32.mrb[0].mxu0
      %v6309 = vadd.f32 %v5088, %v6308
      %v6310 = vpop.f32.mrb[0].mxu0
      %6311 = vmatprep.mubr.bf16.mxu0 0
      %6312 = vmatmul.mubr.bf16.gmra.mrb[0].mxu0 %v5578
      %v6313 = vpop.f32.mrb[0].mxu0
      %v6314 = vadd.f32 %v5093, %v6313
      %v6315 = vpop.f32.mrb[0].mxu0
      %v6316 = vpop.f32.mrb[0].mxu0
      %v6317 = vadd.f32 %v5096, %v6316
      %v6318 = vpop.f32.mrb[0].mxu0
      %6319 = vmatprep.mubr.bf16.mxu0 0
      %6320 = vmatmul.mubr.bf16.gmra.mrb[0].mxu0 %v5581
      %v6321 = vpop.f32.mrb[0].mxu0
      %v6322 = vadd.f32 %v5101, %v6321
      %v6323 = vpop.f32.mrb[0].mxu0
      %v6324 = vpop.f32.mrb[0].mxu0
      %v6325 = vadd.f32 %v5104, %v6324
      %v6326 = vpop.f32.mrb[0].mxu0
      %6327 = vmatprep.mubr.bf16.mxu0 0
      %6328 = vmatmul.mubr.bf16.gmra.mrb[0].mxu0 %v5584
      %v6329 = vpop.f32.mrb[0].mxu0
      %v6330 = vadd.f32 %v5109, %v6329
      %v6331 = vpop.f32.mrb[0].mxu0
      %v6332 = vpop.f32.mrb[0].mxu0
      %v6333 = vadd.f32 %v5112, %v6332
      %v6334 = vpop.f32.mrb[0].mxu0
      %6335 = vmatprep.mubr.bf16.mxu0 0
      %6336 = vmatmul.mubr.bf16.gmra.mrb[0].mxu0 %v5587
      %v6337 = vpop.f32.mrb[0].mxu0
      %v6338 = vadd.f32 %v5117, %v6337
      %v6339 = vpop.f32.mrb[0].mxu0
      %v6340 = vpop.f32.mrb[0].mxu0
      %v6341 = vadd.f32 %v5120, %v6340
      %v6342 = vpop.f32.mrb[0].mxu0
      %6343 = vmatprep.mubr.bf16.mxu0 0
      %6344 = vmatmul.mubr.bf16.gmra.mrb[0].mxu0 %v5590
      %v6345 = vpop.f32.mrb[0].mxu0
      %v6346 = vadd.f32 %v5125, %v6345
      %v6347 = vpop.f32.mrb[0].mxu0
      %v6348 = vpop.f32.mrb[0].mxu0
      %v6349 = vadd.f32 %v5128, %v6348
      %v6350 = vpop.f32.mrb[0].mxu0
      %6351 = vmatprep.mubr.bf16.mxu0 0
      %6352 = vmatmul.mubr.bf16.gmra.mrb[0].mxu0 %v5593
      %v6353 = vpop.f32.mrb[0].mxu0
      %v6354 = vadd.f32 %v5133, %v6353
      %v6355 = vpop.f32.mrb[0].mxu0
      %v6356 = vpop.f32.mrb[0].mxu0
      %v6357 = vadd.f32 %v5136, %v6356
      %v6358 = vpop.f32.mrb[0].mxu0
      %6359 = vmatprep.mubr.bf16.mxu0 0
      %6360 = vmatmul.mubr.bf16.gmra.mrb[0].mxu0 %v5596
      %v6361 = vpop.f32.mrb[0].mxu0
      %v6362 = vadd.f32 %v5141, %v6361
      %v6363 = vpop.f32.mrb[0].mxu0
      %v6364 = vpop.f32.mrb[0].mxu0
      %v6365 = vadd.f32 %v5144, %v6364
      %v6366 = vpop.f32.mrb[0].mxu0
      %6367 = vmatprep.mubr.bf16.mxu0 0
      %6368 = vmatmul.mubr.bf16.gmra.mrb[0].mxu0 %v5599
      %v6369 = vpop.f32.mrb[0].mxu0
      %v6370 = vadd.f32 %v5149, %v6369
      %v6371 = vpop.f32.mrb[0].mxu0
      %v6372 = vpop.f32.mrb[0].mxu0
      %v6373 = vadd.f32 %v5152, %v6372
      %v6374 = vpop.f32.mrb[0].mxu0
      %6375 = vmatprep.mubr.bf16.mxu0 0
      %6376 = vmatmul.mubr.bf16.gmra.mrb[0].mxu0 %v5602
      %v6377 = vpop.f32.mrb[0].mxu0
      %v6378 = vadd.f32 %v5157, %v6377
      %v6379 = vpop.f32.mrb[0].mxu0
      %v6380 = vpop.f32.mrb[0].mxu0
      %v6381 = vadd.f32 %v5160, %v6380
      %v6382 = vpop.f32.mrb[0].mxu0
      %6383 = vmatprep.mubr.bf16.mxu0 0
      %6384 = vmatmul.mubr.bf16.gmra.mrb[0].mxu0 %v5605
      %v6385 = vpop.f32.mrb[0].mxu0
      %v6386 = vadd.f32 %v5165, %v6385
      %v6387 = vpop.f32.mrb[0].mxu0
      %v6388 = vpop.f32.mrb[0].mxu0
      %v6389 = vadd.f32 %v5168, %v6388
      %v6390 = vpop.f32.mrb[0].mxu0
      %6391 = vmatprep.mubr.bf16.mxu0 0
      %6392 = vmatmul.mubr.bf16.gmra.mrb[0].mxu0 %v5608
      %v6393 = vpop.f32.mrb[0].mxu0
      %v6394 = vadd.f32 %v5173, %v6393
      %v6395 = vpop.f32.mrb[0].mxu0
      %v6396 = vpop.f32.mrb[0].mxu0
      %v6397 = vadd.f32 %v5176, %v6396
      %v6398 = vpop.f32.mrb[0].mxu0
      %6399 = vmatprep.mubr.bf16.mxu0 0
      %6400 = vmatmul.mubr.bf16.gmra.mrb[0].mxu0 %v5611
      %v6401 = vpop.f32.mrb[0].mxu0
      %v6402 = vadd.f32 %v5181, %v6401
      %v6403 = vpop.f32.mrb[0].mxu0
      %v6404 = vpop.f32.mrb[0].mxu0
      %v6405 = vadd.f32 %v5184, %v6404
      %v6406 = vpop.f32.mrb[0].mxu0
      %6407 = vmatprep.mubr.bf16.mxu0 0
      %6408 = vmatmul.mubr.bf16.gmra.mrb[0].mxu0 %v5614
      %v6409 = vpop.f32.mrb[0].mxu0
      %v6410 = vadd.f32 %v5189, %v6409
      %v6411 = vpop.f32.mrb[0].mxu0
      %v6412 = vpop.f32.mrb[0].mxu0
      %v6413 = vadd.f32 %v5192, %v6412
      %v6414 = vpop.f32.mrb[0].mxu0
      %6415 = vmatprep.mubr.bf16.mxu0 0
      %6416 = vmatmul.mubr.bf16.gmra.mrb[0].mxu0 %v5617
      %v6417 = vpop.f32.mrb[0].mxu0
      %v6418 = vadd.f32 %v5197, %v6417
      %v6419 = vpop.f32.mrb[0].mxu0
      %v6420 = vpop.f32.mrb[0].mxu0
      %v6421 = vadd.f32 %v5200, %v6420
      %v6422 = vpop.f32.mrb[0].mxu0
      %6423 = vmatprep.mubr.bf16.mxu0 0
      %6424 = vmatmul.mubr.bf16.gmra.mrb[0].mxu0 %v5620
      %v6425 = vpop.f32.mrb[0].mxu0
      %v6426 = vadd.f32 %v5205, %v6425
      %v6427 = vpop.f32.mrb[0].mxu0
      %v6428 = vpop.f32.mrb[0].mxu0
      %v6429 = vadd.f32 %v5208, %v6428
      %v6430 = vpop.f32.mrb[0].mxu0
      %6431 = vmatprep.mubr.bf16.mxu0 0
      %6432 = vmatmul.mubr.bf16.gmra.mrb[0].mxu0 %v5623
      %v6433 = vpop.f32.mrb[0].mxu0
      %v6434 = vadd.f32 %v5213, %v6433
      %v6435 = vpop.f32.mrb[0].mxu0
      %v6436 = vpop.f32.mrb[0].mxu0
      %v6437 = vadd.f32 %v5216, %v6436
      %v6438 = vpop.f32.mrb[0].mxu0
      %6439 = vmatprep.mubr.bf16.mxu0 0
      %6440 = vmatmul.mubr.bf16.gmra.mrb[0].mxu0 %v5626
      %v6441 = vpop.f32.mrb[0].mxu0
      %v6442 = vadd.f32 %v5221, %v6441
      %v6443 = vpop.f32.mrb[0].mxu0
      %v6444 = vpop.f32.mrb[0].mxu0
      %v6445 = vadd.f32 %v5224, %v6444
      %v6446 = vpop.f32.mrb[0].mxu0
      %6447 = vdwg.mxu0
      %v6452 = vunpack.c.l.b16 %v3671
      %v6453 = vunpack.c.h.b16 %v3671
      %v6454 = vunpack.c.l.b16 %v3673
      %v6455 = vunpack.c.h.b16 %v3673
      %v6456 = vunpack.c.l.b16 %v3675
      %v6457 = vunpack.c.h.b16 %v3675
      %v6458 = vunpack.c.l.b16 %v3677
      %s6459 = scalar_lea.vmem %s366, 24
      %v6460 = vld [vmem:[%s6459] sm:$0xf]
      %v6461 = vld [vmem:[%s6459 + $0x4] sm:$0xf]
      %v6462 = vld [vmem:[%s6459 + $0x8] sm:$0xf]
      %v6463 = vpack.c.b16 %v3994, %v3993
      %v6464 = vpack.c.b16 %v3996, %v3995
      %v6465 = vpack.c.b16 %v3998, %v3997
      %v6466 = vpack.c.b16 %v6452, %v3999
      %v6467 = vpack.c.b16 %v6454, %v6453
      %v6468 = vpack.c.b16 %v6456, %v6455
      %v6469 = vpack.c.b16 %v6458, %v6457
      %v6473 = vunpack.c.l.b16 %v6460
      %v6474 = vunpack.c.l.b16 %v6461
      %v6475 = vunpack.c.l.b16 %v6462
      %v6476 = vpack.c.b16 %v6474, %v6473
      %v6477 = vpack.c.b16 %v6475, %v6475
      %v6480 = vsel %vm4111, %v6463, 0
      %v6483 = vsel %vm4111, %v6464, 0
      %v6486 = vsel %vm4111, %v6465, 0
      %v6489 = vsel %vm4111, %v6466, 0
      %v6492 = vsel %vm4111, %v6467, 0
      %v6495 = vsel %vm4111, %v6468, 0
      %v6498 = vsel %vm4111, %v6469, 0
      %v6501 = vsel %vm4406, %v6477, 0
      %6503 = vmatprep.subr.bf16.mxu0 0
      %6504 = vmatpush1.bf16.msra.mxu0 %v6476
      %6505 = vmatprep.subr.bf16.mxu0 0
      %6506 = vmatpush1.bf16.msra.mxu0 %v6501
      %6507 = vmatprep.subr.bf16.mxu0 0
      %6508 = vmatpush1.bf16.msra.mxu0 0
      %6509 = vmatprep.subr.bf16.mxu0 0
      %6510 = vmatpush1.bf16.msra.mxu0 0
      %6511 = vmatprep.subr.bf16.mxu0 0
      %6512 = vmatpush1.bf16.msra.mxu0 0
      %6513 = vmatprep.subr.bf16.mxu0 0
      %6514 = vmatpush1.bf16.msra.mxu0 0
      %6515 = vmatprep.subr.bf16.mxu0 0
      %6516 = vmatpush1.bf16.msra.mxu0 0
      %6517 = vmatprep.subr.bf16.mxu0 0
      %6518 = vmatpush1.bf16.msra.mxu0 0
      %6519 = vmatprep.subr.bf16.mxu0 0
      %6520 = vmatpush1.bf16.msra.mxu0 0
      %6521 = vmatprep.subr.bf16.mxu0 0
      %6522 = vmatpush1.bf16.msra.mxu0 0
      %6523 = vmatprep.subr.bf16.mxu0 0
      %6524 = vmatpush1.bf16.msra.mxu0 0
      %6525 = vmatprep.subr.bf16.mxu0 0
      %6526 = vmatpush1.bf16.msra.mxu0 0
      %6527 = vmatprep.subr.bf16.mxu0 0
      %6528 = vmatpush1.bf16.msra.mxu0 0
      %6529 = vmatprep.subr.bf16.mxu0 0
      %6530 = vmatpush1.bf16.msra.mxu0 0
      %6531 = vmatprep.subr.bf16.mxu0 0
      %6532 = vmatpush1.bf16.msra.mxu0 0
      %6533 = vmatprep.subr.bf16.mxu0 0
      %6534 = vmatpush1.bf16.msra.mxu0 0
      %6535 = vmatprep.mubr.bf16.mxu0 0
      %6536 = vmatmul.mubr.bf16.gmra.mrb[0].mxu0 %v5356
      %v6537 = vpop.f32.mrb[0].mxu0
      %v6538 = vadd.f32 0.0, %v6537
      %v6539 = vpop.f32.mrb[0].mxu0
      %v6540 = vpop.f32.mrb[0].mxu0
      %v6541 = vadd.f32 0.0, %v6540
      %v6542 = vpop.f32.mrb[0].mxu0
      %6543 = vmatprep.mubr.bf16.mxu0 0
      %6544 = vmatmul.mubr.bf16.gmra.mrb[0].mxu0 %v5359
      %v6545 = vpop.f32.mrb[0].mxu0
      %v6546 = vadd.f32 0.0, %v6545
      %v6547 = vpop.f32.mrb[0].mxu0
      %v6548 = vpop.f32.mrb[0].mxu0
      %v6549 = vadd.f32 0.0, %v6548
      %v6550 = vpop.f32.mrb[0].mxu0
      %6551 = vmatprep.mubr.bf16.mxu0 0
      %6552 = vmatmul.mubr.bf16.gmra.mrb[0].mxu0 %v5362
      %v6553 = vpop.f32.mrb[0].mxu0
      %v6554 = vadd.f32 0.0, %v6553
      %v6555 = vpop.f32.mrb[0].mxu0
      %v6556 = vpop.f32.mrb[0].mxu0
      %v6557 = vadd.f32 0.0, %v6556
      %v6558 = vpop.f32.mrb[0].mxu0
      %6559 = vmatprep.mubr.bf16.mxu0 0
      %6560 = vmatmul.mubr.bf16.gmra.mrb[0].mxu0 %v5365
      %v6561 = vpop.f32.mrb[0].mxu0
      %v6562 = vadd.f32 0.0, %v6561
      %v6563 = vpop.f32.mrb[0].mxu0
      %v6564 = vpop.f32.mrb[0].mxu0
      %v6565 = vadd.f32 0.0, %v6564
      %v6566 = vpop.f32.mrb[0].mxu0
      %6567 = vmatprep.mubr.bf16.mxu0 0
      %6568 = vmatmul.mubr.bf16.gmra.mrb[0].mxu0 %v5368
      %v6569 = vpop.f32.mrb[0].mxu0
      %v6570 = vadd.f32 0.0, %v6569
      %v6571 = vpop.f32.mrb[0].mxu0
      %v6572 = vpop.f32.mrb[0].mxu0
      %v6573 = vadd.f32 0.0, %v6572
      %v6574 = vpop.f32.mrb[0].mxu0
      %6575 = vmatprep.mubr.bf16.mxu0 0
      %6576 = vmatmul.mubr.bf16.gmra.mrb[0].mxu0 %v5371
      %v6577 = vpop.f32.mrb[0].mxu0
      %v6578 = vadd.f32 0.0, %v6577
      %v6579 = vpop.f32.mrb[0].mxu0
      %v6580 = vpop.f32.mrb[0].mxu0
      %v6581 = vadd.f32 0.0, %v6580
      %v6582 = vpop.f32.mrb[0].mxu0
      %6583 = vmatprep.mubr.bf16.mxu0 0
      %6584 = vmatmul.mubr.bf16.gmra.mrb[0].mxu0 %v5374
      %v6585 = vpop.f32.mrb[0].mxu0
      %v6586 = vadd.f32 0.0, %v6585
      %v6587 = vpop.f32.mrb[0].mxu0
      %v6588 = vpop.f32.mrb[0].mxu0
      %v6589 = vadd.f32 0.0, %v6588
      %v6590 = vpop.f32.mrb[0].mxu0
      %6591 = vmatprep.mubr.bf16.mxu0 0
      %6592 = vmatmul.mubr.bf16.gmra.mrb[0].mxu0 %v5377
      %v6593 = vpop.f32.mrb[0].mxu0
      %v6594 = vadd.f32 0.0, %v6593
      %v6595 = vpop.f32.mrb[0].mxu0
      %v6596 = vpop.f32.mrb[0].mxu0
      %v6597 = vadd.f32 0.0, %v6596
      %v6598 = vpop.f32.mrb[0].mxu0
      %6599 = vmatprep.mubr.bf16.mxu0 0
      %6600 = vmatmul.mubr.bf16.gmra.mrb[0].mxu0 %v5380
      %v6601 = vpop.f32.mrb[0].mxu0
      %v6602 = vadd.f32 0.0, %v6601
      %v6603 = vpop.f32.mrb[0].mxu0
      %v6604 = vpop.f32.mrb[0].mxu0
      %v6605 = vadd.f32 0.0, %v6604
      %v6606 = vpop.f32.mrb[0].mxu0
      %6607 = vmatprep.mubr.bf16.mxu0 0
      %6608 = vmatmul.mubr.bf16.gmra.mrb[0].mxu0 %v5383
      %v6609 = vpop.f32.mrb[0].mxu0
      %v6610 = vadd.f32 0.0, %v6609
      %v6611 = vpop.f32.mrb[0].mxu0
      %v6612 = vpop.f32.mrb[0].mxu0
      %v6613 = vadd.f32 0.0, %v6612
      %v6614 = vpop.f32.mrb[0].mxu0
      %6615 = vmatprep.mubr.bf16.mxu0 0
      %6616 = vmatmul.mubr.bf16.gmra.mrb[0].mxu0 %v5386
      %v6617 = vpop.f32.mrb[0].mxu0
      %v6618 = vadd.f32 0.0, %v6617
      %v6619 = vpop.f32.mrb[0].mxu0
      %v6620 = vpop.f32.mrb[0].mxu0
      %v6621 = vadd.f32 0.0, %v6620
      %v6622 = vpop.f32.mrb[0].mxu0
      %6623 = vmatprep.mubr.bf16.mxu0 0
      %6624 = vmatmul.mubr.bf16.gmra.mrb[0].mxu0 %v5389
      %v6625 = vpop.f32.mrb[0].mxu0
      %v6626 = vadd.f32 0.0, %v6625
      %v6627 = vpop.f32.mrb[0].mxu0
      %v6628 = vpop.f32.mrb[0].mxu0
      %v6629 = vadd.f32 0.0, %v6628
      %v6630 = vpop.f32.mrb[0].mxu0
      %6631 = vmatprep.mubr.bf16.mxu0 0
      %6632 = vmatmul.mubr.bf16.gmra.mrb[0].mxu0 %v5392
      %v6633 = vpop.f32.mrb[0].mxu0
      %v6634 = vadd.f32 0.0, %v6633
      %v6635 = vpop.f32.mrb[0].mxu0
      %v6636 = vpop.f32.mrb[0].mxu0
      %v6637 = vadd.f32 0.0, %v6636
      %v6638 = vpop.f32.mrb[0].mxu0
      %6639 = vmatprep.mubr.bf16.mxu0 0
      %6640 = vmatmul.mubr.bf16.gmra.mrb[0].mxu0 %v5395
      %v6641 = vpop.f32.mrb[0].mxu0
      %v6642 = vadd.f32 0.0, %v6641
      %v6643 = vpop.f32.mrb[0].mxu0
      %v6644 = vpop.f32.mrb[0].mxu0
      %v6645 = vadd.f32 0.0, %v6644
      %v6646 = vpop.f32.mrb[0].mxu0
      %6647 = vmatprep.mubr.bf16.mxu0 0
      %6648 = vmatmul.mubr.bf16.gmra.mrb[0].mxu0 %v5398
      %v6649 = vpop.f32.mrb[0].mxu0
      %v6650 = vadd.f32 0.0, %v6649
      %v6651 = vpop.f32.mrb[0].mxu0
      %v6652 = vpop.f32.mrb[0].mxu0
      %v6653 = vadd.f32 0.0, %v6652
      %v6654 = vpop.f32.mrb[0].mxu0
      %6655 = vmatprep.mubr.bf16.mxu0 0
      %6656 = vmatmul.mubr.bf16.gmra.mrb[0].mxu0 %v5401
      %v6657 = vpop.f32.mrb[0].mxu0
      %v6658 = vadd.f32 0.0, %v6657
      %v6659 = vpop.f32.mrb[0].mxu0
      %v6660 = vpop.f32.mrb[0].mxu0
      %v6661 = vadd.f32 0.0, %v6660
      %v6662 = vpop.f32.mrb[0].mxu0
      %6663 = vmatprep.mubr.bf16.mxu0 0
      %6664 = vmatmul.mubr.bf16.gmra.mrb[0].mxu0 %v5404
      %v6665 = vpop.f32.mrb[0].mxu0
      %v6666 = vadd.f32 0.0, %v6665
      %v6667 = vpop.f32.mrb[0].mxu0
      %v6668 = vpop.f32.mrb[0].mxu0
      %v6669 = vadd.f32 0.0, %v6668
      %v6670 = vpop.f32.mrb[0].mxu0
      %6671 = vmatprep.mubr.bf16.mxu0 0
      %6672 = vmatmul.mubr.bf16.gmra.mrb[0].mxu0 %v5407
      %v6673 = vpop.f32.mrb[0].mxu0
      %v6674 = vadd.f32 0.0, %v6673
      %v6675 = vpop.f32.mrb[0].mxu0
      %v6676 = vpop.f32.mrb[0].mxu0
      %v6677 = vadd.f32 0.0, %v6676
      %v6678 = vpop.f32.mrb[0].mxu0
      %6679 = vmatprep.mubr.bf16.mxu0 0
      %6680 = vmatmul.mubr.bf16.gmra.mrb[0].mxu0 %v5410
      %v6681 = vpop.f32.mrb[0].mxu0
      %v6682 = vadd.f32 0.0, %v6681
      %v6683 = vpop.f32.mrb[0].mxu0
      %v6684 = vpop.f32.mrb[0].mxu0
      %v6685 = vadd.f32 0.0, %v6684
      %v6686 = vpop.f32.mrb[0].mxu0
      %6687 = vmatprep.mubr.bf16.mxu0 0
      %6688 = vmatmul.mubr.bf16.gmra.mrb[0].mxu0 %v5413
      %v6689 = vpop.f32.mrb[0].mxu0
      %v6690 = vadd.f32 0.0, %v6689
      %v6691 = vpop.f32.mrb[0].mxu0
      %v6692 = vpop.f32.mrb[0].mxu0
      %v6693 = vadd.f32 0.0, %v6692
      %v6694 = vpop.f32.mrb[0].mxu0
      %6695 = vmatprep.mubr.bf16.mxu0 0
      %6696 = vmatmul.mubr.bf16.gmra.mrb[0].mxu0 %v5416
      %v6697 = vpop.f32.mrb[0].mxu0
      %v6698 = vadd.f32 0.0, %v6697
      %v6699 = vpop.f32.mrb[0].mxu0
      %v6700 = vpop.f32.mrb[0].mxu0
      %v6701 = vadd.f32 0.0, %v6700
      %v6702 = vpop.f32.mrb[0].mxu0
      %6703 = vmatprep.mubr.bf16.mxu0 0
      %6704 = vmatmul.mubr.bf16.gmra.mrb[0].mxu0 %v5419
      %v6705 = vpop.f32.mrb[0].mxu0
      %v6706 = vadd.f32 0.0, %v6705
      %v6707 = vpop.f32.mrb[0].mxu0
      %v6708 = vpop.f32.mrb[0].mxu0
      %v6709 = vadd.f32 0.0, %v6708
      %v6710 = vpop.f32.mrb[0].mxu0
      %6711 = vmatprep.mubr.bf16.mxu0 0
      %6712 = vmatmul.mubr.bf16.gmra.mrb[0].mxu0 %v5422
      %v6713 = vpop.f32.mrb[0].mxu0
      %v6714 = vadd.f32 0.0, %v6713
      %v6715 = vpop.f32.mrb[0].mxu0
      %v6716 = vpop.f32.mrb[0].mxu0
      %v6717 = vadd.f32 0.0, %v6716
      %v6718 = vpop.f32.mrb[0].mxu0
      %6719 = vmatprep.mubr.bf16.mxu0 0
      %6720 = vmatmul.mubr.bf16.gmra.mrb[0].mxu0 %v5425
      %v6721 = vpop.f32.mrb[0].mxu0
      %v6722 = vadd.f32 0.0, %v6721
      %v6723 = vpop.f32.mrb[0].mxu0
      %v6724 = vpop.f32.mrb[0].mxu0
      %v6725 = vadd.f32 0.0, %v6724
      %v6726 = vpop.f32.mrb[0].mxu0
      %6727 = vmatprep.mubr.bf16.mxu0 0
      %6728 = vmatmul.mubr.bf16.gmra.mrb[0].mxu0 %v5428
      %v6729 = vpop.f32.mrb[0].mxu0
      %v6730 = vadd.f32 0.0, %v6729
      %v6731 = vpop.f32.mrb[0].mxu0
      %v6732 = vpop.f32.mrb[0].mxu0
      %v6733 = vadd.f32 0.0, %v6732
      %v6734 = vpop.f32.mrb[0].mxu0
      %6735 = vmatprep.mubr.bf16.mxu0 0
      %6736 = vmatmul.mubr.bf16.gmra.mrb[0].mxu0 %v5431
      %v6737 = vpop.f32.mrb[0].mxu0
      %v6738 = vadd.f32 0.0, %v6737
      %v6739 = vpop.f32.mrb[0].mxu0
      %v6740 = vpop.f32.mrb[0].mxu0
      %v6741 = vadd.f32 0.0, %v6740
      %v6742 = vpop.f32.mrb[0].mxu0
      %6743 = vmatprep.mubr.bf16.mxu0 0
      %6744 = vmatmul.mubr.bf16.gmra.mrb[0].mxu0 %v5434
      %v6745 = vpop.f32.mrb[0].mxu0
      %v6746 = vadd.f32 0.0, %v6745
      %v6747 = vpop.f32.mrb[0].mxu0
      %v6748 = vpop.f32.mrb[0].mxu0
      %v6749 = vadd.f32 0.0, %v6748
      %v6750 = vpop.f32.mrb[0].mxu0
      %6751 = vmatprep.mubr.bf16.mxu0 0
      %6752 = vmatmul.mubr.bf16.gmra.mrb[0].mxu0 %v5437
      %v6753 = vpop.f32.mrb[0].mxu0
      %v6754 = vadd.f32 0.0, %v6753
      %v6755 = vpop.f32.mrb[0].mxu0
      %v6756 = vpop.f32.mrb[0].mxu0
      %v6757 = vadd.f32 0.0, %v6756
      %v6758 = vpop.f32.mrb[0].mxu0
      %6759 = vmatprep.mubr.bf16.mxu0 0
      %6760 = vmatmul.mubr.bf16.gmra.mrb[0].mxu0 %v5440
      %v6761 = vpop.f32.mrb[0].mxu0
      %v6762 = vadd.f32 0.0, %v6761
      %v6763 = vpop.f32.mrb[0].mxu0
      %v6764 = vpop.f32.mrb[0].mxu0
      %v6765 = vadd.f32 0.0, %v6764
      %v6766 = vpop.f32.mrb[0].mxu0
      %6767 = vmatprep.mubr.bf16.mxu0 0
      %6768 = vmatmul.mubr.bf16.gmra.mrb[0].mxu0 %v5443
      %v6769 = vpop.f32.mrb[0].mxu0
      %v6770 = vadd.f32 0.0, %v6769
      %v6771 = vpop.f32.mrb[0].mxu0
      %v6772 = vpop.f32.mrb[0].mxu0
      %v6773 = vadd.f32 0.0, %v6772
      %v6774 = vpop.f32.mrb[0].mxu0
      %6775 = vmatprep.mubr.bf16.mxu0 0
      %6776 = vmatmul.mubr.bf16.gmra.mrb[0].mxu0 %v5446
      %v6777 = vpop.f32.mrb[0].mxu0
      %v6778 = vadd.f32 0.0, %v6777
      %v6779 = vpop.f32.mrb[0].mxu0
      %v6780 = vpop.f32.mrb[0].mxu0
      %v6781 = vadd.f32 0.0, %v6780
      %v6782 = vpop.f32.mrb[0].mxu0
      %6783 = vmatprep.mubr.bf16.mxu0 0
      %6784 = vmatmul.mubr.bf16.gmra.mrb[0].mxu0 %v5449
      %v6785 = vpop.f32.mrb[0].mxu0
      %v6786 = vadd.f32 0.0, %v6785
      %v6787 = vpop.f32.mrb[0].mxu0
      %v6788 = vpop.f32.mrb[0].mxu0
      %v6789 = vadd.f32 0.0, %v6788
      %v6790 = vpop.f32.mrb[0].mxu0
      %6791 = vmatprep.mubr.bf16.mxu0 0
      %6792 = vmatmul.mubr.bf16.gmra.mrb[0].mxu0 %v5452
      %v6793 = vpop.f32.mrb[0].mxu0
      %v6794 = vadd.f32 0.0, %v6793
      %v6795 = vpop.f32.mrb[0].mxu0
      %v6796 = vpop.f32.mrb[0].mxu0
      %v6797 = vadd.f32 0.0, %v6796
      %v6798 = vpop.f32.mrb[0].mxu0
      %6799 = vmatprep.mubr.bf16.mxu0 0
      %6800 = vmatmul.mubr.bf16.gmra.mrb[0].mxu0 %v5455
      %v6801 = vpop.f32.mrb[0].mxu0
      %v6802 = vadd.f32 0.0, %v6801
      %v6803 = vpop.f32.mrb[0].mxu0
      %v6804 = vpop.f32.mrb[0].mxu0
      %v6805 = vadd.f32 0.0, %v6804
      %v6806 = vpop.f32.mrb[0].mxu0
      %6807 = vmatprep.mubr.bf16.mxu0 0
      %6808 = vmatmul.mubr.bf16.gmra.mrb[0].mxu0 %v5458
      %v6809 = vpop.f32.mrb[0].mxu0
      %v6810 = vadd.f32 0.0, %v6809
      %v6811 = vpop.f32.mrb[0].mxu0
      %v6812 = vpop.f32.mrb[0].mxu0
      %v6813 = vadd.f32 0.0, %v6812
      %v6814 = vpop.f32.mrb[0].mxu0
      %6815 = vmatprep.mubr.bf16.mxu0 0
      %6816 = vmatmul.mubr.bf16.gmra.mrb[0].mxu0 %v5461
      %v6817 = vpop.f32.mrb[0].mxu0
      %v6818 = vadd.f32 0.0, %v6817
      %v6819 = vpop.f32.mrb[0].mxu0
      %v6820 = vpop.f32.mrb[0].mxu0
      %v6821 = vadd.f32 0.0, %v6820
      %v6822 = vpop.f32.mrb[0].mxu0
      %6823 = vmatprep.mubr.bf16.mxu0 0
      %6824 = vmatmul.mubr.bf16.gmra.mrb[0].mxu0 %v5464
      %v6825 = vpop.f32.mrb[0].mxu0
      %v6826 = vadd.f32 0.0, %v6825
      %v6827 = vpop.f32.mrb[0].mxu0
      %v6828 = vpop.f32.mrb[0].mxu0
      %v6829 = vadd.f32 0.0, %v6828
      %v6830 = vpop.f32.mrb[0].mxu0
      %6831 = vmatprep.mubr.bf16.mxu0 0
      %6832 = vmatmul.mubr.bf16.gmra.mrb[0].mxu0 %v5467
      %v6833 = vpop.f32.mrb[0].mxu0
      %v6834 = vadd.f32 0.0, %v6833
      %v6835 = vpop.f32.mrb[0].mxu0
      %v6836 = vpop.f32.mrb[0].mxu0
      %v6837 = vadd.f32 0.0, %v6836
      %v6838 = vpop.f32.mrb[0].mxu0
      %6839 = vmatprep.mubr.bf16.mxu0 0
      %6840 = vmatmul.mubr.bf16.gmra.mrb[0].mxu0 %v5470
      %v6841 = vpop.f32.mrb[0].mxu0
      %v6842 = vadd.f32 0.0, %v6841
      %v6843 = vpop.f32.mrb[0].mxu0
      %v6844 = vpop.f32.mrb[0].mxu0
      %v6845 = vadd.f32 0.0, %v6844
      %v6846 = vpop.f32.mrb[0].mxu0
      %6847 = vmatprep.mubr.bf16.mxu0 0
      %6848 = vmatmul.mubr.bf16.gmra.mrb[0].mxu0 %v5473
      %v6849 = vpop.f32.mrb[0].mxu0
      %v6850 = vadd.f32 0.0, %v6849
      %v6851 = vpop.f32.mrb[0].mxu0
      %v6852 = vpop.f32.mrb[0].mxu0
      %v6853 = vadd.f32 0.0, %v6852
      %v6854 = vpop.f32.mrb[0].mxu0
      %6855 = vmatprep.mubr.bf16.mxu0 0
      %6856 = vmatmul.mubr.bf16.gmra.mrb[0].mxu0 %v5476
      %v6857 = vpop.f32.mrb[0].mxu0
      %v6858 = vadd.f32 0.0, %v6857
      %v6859 = vpop.f32.mrb[0].mxu0
      %v6860 = vpop.f32.mrb[0].mxu0
      %v6861 = vadd.f32 0.0, %v6860
      %v6862 = vpop.f32.mrb[0].mxu0
      %6863 = vmatprep.mubr.bf16.mxu0 0
      %6864 = vmatmul.mubr.bf16.gmra.mrb[0].mxu0 %v5479
      %v6865 = vpop.f32.mrb[0].mxu0
      %v6866 = vadd.f32 0.0, %v6865
      %v6867 = vpop.f32.mrb[0].mxu0
      %v6868 = vpop.f32.mrb[0].mxu0
      %v6869 = vadd.f32 0.0, %v6868
      %v6870 = vpop.f32.mrb[0].mxu0
      %6871 = vmatprep.mubr.bf16.mxu0 0
      %6872 = vmatmul.mubr.bf16.gmra.mrb[0].mxu0 %v5482
      %v6873 = vpop.f32.mrb[0].mxu0
      %v6874 = vadd.f32 0.0, %v6873
      %v6875 = vpop.f32.mrb[0].mxu0
      %v6876 = vpop.f32.mrb[0].mxu0
      %v6877 = vadd.f32 0.0, %v6876
      %v6878 = vpop.f32.mrb[0].mxu0
      %6879 = vmatprep.mubr.bf16.mxu0 0
      %6880 = vmatmul.mubr.bf16.gmra.mrb[0].mxu0 %v5485
      %v6881 = vpop.f32.mrb[0].mxu0
      %v6882 = vadd.f32 0.0, %v6881
      %v6883 = vpop.f32.mrb[0].mxu0
      %v6884 = vpop.f32.mrb[0].mxu0
      %v6885 = vadd.f32 0.0, %v6884
      %v6886 = vpop.f32.mrb[0].mxu0
      %6887 = vmatprep.mubr.bf16.mxu0 0
      %6888 = vmatmul.mubr.bf16.gmra.mrb[0].mxu0 %v5488
      %v6889 = vpop.f32.mrb[0].mxu0
      %v6890 = vadd.f32 0.0, %v6889
      %v6891 = vpop.f32.mrb[0].mxu0
      %v6892 = vpop.f32.mrb[0].mxu0
      %v6893 = vadd.f32 0.0, %v6892
      %v6894 = vpop.f32.mrb[0].mxu0
      %6895 = vmatprep.mubr.bf16.mxu0 0
      %6896 = vmatmul.mubr.bf16.gmra.mrb[0].mxu0 %v5491
      %v6897 = vpop.f32.mrb[0].mxu0
      %v6898 = vadd.f32 0.0, %v6897
      %v6899 = vpop.f32.mrb[0].mxu0
      %v6900 = vpop.f32.mrb[0].mxu0
      %v6901 = vadd.f32 0.0, %v6900
      %v6902 = vpop.f32.mrb[0].mxu0
      %6903 = vmatprep.mubr.bf16.mxu0 0
      %6904 = vmatmul.mubr.bf16.gmra.mrb[0].mxu0 %v5494
      %v6905 = vpop.f32.mrb[0].mxu0
      %v6906 = vadd.f32 0.0, %v6905
      %v6907 = vpop.f32.mrb[0].mxu0
      %v6908 = vpop.f32.mrb[0].mxu0
      %v6909 = vadd.f32 0.0, %v6908
      %v6910 = vpop.f32.mrb[0].mxu0
      %6911 = vmatprep.mubr.bf16.mxu0 0
      %6912 = vmatmul.mubr.bf16.gmra.mrb[0].mxu0 %v5497
      %v6913 = vpop.f32.mrb[0].mxu0
      %v6914 = vadd.f32 0.0, %v6913
      %v6915 = vpop.f32.mrb[0].mxu0
      %v6916 = vpop.f32.mrb[0].mxu0
      %v6917 = vadd.f32 0.0, %v6916
      %v6918 = vpop.f32.mrb[0].mxu0
      %6919 = vmatprep.mubr.bf16.mxu0 0
      %6920 = vmatmul.mubr.bf16.gmra.mrb[0].mxu0 %v5500
      %v6921 = vpop.f32.mrb[0].mxu0
      %v6922 = vadd.f32 0.0, %v6921
      %v6923 = vpop.f32.mrb[0].mxu0
      %v6924 = vpop.f32.mrb[0].mxu0
      %v6925 = vadd.f32 0.0, %v6924
      %v6926 = vpop.f32.mrb[0].mxu0
      %6927 = vmatprep.mubr.bf16.mxu0 0
      %6928 = vmatmul.mubr.bf16.gmra.mrb[0].mxu0 %v5503
      %v6929 = vpop.f32.mrb[0].mxu0
      %v6930 = vadd.f32 0.0, %v6929
      %v6931 = vpop.f32.mrb[0].mxu0
      %v6932 = vpop.f32.mrb[0].mxu0
      %v6933 = vadd.f32 0.0, %v6932
      %v6934 = vpop.f32.mrb[0].mxu0
      %6935 = vmatprep.mubr.bf16.mxu0 0
      %6936 = vmatmul.mubr.bf16.gmra.mrb[0].mxu0 %v5506
      %v6937 = vpop.f32.mrb[0].mxu0
      %v6938 = vadd.f32 0.0, %v6937
      %v6939 = vpop.f32.mrb[0].mxu0
      %v6940 = vpop.f32.mrb[0].mxu0
      %v6941 = vadd.f32 0.0, %v6940
      %v6942 = vpop.f32.mrb[0].mxu0
      %6943 = vmatprep.mubr.bf16.mxu0 0
      %6944 = vmatmul.mubr.bf16.gmra.mrb[0].mxu0 %v5509
      %v6945 = vpop.f32.mrb[0].mxu0
      %v6946 = vadd.f32 0.0, %v6945
      %v6947 = vpop.f32.mrb[0].mxu0
      %v6948 = vpop.f32.mrb[0].mxu0
      %v6949 = vadd.f32 0.0, %v6948
      %v6950 = vpop.f32.mrb[0].mxu0
      %6951 = vmatprep.mubr.bf16.mxu0 0
      %6952 = vmatmul.mubr.bf16.gmra.mrb[0].mxu0 %v5512
      %v6953 = vpop.f32.mrb[0].mxu0
      %v6954 = vadd.f32 0.0, %v6953
      %v6955 = vpop.f32.mrb[0].mxu0
      %v6956 = vpop.f32.mrb[0].mxu0
      %v6957 = vadd.f32 0.0, %v6956
      %v6958 = vpop.f32.mrb[0].mxu0
      %6959 = vmatprep.mubr.bf16.mxu0 0
      %6960 = vmatmul.mubr.bf16.gmra.mrb[0].mxu0 %v5515
      %v6961 = vpop.f32.mrb[0].mxu0
      %v6962 = vadd.f32 0.0, %v6961
      %v6963 = vpop.f32.mrb[0].mxu0
      %v6964 = vpop.f32.mrb[0].mxu0
      %v6965 = vadd.f32 0.0, %v6964
      %v6966 = vpop.f32.mrb[0].mxu0
      %6967 = vmatprep.mubr.bf16.mxu0 0
      %6968 = vmatmul.mubr.bf16.gmra.mrb[0].mxu0 %v5518
      %v6969 = vpop.f32.mrb[0].mxu0
      %v6970 = vadd.f32 0.0, %v6969
      %v6971 = vpop.f32.mrb[0].mxu0
      %v6972 = vpop.f32.mrb[0].mxu0
      %v6973 = vadd.f32 0.0, %v6972
      %v6974 = vpop.f32.mrb[0].mxu0
      %6975 = vmatprep.mubr.bf16.mxu0 0
      %6976 = vmatmul.mubr.bf16.gmra.mrb[0].mxu0 %v5521
      %v6977 = vpop.f32.mrb[0].mxu0
      %v6978 = vadd.f32 0.0, %v6977
      %v6979 = vpop.f32.mrb[0].mxu0
      %v6980 = vpop.f32.mrb[0].mxu0
      %v6981 = vadd.f32 0.0, %v6980
      %v6982 = vpop.f32.mrb[0].mxu0
      %6983 = vmatprep.mubr.bf16.mxu0 0
      %6984 = vmatmul.mubr.bf16.gmra.mrb[0].mxu0 %v5524
      %v6985 = vpop.f32.mrb[0].mxu0
      %v6986 = vadd.f32 0.0, %v6985
      %v6987 = vpop.f32.mrb[0].mxu0
      %v6988 = vpop.f32.mrb[0].mxu0
      %v6989 = vadd.f32 0.0, %v6988
      %v6990 = vpop.f32.mrb[0].mxu0
      %6991 = vmatprep.mubr.bf16.mxu0 0
      %6992 = vmatmul.mubr.bf16.gmra.mrb[0].mxu0 %v5527
      %v6993 = vpop.f32.mrb[0].mxu0
      %v6994 = vadd.f32 0.0, %v6993
      %v6995 = vpop.f32.mrb[0].mxu0
      %v6996 = vpop.f32.mrb[0].mxu0
      %v6997 = vadd.f32 0.0, %v6996
      %v6998 = vpop.f32.mrb[0].mxu0
      %6999 = vmatprep.mubr.bf16.mxu0 0
      %7000 = vmatmul.mubr.bf16.gmra.mrb[0].mxu0 %v5530
      %v7001 = vpop.f32.mrb[0].mxu0
      %v7002 = vadd.f32 0.0, %v7001
      %v7003 = vpop.f32.mrb[0].mxu0
      %v7004 = vpop.f32.mrb[0].mxu0
      %v7005 = vadd.f32 0.0, %v7004
      %v7006 = vpop.f32.mrb[0].mxu0
      %7007 = vmatprep.mubr.bf16.mxu0 0
      %7008 = vmatmul.mubr.bf16.gmra.mrb[0].mxu0 %v5533
      %v7009 = vpop.f32.mrb[0].mxu0
      %v7010 = vadd.f32 0.0, %v7009
      %v7011 = vpop.f32.mrb[0].mxu0
      %v7012 = vpop.f32.mrb[0].mxu0
      %v7013 = vadd.f32 0.0, %v7012
      %v7014 = vpop.f32.mrb[0].mxu0
      %7015 = vmatprep.mubr.bf16.mxu0 0
      %7016 = vmatmul.mubr.bf16.gmra.mrb[0].mxu0 %v5536
      %v7017 = vpop.f32.mrb[0].mxu0
      %v7018 = vadd.f32 0.0, %v7017
      %v7019 = vpop.f32.mrb[0].mxu0
      %v7020 = vpop.f32.mrb[0].mxu0
      %v7021 = vadd.f32 0.0, %v7020
      %v7022 = vpop.f32.mrb[0].mxu0
      %7023 = vmatprep.mubr.bf16.mxu0 0
      %7024 = vmatmul.mubr.bf16.gmra.mrb[0].mxu0 %v5539
      %v7025 = vpop.f32.mrb[0].mxu0
      %v7026 = vadd.f32 0.0, %v7025
      %v7027 = vpop.f32.mrb[0].mxu0
      %v7028 = vpop.f32.mrb[0].mxu0
      %v7029 = vadd.f32 0.0, %v7028
      %v7030 = vpop.f32.mrb[0].mxu0
      %7031 = vmatprep.mubr.bf16.mxu0 0
      %7032 = vmatmul.mubr.bf16.gmra.mrb[0].mxu0 %v5542
      %v7033 = vpop.f32.mrb[0].mxu0
      %v7034 = vadd.f32 0.0, %v7033
      %v7035 = vpop.f32.mrb[0].mxu0
      %v7036 = vpop.f32.mrb[0].mxu0
      %v7037 = vadd.f32 0.0, %v7036
      %v7038 = vpop.f32.mrb[0].mxu0
      %7039 = vmatprep.mubr.bf16.mxu0 0
      %7040 = vmatmul.mubr.bf16.gmra.mrb[0].mxu0 %v5545
      %v7041 = vpop.f32.mrb[0].mxu0
      %v7042 = vadd.f32 0.0, %v7041
      %v7043 = vpop.f32.mrb[0].mxu0
      %v7044 = vpop.f32.mrb[0].mxu0
      %v7045 = vadd.f32 0.0, %v7044
      %v7046 = vpop.f32.mrb[0].mxu0
      %7047 = vmatprep.mubr.bf16.mxu0 0
      %7048 = vmatmul.mubr.bf16.gmra.mrb[0].mxu0 %v5548
      %v7049 = vpop.f32.mrb[0].mxu0
      %v7050 = vadd.f32 0.0, %v7049
      %v7051 = vpop.f32.mrb[0].mxu0
      %v7052 = vpop.f32.mrb[0].mxu0
      %v7053 = vadd.f32 0.0, %v7052
      %v7054 = vpop.f32.mrb[0].mxu0
      %7055 = vmatprep.mubr.bf16.mxu0 0
      %7056 = vmatmul.mubr.bf16.gmra.mrb[0].mxu0 %v5551
      %v7057 = vpop.f32.mrb[0].mxu0
      %v7058 = vadd.f32 0.0, %v7057
      %v7059 = vpop.f32.mrb[0].mxu0
      %v7060 = vpop.f32.mrb[0].mxu0
      %v7061 = vadd.f32 0.0, %v7060
      %v7062 = vpop.f32.mrb[0].mxu0
      %7063 = vmatprep.mubr.bf16.mxu0 0
      %7064 = vmatmul.mubr.bf16.gmra.mrb[0].mxu0 %v5554
      %v7065 = vpop.f32.mrb[0].mxu0
      %v7066 = vadd.f32 0.0, %v7065
      %v7067 = vpop.f32.mrb[0].mxu0
      %v7068 = vpop.f32.mrb[0].mxu0
      %v7069 = vadd.f32 0.0, %v7068
      %v7070 = vpop.f32.mrb[0].mxu0
      %7071 = vmatprep.mubr.bf16.mxu0 0
      %7072 = vmatmul.mubr.bf16.gmra.mrb[0].mxu0 %v5557
      %v7073 = vpop.f32.mrb[0].mxu0
      %v7074 = vadd.f32 0.0, %v7073
      %v7075 = vpop.f32.mrb[0].mxu0
      %v7076 = vpop.f32.mrb[0].mxu0
      %v7077 = vadd.f32 0.0, %v7076
      %v7078 = vpop.f32.mrb[0].mxu0
      %7079 = vmatprep.mubr.bf16.mxu0 0
      %7080 = vmatmul.mubr.bf16.gmra.mrb[0].mxu0 %v5560
      %v7081 = vpop.f32.mrb[0].mxu0
      %v7082 = vadd.f32 0.0, %v7081
      %v7083 = vpop.f32.mrb[0].mxu0
      %v7084 = vpop.f32.mrb[0].mxu0
      %v7085 = vadd.f32 0.0, %v7084
      %v7086 = vpop.f32.mrb[0].mxu0
      %7087 = vmatprep.mubr.bf16.mxu0 0
      %7088 = vmatmul.mubr.bf16.gmra.mrb[0].mxu0 %v5563
      %v7089 = vpop.f32.mrb[0].mxu0
      %v7090 = vadd.f32 0.0, %v7089
      %v7091 = vpop.f32.mrb[0].mxu0
      %v7092 = vpop.f32.mrb[0].mxu0
      %v7093 = vadd.f32 0.0, %v7092
      %v7094 = vpop.f32.mrb[0].mxu0
      %7095 = vmatprep.mubr.bf16.mxu0 0
      %7096 = vmatmul.mubr.bf16.gmra.mrb[0].mxu0 %v5566
      %v7097 = vpop.f32.mrb[0].mxu0
      %v7098 = vadd.f32 0.0, %v7097
      %v7099 = vpop.f32.mrb[0].mxu0
      %v7100 = vpop.f32.mrb[0].mxu0
      %v7101 = vadd.f32 0.0, %v7100
      %v7102 = vpop.f32.mrb[0].mxu0
      %7103 = vmatprep.mubr.bf16.mxu0 0
      %7104 = vmatmul.mubr.bf16.gmra.mrb[0].mxu0 %v5569
      %v7105 = vpop.f32.mrb[0].mxu0
      %v7106 = vadd.f32 0.0, %v7105
      %v7107 = vpop.f32.mrb[0].mxu0
      %v7108 = vpop.f32.mrb[0].mxu0
      %v7109 = vadd.f32 0.0, %v7108
      %v7110 = vpop.f32.mrb[0].mxu0
      %7111 = vmatprep.mubr.bf16.mxu0 0
      %7112 = vmatmul.mubr.bf16.gmra.mrb[0].mxu0 %v5572
      %v7113 = vpop.f32.mrb[0].mxu0
      %v7114 = vadd.f32 0.0, %v7113
      %v7115 = vpop.f32.mrb[0].mxu0
      %v7116 = vpop.f32.mrb[0].mxu0
      %v7117 = vadd.f32 0.0, %v7116
      %v7118 = vpop.f32.mrb[0].mxu0
      %7119 = vmatprep.mubr.bf16.mxu0 0
      %7120 = vmatmul.mubr.bf16.gmra.mrb[0].mxu0 %v5575
      %v7121 = vpop.f32.mrb[0].mxu0
      %v7122 = vadd.f32 0.0, %v7121
      %v7123 = vpop.f32.mrb[0].mxu0
      %v7124 = vpop.f32.mrb[0].mxu0
      %v7125 = vadd.f32 0.0, %v7124
      %v7126 = vpop.f32.mrb[0].mxu0
      %7127 = vmatprep.mubr.bf16.mxu0 0
      %7128 = vmatmul.mubr.bf16.gmra.mrb[0].mxu0 %v5578
      %v7129 = vpop.f32.mrb[0].mxu0
      %v7130 = vadd.f32 0.0, %v7129
      %v7131 = vpop.f32.mrb[0].mxu0
      %v7132 = vpop.f32.mrb[0].mxu0
      %v7133 = vadd.f32 0.0, %v7132
      %v7134 = vpop.f32.mrb[0].mxu0
      %7135 = vmatprep.mubr.bf16.mxu0 0
      %7136 = vmatmul.mubr.bf16.gmra.mrb[0].mxu0 %v5581
      %v7137 = vpop.f32.mrb[0].mxu0
      %v7138 = vadd.f32 0.0, %v7137
      %v7139 = vpop.f32.mrb[0].mxu0
      %v7140 = vpop.f32.mrb[0].mxu0
      %v7141 = vadd.f32 0.0, %v7140
      %v7142 = vpop.f32.mrb[0].mxu0
      %7143 = vmatprep.mubr.bf16.mxu0 0
      %7144 = vmatmul.mubr.bf16.gmra.mrb[0].mxu0 %v5584
      %v7145 = vpop.f32.mrb[0].mxu0
      %v7146 = vadd.f32 0.0, %v7145
      %v7147 = vpop.f32.mrb[0].mxu0
      %v7148 = vpop.f32.mrb[0].mxu0
      %v7149 = vadd.f32 0.0, %v7148
      %v7150 = vpop.f32.mrb[0].mxu0
      %7151 = vmatprep.mubr.bf16.mxu0 0
      %7152 = vmatmul.mubr.bf16.gmra.mrb[0].mxu0 %v5587
      %v7153 = vpop.f32.mrb[0].mxu0
      %v7154 = vadd.f32 0.0, %v7153
      %v7155 = vpop.f32.mrb[0].mxu0
      %v7156 = vpop.f32.mrb[0].mxu0
      %v7157 = vadd.f32 0.0, %v7156
      %v7158 = vpop.f32.mrb[0].mxu0
      %7159 = vmatprep.mubr.bf16.mxu0 0
      %7160 = vmatmul.mubr.bf16.gmra.mrb[0].mxu0 %v5590
      %v7161 = vpop.f32.mrb[0].mxu0
      %v7162 = vadd.f32 0.0, %v7161
      %v7163 = vpop.f32.mrb[0].mxu0
      %v7164 = vpop.f32.mrb[0].mxu0
      %v7165 = vadd.f32 0.0, %v7164
      %v7166 = vpop.f32.mrb[0].mxu0
      %7167 = vmatprep.mubr.bf16.mxu0 0
      %7168 = vmatmul.mubr.bf16.gmra.mrb[0].mxu0 %v5593
      %v7169 = vpop.f32.mrb[0].mxu0
      %v7170 = vadd.f32 0.0, %v7169
      %v7171 = vpop.f32.mrb[0].mxu0
      %v7172 = vpop.f32.mrb[0].mxu0
      %v7173 = vadd.f32 0.0, %v7172
      %v7174 = vpop.f32.mrb[0].mxu0
      %7175 = vmatprep.mubr.bf16.mxu0 0
      %7176 = vmatmul.mubr.bf16.gmra.mrb[0].mxu0 %v5596
      %v7177 = vpop.f32.mrb[0].mxu0
      %v7178 = vadd.f32 0.0, %v7177
      %v7179 = vpop.f32.mrb[0].mxu0
      %v7180 = vpop.f32.mrb[0].mxu0
      %v7181 = vadd.f32 0.0, %v7180
      %v7182 = vpop.f32.mrb[0].mxu0
      %7183 = vmatprep.mubr.bf16.mxu0 0
      %7184 = vmatmul.mubr.bf16.gmra.mrb[0].mxu0 %v5599
      %v7185 = vpop.f32.mrb[0].mxu0
      %v7186 = vadd.f32 0.0, %v7185
      %v7187 = vpop.f32.mrb[0].mxu0
      %v7188 = vpop.f32.mrb[0].mxu0
      %v7189 = vadd.f32 0.0, %v7188
      %v7190 = vpop.f32.mrb[0].mxu0
      %7191 = vmatprep.mubr.bf16.mxu0 0
      %7192 = vmatmul.mubr.bf16.gmra.mrb[0].mxu0 %v5602
      %v7193 = vpop.f32.mrb[0].mxu0
      %v7194 = vadd.f32 0.0, %v7193
      %v7195 = vpop.f32.mrb[0].mxu0
      %v7196 = vpop.f32.mrb[0].mxu0
      %v7197 = vadd.f32 0.0, %v7196
      %v7198 = vpop.f32.mrb[0].mxu0
      %7199 = vmatprep.mubr.bf16.mxu0 0
      %7200 = vmatmul.mubr.bf16.gmra.mrb[0].mxu0 %v5605
      %v7201 = vpop.f32.mrb[0].mxu0
      %v7202 = vadd.f32 0.0, %v7201
      %v7203 = vpop.f32.mrb[0].mxu0
      %v7204 = vpop.f32.mrb[0].mxu0
      %v7205 = vadd.f32 0.0, %v7204
      %v7206 = vpop.f32.mrb[0].mxu0
      %7207 = vmatprep.mubr.bf16.mxu0 0
      %7208 = vmatmul.mubr.bf16.gmra.mrb[0].mxu0 %v5608
      %v7209 = vpop.f32.mrb[0].mxu0
      %v7210 = vadd.f32 0.0, %v7209
      %v7211 = vpop.f32.mrb[0].mxu0
      %v7212 = vpop.f32.mrb[0].mxu0
      %v7213 = vadd.f32 0.0, %v7212
      %v7214 = vpop.f32.mrb[0].mxu0
      %7215 = vmatprep.mubr.bf16.mxu0 0
      %7216 = vmatmul.mubr.bf16.gmra.mrb[0].mxu0 %v5611
      %v7217 = vpop.f32.mrb[0].mxu0
      %v7218 = vadd.f32 0.0, %v7217
      %v7219 = vpop.f32.mrb[0].mxu0
      %v7220 = vpop.f32.mrb[0].mxu0
      %v7221 = vadd.f32 0.0, %v7220
      %v7222 = vpop.f32.mrb[0].mxu0
      %7223 = vmatprep.mubr.bf16.mxu0 0
      %7224 = vmatmul.mubr.bf16.gmra.mrb[0].mxu0 %v5614
      %v7225 = vpop.f32.mrb[0].mxu0
      %v7226 = vadd.f32 0.0, %v7225
      %v7227 = vpop.f32.mrb[0].mxu0
      %v7228 = vpop.f32.mrb[0].mxu0
      %v7229 = vadd.f32 0.0, %v7228
      %v7230 = vpop.f32.mrb[0].mxu0
      %7231 = vmatprep.mubr.bf16.mxu0 0
      %7232 = vmatmul.mubr.bf16.gmra.mrb[0].mxu0 %v5617
      %v7233 = vpop.f32.mrb[0].mxu0
      %v7234 = vadd.f32 0.0, %v7233
      %v7235 = vpop.f32.mrb[0].mxu0
      %v7236 = vpop.f32.mrb[0].mxu0
      %v7237 = vadd.f32 0.0, %v7236
      %v7238 = vpop.f32.mrb[0].mxu0
      %7239 = vmatprep.mubr.bf16.mxu0 0
      %7240 = vmatmul.mubr.bf16.gmra.mrb[0].mxu0 %v5620
      %v7241 = vpop.f32.mrb[0].mxu0
      %v7242 = vadd.f32 0.0, %v7241
      %v7243 = vpop.f32.mrb[0].mxu0
      %v7244 = vpop.f32.mrb[0].mxu0
      %v7245 = vadd.f32 0.0, %v7244
      %v7246 = vpop.f32.mrb[0].mxu0
      %7247 = vmatprep.mubr.bf16.mxu0 0
      %7248 = vmatmul.mubr.bf16.gmra.mrb[0].mxu0 %v5623
      %v7249 = vpop.f32.mrb[0].mxu0
      %v7250 = vadd.f32 0.0, %v7249
      %v7251 = vpop.f32.mrb[0].mxu0
      %v7252 = vpop.f32.mrb[0].mxu0
      %v7253 = vadd.f32 0.0, %v7252
      %v7254 = vpop.f32.mrb[0].mxu0
      %7255 = vmatprep.mubr.bf16.mxu0 0
      %7256 = vmatmul.mubr.bf16.gmra.mrb[0].mxu0 %v5626
      %v7257 = vpop.f32.mrb[0].mxu0
      %v7258 = vadd.f32 0.0, %v7257
      %v7259 = vpop.f32.mrb[0].mxu0
      %v7260 = vpop.f32.mrb[0].mxu0
      %v7261 = vadd.f32 0.0, %v7260
      %v7262 = vpop.f32.mrb[0].mxu0
      %7263 = vmatprep.mubr.bf16.mxu0 0
      %7264 = vmatmul.mubr.bf16.gmra.mrb[0].mxu0 %v6480
      %v7265 = vpop.f32.mrb[0].mxu0
      %v7266 = vadd.f32 0.0, %v7265
      %v7267 = vpop.f32.mrb[0].mxu0
      %v7268 = vpop.f32.mrb[0].mxu0
      %v7269 = vadd.f32 0.0, %v7268
      %v7270 = vpop.f32.mrb[0].mxu0
      %7271 = vmatprep.mubr.bf16.mxu0 0
      %7272 = vmatmul.mubr.bf16.gmra.mrb[0].mxu0 %v6483
      %v7273 = vpop.f32.mrb[0].mxu0
      %v7274 = vadd.f32 0.0, %v7273
      %v7275 = vpop.f32.mrb[0].mxu0
      %v7276 = vpop.f32.mrb[0].mxu0
      %v7277 = vadd.f32 0.0, %v7276
      %v7278 = vpop.f32.mrb[0].mxu0
      %7279 = vmatprep.mubr.bf16.mxu0 0
      %7280 = vmatmul.mubr.bf16.gmra.mrb[0].mxu0 %v6486
      %v7281 = vpop.f32.mrb[0].mxu0
      %v7282 = vadd.f32 0.0, %v7281
      %v7283 = vpop.f32.mrb[0].mxu0
      %v7284 = vpop.f32.mrb[0].mxu0
      %v7285 = vadd.f32 0.0, %v7284
      %v7286 = vpop.f32.mrb[0].mxu0
      %7287 = vmatprep.mubr.bf16.mxu0 0
      %7288 = vmatmul.mubr.bf16.gmra.mrb[0].mxu0 %v6489
      %v7289 = vpop.f32.mrb[0].mxu0
      %v7290 = vadd.f32 0.0, %v7289
      %v7291 = vpop.f32.mrb[0].mxu0
      %v7292 = vpop.f32.mrb[0].mxu0
      %v7293 = vadd.f32 0.0, %v7292
      %v7294 = vpop.f32.mrb[0].mxu0
      %7295 = vmatprep.mubr.bf16.mxu0 0
      %7296 = vmatmul.mubr.bf16.gmra.mrb[0].mxu0 %v6492
      %v7297 = vpop.f32.mrb[0].mxu0
      %v7298 = vadd.f32 0.0, %v7297
      %v7299 = vpop.f32.mrb[0].mxu0
      %v7300 = vpop.f32.mrb[0].mxu0
      %v7301 = vadd.f32 0.0, %v7300
      %v7302 = vpop.f32.mrb[0].mxu0
      %7303 = vmatprep.mubr.bf16.mxu0 0
      %7304 = vmatmul.mubr.bf16.gmra.mrb[0].mxu0 %v6495
      %v7305 = vpop.f32.mrb[0].mxu0
      %v7306 = vadd.f32 0.0, %v7305
      %v7307 = vpop.f32.mrb[0].mxu0
      %v7308 = vpop.f32.mrb[0].mxu0
      %v7309 = vadd.f32 0.0, %v7308
      %v7310 = vpop.f32.mrb[0].mxu0
      %7311 = vmatprep.mubr.bf16.mxu0 0
      %7312 = vmatmul.mubr.bf16.gmra.mrb[0].mxu0 %v6498
      %v7313 = vpop.f32.mrb[0].mxu0
      %v7314 = vadd.f32 0.0, %v7313
      %v7315 = vpop.f32.mrb[0].mxu0
      %v7316 = vpop.f32.mrb[0].mxu0
      %v7317 = vadd.f32 0.0, %v7316
      %v7318 = vpop.f32.mrb[0].mxu0
      %7319 = vdwg.mxu0
      %v7320 = vadd.f32 %v5666, %v6538
      %v7321 = vadd.f32 %v5669, %v6541
      %v7322 = vadd.f32 %v5674, %v6546
      %v7323 = vadd.f32 %v5677, %v6549
      %v7324 = vadd.f32 %v5682, %v6554
      %v7325 = vadd.f32 %v5685, %v6557
      %v7326 = vadd.f32 %v5690, %v6562
      %v7327 = vadd.f32 %v5693, %v6565
      %v7328 = vadd.f32 %v5698, %v6570
      %v7329 = vadd.f32 %v5701, %v6573
      %v7330 = vadd.f32 %v5706, %v6578
      %v7331 = vadd.f32 %v5709, %v6581
      %v7332 = vadd.f32 %v5714, %v6586
      %v7333 = vadd.f32 %v5717, %v6589
      %v7334 = vadd.f32 %v5722, %v6594
      %v7335 = vadd.f32 %v5725, %v6597
      %v7336 = vadd.f32 %v5730, %v6602
      %v7337 = vadd.f32 %v5733, %v6605
      %v7338 = vadd.f32 %v5738, %v6610
      %v7339 = vadd.f32 %v5741, %v6613
      %v7340 = vadd.f32 %v5746, %v6618
      %v7341 = vadd.f32 %v5749, %v6621
      %v7342 = vadd.f32 %v5754, %v6626
      %v7343 = vadd.f32 %v5757, %v6629
      %v7344 = vadd.f32 %v5762, %v6634
      %v7345 = vadd.f32 %v5765, %v6637
      %v7346 = vadd.f32 %v5770, %v6642
      %v7347 = vadd.f32 %v5773, %v6645
      %v7348 = vadd.f32 %v5778, %v6650
      %v7349 = vadd.f32 %v5781, %v6653
      %v7350 = vadd.f32 %v5786, %v6658
      %v7351 = vadd.f32 %v5789, %v6661
      %v7352 = vadd.f32 %v5794, %v6666
      %v7353 = vadd.f32 %v5797, %v6669
      %v7354 = vadd.f32 %v5802, %v6674
      %v7355 = vadd.f32 %v5805, %v6677
      %v7356 = vadd.f32 %v5810, %v6682
      %v7357 = vadd.f32 %v5813, %v6685
      %v7358 = vadd.f32 %v5818, %v6690
      %v7359 = vadd.f32 %v5821, %v6693
      %v7360 = vadd.f32 %v5826, %v6698
      %v7361 = vadd.f32 %v5829, %v6701
      %v7362 = vadd.f32 %v5834, %v6706
      %v7363 = vadd.f32 %v5837, %v6709
      %v7364 = vadd.f32 %v5842, %v6714
      %v7365 = vadd.f32 %v5845, %v6717
      %v7366 = vadd.f32 %v5850, %v6722
      %v7367 = vadd.f32 %v5853, %v6725
      %v7368 = vadd.f32 %v5858, %v6730
      %v7369 = vadd.f32 %v5861, %v6733
      %v7370 = vadd.f32 %v5866, %v6738
      %v7371 = vadd.f32 %v5869, %v6741
      %v7372 = vadd.f32 %v5874, %v6746
      %v7373 = vadd.f32 %v5877, %v6749
      %v7374 = vadd.f32 %v5882, %v6754
      %v7375 = vadd.f32 %v5885, %v6757
      %v7376 = vadd.f32 %v5890, %v6762
      %v7377 = vadd.f32 %v5893, %v6765
      %v7378 = vadd.f32 %v5898, %v6770
      %v7379 = vadd.f32 %v5901, %v6773
      %v7380 = vadd.f32 %v5906, %v6778
      %v7381 = vadd.f32 %v5909, %v6781
      %v7382 = vadd.f32 %v5914, %v6786
      %v7383 = vadd.f32 %v5917, %v6789
      %v7384 = vadd.f32 %v5922, %v6794
      %v7385 = vadd.f32 %v5925, %v6797
      %v7386 = vadd.f32 %v5930, %v6802
      %v7387 = vadd.f32 %v5933, %v6805
      %v7388 = vadd.f32 %v5938, %v6810
      %v7389 = vadd.f32 %v5941, %v6813
      %v7390 = vadd.f32 %v5946, %v6818
      %v7391 = vadd.f32 %v5949, %v6821
      %v7392 = vadd.f32 %v5954, %v6826
      %v7393 = vadd.f32 %v5957, %v6829
      %v7394 = vadd.f32 %v5962, %v6834
      %v7395 = vadd.f32 %v5965, %v6837
      %v7396 = vadd.f32 %v5970, %v6842
      %v7397 = vadd.f32 %v5973, %v6845
      %v7398 = vadd.f32 %v5978, %v6850
      %v7399 = vadd.f32 %v5981, %v6853
      %v7400 = vadd.f32 %v5986, %v6858
      %v7401 = vadd.f32 %v5989, %v6861
      %v7402 = vadd.f32 %v5994, %v6866
      %v7403 = vadd.f32 %v5997, %v6869
      %v7404 = vadd.f32 %v6002, %v6874
      %v7405 = vadd.f32 %v6005, %v6877
      %v7406 = vadd.f32 %v6010, %v6882
      %v7407 = vadd.f32 %v6013, %v6885
      %v7408 = vadd.f32 %v6018, %v6890
      %v7409 = vadd.f32 %v6021, %v6893
      %v7410 = vadd.f32 %v6026, %v6898
      %v7411 = vadd.f32 %v6029, %v6901
      %v7412 = vadd.f32 %v6034, %v6906
      %v7413 = vadd.f32 %v6037, %v6909
      %v7414 = vadd.f32 %v6042, %v6914
      %v7415 = vadd.f32 %v6045, %v6917
      %v7416 = vadd.f32 %v6050, %v6922
      %v7417 = vadd.f32 %v6053, %v6925
      %v7418 = vadd.f32 %v6058, %v6930
      %v7419 = vadd.f32 %v6061, %v6933
      %v7420 = vadd.f32 %v6066, %v6938
      %v7421 = vadd.f32 %v6069, %v6941
      %v7422 = vadd.f32 %v6074, %v6946
      %v7423 = vadd.f32 %v6077, %v6949
      %v7424 = vadd.f32 %v6082, %v6954
      %v7425 = vadd.f32 %v6085, %v6957
      %v7426 = vadd.f32 %v6090, %v6962
      %v7427 = vadd.f32 %v6093, %v6965
      %v7428 = vadd.f32 %v6098, %v6970
      %v7429 = vadd.f32 %v6101, %v6973
      %v7430 = vadd.f32 %v6106, %v6978
      %v7431 = vadd.f32 %v6109, %v6981
      %v7432 = vadd.f32 %v6114, %v6986
      %v7433 = vadd.f32 %v6117, %v6989
      %v7434 = vadd.f32 %v6122, %v6994
      %v7435 = vadd.f32 %v6125, %v6997
      %v7436 = vadd.f32 %v6130, %v7002
      %v7437 = vadd.f32 %v6133, %v7005
      %v7438 = vadd.f32 %v6138, %v7010
      %v7439 = vadd.f32 %v6141, %v7013
      %v7440 = vadd.f32 %v6146, %v7018
      %v7441 = vadd.f32 %v6149, %v7021
      %v7442 = vadd.f32 %v6154, %v7026
      %v7443 = vadd.f32 %v6157, %v7029
      %v7444 = vadd.f32 %v6162, %v7034
      %v7445 = vadd.f32 %v6165, %v7037
      %v7446 = vadd.f32 %v6170, %v7042
      %v7447 = vadd.f32 %v6173, %v7045
      %v7448 = vadd.f32 %v6178, %v7050
      %v7449 = vadd.f32 %v6181, %v7053
      %v7450 = vadd.f32 %v6186, %v7058
      %v7451 = vadd.f32 %v6189, %v7061
      %v7452 = vadd.f32 %v6194, %v7066
      %v7453 = vadd.f32 %v6197, %v7069
      %v7454 = vadd.f32 %v6202, %v7074
      %v7455 = vadd.f32 %v6205, %v7077
      %v7456 = vadd.f32 %v6210, %v7082
      %v7457 = vadd.f32 %v6213, %v7085
      %v7458 = vadd.f32 %v6218, %v7090
      %v7459 = vadd.f32 %v6221, %v7093
      %v7460 = vadd.f32 %v6226, %v7098
      %v7461 = vadd.f32 %v6229, %v7101
      %v7462 = vadd.f32 %v6234, %v7106
      %v7463 = vadd.f32 %v6237, %v7109
      %v7464 = vadd.f32 %v6242, %v7114
      %v7465 = vadd.f32 %v6245, %v7117
      %v7466 = vadd.f32 %v6250, %v7122
      %v7467 = vadd.f32 %v6253, %v7125
      %v7468 = vadd.f32 %v6258, %v7130
      %v7469 = vadd.f32 %v6261, %v7133
      %v7470 = vadd.f32 %v6266, %v7138
      %v7471 = vadd.f32 %v6269, %v7141
      %v7472 = vadd.f32 %v6274, %v7146
      %v7473 = vadd.f32 %v6277, %v7149
      %v7474 = vadd.f32 %v6282, %v7154
      %v7475 = vadd.f32 %v6285, %v7157
      %v7476 = vadd.f32 %v6290, %v7162
      %v7477 = vadd.f32 %v6293, %v7165
      %v7478 = vadd.f32 %v6298, %v7170
      %v7479 = vadd.f32 %v6301, %v7173
      %v7480 = vadd.f32 %v6306, %v7178
      %v7481 = vadd.f32 %v6309, %v7181
      %v7482 = vadd.f32 %v6314, %v7186
      %v7483 = vadd.f32 %v6317, %v7189
      %v7484 = vadd.f32 %v6322, %v7194
      %v7485 = vadd.f32 %v6325, %v7197
      %v7486 = vadd.f32 %v6330, %v7202
      %v7487 = vadd.f32 %v6333, %v7205
      %v7488 = vadd.f32 %v6338, %v7210
      %v7489 = vadd.f32 %v6341, %v7213
      %v7490 = vadd.f32 %v6346, %v7218
      %v7491 = vadd.f32 %v6349, %v7221
      %v7492 = vadd.f32 %v6354, %v7226
      %v7493 = vadd.f32 %v6357, %v7229
      %v7494 = vadd.f32 %v6362, %v7234
      %v7495 = vadd.f32 %v6365, %v7237
      %v7496 = vadd.f32 %v6370, %v7242
      %v7497 = vadd.f32 %v6373, %v7245
      %v7498 = vadd.f32 %v6378, %v7250
      %v7499 = vadd.f32 %v6381, %v7253
      %v7500 = vadd.f32 %v6386, %v7258
      %v7501 = vadd.f32 %v6389, %v7261
      %v7502 = vadd.f32 %v6394, %v7266
      %v7503 = vadd.f32 %v6397, %v7269
      %v7504 = vadd.f32 %v6402, %v7274
      %v7505 = vadd.f32 %v6405, %v7277
      %v7506 = vadd.f32 %v6410, %v7282
      %v7507 = vadd.f32 %v6413, %v7285
      %v7508 = vadd.f32 %v6418, %v7290
      %v7509 = vadd.f32 %v6421, %v7293
      %v7510 = vadd.f32 %v6426, %v7298
      %v7511 = vadd.f32 %v6429, %v7301
      %v7512 = vadd.f32 %v6434, %v7306
      %v7513 = vadd.f32 %v6437, %v7309
      %v7514 = vadd.f32 %v6442, %v7314
      %v7515 = vadd.f32 %v6445, %v7317
      %v7516 = vld [vmem:[%s369] sm:$0x1]
      %v7518 = vlaneseq
      %v7519 = vshrl.u32 %v7518, 7
      %v7520 = vsub.s32 0, %v7519
      %v7521 = vrot.slane %v7516, %v7520
      %v7523 = vadd.f32 %v7320, %v7521
      %v7524 = vadd.f32 %v7321, %v7521
      %v7525 = vadd.f32 %v7322, %v7521
      %v7526 = vadd.f32 %v7323, %v7521
      %v7527 = vadd.f32 %v7324, %v7521
      %v7528 = vadd.f32 %v7325, %v7521
      %v7529 = vadd.f32 %v7326, %v7521
      %v7530 = vadd.f32 %v7327, %v7521
      %v7531 = vadd.f32 %v7328, %v7521
      %v7532 = vadd.f32 %v7329, %v7521
      %v7533 = vadd.f32 %v7330, %v7521
      %v7534 = vadd.f32 %v7331, %v7521
      %v7535 = vadd.f32 %v7332, %v7521
      %v7536 = vadd.f32 %v7333, %v7521
      %v7537 = vadd.f32 %v7334, %v7521
      %v7538 = vadd.f32 %v7335, %v7521
      %v7539 = vadd.f32 %v7336, %v7521
      %v7540 = vadd.f32 %v7337, %v7521
      %v7541 = vadd.f32 %v7338, %v7521
      %v7542 = vadd.f32 %v7339, %v7521
      %v7543 = vadd.f32 %v7340, %v7521
      %v7544 = vadd.f32 %v7341, %v7521
      %v7545 = vadd.f32 %v7342, %v7521
      %v7546 = vadd.f32 %v7343, %v7521
      %v7547 = vadd.f32 %v7344, %v7521
      %v7548 = vadd.f32 %v7345, %v7521
      %v7549 = vadd.f32 %v7346, %v7521
      %v7550 = vadd.f32 %v7347, %v7521
      %v7551 = vadd.f32 %v7348, %v7521
      %v7552 = vadd.f32 %v7349, %v7521
      %v7553 = vadd.f32 %v7350, %v7521
      %v7554 = vadd.f32 %v7351, %v7521
      %v7555 = vadd.f32 %v7352, %v7521
      %v7556 = vadd.f32 %v7353, %v7521
      %v7557 = vadd.f32 %v7354, %v7521
      %v7558 = vadd.f32 %v7355, %v7521
      %v7559 = vadd.f32 %v7356, %v7521
      %v7560 = vadd.f32 %v7357, %v7521
      %v7561 = vadd.f32 %v7358, %v7521
      %v7562 = vadd.f32 %v7359, %v7521
      %v7563 = vadd.f32 %v7360, %v7521
      %v7564 = vadd.f32 %v7361, %v7521
      %v7565 = vadd.f32 %v7362, %v7521
      %v7566 = vadd.f32 %v7363, %v7521
      %v7567 = vadd.f32 %v7364, %v7521
      %v7568 = vadd.f32 %v7365, %v7521
      %v7569 = vadd.f32 %v7366, %v7521
      %v7570 = vadd.f32 %v7367, %v7521
      %v7571 = vadd.f32 %v7368, %v7521
      %v7572 = vadd.f32 %v7369, %v7521
      %v7573 = vadd.f32 %v7370, %v7521
      %v7574 = vadd.f32 %v7371, %v7521
      %v7575 = vadd.f32 %v7372, %v7521
      %v7576 = vadd.f32 %v7373, %v7521
      %v7577 = vadd.f32 %v7374, %v7521
      %v7578 = vadd.f32 %v7375, %v7521
      %v7579 = vadd.f32 %v7376, %v7521
      %v7580 = vadd.f32 %v7377, %v7521
      %v7581 = vadd.f32 %v7378, %v7521
      %v7582 = vadd.f32 %v7379, %v7521
      %v7583 = vadd.f32 %v7380, %v7521
      %v7584 = vadd.f32 %v7381, %v7521
      %v7585 = vadd.f32 %v7382, %v7521
      %v7586 = vadd.f32 %v7383, %v7521
      %v7587 = vadd.f32 %v7384, %v7521
      %v7588 = vadd.f32 %v7385, %v7521
      %v7589 = vadd.f32 %v7386, %v7521
      %v7590 = vadd.f32 %v7387, %v7521
      %v7591 = vadd.f32 %v7388, %v7521
      %v7592 = vadd.f32 %v7389, %v7521
      %v7593 = vadd.f32 %v7390, %v7521
      %v7594 = vadd.f32 %v7391, %v7521
      %v7595 = vadd.f32 %v7392, %v7521
      %v7596 = vadd.f32 %v7393, %v7521
      %v7597 = vadd.f32 %v7394, %v7521
      %v7598 = vadd.f32 %v7395, %v7521
      %v7599 = vadd.f32 %v7396, %v7521
      %v7600 = vadd.f32 %v7397, %v7521
      %v7601 = vadd.f32 %v7398, %v7521
      %v7602 = vadd.f32 %v7399, %v7521
      %v7603 = vadd.f32 %v7400, %v7521
      %v7604 = vadd.f32 %v7401, %v7521
      %v7605 = vadd.f32 %v7402, %v7521
      %v7606 = vadd.f32 %v7403, %v7521
      %v7607 = vadd.f32 %v7404, %v7521
      %v7608 = vadd.f32 %v7405, %v7521
      %v7609 = vadd.f32 %v7406, %v7521
      %v7610 = vadd.f32 %v7407, %v7521
      %v7611 = vadd.f32 %v7408, %v7521
      %v7612 = vadd.f32 %v7409, %v7521
      %v7613 = vadd.f32 %v7410, %v7521
      %v7614 = vadd.f32 %v7411, %v7521
      %v7615 = vadd.f32 %v7412, %v7521
      %v7616 = vadd.f32 %v7413, %v7521
      %v7617 = vadd.f32 %v7414, %v7521
      %v7618 = vadd.f32 %v7415, %v7521
      %v7619 = vadd.f32 %v7416, %v7521
      %v7620 = vadd.f32 %v7417, %v7521
      %v7621 = vadd.f32 %v7418, %v7521
      %v7622 = vadd.f32 %v7419, %v7521
      %v7623 = vadd.f32 %v7420, %v7521
      %v7624 = vadd.f32 %v7421, %v7521
      %v7625 = vadd.f32 %v7422, %v7521
      %v7626 = vadd.f32 %v7423, %v7521
      %v7627 = vadd.f32 %v7424, %v7521
      %v7628 = vadd.f32 %v7425, %v7521
      %v7629 = vadd.f32 %v7426, %v7521
      %v7630 = vadd.f32 %v7427, %v7521
      %v7631 = vadd.f32 %v7428, %v7521
      %v7632 = vadd.f32 %v7429, %v7521
      %v7633 = vadd.f32 %v7430, %v7521
      %v7634 = vadd.f32 %v7431, %v7521
      %v7635 = vadd.f32 %v7432, %v7521
      %v7636 = vadd.f32 %v7433, %v7521
      %v7637 = vadd.f32 %v7434, %v7521
      %v7638 = vadd.f32 %v7435, %v7521
      %v7639 = vadd.f32 %v7436, %v7521
      %v7640 = vadd.f32 %v7437, %v7521
      %v7641 = vadd.f32 %v7438, %v7521
      %v7642 = vadd.f32 %v7439, %v7521
      %v7643 = vadd.f32 %v7440, %v7521
      %v7644 = vadd.f32 %v7441, %v7521
      %v7645 = vadd.f32 %v7442, %v7521
      %v7646 = vadd.f32 %v7443, %v7521
      %v7647 = vadd.f32 %v7444, %v7521
      %v7648 = vadd.f32 %v7445, %v7521
      %v7649 = vadd.f32 %v7446, %v7521
      %v7650 = vadd.f32 %v7447, %v7521
      %v7651 = vadd.f32 %v7448, %v7521
      %v7652 = vadd.f32 %v7449, %v7521
      %v7653 = vadd.f32 %v7450, %v7521
      %v7654 = vadd.f32 %v7451, %v7521
      %v7655 = vadd.f32 %v7452, %v7521
      %v7656 = vadd.f32 %v7453, %v7521
      %v7657 = vadd.f32 %v7454, %v7521
      %v7658 = vadd.f32 %v7455, %v7521
      %v7659 = vadd.f32 %v7456, %v7521
      %v7660 = vadd.f32 %v7457, %v7521
      %v7661 = vadd.f32 %v7458, %v7521
      %v7662 = vadd.f32 %v7459, %v7521
      %v7663 = vadd.f32 %v7460, %v7521
      %v7664 = vadd.f32 %v7461, %v7521
      %v7665 = vadd.f32 %v7462, %v7521
      %v7666 = vadd.f32 %v7463, %v7521
      %v7667 = vadd.f32 %v7464, %v7521
      %v7668 = vadd.f32 %v7465, %v7521
      %v7669 = vadd.f32 %v7466, %v7521
      %v7670 = vadd.f32 %v7467, %v7521
      %v7671 = vadd.f32 %v7468, %v7521
      %v7672 = vadd.f32 %v7469, %v7521
      %v7673 = vadd.f32 %v7470, %v7521
      %v7674 = vadd.f32 %v7471, %v7521
      %v7675 = vadd.f32 %v7472, %v7521
      %v7676 = vadd.f32 %v7473, %v7521
      %v7677 = vadd.f32 %v7474, %v7521
      %v7678 = vadd.f32 %v7475, %v7521
      %v7679 = vadd.f32 %v7476, %v7521
      %v7680 = vadd.f32 %v7477, %v7521
      %v7681 = vadd.f32 %v7478, %v7521
      %v7682 = vadd.f32 %v7479, %v7521
      %v7683 = vadd.f32 %v7480, %v7521
      %v7684 = vadd.f32 %v7481, %v7521
      %v7685 = vadd.f32 %v7482, %v7521
      %v7686 = vadd.f32 %v7483, %v7521
      %v7687 = vadd.f32 %v7484, %v7521
      %v7688 = vadd.f32 %v7485, %v7521
      %v7689 = vadd.f32 %v7486, %v7521
      %v7690 = vadd.f32 %v7487, %v7521
      %v7691 = vadd.f32 %v7488, %v7521
      %v7692 = vadd.f32 %v7489, %v7521
      %v7693 = vadd.f32 %v7490, %v7521
      %v7694 = vadd.f32 %v7491, %v7521
      %v7695 = vadd.f32 %v7492, %v7521
      %v7696 = vadd.f32 %v7493, %v7521
      %v7697 = vadd.f32 %v7494, %v7521
      %v7698 = vadd.f32 %v7495, %v7521
      %v7699 = vadd.f32 %v7496, %v7521
      %v7700 = vadd.f32 %v7497, %v7521
      %v7701 = vadd.f32 %v7498, %v7521
      %v7702 = vadd.f32 %v7499, %v7521
      %v7703 = vadd.f32 %v7500, %v7521
      %v7704 = vadd.f32 %v7501, %v7521
      %v7705 = vadd.f32 %v7502, %v7521
      %v7706 = vadd.f32 %v7503, %v7521
      %v7707 = vadd.f32 %v7504, %v7521
      %v7708 = vadd.f32 %v7505, %v7521
      %v7709 = vadd.f32 %v7506, %v7521
      %v7710 = vadd.f32 %v7507, %v7521
      %v7711 = vadd.f32 %v7508, %v7521
      %v7712 = vadd.f32 %v7509, %v7521
      %v7713 = vadd.f32 %v7510, %v7521
      %v7714 = vadd.f32 %v7511, %v7521
      %v7715 = vadd.f32 %v7512, %v7521
      %v7716 = vadd.f32 %v7513, %v7521
      %v7717 = vadd.f32 %v7514, %v7521
      %v7718 = vadd.f32 %v7515, %v7521
      %v7719 = vmax.f32 %v7523, 0.0
      %v7720 = vmax.f32 %v7524, 0.0
      %v7721 = vmax.f32 %v7525, 0.0
      %v7722 = vmax.f32 %v7526, 0.0
      %v7723 = vmax.f32 %v7527, 0.0
      %v7724 = vmax.f32 %v7528, 0.0
      %v7725 = vmax.f32 %v7529, 0.0
      %v7726 = vmax.f32 %v7530, 0.0
      %v7727 = vmax.f32 %v7531, 0.0
      %v7728 = vmax.f32 %v7532, 0.0
      %v7729 = vmax.f32 %v7533, 0.0
      %v7730 = vmax.f32 %v7534, 0.0
      %v7731 = vmax.f32 %v7535, 0.0
      %v7732 = vmax.f32 %v7536, 0.0
      %v7733 = vmax.f32 %v7537, 0.0
      %v7734 = vmax.f32 %v7538, 0.0
      %v7735 = vmax.f32 %v7539, 0.0
      %v7736 = vmax.f32 %v7540, 0.0
      %v7737 = vmax.f32 %v7541, 0.0
      %v7738 = vmax.f32 %v7542, 0.0
      %v7739 = vmax.f32 %v7543, 0.0
      %v7740 = vmax.f32 %v7544, 0.0
      %v7741 = vmax.f32 %v7545, 0.0
      %v7742 = vmax.f32 %v7546, 0.0
      %v7743 = vmax.f32 %v7547, 0.0
      %v7744 = vmax.f32 %v7548, 0.0
      %v7745 = vmax.f32 %v7549, 0.0
      %v7746 = vmax.f32 %v7550, 0.0
      %v7747 = vmax.f32 %v7551, 0.0
      %v7748 = vmax.f32 %v7552, 0.0
      %v7749 = vmax.f32 %v7553, 0.0
      %v7750 = vmax.f32 %v7554, 0.0
      %v7751 = vmax.f32 %v7555, 0.0
      %v7752 = vmax.f32 %v7556, 0.0
      %v7753 = vmax.f32 %v7557, 0.0
      %v7754 = vmax.f32 %v7558, 0.0
      %v7755 = vmax.f32 %v7559, 0.0
      %v7756 = vmax.f32 %v7560, 0.0
      %v7757 = vmax.f32 %v7561, 0.0
      %v7758 = vmax.f32 %v7562, 0.0
      %v7759 = vmax.f32 %v7563, 0.0
      %v7760 = vmax.f32 %v7564, 0.0
      %v7761 = vmax.f32 %v7565, 0.0
      %v7762 = vmax.f32 %v7566, 0.0
      %v7763 = vmax.f32 %v7567, 0.0
      %v7764 = vmax.f32 %v7568, 0.0
      %v7765 = vmax.f32 %v7569, 0.0
      %v7766 = vmax.f32 %v7570, 0.0
      %v7767 = vmax.f32 %v7571, 0.0
      %v7768 = vmax.f32 %v7572, 0.0
      %v7769 = vmax.f32 %v7573, 0.0
      %v7770 = vmax.f32 %v7574, 0.0
      %v7771 = vmax.f32 %v7575, 0.0
      %v7772 = vmax.f32 %v7576, 0.0
      %v7773 = vmax.f32 %v7577, 0.0
      %v7774 = vmax.f32 %v7578, 0.0
      %v7775 = vmax.f32 %v7579, 0.0
      %v7776 = vmax.f32 %v7580, 0.0
      %v7777 = vmax.f32 %v7581, 0.0
      %v7778 = vmax.f32 %v7582, 0.0
      %v7779 = vmax.f32 %v7583, 0.0
      %v7780 = vmax.f32 %v7584, 0.0
      %v7781 = vmax.f32 %v7585, 0.0
      %v7782 = vmax.f32 %v7586, 0.0
      %v7783 = vmax.f32 %v7587, 0.0
      %v7784 = vmax.f32 %v7588, 0.0
      %v7785 = vmax.f32 %v7589, 0.0
      %v7786 = vmax.f32 %v7590, 0.0
      %v7787 = vmax.f32 %v7591, 0.0
      %v7788 = vmax.f32 %v7592, 0.0
      %v7789 = vmax.f32 %v7593, 0.0
      %v7790 = vmax.f32 %v7594, 0.0
      %v7791 = vmax.f32 %v7595, 0.0
      %v7792 = vmax.f32 %v7596, 0.0
      %v7793 = vmax.f32 %v7597, 0.0
      %v7794 = vmax.f32 %v7598, 0.0
      %v7795 = vmax.f32 %v7599, 0.0
      %v7796 = vmax.f32 %v7600, 0.0
      %v7797 = vmax.f32 %v7601, 0.0
      %v7798 = vmax.f32 %v7602, 0.0
      %v7799 = vmax.f32 %v7603, 0.0
      %v7800 = vmax.f32 %v7604, 0.0
      %v7801 = vmax.f32 %v7605, 0.0
      %v7802 = vmax.f32 %v7606, 0.0
      %v7803 = vmax.f32 %v7607, 0.0
      %v7804 = vmax.f32 %v7608, 0.0
      %v7805 = vmax.f32 %v7609, 0.0
      %v7806 = vmax.f32 %v7610, 0.0
      %v7807 = vmax.f32 %v7611, 0.0
      %v7808 = vmax.f32 %v7612, 0.0
      %v7809 = vmax.f32 %v7613, 0.0
      %v7810 = vmax.f32 %v7614, 0.0
      %v7811 = vmax.f32 %v7615, 0.0
      %v7812 = vmax.f32 %v7616, 0.0
      %v7813 = vmax.f32 %v7617, 0.0
      %v7814 = vmax.f32 %v7618, 0.0
      %v7815 = vmax.f32 %v7619, 0.0
      %v7816 = vmax.f32 %v7620, 0.0
      %v7817 = vmax.f32 %v7621, 0.0
      %v7818 = vmax.f32 %v7622, 0.0
      %v7819 = vmax.f32 %v7623, 0.0
      %v7820 = vmax.f32 %v7624, 0.0
      %v7821 = vmax.f32 %v7625, 0.0
      %v7822 = vmax.f32 %v7626, 0.0
      %v7823 = vmax.f32 %v7627, 0.0
      %v7824 = vmax.f32 %v7628, 0.0
      %v7825 = vmax.f32 %v7629, 0.0
      %v7826 = vmax.f32 %v7630, 0.0
      %v7827 = vmax.f32 %v7631, 0.0
      %v7828 = vmax.f32 %v7632, 0.0
      %v7829 = vmax.f32 %v7633, 0.0
      %v7830 = vmax.f32 %v7634, 0.0
      %v7831 = vmax.f32 %v7635, 0.0
      %v7832 = vmax.f32 %v7636, 0.0
      %v7833 = vmax.f32 %v7637, 0.0
      %v7834 = vmax.f32 %v7638, 0.0
      %v7835 = vmax.f32 %v7639, 0.0
      %v7836 = vmax.f32 %v7640, 0.0
      %v7837 = vmax.f32 %v7641, 0.0
      %v7838 = vmax.f32 %v7642, 0.0
      %v7839 = vmax.f32 %v7643, 0.0
      %v7840 = vmax.f32 %v7644, 0.0
      %v7841 = vmax.f32 %v7645, 0.0
      %v7842 = vmax.f32 %v7646, 0.0
      %v7843 = vmax.f32 %v7647, 0.0
      %v7844 = vmax.f32 %v7648, 0.0
      %v7845 = vmax.f32 %v7649, 0.0
      %v7846 = vmax.f32 %v7650, 0.0
      %v7847 = vmax.f32 %v7651, 0.0
      %v7848 = vmax.f32 %v7652, 0.0
      %v7849 = vmax.f32 %v7653, 0.0
      %v7850 = vmax.f32 %v7654, 0.0
      %v7851 = vmax.f32 %v7655, 0.0
      %v7852 = vmax.f32 %v7656, 0.0
      %v7853 = vmax.f32 %v7657, 0.0
      %v7854 = vmax.f32 %v7658, 0.0
      %v7855 = vmax.f32 %v7659, 0.0
      %v7856 = vmax.f32 %v7660, 0.0
      %v7857 = vmax.f32 %v7661, 0.0
      %v7858 = vmax.f32 %v7662, 0.0
      %v7859 = vmax.f32 %v7663, 0.0
      %v7860 = vmax.f32 %v7664, 0.0
      %v7861 = vmax.f32 %v7665, 0.0
      %v7862 = vmax.f32 %v7666, 0.0
      %v7863 = vmax.f32 %v7667, 0.0
      %v7864 = vmax.f32 %v7668, 0.0
      %v7865 = vmax.f32 %v7669, 0.0
      %v7866 = vmax.f32 %v7670, 0.0
      %v7867 = vmax.f32 %v7671, 0.0
      %v7868 = vmax.f32 %v7672, 0.0
      %v7869 = vmax.f32 %v7673, 0.0
      %v7870 = vmax.f32 %v7674, 0.0
      %v7871 = vmax.f32 %v7675, 0.0
      %v7872 = vmax.f32 %v7676, 0.0
      %v7873 = vmax.f32 %v7677, 0.0
      %v7874 = vmax.f32 %v7678, 0.0
      %v7875 = vmax.f32 %v7679, 0.0
      %v7876 = vmax.f32 %v7680, 0.0
      %v7877 = vmax.f32 %v7681, 0.0
      %v7878 = vmax.f32 %v7682, 0.0
      %v7879 = vmax.f32 %v7683, 0.0
      %v7880 = vmax.f32 %v7684, 0.0
      %v7881 = vmax.f32 %v7685, 0.0
      %v7882 = vmax.f32 %v7686, 0.0
      %v7883 = vmax.f32 %v7687, 0.0
      %v7884 = vmax.f32 %v7688, 0.0
      %v7885 = vmax.f32 %v7689, 0.0
      %v7886 = vmax.f32 %v7690, 0.0
      %v7887 = vmax.f32 %v7691, 0.0
      %v7888 = vmax.f32 %v7692, 0.0
      %v7889 = vmax.f32 %v7693, 0.0
      %v7890 = vmax.f32 %v7694, 0.0
      %v7891 = vmax.f32 %v7695, 0.0
      %v7892 = vmax.f32 %v7696, 0.0
      %v7893 = vmax.f32 %v7697, 0.0
      %v7894 = vmax.f32 %v7698, 0.0
      %v7895 = vmax.f32 %v7699, 0.0
      %v7896 = vmax.f32 %v7700, 0.0
      %v7897 = vmax.f32 %v7701, 0.0
      %v7898 = vmax.f32 %v7702, 0.0
      %v7899 = vmax.f32 %v7703, 0.0
      %v7900 = vmax.f32 %v7704, 0.0
      %v7901 = vmax.f32 %v7705, 0.0
      %v7902 = vmax.f32 %v7706, 0.0
      %v7903 = vmax.f32 %v7707, 0.0
      %v7904 = vmax.f32 %v7708, 0.0
      %v7905 = vmax.f32 %v7709, 0.0
      %v7906 = vmax.f32 %v7710, 0.0
      %v7907 = vmax.f32 %v7711, 0.0
      %v7908 = vmax.f32 %v7712, 0.0
      %v7909 = vmax.f32 %v7713, 0.0
      %v7910 = vmax.f32 %v7714, 0.0
      %v7911 = vmax.f32 %v7715, 0.0
      %v7912 = vmax.f32 %v7716, 0.0
      %v7913 = vmax.f32 %v7717, 0.0
      %v7914 = vmax.f32 %v7718, 0.0
      %v7915 = vpack.c.bf16 %v7720, %v7719
      %v7916 = vpack.c.bf16 %v7722, %v7721
      %v7917 = vpack.c.bf16 %v7724, %v7723
      %v7918 = vpack.c.bf16 %v7726, %v7725
      %v7919 = vpack.c.bf16 %v7728, %v7727
      %v7920 = vpack.c.bf16 %v7730, %v7729
      %v7921 = vpack.c.bf16 %v7732, %v7731
      %v7922 = vpack.c.bf16 %v7734, %v7733
      %v7923 = vpack.c.bf16 %v7736, %v7735
      %v7924 = vpack.c.bf16 %v7738, %v7737
      %v7925 = vpack.c.bf16 %v7740, %v7739
      %v7926 = vpack.c.bf16 %v7742, %v7741
      %v7927 = vpack.c.bf16 %v7744, %v7743
      %v7928 = vpack.c.bf16 %v7746, %v7745
      %v7929 = vpack.c.bf16 %v7748, %v7747
      %v7930 = vpack.c.bf16 %v7750, %v7749
      %v7931 = vpack.c.bf16 %v7752, %v7751
      %v7932 = vpack.c.bf16 %v7754, %v7753
      %v7933 = vpack.c.bf16 %v7756, %v7755
      %v7934 = vpack.c.bf16 %v7758, %v7757
      %v7935 = vpack.c.bf16 %v7760, %v7759
      %v7936 = vpack.c.bf16 %v7762, %v7761
      %v7937 = vpack.c.bf16 %v7764, %v7763
      %v7938 = vpack.c.bf16 %v7766, %v7765
      %v7939 = vpack.c.bf16 %v7768, %v7767
      %v7940 = vpack.c.bf16 %v7770, %v7769
      %v7941 = vpack.c.bf16 %v7772, %v7771
      %v7942 = vpack.c.bf16 %v7774, %v7773
      %v7943 = vpack.c.bf16 %v7776, %v7775
      %v7944 = vpack.c.bf16 %v7778, %v7777
      %v7945 = vpack.c.bf16 %v7780, %v7779
      %v7946 = vpack.c.bf16 %v7782, %v7781
      %v7947 = vpack.c.bf16 %v7784, %v7783
      %v7948 = vpack.c.bf16 %v7786, %v7785
      %v7949 = vpack.c.bf16 %v7788, %v7787
      %v7950 = vpack.c.bf16 %v7790, %v7789
      %v7951 = vpack.c.bf16 %v7792, %v7791
      %v7952 = vpack.c.bf16 %v7794, %v7793
      %v7953 = vpack.c.bf16 %v7796, %v7795
      %v7954 = vpack.c.bf16 %v7798, %v7797
      %v7955 = vpack.c.bf16 %v7800, %v7799
      %v7956 = vpack.c.bf16 %v7802, %v7801
      %v7957 = vpack.c.bf16 %v7804, %v7803
      %v7958 = vpack.c.bf16 %v7806, %v7805
      %v7959 = vpack.c.bf16 %v7808, %v7807
      %v7960 = vpack.c.bf16 %v7810, %v7809
      %v7961 = vpack.c.bf16 %v7812, %v7811
      %v7962 = vpack.c.bf16 %v7814, %v7813
      %v7963 = vpack.c.bf16 %v7816, %v7815
      %v7964 = vpack.c.bf16 %v7818, %v7817
      %v7965 = vpack.c.bf16 %v7820, %v7819
      %v7966 = vpack.c.bf16 %v7822, %v7821
      %v7967 = vpack.c.bf16 %v7824, %v7823
      %v7968 = vpack.c.bf16 %v7826, %v7825
      %v7969 = vpack.c.bf16 %v7828, %v7827
      %v7970 = vpack.c.bf16 %v7830, %v7829
      %v7971 = vpack.c.bf16 %v7832, %v7831
      %v7972 = vpack.c.bf16 %v7834, %v7833
      %v7973 = vpack.c.bf16 %v7836, %v7835
      %v7974 = vpack.c.bf16 %v7838, %v7837
      %v7975 = vpack.c.bf16 %v7840, %v7839
      %v7976 = vpack.c.bf16 %v7842, %v7841
      %v7977 = vpack.c.bf16 %v7844, %v7843
      %v7978 = vpack.c.bf16 %v7846, %v7845
      %v7979 = vpack.c.bf16 %v7848, %v7847
      %v7980 = vpack.c.bf16 %v7850, %v7849
      %v7981 = vpack.c.bf16 %v7852, %v7851
      %v7982 = vpack.c.bf16 %v7854, %v7853
      %v7983 = vpack.c.bf16 %v7856, %v7855
      %v7984 = vpack.c.bf16 %v7858, %v7857
      %v7985 = vpack.c.bf16 %v7860, %v7859
      %v7986 = vpack.c.bf16 %v7862, %v7861
      %v7987 = vpack.c.bf16 %v7864, %v7863
      %v7988 = vpack.c.bf16 %v7866, %v7865
      %v7989 = vpack.c.bf16 %v7868, %v7867
      %v7990 = vpack.c.bf16 %v7870, %v7869
      %v7991 = vpack.c.bf16 %v7872, %v7871
      %v7992 = vpack.c.bf16 %v7874, %v7873
      %v7993 = vpack.c.bf16 %v7876, %v7875
      %v7994 = vpack.c.bf16 %v7878, %v7877
      %v7995 = vpack.c.bf16 %v7880, %v7879
      %v7996 = vpack.c.bf16 %v7882, %v7881
      %v7997 = vpack.c.bf16 %v7884, %v7883
      %v7998 = vpack.c.bf16 %v7886, %v7885
      %v7999 = vpack.c.bf16 %v7888, %v7887
      %v8000 = vpack.c.bf16 %v7890, %v7889
      %v8001 = vpack.c.bf16 %v7892, %v7891
      %v8002 = vpack.c.bf16 %v7894, %v7893
      %v8003 = vpack.c.bf16 %v7896, %v7895
      %v8004 = vpack.c.bf16 %v7898, %v7897
      %v8005 = vpack.c.bf16 %v7900, %v7899
      %v8006 = vpack.c.bf16 %v7902, %v7901
      %v8007 = vpack.c.bf16 %v7904, %v7903
      %v8008 = vpack.c.bf16 %v7906, %v7905
      %v8009 = vpack.c.bf16 %v7908, %v7907
      %v8010 = vpack.c.bf16 %v7910, %v7909
      %v8011 = vpack.c.bf16 %v7912, %v7911
      %v8012 = vpack.c.bf16 %v7914, %v7913
      %v8111 = vunpack.c.l.b16 %v7915
      %v8112 = vunpack.c.h.b16 %v7915
      %v8113 = vunpack.c.l.b16 %v7916
      %v8114 = vunpack.c.h.b16 %v7916
      %v8115 = vunpack.c.l.b16 %v7917
      %v8116 = vunpack.c.h.b16 %v7917
      %v8117 = vunpack.c.l.b16 %v7918
      %v8118 = vunpack.c.h.b16 %v7918
      %v8119 = vunpack.c.l.b16 %v7919
      %v8120 = vunpack.c.h.b16 %v7919
      %v8121 = vunpack.c.l.b16 %v7920
      %v8122 = vunpack.c.h.b16 %v7920
      %v8123 = vunpack.c.l.b16 %v7921
      %v8124 = vunpack.c.h.b16 %v7921
      %v8125 = vunpack.c.l.b16 %v7922
      %v8126 = vunpack.c.h.b16 %v7922
      %v8127 = vunpack.c.l.b16 %v7923
      %v8128 = vunpack.c.h.b16 %v7923
      %v8129 = vunpack.c.l.b16 %v7924
      %v8130 = vunpack.c.h.b16 %v7924
      %v8131 = vunpack.c.l.b16 %v7925
      %v8132 = vunpack.c.h.b16 %v7925
      %v8133 = vunpack.c.l.b16 %v7926
      %v8134 = vunpack.c.h.b16 %v7926
      %v8135 = vunpack.c.l.b16 %v7927
      %v8136 = vunpack.c.h.b16 %v7927
      %v8137 = vunpack.c.l.b16 %v7928
      %v8138 = vunpack.c.h.b16 %v7928
      %v8139 = vunpack.c.l.b16 %v7929
      %v8140 = vunpack.c.h.b16 %v7929
      %v8141 = vunpack.c.l.b16 %v7930
      %v8142 = vunpack.c.h.b16 %v7930
      %v8143 = vunpack.c.l.b16 %v7931
      %v8144 = vunpack.c.h.b16 %v7931
      %v8145 = vunpack.c.l.b16 %v7932
      %v8146 = vunpack.c.h.b16 %v7932
      %v8147 = vunpack.c.l.b16 %v7933
      %v8148 = vunpack.c.h.b16 %v7933
      %v8149 = vunpack.c.l.b16 %v7934
      %v8150 = vunpack.c.h.b16 %v7934
      %v8151 = vunpack.c.l.b16 %v7935
      %v8152 = vunpack.c.h.b16 %v7935
      %v8153 = vunpack.c.l.b16 %v7936
      %v8154 = vunpack.c.h.b16 %v7936
      %v8155 = vunpack.c.l.b16 %v7937
      %v8156 = vunpack.c.h.b16 %v7937
      %v8157 = vunpack.c.l.b16 %v7938
      %v8158 = vunpack.c.h.b16 %v7938
      %v8159 = vunpack.c.l.b16 %v7939
      %v8160 = vunpack.c.h.b16 %v7939
      %v8161 = vunpack.c.l.b16 %v7940
      %v8162 = vunpack.c.h.b16 %v7940
      %v8163 = vunpack.c.l.b16 %v7941
      %v8164 = vunpack.c.h.b16 %v7941
      %v8165 = vunpack.c.l.b16 %v7942
      %v8166 = vunpack.c.h.b16 %v7942
      %v8167 = vunpack.c.l.b16 %v7943
      %v8168 = vunpack.c.h.b16 %v7943
      %v8169 = vunpack.c.l.b16 %v7944
      %v8170 = vunpack.c.h.b16 %v7944
      %v8171 = vunpack.c.l.b16 %v7945
      %v8172 = vunpack.c.h.b16 %v7945
      %v8173 = vunpack.c.l.b16 %v7946
      %v8174 = vunpack.c.h.b16 %v7946
      %v8175 = vunpack.c.l.b16 %v7947
      %v8176 = vunpack.c.h.b16 %v7947
      %v8177 = vunpack.c.l.b16 %v7948
      %v8178 = vunpack.c.h.b16 %v7948
      %v8179 = vunpack.c.l.b16 %v7949
      %v8180 = vunpack.c.h.b16 %v7949
      %v8181 = vunpack.c.l.b16 %v7950
      %v8182 = vunpack.c.h.b16 %v7950
      %v8183 = vunpack.c.l.b16 %v7951
      %v8184 = vunpack.c.h.b16 %v7951
      %v8185 = vunpack.c.l.b16 %v7952
      %v8186 = vunpack.c.h.b16 %v7952
      %v8187 = vunpack.c.l.b16 %v7953
      %v8188 = vunpack.c.h.b16 %v7953
      %v8189 = vunpack.c.l.b16 %v7954
      %v8190 = vunpack.c.h.b16 %v7954
      %v8191 = vunpack.c.l.b16 %v7955
      %v8192 = vunpack.c.h.b16 %v7955
      %v8193 = vunpack.c.l.b16 %v7956
      %v8194 = vunpack.c.h.b16 %v7956
      %v8195 = vunpack.c.l.b16 %v7957
      %v8196 = vunpack.c.h.b16 %v7957
      %v8197 = vunpack.c.l.b16 %v7958
      %v8198 = vunpack.c.h.b16 %v7958
      %v8199 = vunpack.c.l.b16 %v7959
      %v8200 = vunpack.c.h.b16 %v7959
      %v8201 = vunpack.c.l.b16 %v7960
      %v8202 = vunpack.c.h.b16 %v7960
      %v8203 = vunpack.c.l.b16 %v7961
      %v8204 = vunpack.c.h.b16 %v7961
      %v8205 = vunpack.c.l.b16 %v7962
      %v8206 = vunpack.c.h.b16 %v7962
      %v8207 = vunpack.c.l.b16 %v7963
      %v8208 = vunpack.c.h.b16 %v7963
      %v8209 = vunpack.c.l.b16 %v7964
      %v8210 = vunpack.c.h.b16 %v7964
      %v8211 = vunpack.c.l.b16 %v7965
      %v8212 = vunpack.c.h.b16 %v7965
      %v8213 = vunpack.c.l.b16 %v7966
      %v8214 = vunpack.c.h.b16 %v7966
      %v8215 = vunpack.c.l.b16 %v7967
      %v8216 = vunpack.c.h.b16 %v7967
      %v8217 = vunpack.c.l.b16 %v7968
      %v8218 = vunpack.c.h.b16 %v7968
      %v8219 = vunpack.c.l.b16 %v7969
      %v8220 = vunpack.c.h.b16 %v7969
      %v8221 = vunpack.c.l.b16 %v7970
      %v8222 = vunpack.c.h.b16 %v7970
      %v8223 = vunpack.c.l.b16 %v7971
      %v8224 = vunpack.c.h.b16 %v7971
      %v8225 = vunpack.c.l.b16 %v7972
      %v8226 = vunpack.c.h.b16 %v7972
      %v8227 = vunpack.c.l.b16 %v7973
      %v8228 = vunpack.c.h.b16 %v7973
      %v8229 = vunpack.c.l.b16 %v7974
      %v8230 = vunpack.c.h.b16 %v7974
      %v8231 = vunpack.c.l.b16 %v7975
      %v8232 = vunpack.c.h.b16 %v7975
      %v8233 = vunpack.c.l.b16 %v7976
      %v8234 = vunpack.c.h.b16 %v7976
      %v8235 = vunpack.c.l.b16 %v7977
      %v8236 = vunpack.c.h.b16 %v7977
      %v8237 = vunpack.c.l.b16 %v7978
      %v8238 = vunpack.c.h.b16 %v7978
      %v8239 = vunpack.c.l.b16 %v7979
      %v8240 = vunpack.c.h.b16 %v7979
      %v8241 = vunpack.c.l.b16 %v7980
      %v8242 = vunpack.c.h.b16 %v7980
      %v8243 = vunpack.c.l.b16 %v7981
      %v8244 = vunpack.c.h.b16 %v7981
      %v8245 = vunpack.c.l.b16 %v7982
      %v8246 = vunpack.c.h.b16 %v7982
      %v8247 = vunpack.c.l.b16 %v7983
      %v8248 = vunpack.c.h.b16 %v7983
      %v8249 = vunpack.c.l.b16 %v7984
      %v8250 = vunpack.c.h.b16 %v7984
      %v8251 = vunpack.c.l.b16 %v7985
      %v8252 = vunpack.c.h.b16 %v7985
      %v8253 = vunpack.c.l.b16 %v7986
      %v8254 = vunpack.c.h.b16 %v7986
      %v8255 = vunpack.c.l.b16 %v7987
      %v8256 = vunpack.c.h.b16 %v7987
      %v8257 = vunpack.c.l.b16 %v7988
      %v8258 = vunpack.c.h.b16 %v7988
      %v8259 = vunpack.c.l.b16 %v7989
      %v8260 = vunpack.c.h.b16 %v7989
      %v8261 = vunpack.c.l.b16 %v7990
      %v8262 = vunpack.c.h.b16 %v7990
      %v8263 = vunpack.c.l.b16 %v7991
      %v8264 = vunpack.c.h.b16 %v7991
      %v8265 = vunpack.c.l.b16 %v7992
      %v8266 = vunpack.c.h.b16 %v7992
      %v8267 = vunpack.c.l.b16 %v7993
      %v8268 = vunpack.c.h.b16 %v7993
      %v8269 = vunpack.c.l.b16 %v7994
      %v8270 = vunpack.c.h.b16 %v7994
      %v8271 = vunpack.c.l.b16 %v7995
      %v8272 = vunpack.c.h.b16 %v7995
      %v8273 = vunpack.c.l.b16 %v7996
      %v8274 = vunpack.c.h.b16 %v7996
      %v8275 = vunpack.c.l.b16 %v7997
      %v8276 = vunpack.c.h.b16 %v7997
      %v8277 = vunpack.c.l.b16 %v7998
      %v8278 = vunpack.c.h.b16 %v7998
      %v8279 = vunpack.c.l.b16 %v7999
      %v8280 = vunpack.c.h.b16 %v7999
      %v8281 = vunpack.c.l.b16 %v8000
      %v8282 = vunpack.c.h.b16 %v8000
      %v8283 = vunpack.c.l.b16 %v8001
      %v8284 = vunpack.c.h.b16 %v8001
      %v8285 = vunpack.c.l.b16 %v8002
      %v8286 = vunpack.c.h.b16 %v8002
      %v8287 = vunpack.c.l.b16 %v8003
      %v8288 = vunpack.c.h.b16 %v8003
      %v8289 = vunpack.c.l.b16 %v8004
      %v8290 = vunpack.c.h.b16 %v8004
      %v8291 = vunpack.c.l.b16 %v8005
      %v8292 = vunpack.c.h.b16 %v8005
      %v8293 = vunpack.c.l.b16 %v8006
      %v8294 = vunpack.c.h.b16 %v8006
      %v8295 = vunpack.c.l.b16 %v8007
      %v8296 = vunpack.c.h.b16 %v8007
      %v8297 = vunpack.c.l.b16 %v8008
      %v8298 = vunpack.c.h.b16 %v8008
      %v8299 = vunpack.c.l.b16 %v8009
      %v8300 = vunpack.c.h.b16 %v8009
      %v8301 = vunpack.c.l.b16 %v8010
      %v8302 = vunpack.c.h.b16 %v8010
      %v8303 = vunpack.c.l.b16 %v8011
      %v8304 = vunpack.c.h.b16 %v8011
      %v8305 = vunpack.c.l.b16 %v8012
      %v8306 = vunpack.c.h.b16 %v8012
      %v8307 = vpack.c.b16 %v8111, %v8111
      %v8308 = vpack.c.b16 %v8112, %v8112
      %v8309 = vpack.c.b16 %v8113, %v8113
      %v8310 = vpack.c.b16 %v8114, %v8114
      %v8311 = vpack.c.b16 %v8115, %v8115
      %v8312 = vpack.c.b16 %v8116, %v8116
      %v8313 = vpack.c.b16 %v8117, %v8117
      %v8314 = vpack.c.b16 %v8118, %v8118
      %v8315 = vpack.c.b16 %v8119, %v8119
      %v8316 = vpack.c.b16 %v8120, %v8120
      %v8317 = vpack.c.b16 %v8121, %v8121
      %v8318 = vpack.c.b16 %v8122, %v8122
      %v8319 = vpack.c.b16 %v8123, %v8123
      %v8320 = vpack.c.b16 %v8124, %v8124
      %v8321 = vpack.c.b16 %v8125, %v8125
      %v8322 = vpack.c.b16 %v8126, %v8126
      %v8323 = vpack.c.b16 %v8127, %v8127
      %v8324 = vpack.c.b16 %v8128, %v8128
      %v8325 = vpack.c.b16 %v8129, %v8129
      %v8326 = vpack.c.b16 %v8130, %v8130
      %v8327 = vpack.c.b16 %v8131, %v8131
      %v8328 = vpack.c.b16 %v8132, %v8132
      %v8329 = vpack.c.b16 %v8133, %v8133
      %v8330 = vpack.c.b16 %v8134, %v8134
      %v8331 = vpack.c.b16 %v8135, %v8135
      %v8332 = vpack.c.b16 %v8136, %v8136
      %v8333 = vpack.c.b16 %v8137, %v8137
      %v8334 = vpack.c.b16 %v8138, %v8138
      %v8335 = vpack.c.b16 %v8139, %v8139
      %v8336 = vpack.c.b16 %v8140, %v8140
      %v8337 = vpack.c.b16 %v8141, %v8141
      %v8338 = vpack.c.b16 %v8142, %v8142
      %v8339 = vpack.c.b16 %v8143, %v8143
      %v8340 = vpack.c.b16 %v8144, %v8144
      %v8341 = vpack.c.b16 %v8145, %v8145
      %v8342 = vpack.c.b16 %v8146, %v8146
      %v8343 = vpack.c.b16 %v8147, %v8147
      %v8344 = vpack.c.b16 %v8148, %v8148
      %v8345 = vpack.c.b16 %v8149, %v8149
      %v8346 = vpack.c.b16 %v8150, %v8150
      %v8347 = vpack.c.b16 %v8151, %v8151
      %v8348 = vpack.c.b16 %v8152, %v8152
      %v8349 = vpack.c.b16 %v8153, %v8153
      %v8350 = vpack.c.b16 %v8154, %v8154
      %v8351 = vpack.c.b16 %v8155, %v8155
      %v8352 = vpack.c.b16 %v8156, %v8156
      %v8353 = vpack.c.b16 %v8157, %v8157
      %v8354 = vpack.c.b16 %v8158, %v8158
      %v8355 = vpack.c.b16 %v8159, %v8159
      %v8356 = vpack.c.b16 %v8160, %v8160
      %v8357 = vpack.c.b16 %v8161, %v8161
      %v8358 = vpack.c.b16 %v8162, %v8162
      %v8359 = vpack.c.b16 %v8163, %v8163
      %v8360 = vpack.c.b16 %v8164, %v8164
      %v8361 = vpack.c.b16 %v8165, %v8165
      %v8362 = vpack.c.b16 %v8166, %v8166
      %v8363 = vpack.c.b16 %v8167, %v8167
      %v8364 = vpack.c.b16 %v8168, %v8168
      %v8365 = vpack.c.b16 %v8169, %v8169
      %v8366 = vpack.c.b16 %v8170, %v8170
      %v8367 = vpack.c.b16 %v8171, %v8171
      %v8368 = vpack.c.b16 %v8172, %v8172
      %v8369 = vpack.c.b16 %v8173, %v8173
      %v8370 = vpack.c.b16 %v8174, %v8174
      %v8371 = vpack.c.b16 %v8175, %v8175
      %v8372 = vpack.c.b16 %v8176, %v8176
      %v8373 = vpack.c.b16 %v8177, %v8177
      %v8374 = vpack.c.b16 %v8178, %v8178
      %v8375 = vpack.c.b16 %v8179, %v8179
      %v8376 = vpack.c.b16 %v8180, %v8180
      %v8377 = vpack.c.b16 %v8181, %v8181
      %v8378 = vpack.c.b16 %v8182, %v8182
      %v8379 = vpack.c.b16 %v8183, %v8183
      %v8380 = vpack.c.b16 %v8184, %v8184
      %v8381 = vpack.c.b16 %v8185, %v8185
      %v8382 = vpack.c.b16 %v8186, %v8186
      %v8383 = vpack.c.b16 %v8187, %v8187
      %v8384 = vpack.c.b16 %v8188, %v8188
      %v8385 = vpack.c.b16 %v8189, %v8189
      %v8386 = vpack.c.b16 %v8190, %v8190
      %v8387 = vpack.c.b16 %v8191, %v8191
      %v8388 = vpack.c.b16 %v8192, %v8192
      %v8389 = vpack.c.b16 %v8193, %v8193
      %v8390 = vpack.c.b16 %v8194, %v8194
      %v8391 = vpack.c.b16 %v8195, %v8195
      %v8392 = vpack.c.b16 %v8196, %v8196
      %v8393 = vpack.c.b16 %v8197, %v8197
      %v8394 = vpack.c.b16 %v8198, %v8198
      %v8395 = vpack.c.b16 %v8199, %v8199
      %v8396 = vpack.c.b16 %v8200, %v8200
      %v8397 = vpack.c.b16 %v8201, %v8201
      %v8398 = vpack.c.b16 %v8202, %v8202
      %v8399 = vpack.c.b16 %v8203, %v8203
      %v8400 = vpack.c.b16 %v8204, %v8204
      %v8401 = vpack.c.b16 %v8205, %v8205
      %v8402 = vpack.c.b16 %v8206, %v8206
      %v8403 = vpack.c.b16 %v8207, %v8207
      %v8404 = vpack.c.b16 %v8208, %v8208
      %v8405 = vpack.c.b16 %v8209, %v8209
      %v8406 = vpack.c.b16 %v8210, %v8210
      %v8407 = vpack.c.b16 %v8211, %v8211
      %v8408 = vpack.c.b16 %v8212, %v8212
      %v8409 = vpack.c.b16 %v8213, %v8213
      %v8410 = vpack.c.b16 %v8214, %v8214
      %v8411 = vpack.c.b16 %v8215, %v8215
      %v8412 = vpack.c.b16 %v8216, %v8216
      %v8413 = vpack.c.b16 %v8217, %v8217
      %v8414 = vpack.c.b16 %v8218, %v8218
      %v8415 = vpack.c.b16 %v8219, %v8219
      %v8416 = vpack.c.b16 %v8220, %v8220
      %v8417 = vpack.c.b16 %v8221, %v8221
      %v8418 = vpack.c.b16 %v8222, %v8222
      %v8419 = vpack.c.b16 %v8223, %v8223
      %v8420 = vpack.c.b16 %v8224, %v8224
      %v8421 = vpack.c.b16 %v8225, %v8225
      %v8422 = vpack.c.b16 %v8226, %v8226
      %v8423 = vpack.c.b16 %v8227, %v8227
      %v8424 = vpack.c.b16 %v8228, %v8228
      %v8425 = vpack.c.b16 %v8229, %v8229
      %v8426 = vpack.c.b16 %v8230, %v8230
      %v8427 = vpack.c.b16 %v8231, %v8231
      %v8428 = vpack.c.b16 %v8232, %v8232
      %v8429 = vpack.c.b16 %v8233, %v8233
      %v8430 = vpack.c.b16 %v8234, %v8234
      %v8431 = vpack.c.b16 %v8235, %v8235
      %v8432 = vpack.c.b16 %v8236, %v8236
      %v8433 = vpack.c.b16 %v8237, %v8237
      %v8434 = vpack.c.b16 %v8238, %v8238
      %v8435 = vpack.c.b16 %v8239, %v8239
      %v8436 = vpack.c.b16 %v8240, %v8240
      %v8437 = vpack.c.b16 %v8241, %v8241
      %v8438 = vpack.c.b16 %v8242, %v8242
      %v8439 = vpack.c.b16 %v8243, %v8243
      %v8440 = vpack.c.b16 %v8244, %v8244
      %v8441 = vpack.c.b16 %v8245, %v8245
      %v8442 = vpack.c.b16 %v8246, %v8246
      %v8443 = vpack.c.b16 %v8247, %v8247
      %v8444 = vpack.c.b16 %v8248, %v8248
      %v8445 = vpack.c.b16 %v8249, %v8249
      %v8446 = vpack.c.b16 %v8250, %v8250
      %v8447 = vpack.c.b16 %v8251, %v8251
      %v8448 = vpack.c.b16 %v8252, %v8252
      %v8449 = vpack.c.b16 %v8253, %v8253
      %v8450 = vpack.c.b16 %v8254, %v8254
      %v8451 = vpack.c.b16 %v8255, %v8255
      %v8452 = vpack.c.b16 %v8256, %v8256
      %v8453 = vpack.c.b16 %v8257, %v8257
      %v8454 = vpack.c.b16 %v8258, %v8258
      %v8455 = vpack.c.b16 %v8259, %v8259
      %v8456 = vpack.c.b16 %v8260, %v8260
      %v8457 = vpack.c.b16 %v8261, %v8261
      %v8458 = vpack.c.b16 %v8262, %v8262
      %v8459 = vpack.c.b16 %v8263, %v8263
      %v8460 = vpack.c.b16 %v8264, %v8264
      %v8461 = vpack.c.b16 %v8265, %v8265
      %v8462 = vpack.c.b16 %v8266, %v8266
      %v8463 = vpack.c.b16 %v8267, %v8267
      %v8464 = vpack.c.b16 %v8268, %v8268
      %v8465 = vpack.c.b16 %v8269, %v8269
      %v8466 = vpack.c.b16 %v8270, %v8270
      %v8467 = vpack.c.b16 %v8271, %v8271
      %v8468 = vpack.c.b16 %v8272, %v8272
      %v8469 = vpack.c.b16 %v8273, %v8273
      %v8470 = vpack.c.b16 %v8274, %v8274
      %v8471 = vpack.c.b16 %v8275, %v8275
      %v8472 = vpack.c.b16 %v8276, %v8276
      %v8473 = vpack.c.b16 %v8277, %v8277
      %v8474 = vpack.c.b16 %v8278, %v8278
      %v8475 = vpack.c.b16 %v8279, %v8279
      %v8476 = vpack.c.b16 %v8280, %v8280
      %v8477 = vpack.c.b16 %v8281, %v8281
      %v8478 = vpack.c.b16 %v8282, %v8282
      %v8479 = vpack.c.b16 %v8283, %v8283
      %v8480 = vpack.c.b16 %v8284, %v8284
      %v8481 = vpack.c.b16 %v8285, %v8285
      %v8482 = vpack.c.b16 %v8286, %v8286
      %v8483 = vpack.c.b16 %v8287, %v8287
      %v8484 = vpack.c.b16 %v8288, %v8288
      %v8485 = vpack.c.b16 %v8289, %v8289
      %v8486 = vpack.c.b16 %v8290, %v8290
      %v8487 = vpack.c.b16 %v8291, %v8291
      %v8488 = vpack.c.b16 %v8292, %v8292
      %v8489 = vpack.c.b16 %v8293, %v8293
      %v8490 = vpack.c.b16 %v8294, %v8294
      %v8491 = vpack.c.b16 %v8295, %v8295
      %v8492 = vpack.c.b16 %v8296, %v8296
      %v8493 = vpack.c.b16 %v8297, %v8297
      %v8494 = vpack.c.b16 %v8298, %v8298
      %v8495 = vpack.c.b16 %v8299, %v8299
      %v8496 = vpack.c.b16 %v8300, %v8300
      %v8497 = vpack.c.b16 %v8301, %v8301
      %v8498 = vpack.c.b16 %v8302, %v8302
      %v8499 = vpack.c.b16 %v8303, %v8303
      %v8500 = vpack.c.b16 %v8304, %v8304
      %v8501 = vpack.c.b16 %v8305, %v8305
      %v8502 = vpack.c.b16 %v8306, %v8306
      %vm8699 = vcmask 125952
      %8700 = vst.msk [vmem:[%s378] sm:$0xf] %vm8699, %v8307
      %8701 = vst.msk [vmem:[%s378 + $0x4] sm:$0xf] %vm8699, %v8308
      %8702 = vst.msk [vmem:[%s378 + $0x8] sm:$0xf] %vm8699, %v8309
      %8703 = vst.msk [vmem:[%s378 + $0xc] sm:$0xf] %vm8699, %v8310
      %8704 = vst.msk [vmem:[%s378 + $0x10] sm:$0xf] %vm8699, %v8311
      %8705 = vst.msk [vmem:[%s378 + $0x14] sm:$0xf] %vm8699, %v8312
      %8706 = vst.msk [vmem:[%s378 + $0x18] sm:$0xf] %vm8699, %v8313
      %8707 = vst.msk [vmem:[%s378 + $0x1c] sm:$0xf] %vm8699, %v8314
      %8708 = vst.msk [vmem:[%s378 + $0x20] sm:$0xf] %vm8699, %v8315
      %8709 = vst.msk [vmem:[%s378 + $0x24] sm:$0xf] %vm8699, %v8316
      %8710 = vst.msk [vmem:[%s378 + $0x28] sm:$0xf] %vm8699, %v8317
      %8711 = vst.msk [vmem:[%s378 + $0x2c] sm:$0xf] %vm8699, %v8318
      %8712 = vst.msk [vmem:[%s378 + $0x30] sm:$0xf] %vm8699, %v8319
      %8713 = vst.msk [vmem:[%s378 + $0x34] sm:$0xf] %vm8699, %v8320
      %8714 = vst.msk [vmem:[%s378 + $0x38] sm:$0xf] %vm8699, %v8321
      %8715 = vst.msk [vmem:[%s378 + $0x3c] sm:$0xf] %vm8699, %v8322
      %8716 = vst.msk [vmem:[%s378 + $0x40] sm:$0xf] %vm8699, %v8323
      %8717 = vst.msk [vmem:[%s378 + $0x44] sm:$0xf] %vm8699, %v8324
      %8718 = vst.msk [vmem:[%s378 + $0x48] sm:$0xf] %vm8699, %v8325
      %8719 = vst.msk [vmem:[%s378 + $0x4c] sm:$0xf] %vm8699, %v8326
      %8720 = vst.msk [vmem:[%s378 + $0x50] sm:$0xf] %vm8699, %v8327
      %8721 = vst.msk [vmem:[%s378 + $0x54] sm:$0xf] %vm8699, %v8328
      %8722 = vst.msk [vmem:[%s378 + $0x58] sm:$0xf] %vm8699, %v8329
      %8723 = vst.msk [vmem:[%s378 + $0x5c] sm:$0xf] %vm8699, %v8330
      %8724 = vst.msk [vmem:[%s378 + $0x60] sm:$0xf] %vm8699, %v8331
      %8725 = vst.msk [vmem:[%s378 + $0x64] sm:$0xf] %vm8699, %v8332
      %8726 = vst.msk [vmem:[%s378 + $0x68] sm:$0xf] %vm8699, %v8333
      %8727 = vst.msk [vmem:[%s378 + $0x6c] sm:$0xf] %vm8699, %v8334
      %8728 = vst.msk [vmem:[%s378 + $0x70] sm:$0xf] %vm8699, %v8335
      %8729 = vst.msk [vmem:[%s378 + $0x74] sm:$0xf] %vm8699, %v8336
      %8730 = vst.msk [vmem:[%s378 + $0x78] sm:$0xf] %vm8699, %v8337
      %8731 = vst.msk [vmem:[%s378 + $0x7c] sm:$0xf] %vm8699, %v8338
      %8732 = vst.msk [vmem:[%s378 + $0x80] sm:$0xf] %vm8699, %v8339
      %8733 = vst.msk [vmem:[%s378 + $0x84] sm:$0xf] %vm8699, %v8340
      %8734 = vst.msk [vmem:[%s378 + $0x88] sm:$0xf] %vm8699, %v8341
      %8735 = vst.msk [vmem:[%s378 + $0x8c] sm:$0xf] %vm8699, %v8342
      %8736 = vst.msk [vmem:[%s378 + $0x90] sm:$0xf] %vm8699, %v8343
      %8737 = vst.msk [vmem:[%s378 + $0x94] sm:$0xf] %vm8699, %v8344
      %8738 = vst.msk [vmem:[%s378 + $0x98] sm:$0xf] %vm8699, %v8345
      %8739 = vst.msk [vmem:[%s378 + $0x9c] sm:$0xf] %vm8699, %v8346
      %8740 = vst.msk [vmem:[%s378 + $0xa0] sm:$0xf] %vm8699, %v8347
      %8741 = vst.msk [vmem:[%s378 + $0xa4] sm:$0xf] %vm8699, %v8348
      %8742 = vst.msk [vmem:[%s378 + $0xa8] sm:$0xf] %vm8699, %v8349
      %8743 = vst.msk [vmem:[%s378 + $0xac] sm:$0xf] %vm8699, %v8350
      %8744 = vst.msk [vmem:[%s378 + $0xb0] sm:$0xf] %vm8699, %v8351
      %8745 = vst.msk [vmem:[%s378 + $0xb4] sm:$0xf] %vm8699, %v8352
      %8746 = vst.msk [vmem:[%s378 + $0xb8] sm:$0xf] %vm8699, %v8353
      %8747 = vst.msk [vmem:[%s378 + $0xbc] sm:$0xf] %vm8699, %v8354
      %8748 = vst.msk [vmem:[%s378 + $0xc0] sm:$0xf] %vm8699, %v8355
      %8749 = vst.msk [vmem:[%s378 + $0xc4] sm:$0xf] %vm8699, %v8356
      %8750 = vst.msk [vmem:[%s378 + $0xc8] sm:$0xf] %vm8699, %v8357
      %8751 = vst.msk [vmem:[%s378 + $0xcc] sm:$0xf] %vm8699, %v8358
      %8752 = vst.msk [vmem:[%s378 + $0xd0] sm:$0xf] %vm8699, %v8359
      %8753 = vst.msk [vmem:[%s378 + $0xd4] sm:$0xf] %vm8699, %v8360
      %8754 = vst.msk [vmem:[%s378 + $0xd8] sm:$0xf] %vm8699, %v8361
      %8755 = vst.msk [vmem:[%s378 + $0xdc] sm:$0xf] %vm8699, %v8362
      %8756 = vst.msk [vmem:[%s378 + $0xe0] sm:$0xf] %vm8699, %v8363
      %8757 = vst.msk [vmem:[%s378 + $0xe4] sm:$0xf] %vm8699, %v8364
      %8758 = vst.msk [vmem:[%s378 + $0xe8] sm:$0xf] %vm8699, %v8365
      %8759 = vst.msk [vmem:[%s378 + $0xec] sm:$0xf] %vm8699, %v8366
      %8760 = vst.msk [vmem:[%s378 + $0xf0] sm:$0xf] %vm8699, %v8367
      %8761 = vst.msk [vmem:[%s378 + $0xf4] sm:$0xf] %vm8699, %v8368
      %8762 = vst.msk [vmem:[%s378 + $0xf8] sm:$0xf] %vm8699, %v8369
      %8763 = vst.msk [vmem:[%s378 + $0xfc] sm:$0xf] %vm8699, %v8370
      %8764 = vst.msk [vmem:[%s378 + $0x100] sm:$0xf] %vm8699, %v8371
      %8765 = vst.msk [vmem:[%s378 + $0x104] sm:$0xf] %vm8699, %v8372
      %8766 = vst.msk [vmem:[%s378 + $0x108] sm:$0xf] %vm8699, %v8373
      %8767 = vst.msk [vmem:[%s378 + $0x10c] sm:$0xf] %vm8699, %v8374
      %8768 = vst.msk [vmem:[%s378 + $0x110] sm:$0xf] %vm8699, %v8375
      %8769 = vst.msk [vmem:[%s378 + $0x114] sm:$0xf] %vm8699, %v8376
      %8770 = vst.msk [vmem:[%s378 + $0x118] sm:$0xf] %vm8699, %v8377
      %8771 = vst.msk [vmem:[%s378 + $0x11c] sm:$0xf] %vm8699, %v8378
      %8772 = vst.msk [vmem:[%s378 + $0x120] sm:$0xf] %vm8699, %v8379
      %8773 = vst.msk [vmem:[%s378 + $0x124] sm:$0xf] %vm8699, %v8380
      %8774 = vst.msk [vmem:[%s378 + $0x128] sm:$0xf] %vm8699, %v8381
      %8775 = vst.msk [vmem:[%s378 + $0x12c] sm:$0xf] %vm8699, %v8382
      %8776 = vst.msk [vmem:[%s378 + $0x130] sm:$0xf] %vm8699, %v8383
      %8777 = vst.msk [vmem:[%s378 + $0x134] sm:$0xf] %vm8699, %v8384
      %8778 = vst.msk [vmem:[%s378 + $0x138] sm:$0xf] %vm8699, %v8385
      %8779 = vst.msk [vmem:[%s378 + $0x13c] sm:$0xf] %vm8699, %v8386
      %8780 = vst.msk [vmem:[%s378 + $0x140] sm:$0xf] %vm8699, %v8387
      %8781 = vst.msk [vmem:[%s378 + $0x144] sm:$0xf] %vm8699, %v8388
      %8782 = vst.msk [vmem:[%s378 + $0x148] sm:$0xf] %vm8699, %v8389
      %8783 = vst.msk [vmem:[%s378 + $0x14c] sm:$0xf] %vm8699, %v8390
      %8784 = vst.msk [vmem:[%s378 + $0x150] sm:$0xf] %vm8699, %v8391
      %8785 = vst.msk [vmem:[%s378 + $0x154] sm:$0xf] %vm8699, %v8392
      %8786 = vst.msk [vmem:[%s378 + $0x158] sm:$0xf] %vm8699, %v8393
      %8787 = vst.msk [vmem:[%s378 + $0x15c] sm:$0xf] %vm8699, %v8394
      %8788 = vst.msk [vmem:[%s378 + $0x160] sm:$0xf] %vm8699, %v8395
      %8789 = vst.msk [vmem:[%s378 + $0x164] sm:$0xf] %vm8699, %v8396
      %8790 = vst.msk [vmem:[%s378 + $0x168] sm:$0xf] %vm8699, %v8397
      %8791 = vst.msk [vmem:[%s378 + $0x16c] sm:$0xf] %vm8699, %v8398
      %8792 = vst.msk [vmem:[%s378 + $0x170] sm:$0xf] %vm8699, %v8399
      %8793 = vst.msk [vmem:[%s378 + $0x174] sm:$0xf] %vm8699, %v8400
      %8794 = vst.msk [vmem:[%s378 + $0x178] sm:$0xf] %vm8699, %v8401
      %8795 = vst.msk [vmem:[%s378 + $0x17c] sm:$0xf] %vm8699, %v8402
      %8796 = vst.msk [vmem:[%s378 + $0x180] sm:$0xf] %vm8699, %v8403
      %8797 = vst.msk [vmem:[%s378 + $0x184] sm:$0xf] %vm8699, %v8404
      %8798 = vst.msk [vmem:[%s378 + $0x188] sm:$0xf] %vm8699, %v8405
      %8799 = vst.msk [vmem:[%s378 + $0x18c] sm:$0xf] %vm8699, %v8406
      %8800 = vst.msk [vmem:[%s378 + $0x190] sm:$0xf] %vm8699, %v8407
      %8801 = vst.msk [vmem:[%s378 + $0x194] sm:$0xf] %vm8699, %v8408
      %8802 = vst.msk [vmem:[%s378 + $0x198] sm:$0xf] %vm8699, %v8409
      %8803 = vst.msk [vmem:[%s378 + $0x19c] sm:$0xf] %vm8699, %v8410
      %8804 = vst.msk [vmem:[%s378 + $0x1a0] sm:$0xf] %vm8699, %v8411
      %8805 = vst.msk [vmem:[%s378 + $0x1a4] sm:$0xf] %vm8699, %v8412
      %8806 = vst.msk [vmem:[%s378 + $0x1a8] sm:$0xf] %vm8699, %v8413
      %8807 = vst.msk [vmem:[%s378 + $0x1ac] sm:$0xf] %vm8699, %v8414
      %8808 = vst.msk [vmem:[%s378 + $0x1b0] sm:$0xf] %vm8699, %v8415
      %8809 = vst.msk [vmem:[%s378 + $0x1b4] sm:$0xf] %vm8699, %v8416
      %8810 = vst.msk [vmem:[%s378 + $0x1b8] sm:$0xf] %vm8699, %v8417
      %8811 = vst.msk [vmem:[%s378 + $0x1bc] sm:$0xf] %vm8699, %v8418
      %8812 = vst.msk [vmem:[%s378 + $0x1c0] sm:$0xf] %vm8699, %v8419
      %8813 = vst.msk [vmem:[%s378 + $0x1c4] sm:$0xf] %vm8699, %v8420
      %8814 = vst.msk [vmem:[%s378 + $0x1c8] sm:$0xf] %vm8699, %v8421
      %8815 = vst.msk [vmem:[%s378 + $0x1cc] sm:$0xf] %vm8699, %v8422
      %8816 = vst.msk [vmem:[%s378 + $0x1d0] sm:$0xf] %vm8699, %v8423
      %8817 = vst.msk [vmem:[%s378 + $0x1d4] sm:$0xf] %vm8699, %v8424
      %8818 = vst.msk [vmem:[%s378 + $0x1d8] sm:$0xf] %vm8699, %v8425
      %8819 = vst.msk [vmem:[%s378 + $0x1dc] sm:$0xf] %vm8699, %v8426
      %8820 = vst.msk [vmem:[%s378 + $0x1e0] sm:$0xf] %vm8699, %v8427
      %8821 = vst.msk [vmem:[%s378 + $0x1e4] sm:$0xf] %vm8699, %v8428
      %8822 = vst.msk [vmem:[%s378 + $0x1e8] sm:$0xf] %vm8699, %v8429
      %8823 = vst.msk [vmem:[%s378 + $0x1ec] sm:$0xf] %vm8699, %v8430
      %8824 = vst.msk [vmem:[%s378 + $0x1f0] sm:$0xf] %vm8699, %v8431
      %8825 = vst.msk [vmem:[%s378 + $0x1f4] sm:$0xf] %vm8699, %v8432
      %8826 = vst.msk [vmem:[%s378 + $0x1f8] sm:$0xf] %vm8699, %v8433
      %8827 = vst.msk [vmem:[%s378 + $0x1fc] sm:$0xf] %vm8699, %v8434
      %8828 = vst.msk [vmem:[%s378 + $0x200] sm:$0xf] %vm8699, %v8435
      %8829 = vst.msk [vmem:[%s378 + $0x204] sm:$0xf] %vm8699, %v8436
      %8830 = vst.msk [vmem:[%s378 + $0x208] sm:$0xf] %vm8699, %v8437
      %8831 = vst.msk [vmem:[%s378 + $0x20c] sm:$0xf] %vm8699, %v8438
      %8832 = vst.msk [vmem:[%s378 + $0x210] sm:$0xf] %vm8699, %v8439
      %8833 = vst.msk [vmem:[%s378 + $0x214] sm:$0xf] %vm8699, %v8440
      %8834 = vst.msk [vmem:[%s378 + $0x218] sm:$0xf] %vm8699, %v8441
      %8835 = vst.msk [vmem:[%s378 + $0x21c] sm:$0xf] %vm8699, %v8442
      %8836 = vst.msk [vmem:[%s378 + $0x220] sm:$0xf] %vm8699, %v8443
      %8837 = vst.msk [vmem:[%s378 + $0x224] sm:$0xf] %vm8699, %v8444
      %8838 = vst.msk [vmem:[%s378 + $0x228] sm:$0xf] %vm8699, %v8445
      %8839 = vst.msk [vmem:[%s378 + $0x22c] sm:$0xf] %vm8699, %v8446
      %8840 = vst.msk [vmem:[%s378 + $0x230] sm:$0xf] %vm8699, %v8447
      %8841 = vst.msk [vmem:[%s378 + $0x234] sm:$0xf] %vm8699, %v8448
      %8842 = vst.msk [vmem:[%s378 + $0x238] sm:$0xf] %vm8699, %v8449
      %8843 = vst.msk [vmem:[%s378 + $0x23c] sm:$0xf] %vm8699, %v8450
      %8844 = vst.msk [vmem:[%s378 + $0x240] sm:$0xf] %vm8699, %v8451
      %8845 = vst.msk [vmem:[%s378 + $0x244] sm:$0xf] %vm8699, %v8452
      %8846 = vst.msk [vmem:[%s378 + $0x248] sm:$0xf] %vm8699, %v8453
      %8847 = vst.msk [vmem:[%s378 + $0x24c] sm:$0xf] %vm8699, %v8454
      %8848 = vst.msk [vmem:[%s378 + $0x250] sm:$0xf] %vm8699, %v8455
      %8849 = vst.msk [vmem:[%s378 + $0x254] sm:$0xf] %vm8699, %v8456
      %8850 = vst.msk [vmem:[%s378 + $0x258] sm:$0xf] %vm8699, %v8457
      %8851 = vst.msk [vmem:[%s378 + $0x25c] sm:$0xf] %vm8699, %v8458
      %8852 = vst.msk [vmem:[%s378 + $0x260] sm:$0xf] %vm8699, %v8459
      %8853 = vst.msk [vmem:[%s378 + $0x264] sm:$0xf] %vm8699, %v8460
      %8854 = vst.msk [vmem:[%s378 + $0x268] sm:$0xf] %vm8699, %v8461
      %8855 = vst.msk [vmem:[%s378 + $0x26c] sm:$0xf] %vm8699, %v8462
      %8856 = vst.msk [vmem:[%s378 + $0x270] sm:$0xf] %vm8699, %v8463
      %8857 = vst.msk [vmem:[%s378 + $0x274] sm:$0xf] %vm8699, %v8464
      %8858 = vst.msk [vmem:[%s378 + $0x278] sm:$0xf] %vm8699, %v8465
      %8859 = vst.msk [vmem:[%s378 + $0x27c] sm:$0xf] %vm8699, %v8466
      %8860 = vst.msk [vmem:[%s378 + $0x280] sm:$0xf] %vm8699, %v8467
      %8861 = vst.msk [vmem:[%s378 + $0x284] sm:$0xf] %vm8699, %v8468
      %8862 = vst.msk [vmem:[%s378 + $0x288] sm:$0xf] %vm8699, %v8469
      %8863 = vst.msk [vmem:[%s378 + $0x28c] sm:$0xf] %vm8699, %v8470
      %8864 = vst.msk [vmem:[%s378 + $0x290] sm:$0xf] %vm8699, %v8471
      %8865 = vst.msk [vmem:[%s378 + $0x294] sm:$0xf] %vm8699, %v8472
      %8866 = vst.msk [vmem:[%s378 + $0x298] sm:$0xf] %vm8699, %v8473
      %8867 = vst.msk [vmem:[%s378 + $0x29c] sm:$0xf] %vm8699, %v8474
      %8868 = vst.msk [vmem:[%s378 + $0x2a0] sm:$0xf] %vm8699, %v8475
      %8869 = vst.msk [vmem:[%s378 + $0x2a4] sm:$0xf] %vm8699, %v8476
      %8870 = vst.msk [vmem:[%s378 + $0x2a8] sm:$0xf] %vm8699, %v8477
      %8871 = vst.msk [vmem:[%s378 + $0x2ac] sm:$0xf] %vm8699, %v8478
      %8872 = vst.msk [vmem:[%s378 + $0x2b0] sm:$0xf] %vm8699, %v8479
      %8873 = vst.msk [vmem:[%s378 + $0x2b4] sm:$0xf] %vm8699, %v8480
      %8874 = vst.msk [vmem:[%s378 + $0x2b8] sm:$0xf] %vm8699, %v8481
      %8875 = vst.msk [vmem:[%s378 + $0x2bc] sm:$0xf] %vm8699, %v8482
      %8876 = vst.msk [vmem:[%s378 + $0x2c0] sm:$0xf] %vm8699, %v8483
      %8877 = vst.msk [vmem:[%s378 + $0x2c4] sm:$0xf] %vm8699, %v8484
      %8878 = vst.msk [vmem:[%s378 + $0x2c8] sm:$0xf] %vm8699, %v8485
      %8879 = vst.msk [vmem:[%s378 + $0x2cc] sm:$0xf] %vm8699, %v8486
      %8880 = vst.msk [vmem:[%s378 + $0x2d0] sm:$0xf] %vm8699, %v8487
      %8881 = vst.msk [vmem:[%s378 + $0x2d4] sm:$0xf] %vm8699, %v8488
      %8882 = vst.msk [vmem:[%s378 + $0x2d8] sm:$0xf] %vm8699, %v8489
      %8883 = vst.msk [vmem:[%s378 + $0x2dc] sm:$0xf] %vm8699, %v8490
      %8884 = vst.msk [vmem:[%s378 + $0x2e0] sm:$0xf] %vm8699, %v8491
      %8885 = vst.msk [vmem:[%s378 + $0x2e4] sm:$0xf] %vm8699, %v8492
      %8886 = vst.msk [vmem:[%s378 + $0x2e8] sm:$0xf] %vm8699, %v8493
      %8887 = vst.msk [vmem:[%s378 + $0x2ec] sm:$0xf] %vm8699, %v8494
      %8888 = vst.msk [vmem:[%s378 + $0x2f0] sm:$0xf] %vm8699, %v8495
      %8889 = vst.msk [vmem:[%s378 + $0x2f4] sm:$0xf] %vm8699, %v8496
      %8890 = vst.msk [vmem:[%s378 + $0x2f8] sm:$0xf] %vm8699, %v8497
      %8891 = vst.msk [vmem:[%s378 + $0x2fc] sm:$0xf] %vm8699, %v8498
      %8892 = vst.msk [vmem:[%s378 + $0x300] sm:$0xf] %vm8699, %v8499
      %8893 = vst.msk [vmem:[%s378 + $0x304] sm:$0xf] %vm8699, %v8500
      %8894 = vst.msk [vmem:[%s378 + $0x308] sm:$0xf] %vm8699, %v8501
      %8895 = vst.msk [vmem:[%s378 + $0x30c] sm:$0xf] %vm8699, %v8502
      %s8896 = smul.u32 28, %s21
      %p8897 = scmp.lt.s32.totalorder %s8896, 55
      %s8898 = scalar_select %p8897, %s8896, 55
      %p8899 = scmp.lt.s32.totalorder %s20, 0
      %s8900 = scalar_select %p8899, %s20, 0
      %s8901 = smul.addr %s8898, 7
      %s8902 = sadd.s32 %s8900, %s8901
      %s8903 = smul.addr %s8902, 4
      %s8904 = scalar_lea.vmem %s5, %s8903
      // Predicated region
      $region41: #{tpu_custom_call.1} parent=39 // pred_check
        %p8905 = pneg %p194
      $region42: #{tpu_custom_call.1} parent=39 // pred_check_branch
        %8907 = sbr.rel (%p8905) target = $region44
      $region43: #{tpu_custom_call.1} parent=39 // pred_region
        %s8908 = smul.u32 28, %s21
      $region44: #{tpu_custom_call.1} parent=39 // pred_fallthru
        _
    $region40: #{tpu_custom_call.1} parent=5 // pred_fallthru
      _
    %p8909 = scmp.le.s32.totalorder 2, %s11
    // Predicated region
    $region45: #{tpu_custom_call.1} parent=5 // pred_check
      %p8910 = pneg %p8909
    $region46: #{tpu_custom_call.1} parent=5 // pred_check_branch
      %8912 = sbr.rel (%p8910) target = $region48
    $region47: #{tpu_custom_call.1} parent=5 // pred_region
      %s8913 = ssub.s32 %s11, 2
      // Predicated region
      $region49: #{tpu_custom_call.1} parent=47 // pred_check
        %p8914 = pneg %p200
      $region50: #{tpu_custom_call.1} parent=47 // pred_check_branch
        %8916 = sbr.rel (%p8914) target = $region52
      $region51: #{tpu_custom_call.1} parent=47 // pred_region
        %s8917 = smul.u32 28, %s23
        %p8918 = scmp.lt.s32.totalorder %s8917, 55
        %s8919 = scalar_select %p8918, %s8917, 55
        %p8920 = scmp.lt.s32.totalorder %s22, 0
        %s8921 = scalar_select %p8920, %s22, 0
        %s8922 = smul.addr %s8919, 7
        %s8923 = sadd.s32 %s8921, %s8922
        %s8924 = smul.addr %s8923, 4
        %s8925 = scalar_lea.vmem %s5, %s8924
      $region52: #{tpu_custom_call.1} parent=47 // pred_fallthru
        _
    $region48: #{tpu_custom_call.1} parent=5 // pred_fallthru
      _
  $region6: #{tpu_custom_call.1} parent=0 // loop_footer
    %s15 = sadd.s32 1, %s11
  $region7: #{tpu_custom_call.1} parent=0 // loop_footer_branch
    %10 = sbr.rel target = $region3
  $region8: #{tpu_custom_call.1} parent=0 // loop_exit
    _

</llo_original>
